<compile_context>
chip_gen: v5e
topology: v5e:2x2
jax: 0.10.0
libtpu: 0.0.40
codegen_flags: <defaults>
</compile_context>

<pallas_src>
import math

import jax
import jax.numpy as jnp
import numpy as np
from jax.experimental import pallas as pl
from jax.experimental.pallas import tpu as pltpu

N_MAX_POSITIONS = 512


def _layernorm(x, g, b, eps=1e-12):
    mu = jnp.mean(x, axis=-1, keepdims=True)
    xc = x - mu
    var = jnp.mean(xc * xc, axis=-1, keepdims=True)
    return xc * jax.lax.rsqrt(var + eps) * g + b


# ---------------------------------------------------------------------------
# One fused kernel: (layer == 0: masks -> scratch, embeddings + LN) then one
# transformer layer (MHA + LN1, FFN + LN2, mask, sigmoid-gated fusion add).
# ---------------------------------------------------------------------------
def make_layer_kernel(n_heads):
    def kernel(we_ref, mask_ref, ge_ref, be_ref, fus_ref,
               wq_ref, bq_ref, wk_ref, bk_ref, wv_ref, bv_ref,
               wo_ref, bo_ref, g1_ref, bt1_ref,
               w1_ref, b1_ref, w2_ref, b2_ref, g2_ref, bt2_ref,
               out_ref,
               mq_scr, bias_scr, invlen_scr, ctx_scr):
        bt, slen, dim = out_ref.shape
        dh = dim // n_heads
        scale = 1.0 / math.sqrt(dh)
        nrows = bt * slen

        layer = pl.program_id(1)

        # ---- layer 0: masks -> persistent scratch, emb + LN + padding mask ---
        @pl.when(layer == 0)
        def _init():
            mk = mask_ref[...]                                   # (bt,1,slen) 0/1
            seq_len = jnp.sum(mk, axis=2, keepdims=True)         # (bt,1,1)
            row = jax.lax.broadcasted_iota(jnp.int32, (bt, slen, 1), 1).astype(jnp.float32)
            mq_scr[...] = (row < seq_len).astype(jnp.float32)    # (bt,slen,1)
            bias_scr[...] = jnp.where(mk > 0.0, 0.0, -1e30)      # (bt,1,slen)
            invlen_scr[...] = 1.0 / seq_len                      # exact (fusion-gate mean)

            x = we_ref[...].astype(jnp.float32)                  # word+pos emb (bf16 in)
            x = _layernorm(x, ge_ref[...], be_ref[...])
            out_ref[...] = x * mq_scr[...]

        mq = mq_scr[...]                                         # (bt,slen,1)
        bias = bias_scr[...]                                     # (bt,1,slen)

        t3 = out_ref[...]                                        # running hidden, f32
        t = t3.reshape(nrows, dim)
        tb = t.astype(jnp.bfloat16)

        # ---- fused QKV projections (full-dim MXU matmuls, f32 accumulate) ----
        # Bias/scale/cast fused so no duplicate f32+bf16 copies stay live.
        q3 = ((jnp.dot(tb, wq_ref[0], preferred_element_type=jnp.float32)
               + bq_ref[0]) * scale).astype(jnp.bfloat16).reshape(bt, slen, dim)
        k3 = (jnp.dot(tb, wk_ref[0], preferred_element_type=jnp.float32)
              + bk_ref[0]).astype(jnp.bfloat16).reshape(bt, slen, dim)
        v3 = (jnp.dot(tb, wv_ref[0], preferred_element_type=jnp.float32)
              + bv_ref[0]).astype(jnp.bfloat16).reshape(bt, slen, dim)

        # ---- per-head attention core -> bf16 context slab (no lane concat) ---
        # TODO(synk): Mosaic dot_general does not reliably lower two batch dims,
        # so the heads stay a static loop; storing each head's context straight
        # into ctx_scr bounds its live range and removes the concatenate, while
        # keeping the full-contraction W_o matmul.  Prefer configs with dh>=128.
        for h in range(n_heads):
            lo = h * dh
            qh = q3[:, :, lo:lo + dh]
            kh = k3[:, :, lo:lo + dh]
            vh = v3[:, :, lo:lo + dh]
            s = jnp.einsum('bqd,bkd->bqk', qh, kh,
                           preferred_element_type=jnp.float32) + bias
            s = s - jnp.max(s, axis=-1, keepdims=True)
            p = jnp.exp(s)
            # approx reciprocal (EUP) for the softmax denominator: ~1e-3 rel
            # error, covered by the test tolerance (documented accuracy trade).
            p = p * pl.reciprocal(jnp.sum(p, axis=-1, keepdims=True), approx=True)
            ch = jnp.einsum('bqk,bkd->bqd', p.astype(jnp.bfloat16), vh,
                            preferred_element_type=jnp.float32)
            ctx_scr[:, lo:lo + dh] = ch.reshape(nrows, dh).astype(jnp.bfloat16)

        attn = (jnp.dot(ctx_scr[...], wo_ref[0],
                        preferred_element_type=jnp.float32) + bo_ref[0])

        x = _layernorm(t + attn, g1_ref[0], bt1_ref[0])

        # ---- FFN (gelu_activation=False -> ReLU); h1 -> bf16 immediately -----
        h1 = jnp.maximum(
            jnp.dot(x.astype(jnp.bfloat16), w1_ref[0],
                    preferred_element_type=jnp.float32) + b1_ref[0],
            0.0).astype(jnp.bfloat16)
        ff = jnp.dot(h1, w2_ref[0], preferred_element_type=jnp.float32) + b2_ref[0]
        y = _layernorm(x + ff, g2_ref[0], bt2_ref[0])

        # ---- padding mask + sigmoid-gated fusion addition ---------------------
        y3 = y.reshape(bt, slen, dim) * mq
        avg = jnp.sum(y3, axis=1, keepdims=True) * invlen_scr[...]
        theta = jax.nn.sigmoid(avg)                              # (bt,1,dim)
        out_ref[...] = y3 + theta * fus_ref[0]                   # fus is bf16

    return kernel


# ---------------------------------------------------------------------------
# Per-generation resource sizing
# ---------------------------------------------------------------------------
def _tpu_resources():
    """(physical VMEM bytes, has 2 TensorCores per chip?) — best effort."""
    vmem_cap = 64 << 20                 # conservative fallback (v7x size)
    two_tc = False
    try:
        vmem_cap = int(pltpu.get_tpu_info().vmem_capacity_bytes)
    except Exception:
        pass
    try:
        kind = jax.devices()[0].device_kind.lower()
        two_tc = ('v7' in kind) or ('7x' in kind) or ('tpu7' in kind)
    except Exception:
        pass
    return vmem_cap, two_tc


def _vmem_bytes_estimate(bt, slen, dim, hidden):
    """Rough upper bound on VMEM residency for one grid step at batch tile bt."""
    rows = bt * slen
    weights = 2 * (4 * dim * dim + 2 * dim * hidden) * 2     # double-buffered bf16 W
    biases = 2 * (8 * dim + hidden) * 4                      # double-buffered f32 biases/LN
    streams = (rows * dim * 2                                # we (bf16, single-buffered)
               + 2 * rows * dim * 2                          # fusion hiddens (bf16, 2 bufs)
               + 2 * rows * dim * 4                          # resident + staged f32 output
               + 2 * bt * 8 * 128 * 4)                       # padding-mask block (padded)
    temps = (rows * dim * (5 * 4 + 4 * 2)                    # t/q/k/v/x/y f32 + bf16 copies
             + rows * hidden * (4 + 2)                       # FFN h1 (f32 transient + bf16)
             + 2 * bt * slen * max(slen, 128) * 4            # ~2 live per-head score tiles
             + rows * dim * 2)                               # bf16 context slab
    scratch = bt * (slen + 16) * 128 * 4                     # mq / bias / inv_len (lane-padded)
    return weights + biases + streams + temps + scratch


# ---------------------------------------------------------------------------
# Wrapper: embedding gather (XLA glue) + one pallas_call over (batch, layer)
# ---------------------------------------------------------------------------
def fusion_encoder_forward(params, x, lengths, fusion_hiddens,
                           batch_tile=None, transpose_output=False):
    """x: (slen, bs) int32 token ids.  Returns (bs, slen, dim) float32 by
    default; set transpose_output=True for the PyTorch module's (slen, bs, dim)
    layout (costs an extra HBM read+write in XLA)."""
    slen, bs = x.shape
    emb = params['emb']
    dim = emb.shape[1]
    H = params['n_heads']
    L = params['wq'].shape[0]
    hidden = params['w1'].shape[-1]

    assert slen % 8 == 0, "pad slen to a multiple of 8 for sublane alignment"
    assert dim % 128 == 0, "keep dim lane-dense (multiple of 128)"
    assert dim % H == 0

    vmem_cap, two_tc = _tpu_resources()
    vmem_budget = int(vmem_cap * 0.85)   # ~109 MiB on v5e/v6e, ~54 MiB on v7x

    if batch_tile is None:
        # Largest divisor of bs whose residency estimate fits the budget;
        # on 2-TC chips (v7x) keep >= 2 batch-grid steps so the "parallel"
        # axis feeds both TensorCores.  On 1-TC chips a bigger tile minimizes
        # weight re-streaming (weights are DMA'd bs/batch_tile times).
        cap = bs // 2 if (two_tc and bs >= 2) else bs
        batch_tile = 1
        for cand in range(1, cap + 1):
            if bs % cand == 0 and _vmem_bytes_estimate(cand, slen, dim, hidden) <= vmem_budget:
                batch_tile = cand
    assert bs % batch_tile == 0
    Bt = batch_tile

    # TODO(synk): for dim >= 1024 on v7x (64 MiB VMEM) the double-buffered bf16
    # FFN weights alone approach the budget; sub-tile w1 (columns) / w2 (rows)
    # over the hidden dim (extra inner grid axis or pltpu.emit_pipeline) before
    # scaling the config.

    xb = x.T                                                          # (bs, slen)
    mask = (jnp.arange(slen)[None, :] < lengths[:, None]).astype(jnp.float32)
    mask3 = mask[:, None, :]                                          # (bs, 1, slen)

    # Word + position embeddings folded into ONE bf16 stream (drops the pe
    # input and halves the layer-0 block DMA).
    we = (jnp.take(emb, xb, axis=0) + params['pos'][:slen][None]).astype(jnp.bfloat16)
    ge = params['ln_emb_g'].reshape(1, 1, dim)
    be = params['ln_emb_b'].reshape(1, 1, dim)

    bf16 = lambda a: a.astype(jnp.bfloat16)
    wq, wk, wv, wo = bf16(params['wq']), bf16(params['wk']), bf16(params['wv']), bf16(params['wo'])
    w1, w2 = bf16(params['w1']), bf16(params['w2'])
    bq = params['bq'].reshape(L, 1, dim)
    bk = params['bk'].reshape(L, 1, dim)
    bv = params['bv'].reshape(L, 1, dim)
    bo = params['bo'].reshape(L, 1, dim)
    b1 = params['b1'].reshape(L, 1, hidden)
    b2 = params['b2'].reshape(L, 1, dim)
    g1 = params['ln1_g'].reshape(L, 1, dim)
    bt1 = params['ln1_b'].reshape(L, 1, dim)
    g2 = params['ln2_g'].reshape(L, 1, dim)
    bt2 = params['ln2_b'].reshape(L, 1, dim)

    # The only per-layer activation-sized HBM stream; bf16 halves it.
    fus = jnp.stack(fusion_hiddens, axis=0).astype(jnp.bfloat16)      # (L, bs, slen, dim)

    bmap3 = lambda b, l: (b, 0, 0)
    cmap3 = lambda b, l: (0, 0, 0)
    lmap3 = lambda b, l: (l, 0, 0)

    est = _vmem_bytes_estimate(Bt, slen, dim, hidden)
    vmem_limit = int(min(max(est + (8 << 20), 32 << 20), vmem_budget))

    scratch = [
        pltpu.VMEM((Bt, slen, 1), jnp.float32),       # query-row padding mask
        pltpu.VMEM((Bt, 1, slen), jnp.float32),       # key-mask bias (-1e30 at pads)
        pltpu.VMEM((Bt, 1, 1), jnp.float32),          # exact 1/seq_len
        pltpu.VMEM((Bt * slen, dim), jnp.bfloat16),   # per-head context slab
    ]

    weight_specs = [
        pl.BlockSpec((1, dim, dim), lmap3),           # wq
        pl.BlockSpec((1, 1, dim), lmap3),             # bq
        pl.BlockSpec((1, dim, dim), lmap3),           # wk
        pl.BlockSpec((1, 1, dim), lmap3),             # bk
        pl.BlockSpec((1, dim, dim), lmap3),           # wv
        pl.BlockSpec((1, 1, dim), lmap3),             # bv
        pl.BlockSpec((1, dim, dim), lmap3),           # wo
        pl.BlockSpec((1, 1, dim), lmap3),             # bo
        pl.BlockSpec((1, 1, dim), lmap3),             # ln1 gamma
        pl.BlockSpec((1, 1, dim), lmap3),             # ln1 beta
        pl.BlockSpec((1, dim, hidden), lmap3),        # w1
        pl.BlockSpec((1, 1, hidden), lmap3),          # b1
        pl.BlockSpec((1, hidden, dim), lmap3),        # w2
        pl.BlockSpec((1, 1, dim), lmap3),             # b2
        pl.BlockSpec((1, 1, dim), lmap3),             # ln2 gamma
        pl.BlockSpec((1, 1, dim), lmap3),             # ln2 beta
    ]

    def run(single_buffer_invariants):
        # Layer-invariant inputs are fetched once per batch tile; a single
        # buffer frees their double-buffer VMEM at zero DMA cost.
        inv = dict(pipeline_mode=pl.Buffered(1)) if single_buffer_invariants else {}
        in_specs = [
            pl.BlockSpec((Bt, slen, dim), bmap3, **inv),   # word+pos embeddings (bf16)
            pl.BlockSpec((Bt, 1, slen), bmap3, **inv),     # padding mask
            pl.BlockSpec((1, 1, dim), cmap3, **inv),       # emb LN gamma
            pl.BlockSpec((1, 1, dim), cmap3, **inv),       # emb LN beta
            pl.BlockSpec((1, Bt, slen, dim), lambda b, l: (l, b, 0, 0)),  # fusion hiddens
        ] + weight_specs
        res = pl.pallas_call(
            make_layer_kernel(H),
            out_shape=jax.ShapeDtypeStruct((bs, slen, dim), jnp.float32),
            grid=(bs // Bt, L),
            in_specs=in_specs,
            out_specs=pl.BlockSpec((Bt, slen, dim), bmap3),
            scratch_shapes=scratch,
            compiler_params=pltpu.CompilerParams(
                dimension_semantics=("parallel", "arbitrary"),
                vmem_limit_bytes=vmem_limit),
        )(we, mask3, ge, be, fus,
          wq, bq, wk, bk, wv, bv, wo, bo, g1, bt1,
          w1, b1, w2, b2, g2, bt2)
        return jax.block_until_ready(res)

    try:
        out = run(True)
    except Exception:
        # pl.Buffered(1) rejected by this jax/Mosaic version -> fall back to the
        # default double buffering (identical results, slightly more VMEM).
        out = run(False)

    if transpose_output:
        return jnp.transpose(out, (1, 0, 2))              # PyTorch layout (slen, bs, dim)
    return out


# ---------------------------------------------------------------------------
# Deterministic synthetic parameter init (shapes from the module's __init__)
# ---------------------------------------------------------------------------
def init_params(key, n_words, dim, n_heads, n_layers, pad_index):
    hidden = 4 * dim
    ks = jax.random.split(key, 3)

    def nrm(k, shape, std):
        return (std * jax.random.normal(k, shape)).astype(jnp.float32)

    emb = nrm(ks[0], (n_words, dim), dim ** -0.5).at[pad_index].set(0.0)
    pos = nrm(ks[1], (N_MAX_POSITIONS, dim), dim ** -0.5)

    p = {
        'emb': emb,
        'pos': pos,
        'ln_emb_g': jnp.ones((dim,), jnp.float32),
        'ln_emb_b': jnp.zeros((dim,), jnp.float32),
        'n_heads': n_heads,
    }
    kl = jax.random.split(ks[2], n_layers)
    wq, bq, wk, bk, wv, bv, wo, bo = [], [], [], [], [], [], [], []
    w1, b1, w2, b2 = [], [], [], []
    for i in range(n_layers):
        kk = jax.random.split(kl[i], 12)
        wq.append(nrm(kk[0], (dim, dim), 0.05)); bq.append(nrm(kk[1], (dim,), 0.05))
        wk.append(nrm(kk[2], (dim, dim), 0.05)); bk.append(nrm(kk[3], (dim,), 0.05))
        wv.append(nrm(kk[4], (dim, dim), 0.05)); bv.append(nrm(kk[5], (dim,), 0.05))
        wo.append(nrm(kk[6], (dim, dim), 0.05)); bo.append(nrm(kk[7], (dim,), 0.05))
        w1.append(nrm(kk[8], (dim, hidden), 0.05)); b1.append(nrm(kk[9], (hidden,), 0.05))
        w2.append(nrm(kk[10], (hidden, dim), 0.05)); b2.append(nrm(kk[11], (dim,), 0.05))
    p.update(
        wq=jnp.stack(wq), bq=jnp.stack(bq), wk=jnp.stack(wk), bk=jnp.stack(bk),
        wv=jnp.stack(wv), bv=jnp.stack(bv), wo=jnp.stack(wo), bo=jnp.stack(bo),
        w1=jnp.stack(w1), b1=jnp.stack(b1), w2=jnp.stack(w2), b2=jnp.stack(b2),
        ln1_g=jnp.ones((n_layers, dim), jnp.float32),
        ln1_b=jnp.zeros((n_layers, dim), jnp.float32),
        ln2_g=jnp.ones((n_layers, dim), jnp.float32),
        ln2_b=jnp.zeros((n_layers, dim), jnp.float32),
    )
    return p


# ---------------------------------------------------------------------------
# Pure-JAX f32 reference mirroring the PyTorch fwd() (eval, encoder, no cache).
# Returns batch-first (bs, slen, dim); the PyTorch module would transpose.
# ---------------------------------------------------------------------------
def reference_forward(params, x, lengths, fusion_hiddens):
    slen, bs = x.shape
    dim = params['emb'].shape[1]
    H = params['n_heads']
    dh = dim // H
    L = params['wq'].shape[0]

    xb = x.T
    mask = (jnp.arange(slen)[None, :] < lengths[:, None]).astype(jnp.float32)
    t = params['emb'][xb] + params['pos'][jnp.arange(slen)][None]
    t = _layernorm(t, params['ln_emb_g'], params['ln_emb_b'])
    t = t * mask[:, :, None]
    for i in range(L):
        q = jnp.einsum('bsd,de->bse', t, params['wq'][i]) + params['bq'][i]
        k = jnp.einsum('bsd,de->bse', t, params['wk'][i]) + params['bk'][i]
        v = jnp.einsum('bsd,de->bse', t, params['wv'][i]) + params['bv'][i]
        q = q.reshape(bs, slen, H, dh).transpose(0, 2, 1, 3) / math.sqrt(dh)
        k = k.reshape(bs, slen, H, dh).transpose(0, 2, 1, 3)
        v = v.reshape(bs, slen, H, dh).transpose(0, 2, 1, 3)
        s = jnp.einsum('bhqd,bhkd->bhqk', q, k)
        s = jnp.where(mask[:, None, None, :] > 0, s, -1e30)
        w = jax.nn.softmax(s, axis=-1)
        c = jnp.einsum('bhqk,bhkd->bhqd', w, v)
        c = c.transpose(0, 2, 1, 3).reshape(bs, slen, dim)
        attn = jnp.einsum('bsd,de->bse', c, params['wo'][i]) + params['bo'][i]
        t = _layernorm(t + attn, params['ln1_g'][i], params['ln1_b'][i])
        h1 = jnp.maximum(jnp.einsum('bsd,dh->bsh', t, params['w1'][i]) + params['b1'][i], 0.0)
        ff = jnp.einsum('bsh,hd->bsd', h1, params['w2'][i]) + params['b2'][i]
        t = _layernorm(t + ff, params['ln2_g'][i], params['ln2_b'][i])
        t = t * mask[:, :, None]
        seq_lens = jnp.sum(mask, axis=1, keepdims=True)           # (bs, 1)
        theta = jax.nn.sigmoid(jnp.sum(t, axis=1) / seq_lens)     # (bs, dim)
        t = t + theta[:, None, :] * fusion_hiddens[i]
    return t                                                      # (bs, slen, dim)


if __name__ == "__main__":
    key = jax.random.PRNGKey(0)
    slen, bs = 8, 2
    dim, n_heads, n_layers = 256, 2, 2        # dh = 128 -> lane-aligned heads
    n_words, pad_index = 50, 2

    kp, kx, kf = jax.random.split(key, 3)
    params = init_params(kp, n_words, dim, n_heads, n_layers, pad_index)

    x = jax.random.randint(kx, (slen, bs), 0, n_words, dtype=jnp.int32)   # (slen, bs)
    lengths = jnp.array([slen, 5], dtype=jnp.int32)                       # (bs,)
    fusion_hiddens = [0.1 * jax.random.normal(k, (bs, slen, dim), jnp.float32)
                      for k in jax.random.split(kf, n_layers)]

    out = jax.block_until_ready(fusion_encoder_forward(params, x, lengths, fusion_hiddens))
    assert out.shape == (bs, slen, dim)

    ref = reference_forward(params, x, lengths, fusion_hiddens)
    # bf16 weights/activations/embeddings with f32 accumulation + approx
    # softmax reciprocal -> slightly loosened tolerance.
    np.testing.assert_allclose(np.asarray(out), np.asarray(ref), atol=3e-2, rtol=3e-2)

    print("KERNEL_OK")
</pallas_src>

<mosaic_0001>
module attributes {stable_mosaic.version = 11 : i64} {
  func.func @kernel(%arg0: i32, %arg1: i32, %arg2: memref<2x8x256xbf16, #tpu.memory_space<vmem>>, %arg3: memref<2x1x8xf32, #tpu.memory_space<vmem>>, %arg4: memref<1x1x256xf32, #tpu.memory_space<vmem>>, %arg5: memref<1x1x256xf32, #tpu.memory_space<vmem>>, %arg6: memref<1x2x8x256xbf16, #tpu.memory_space<vmem>>, %arg7: memref<1x256x256xbf16, #tpu.memory_space<vmem>>, %arg8: memref<1x1x256xf32, #tpu.memory_space<vmem>>, %arg9: memref<1x256x256xbf16, #tpu.memory_space<vmem>>, %arg10: memref<1x1x256xf32, #tpu.memory_space<vmem>>, %arg11: memref<1x256x256xbf16, #tpu.memory_space<vmem>>, %arg12: memref<1x1x256xf32, #tpu.memory_space<vmem>>, %arg13: memref<1x256x256xbf16, #tpu.memory_space<vmem>>, %arg14: memref<1x1x256xf32, #tpu.memory_space<vmem>>, %arg15: memref<1x1x256xf32, #tpu.memory_space<vmem>>, %arg16: memref<1x1x256xf32, #tpu.memory_space<vmem>>, %arg17: memref<1x256x1024xbf16, #tpu.memory_space<vmem>>, %arg18: memref<1x1x1024xf32, #tpu.memory_space<vmem>>, %arg19: memref<1x1024x256xbf16, #tpu.memory_space<vmem>>, %arg20: memref<1x1x256xf32, #tpu.memory_space<vmem>>, %arg21: memref<1x1x256xf32, #tpu.memory_space<vmem>>, %arg22: memref<1x1x256xf32, #tpu.memory_space<vmem>>, %arg23: memref<2x8x256xf32, #tpu.memory_space<vmem>>, %arg24: memref<2x8x1xf32, #tpu.memory_space<vmem>>, %arg25: memref<2x1x8xf32, #tpu.memory_space<vmem>>, %arg26: memref<2x1x1xf32, #tpu.memory_space<vmem>>, %arg27: memref<16x256xbf16, #tpu.memory_space<vmem>>) attributes {dimension_semantics = [#tpu.dimension_semantics<parallel>, #tpu.dimension_semantics<arbitrary>], iteration_bounds = array<i64: 1, 2>, scalar_prefetch = 0 : i64, scratch_operands = 4 : i64, tpu.core_type = #tpu.core_type<tc>, window_params = [{pipeline_mode = #tpu.pipeline_mode<synchronous>, transform_indices = @transform_0, window_bounds = array<i64: 2, 8, 256>}, {pipeline_mode = #tpu.pipeline_mode<synchronous>, transform_indices = @transform_1, window_bounds = array<i64: 2, 1, 8>}, {pipeline_mode = #tpu.pipeline_mode<synchronous>, transform_indices = @transform_2, window_bounds = array<i64: 1, 1, 256>}, {pipeline_mode = #tpu.pipeline_mode<synchronous>, transform_indices = @transform_3, window_bounds = array<i64: 1, 1, 256>}, {transform_indices = @transform_4, window_bounds = array<i64: 1, 2, 8, 256>}, {transform_indices = @transform_5, window_bounds = array<i64: 1, 256, 256>}, {transform_indices = @transform_6, window_bounds = array<i64: 1, 1, 256>}, {transform_indices = @transform_7, window_bounds = array<i64: 1, 256, 256>}, {transform_indices = @transform_8, window_bounds = array<i64: 1, 1, 256>}, {transform_indices = @transform_9, window_bounds = array<i64: 1, 256, 256>}, {transform_indices = @transform_10, window_bounds = array<i64: 1, 1, 256>}, {transform_indices = @transform_11, window_bounds = array<i64: 1, 256, 256>}, {transform_indices = @transform_12, window_bounds = array<i64: 1, 1, 256>}, {transform_indices = @transform_13, window_bounds = array<i64: 1, 1, 256>}, {transform_indices = @transform_14, window_bounds = array<i64: 1, 1, 256>}, {transform_indices = @transform_15, window_bounds = array<i64: 1, 256, 1024>}, {transform_indices = @transform_16, window_bounds = array<i64: 1, 1, 1024>}, {transform_indices = @transform_17, window_bounds = array<i64: 1, 1024, 256>}, {transform_indices = @transform_18, window_bounds = array<i64: 1, 1, 256>}, {transform_indices = @transform_19, window_bounds = array<i64: 1, 1, 256>}, {transform_indices = @transform_20, window_bounds = array<i64: 1, 1, 256>}, {transform_indices = @transform_21, window_bounds = array<i64: 2, 8, 256>}]} {
    %c0_i32 = arith.constant 0 : i32
    %0 = arith.cmpi eq, %arg1, %c0_i32 : i32
    %1 = arith.extui %0 : i1 to i32
    %c0_i32_0 = arith.constant 0 : i32
    %2 = arith.cmpi ne, %1, %c0_i32_0 : i32
    scf.if %2 {
      %c0_99 = arith.constant 0 : index
      %c0_100 = arith.constant 0 : index
      %c0_101 = arith.constant 0 : index
      %175 = vector.load %arg3[%c0_99, %c0_100, %c0_101] : memref<2x1x8xf32, #tpu.memory_space<vmem>>, vector<2x1x8xf32>
      %cst_102 = arith.constant dense<0.000000e+00> : vector<2x1xf32>
      %176 = vector.multi_reduction <add>, %175, %cst_102 [2] : vector<2x1x8xf32> to vector<2x1xf32>
      %177 = vector.shape_cast %176 : vector<2x1xf32> to vector<2x1x1xf32>
      %178 = tpu.iota {dimensions = array<i32: 1>} : vector<2x8x1xi32>
      %179 = arith.sitofp %178 : vector<2x8x1xi32> to vector<2x8x1xf32>
      %180 = vector.broadcast %177 : vector<2x1x1xf32> to vector<2x8x1xf32>
      %181 = arith.cmpf olt, %179, %180 : vector<2x8x1xf32>
      %182 = arith.extui %181 : vector<2x8x1xi1> to vector<2x8x1xi32>
      %183 = arith.sitofp %182 : vector<2x8x1xi32> to vector<2x8x1xf32>
      %c0_103 = arith.constant 0 : index
      %c0_104 = arith.constant 0 : index
      %c0_105 = arith.constant 0 : index
      %184 = vector.load %arg24[%c0_103, %c0_104, %c0_105] : memref<2x8x1xf32, #tpu.memory_space<vmem>>, vector<2x8x1xf32>
      tpu.vector_store %arg24[%c0_103, %c0_104, %c0_105], %183 {strides = array<i32>} : memref<2x8x1xf32, #tpu.memory_space<vmem>>, vector<2x8x1xf32>,
      %cst_106 = arith.constant 0.000000e+00 : f32
      %185 = vector.broadcast %cst_106 : f32 to vector<2x1x8xf32>
      %186 = arith.cmpf ogt, %175, %185 : vector<2x1x8xf32>
      %cst_107 = arith.constant 0.000000e+00 : f32
      %cst_108 = arith.constant -1.000000e+30 : f32
      %187 = vector.broadcast %cst_107 : f32 to vector<2x1x8xf32>
      %188 = vector.broadcast %cst_108 : f32 to vector<2x1x8xf32>
      %189 = arith.select %186, %187, %188 : vector<2x1x8xi1>, vector<2x1x8xf32>
      %c0_109 = arith.constant 0 : index
      %c0_110 = arith.constant 0 : index
      %c0_111 = arith.constant 0 : index
      %190 = vector.load %arg25[%c0_109, %c0_110, %c0_111] : memref<2x1x8xf32, #tpu.memory_space<vmem>>, vector<2x1x8xf32>
      tpu.vector_store %arg25[%c0_109, %c0_110, %c0_111], %189 {strides = array<i32>} : memref<2x1x8xf32, #tpu.memory_space<vmem>>, vector<2x1x8xf32>,
      %cst_112 = arith.constant 1.000000e+00 : f32
      %191 = vector.broadcast %cst_112 : f32 to vector<2x1x1xf32>
      %192 = arith.divf %191, %177 : vector<2x1x1xf32>
      %c0_113 = arith.constant 0 : index
      %c0_114 = arith.constant 0 : index
      %c0_115 = arith.constant 0 : index
      %193 = vector.load %arg26[%c0_113, %c0_114, %c0_115] : memref<2x1x1xf32, #tpu.memory_space<vmem>>, vector<2x1x1xf32>
      tpu.vector_store %arg26[%c0_113, %c0_114, %c0_115], %192 {strides = array<i32>} : memref<2x1x1xf32, #tpu.memory_space<vmem>>, vector<2x1x1xf32>,
      %c0_116 = arith.constant 0 : index
      %c0_117 = arith.constant 0 : index
      %c0_118 = arith.constant 0 : index
      %194 = vector.load %arg2[%c0_116, %c0_117, %c0_118] : memref<2x8x256xbf16, #tpu.memory_space<vmem>>, vector<2x8x256xbf16>
      %195 = arith.extf %194 : vector<2x8x256xbf16> to vector<2x8x256xf32>
      %c0_119 = arith.constant 0 : index
      %c0_120 = arith.constant 0 : index
      %c0_121 = arith.constant 0 : index
      %196 = vector.load %arg4[%c0_119, %c0_120, %c0_121] : memref<1x1x256xf32, #tpu.memory_space<vmem>>, vector<1x1x256xf32>
      %c0_122 = arith.constant 0 : index
      %c0_123 = arith.constant 0 : index
      %c0_124 = arith.constant 0 : index
      %197 = vector.load %arg5[%c0_122, %c0_123, %c0_124] : memref<1x1x256xf32, #tpu.memory_space<vmem>>, vector<1x1x256xf32>
      %cst_125 = arith.constant dense<0.000000e+00> : vector<2x8xf32>
      %198 = vector.multi_reduction <add>, %195, %cst_125 [2] : vector<2x8x256xf32> to vector<2x8xf32>
      %199 = vector.shape_cast %198 : vector<2x8xf32> to vector<2x8x1xf32>
      %cst_126 = arith.constant 2.560000e+02 : f32
      %200 = vector.broadcast %cst_126 : f32 to vector<2x8x1xf32>
      %201 = arith.divf %199, %200 : vector<2x8x1xf32>
      %202 = vector.broadcast %201 : vector<2x8x1xf32> to vector<2x8x256xf32>
      %203 = arith.subf %195, %202 : vector<2x8x256xf32>
      %204 = arith.mulf %203, %203 : vector<2x8x256xf32>
      %cst_127 = arith.constant dense<0.000000e+00> : vector<2x8xf32>
      %205 = vector.multi_reduction <add>, %204, %cst_127 [2] : vector<2x8x256xf32> to vector<2x8xf32>
      %206 = vector.shape_cast %205 : vector<2x8xf32> to vector<2x8x1xf32>
      %cst_128 = arith.constant 2.560000e+02 : f32
      %207 = vector.broadcast %cst_128 : f32 to vector<2x8x1xf32>
      %208 = arith.divf %206, %207 : vector<2x8x1xf32>
      %cst_129 = arith.constant 9.99999996E-13 : f32
      %209 = vector.broadcast %cst_129 : f32 to vector<2x8x1xf32>
      %210 = arith.addf %208, %209 : vector<2x8x1xf32>
      %211 = math.rsqrt %210 : vector<2x8x1xf32>
      %212 = vector.broadcast %211 : vector<2x8x1xf32> to vector<2x8x256xf32>
      %213 = arith.mulf %203, %212 : vector<2x8x256xf32>
      %214 = vector.broadcast %196 : vector<1x1x256xf32> to vector<2x8x256xf32>
      %215 = arith.mulf %213, %214 : vector<2x8x256xf32>
      %216 = vector.broadcast %197 : vector<1x1x256xf32> to vector<2x8x256xf32>
      %217 = arith.addf %215, %216 : vector<2x8x256xf32>
      %c0_130 = arith.constant 0 : index
      %c0_131 = arith.constant 0 : index
      %c0_132 = arith.constant 0 : index
      %218 = vector.load %arg24[%c0_130, %c0_131, %c0_132] : memref<2x8x1xf32, #tpu.memory_space<vmem>>, vector<2x8x1xf32>
      %219 = vector.broadcast %218 : vector<2x8x1xf32> to vector<2x8x256xf32>
      %220 = arith.mulf %217, %219 : vector<2x8x256xf32>
      %c0_133 = arith.constant 0 : index
      %c0_134 = arith.constant 0 : index
      %c0_135 = arith.constant 0 : index
      %221 = vector.load %arg23[%c0_133, %c0_134, %c0_135] : memref<2x8x256xf32, #tpu.memory_space<vmem>>, vector<2x8x256xf32>
      tpu.vector_store %arg23[%c0_133, %c0_134, %c0_135], %220 {strides = array<i32>} : memref<2x8x256xf32, #tpu.memory_space<vmem>>, vector<2x8x256xf32>,
    } else {
    }
    %c0 = arith.constant 0 : index
    %c0_1 = arith.constant 0 : index
    %c0_2 = arith.constant 0 : index
    %3 = vector.load %arg24[%c0, %c0_1, %c0_2] : memref<2x8x1xf32, #tpu.memory_space<vmem>>, vector<2x8x1xf32>
    %c0_3 = arith.constant 0 : index
    %c0_4 = arith.constant 0 : index
    %c0_5 = arith.constant 0 : index
    %4 = vector.load %arg25[%c0_3, %c0_4, %c0_5] : memref<2x1x8xf32, #tpu.memory_space<vmem>>, vector<2x1x8xf32>
    %c0_6 = arith.constant 0 : index
    %c0_7 = arith.constant 0 : index
    %c0_8 = arith.constant 0 : index
    %5 = vector.load %arg23[%c0_6, %c0_7, %c0_8] : memref<2x8x256xf32, #tpu.memory_space<vmem>>, vector<2x8x256xf32>
    %6 = vector.shape_cast %5 : vector<2x8x256xf32> to vector<16x256xf32>
    %7 = arith.truncf %6 : vector<16x256xf32> to vector<16x256xbf16>
    %c0_9 = arith.constant 0 : index
    %c0_10 = arith.constant 0 : index
    %c0_11 = arith.constant 0 : index
    %8 = vector.load %arg7[%c0_9, %c0_10, %c0_11] : memref<1x256x256xbf16, #tpu.memory_space<vmem>>, vector<1x256x256xbf16>
    %9 = vector.shape_cast %8 : vector<1x256x256xbf16> to vector<256x256xbf16>
    %cst = arith.constant dense<0.000000e+00> : vector<16x256xf32>
    %10 = tpu.matmul %7, %9, %cst {dimension_numbers = #tpu.dot_dimension_numbers<[1], [0], [0], [1], [0, 0, 1, 1], [], []>} : vector<16x256xbf16>, vector<256x256xbf16>, vector<16x256xf32> -> vector<16x256xf32>
    %c0_12 = arith.constant 0 : index
    %c0_13 = arith.constant 0 : index
    %c0_14 = arith.constant 0 : index
    %11 = vector.load %arg8[%c0_12, %c0_13, %c0_14] : memref<1x1x256xf32, #tpu.memory_space<vmem>>, vector<1x1x256xf32>
    %12 = vector.shape_cast %11 : vector<1x1x256xf32> to vector<1x256xf32>
    %13 = vector.broadcast %12 : vector<1x256xf32> to vector<16x256xf32>
    %14 = arith.addf %10, %13 : vector<16x256xf32>
    %cst_15 = arith.constant 0.0883883461 : f32
    %15 = vector.broadcast %cst_15 : f32 to vector<16x256xf32>
    %16 = arith.mulf %14, %15 : vector<16x256xf32>
    %17 = arith.truncf %16 : vector<16x256xf32> to vector<16x256xbf16>
    %18 = vector.shape_cast %17 : vector<16x256xbf16> to vector<2x8x256xbf16>
    %c0_16 = arith.constant 0 : index
    %c0_17 = arith.constant 0 : index
    %c0_18 = arith.constant 0 : index
    %19 = vector.load %arg9[%c0_16, %c0_17, %c0_18] : memref<1x256x256xbf16, #tpu.memory_space<vmem>>, vector<1x256x256xbf16>
    %20 = vector.shape_cast %19 : vector<1x256x256xbf16> to vector<256x256xbf16>
    %cst_19 = arith.constant dense<0.000000e+00> : vector<16x256xf32>
    %21 = tpu.matmul %7, %20, %cst_19 {dimension_numbers = #tpu.dot_dimension_numbers<[1], [0], [0], [1], [0, 0, 1, 1], [], []>} : vector<16x256xbf16>, vector<256x256xbf16>, vector<16x256xf32> -> vector<16x256xf32>
    %c0_20 = arith.constant 0 : index
    %c0_21 = arith.constant 0 : index
    %c0_22 = arith.constant 0 : index
    %22 = vector.load %arg10[%c0_20, %c0_21, %c0_22] : memref<1x1x256xf32, #tpu.memory_space<vmem>>, vector<1x1x256xf32>
    %23 = vector.shape_cast %22 : vector<1x1x256xf32> to vector<1x256xf32>
    %24 = vector.broadcast %23 : vector<1x256xf32> to vector<16x256xf32>
    %25 = arith.addf %21, %24 : vector<16x256xf32>
    %26 = arith.truncf %25 : vector<16x256xf32> to vector<16x256xbf16>
    %27 = vector.shape_cast %26 : vector<16x256xbf16> to vector<2x8x256xbf16>
    %c0_23 = arith.constant 0 : index
    %c0_24 = arith.constant 0 : index
    %c0_25 = arith.constant 0 : index
    %28 = vector.load %arg11[%c0_23, %c0_24, %c0_25] : memref<1x256x256xbf16, #tpu.memory_space<vmem>>, vector<1x256x256xbf16>
    %29 = vector.shape_cast %28 : vector<1x256x256xbf16> to vector<256x256xbf16>
    %cst_26 = arith.constant dense<0.000000e+00> : vector<16x256xf32>
    %30 = tpu.matmul %7, %29, %cst_26 {dimension_numbers = #tpu.dot_dimension_numbers<[1], [0], [0], [1], [0, 0, 1, 1], [], []>} : vector<16x256xbf16>, vector<256x256xbf16>, vector<16x256xf32> -> vector<16x256xf32>
    %c0_27 = arith.constant 0 : index
    %c0_28 = arith.constant 0 : index
    %c0_29 = arith.constant 0 : index
    %31 = vector.load %arg12[%c0_27, %c0_28, %c0_29] : memref<1x1x256xf32, #tpu.memory_space<vmem>>, vector<1x1x256xf32>
    %32 = vector.shape_cast %31 : vector<1x1x256xf32> to vector<1x256xf32>
    %33 = vector.broadcast %32 : vector<1x256xf32> to vector<16x256xf32>
    %34 = arith.addf %30, %33 : vector<16x256xf32>
    %35 = arith.truncf %34 : vector<16x256xf32> to vector<16x256xbf16>
    %36 = vector.shape_cast %35 : vector<16x256xbf16> to vector<2x8x256xbf16>
    %37 = vector.extract_strided_slice %18 {offsets = [0, 0, 0], sizes = [2, 8, 128], strides = [1, 1, 1]} : vector<2x8x256xbf16> to vector<2x8x128xbf16>
    %38 = vector.extract_strided_slice %27 {offsets = [0, 0, 0], sizes = [2, 8, 128], strides = [1, 1, 1]} : vector<2x8x256xbf16> to vector<2x8x128xbf16>
    %39 = vector.extract_strided_slice %36 {offsets = [0, 0, 0], sizes = [2, 8, 128], strides = [1, 1, 1]} : vector<2x8x256xbf16> to vector<2x8x128xbf16>
    "tpu.trace_start"() <{level = 10 : i32, message = "bqd,bkd->bqk"}> : () -> ()
    %cst_30 = arith.constant dense<0.000000e+00> : vector<2x8x8xf32>
    %40 = tpu.matmul %37, %38, %cst_30 {dimension_numbers = #tpu.dot_dimension_numbers<[2], [2], [1], [1], [0, 0, 0, 1, 1, 1], [0], [0]>} : vector<2x8x128xbf16>, vector<2x8x128xbf16>, vector<2x8x8xf32> -> vector<2x8x8xf32>
    "tpu.trace_stop"() : () -> ()
    %41 = vector.broadcast %4 : vector<2x1x8xf32> to vector<2x8x8xf32>
    %42 = arith.addf %40, %41 : vector<2x8x8xf32>
    %cst_31 = arith.constant dense<0xFF800000> : vector<2x8xf32>
    %43 = vector.multi_reduction <maximumf>, %42, %cst_31 [2] : vector<2x8x8xf32> to vector<2x8xf32>
    %44 = vector.shape_cast %43 : vector<2x8xf32> to vector<2x8x1xf32>
    %45 = vector.broadcast %44 : vector<2x8x1xf32> to vector<2x8x8xf32>
    %46 = arith.subf %42, %45 : vector<2x8x8xf32>
    %47 = math.exp %46 : vector<2x8x8xf32>
    %cst_32 = arith.constant dense<0.000000e+00> : vector<2x8xf32>
    %48 = vector.multi_reduction <add>, %47, %cst_32 [2] : vector<2x8x8xf32> to vector<2x8xf32>
    %49 = vector.shape_cast %48 : vector<2x8xf32> to vector<2x8x1xf32>
    %50 = tpu.reciprocal %49 {approx = true} : vector<2x8x1xf32> -> vector<2x8x1xf32>
    %51 = vector.broadcast %50 : vector<2x8x1xf32> to vector<2x8x8xf32>
    %52 = arith.mulf %47, %51 : vector<2x8x8xf32>
    %53 = arith.truncf %52 : vector<2x8x8xf32> to vector<2x8x8xbf16>
    "tpu.trace_start"() <{level = 10 : i32, message = "bqk,bkd->bqd"}> : () -> ()
    %cst_33 = arith.constant dense<0.000000e+00> : vector<2x8x128xf32>
    %54 = tpu.matmul %53, %39, %cst_33 {dimension_numbers = #tpu.dot_dimension_numbers<[2], [1], [1], [2], [0, 0, 0, 1, 1, 2], [0], [0]>} : vector<2x8x8xbf16>, vector<2x8x128xbf16>, vector<2x8x128xf32> -> vector<2x8x128xf32>
    "tpu.trace_stop"() : () -> ()
    %55 = vector.shape_cast %54 : vector<2x8x128xf32> to vector<16x128xf32>
    %56 = arith.truncf %55 : vector<16x128xf32> to vector<16x128xbf16>
    %c0_34 = arith.constant 0 : index
    %c0_35 = arith.constant 0 : index
    %57 = vector.load %arg27[%c0_34, %c0_35] : memref<16x256xbf16, #tpu.memory_space<vmem>>, vector<16x128xbf16>
    tpu.vector_store %arg27[%c0_34, %c0_35], %56 {strides = array<i32>} : memref<16x256xbf16, #tpu.memory_space<vmem>>, vector<16x128xbf16>,
    %58 = vector.extract_strided_slice %18 {offsets = [0, 0, 128], sizes = [2, 8, 128], strides = [1, 1, 1]} : vector<2x8x256xbf16> to vector<2x8x128xbf16>
    %59 = vector.extract_strided_slice %27 {offsets = [0, 0, 128], sizes = [2, 8, 128], strides = [1, 1, 1]} : vector<2x8x256xbf16> to vector<2x8x128xbf16>
    %60 = vector.extract_strided_slice %36 {offsets = [0, 0, 128], sizes = [2, 8, 128], strides = [1, 1, 1]} : vector<2x8x256xbf16> to vector<2x8x128xbf16>
    "tpu.trace_start"() <{level = 10 : i32, message = "bqd,bkd->bqk"}> : () -> ()
    %cst_36 = arith.constant dense<0.000000e+00> : vector<2x8x8xf32>
    %61 = tpu.matmul %58, %59, %cst_36 {dimension_numbers = #tpu.dot_dimension_numbers<[2], [2], [1], [1], [0, 0, 0, 1, 1, 1], [0], [0]>} : vector<2x8x128xbf16>, vector<2x8x128xbf16>, vector<2x8x8xf32> -> vector<2x8x8xf32>
    "tpu.trace_stop"() : () -> ()
    %62 = vector.broadcast %4 : vector<2x1x8xf32> to vector<2x8x8xf32>
    %63 = arith.addf %61, %62 : vector<2x8x8xf32>
    %cst_37 = arith.constant dense<0xFF800000> : vector<2x8xf32>
    %64 = vector.multi_reduction <maximumf>, %63, %cst_37 [2] : vector<2x8x8xf32> to vector<2x8xf32>
    %65 = vector.shape_cast %64 : vector<2x8xf32> to vector<2x8x1xf32>
    %66 = vector.broadcast %65 : vector<2x8x1xf32> to vector<2x8x8xf32>
    %67 = arith.subf %63, %66 : vector<2x8x8xf32>
    %68 = math.exp %67 : vector<2x8x8xf32>
    %cst_38 = arith.constant dense<0.000000e+00> : vector<2x8xf32>
    %69 = vector.multi_reduction <add>, %68, %cst_38 [2] : vector<2x8x8xf32> to vector<2x8xf32>
    %70 = vector.shape_cast %69 : vector<2x8xf32> to vector<2x8x1xf32>
    %71 = tpu.reciprocal %70 {approx = true} : vector<2x8x1xf32> -> vector<2x8x1xf32>
    %72 = vector.broadcast %71 : vector<2x8x1xf32> to vector<2x8x8xf32>
    %73 = arith.mulf %68, %72 : vector<2x8x8xf32>
    %74 = arith.truncf %73 : vector<2x8x8xf32> to vector<2x8x8xbf16>
    "tpu.trace_start"() <{level = 10 : i32, message = "bqk,bkd->bqd"}> : () -> ()
    %cst_39 = arith.constant dense<0.000000e+00> : vector<2x8x128xf32>
    %75 = tpu.matmul %74, %60, %cst_39 {dimension_numbers = #tpu.dot_dimension_numbers<[2], [1], [1], [2], [0, 0, 0, 1, 1, 2], [0], [0]>} : vector<2x8x8xbf16>, vector<2x8x128xbf16>, vector<2x8x128xf32> -> vector<2x8x128xf32>
    "tpu.trace_stop"() : () -> ()
    %76 = vector.shape_cast %75 : vector<2x8x128xf32> to vector<16x128xf32>
    %77 = arith.truncf %76 : vector<16x128xf32> to vector<16x128xbf16>
    %c0_40 = arith.constant 0 : index
    %c128 = arith.constant 128 : index
    %78 = vector.load %arg27[%c0_40, %c128] : memref<16x256xbf16, #tpu.memory_space<vmem>>, vector<16x128xbf16>
    tpu.vector_store %arg27[%c0_40, %c128], %77 {strides = array<i32>} : memref<16x256xbf16, #tpu.memory_space<vmem>>, vector<16x128xbf16>,
    %c0_41 = arith.constant 0 : index
    %c0_42 = arith.constant 0 : index
    %79 = vector.load %arg27[%c0_41, %c0_42] : memref<16x256xbf16, #tpu.memory_space<vmem>>, vector<16x256xbf16>
    %c0_43 = arith.constant 0 : index
    %c0_44 = arith.constant 0 : index
    %c0_45 = arith.constant 0 : index
    %80 = vector.load %arg13[%c0_43, %c0_44, %c0_45] : memref<1x256x256xbf16, #tpu.memory_space<vmem>>, vector<1x256x256xbf16>
    %81 = vector.shape_cast %80 : vector<1x256x256xbf16> to vector<256x256xbf16>
    %cst_46 = arith.constant dense<0.000000e+00> : vector<16x256xf32>
    %82 = tpu.matmul %79, %81, %cst_46 {dimension_numbers = #tpu.dot_dimension_numbers<[1], [0], [0], [1], [0, 0, 1, 1], [], []>} : vector<16x256xbf16>, vector<256x256xbf16>, vector<16x256xf32> -> vector<16x256xf32>
    %c0_47 = arith.constant 0 : index
    %c0_48 = arith.constant 0 : index
    %c0_49 = arith.constant 0 : index
    %83 = vector.load %arg14[%c0_47, %c0_48, %c0_49] : memref<1x1x256xf32, #tpu.memory_space<vmem>>, vector<1x1x256xf32>
    %84 = vector.shape_cast %83 : vector<1x1x256xf32> to vector<1x256xf32>
    %85 = vector.broadcast %84 : vector<1x256xf32> to vector<16x256xf32>
    %86 = arith.addf %82, %85 : vector<16x256xf32>
    %87 = arith.addf %6, %86 : vector<16x256xf32>
    %c0_50 = arith.constant 0 : index
    %c0_51 = arith.constant 0 : index
    %c0_52 = arith.constant 0 : index
    %88 = vector.load %arg15[%c0_50, %c0_51, %c0_52] : memref<1x1x256xf32, #tpu.memory_space<vmem>>, vector<1x1x256xf32>
    %89 = vector.shape_cast %88 : vector<1x1x256xf32> to vector<1x256xf32>
    %c0_53 = arith.constant 0 : index
    %c0_54 = arith.constant 0 : index
    %c0_55 = arith.constant 0 : index
    %90 = vector.load %arg16[%c0_53, %c0_54, %c0_55] : memref<1x1x256xf32, #tpu.memory_space<vmem>>, vector<1x1x256xf32>
    %91 = vector.shape_cast %90 : vector<1x1x256xf32> to vector<1x256xf32>
    %cst_56 = arith.constant dense<0.000000e+00> : vector<16xf32>
    %92 = vector.multi_reduction <add>, %87, %cst_56 [1] : vector<16x256xf32> to vector<16xf32>
    %93 = vector.shape_cast %92 : vector<16xf32> to vector<16x1xf32>
    %cst_57 = arith.constant 2.560000e+02 : f32
    %94 = vector.broadcast %cst_57 : f32 to vector<16x1xf32>
    %95 = arith.divf %93, %94 : vector<16x1xf32>
    %96 = vector.broadcast %95 : vector<16x1xf32> to vector<16x256xf32>
    %97 = arith.subf %87, %96 : vector<16x256xf32>
    %98 = arith.mulf %97, %97 : vector<16x256xf32>
    %cst_58 = arith.constant dense<0.000000e+00> : vector<16xf32>
    %99 = vector.multi_reduction <add>, %98, %cst_58 [1] : vector<16x256xf32> to vector<16xf32>
    %100 = vector.shape_cast %99 : vector<16xf32> to vector<16x1xf32>
    %cst_59 = arith.constant 2.560000e+02 : f32
    %101 = vector.broadcast %cst_59 : f32 to vector<16x1xf32>
    %102 = arith.divf %100, %101 : vector<16x1xf32>
    %cst_60 = arith.constant 9.99999996E-13 : f32
    %103 = vector.broadcast %cst_60 : f32 to vector<16x1xf32>
    %104 = arith.addf %102, %103 : vector<16x1xf32>
    %105 = math.rsqrt %104 : vector<16x1xf32>
    %106 = vector.broadcast %105 : vector<16x1xf32> to vector<16x256xf32>
    %107 = arith.mulf %97, %106 : vector<16x256xf32>
    %108 = vector.broadcast %89 : vector<1x256xf32> to vector<16x256xf32>
    %109 = arith.mulf %107, %108 : vector<16x256xf32>
    %110 = vector.broadcast %91 : vector<1x256xf32> to vector<16x256xf32>
    %111 = arith.addf %109, %110 : vector<16x256xf32>
    %112 = arith.truncf %111 : vector<16x256xf32> to vector<16x256xbf16>
    %c0_61 = arith.constant 0 : index
    %c0_62 = arith.constant 0 : index
    %c0_63 = arith.constant 0 : index
    %113 = vector.load %arg17[%c0_61, %c0_62, %c0_63] : memref<1x256x1024xbf16, #tpu.memory_space<vmem>>, vector<1x256x1024xbf16>
    %114 = vector.shape_cast %113 : vector<1x256x1024xbf16> to vector<256x1024xbf16>
    %cst_64 = arith.constant dense<0.000000e+00> : vector<16x1024xf32>
    %115 = tpu.matmul %112, %114, %cst_64 {dimension_numbers = #tpu.dot_dimension_numbers<[1], [0], [0], [1], [0, 0, 1, 1], [], []>} : vector<16x256xbf16>, vector<256x1024xbf16>, vector<16x1024xf32> -> vector<16x1024xf32>
    %c0_65 = arith.constant 0 : index
    %c0_66 = arith.constant 0 : index
    %c0_67 = arith.constant 0 : index
    %116 = vector.load %arg18[%c0_65, %c0_66, %c0_67] : memref<1x1x1024xf32, #tpu.memory_space<vmem>>, vector<1x1x1024xf32>
    %117 = vector.shape_cast %116 : vector<1x1x1024xf32> to vector<1x1024xf32>
    %118 = vector.broadcast %117 : vector<1x1024xf32> to vector<16x1024xf32>
    %119 = arith.addf %115, %118 : vector<16x1024xf32>
    %cst_68 = arith.constant 0.000000e+00 : f32
    %120 = vector.broadcast %cst_68 : f32 to vector<16x1024xf32>
    %121 = arith.maximumf %119, %120 : vector<16x1024xf32>
    %122 = arith.truncf %121 : vector<16x1024xf32> to vector<16x1024xbf16>
    %c0_69 = arith.constant 0 : index
    %c0_70 = arith.constant 0 : index
    %c0_71 = arith.constant 0 : index
    %123 = vector.load %arg19[%c0_69, %c0_70, %c0_71] : memref<1x1024x256xbf16, #tpu.memory_space<vmem>>, vector<1x1024x256xbf16>
    %124 = vector.shape_cast %123 : vector<1x1024x256xbf16> to vector<1024x256xbf16>
    %cst_72 = arith.constant dense<0.000000e+00> : vector<16x256xf32>
    %125 = tpu.matmul %122, %124, %cst_72 {dimension_numbers = #tpu.dot_dimension_numbers<[1], [0], [0], [1], [0, 0, 1, 1], [], []>} : vector<16x1024xbf16>, vector<1024x256xbf16>, vector<16x256xf32> -> vector<16x256xf32>
    %c0_73 = arith.constant 0 : index
    %c0_74 = arith.constant 0 : index
    %c0_75 = arith.constant 0 : index
    %126 = vector.load %arg20[%c0_73, %c0_74, %c0_75] : memref<1x1x256xf32, #tpu.memory_space<vmem>>, vector<1x1x256xf32>
    %127 = vector.shape_cast %126 : vector<1x1x256xf32> to vector<1x256xf32>
    %128 = vector.broadcast %127 : vector<1x256xf32> to vector<16x256xf32>
    %129 = arith.addf %125, %128 : vector<16x256xf32>
    %130 = arith.addf %111, %129 : vector<16x256xf32>
    %c0_76 = arith.constant 0 : index
    %c0_77 = arith.constant 0 : index
    %c0_78 = arith.constant 0 : index
    %131 = vector.load %arg21[%c0_76, %c0_77, %c0_78] : memref<1x1x256xf32, #tpu.memory_space<vmem>>, vector<1x1x256xf32>
    %132 = vector.shape_cast %131 : vector<1x1x256xf32> to vector<1x256xf32>
    %c0_79 = arith.constant 0 : index
    %c0_80 = arith.constant 0 : index
    %c0_81 = arith.constant 0 : index
    %133 = vector.load %arg22[%c0_79, %c0_80, %c0_81] : memref<1x1x256xf32, #tpu.memory_space<vmem>>, vector<1x1x256xf32>
    %134 = vector.shape_cast %133 : vector<1x1x256xf32> to vector<1x256xf32>
    %cst_82 = arith.constant dense<0.000000e+00> : vector<16xf32>
    %135 = vector.multi_reduction <add>, %130, %cst_82 [1] : vector<16x256xf32> to vector<16xf32>
    %136 = vector.shape_cast %135 : vector<16xf32> to vector<16x1xf32>
    %cst_83 = arith.constant 2.560000e+02 : f32
    %137 = vector.broadcast %cst_83 : f32 to vector<16x1xf32>
    %138 = arith.divf %136, %137 : vector<16x1xf32>
    %139 = vector.broadcast %138 : vector<16x1xf32> to vector<16x256xf32>
    %140 = arith.subf %130, %139 : vector<16x256xf32>
    %141 = arith.mulf %140, %140 : vector<16x256xf32>
    %cst_84 = arith.constant dense<0.000000e+00> : vector<16xf32>
    %142 = vector.multi_reduction <add>, %141, %cst_84 [1] : vector<16x256xf32> to vector<16xf32>
    %143 = vector.shape_cast %142 : vector<16xf32> to vector<16x1xf32>
    %cst_85 = arith.constant 2.560000e+02 : f32
    %144 = vector.broadcast %cst_85 : f32 to vector<16x1xf32>
    %145 = arith.divf %143, %144 : vector<16x1xf32>
    %cst_86 = arith.constant 9.99999996E-13 : f32
    %146 = vector.broadcast %cst_86 : f32 to vector<16x1xf32>
    %147 = arith.addf %145, %146 : vector<16x1xf32>
    %148 = math.rsqrt %147 : vector<16x1xf32>
    %149 = vector.broadcast %148 : vector<16x1xf32> to vector<16x256xf32>
    %150 = arith.mulf %140, %149 : vector<16x256xf32>
    %151 = vector.broadcast %132 : vector<1x256xf32> to vector<16x256xf32>
    %152 = arith.mulf %150, %151 : vector<16x256xf32>
    %153 = vector.broadcast %134 : vector<1x256xf32> to vector<16x256xf32>
    %154 = arith.addf %152, %153 : vector<16x256xf32>
    %155 = vector.shape_cast %154 : vector<16x256xf32> to vector<2x8x256xf32>
    %156 = vector.broadcast %3 : vector<2x8x1xf32> to vector<2x8x256xf32>
    %157 = arith.mulf %155, %156 : vector<2x8x256xf32>
    %cst_87 = arith.constant dense<0.000000e+00> : vector<2x256xf32>
    %158 = vector.multi_reduction <add>, %157, %cst_87 [1] : vector<2x8x256xf32> to vector<2x256xf32>
    %159 = vector.shape_cast %158 : vector<2x256xf32> to vector<2x1x256xf32>
    %c0_88 = arith.constant 0 : index
    %c0_89 = arith.constant 0 : index
    %c0_90 = arith.constant 0 : index
    %160 = vector.load %arg26[%c0_88, %c0_89, %c0_90] : memref<2x1x1xf32, #tpu.memory_space<vmem>>, vector<2x1x1xf32>
    %161 = vector.broadcast %160 : vector<2x1x1xf32> to vector<2x1x256xf32>
    %162 = arith.mulf %159, %161 : vector<2x1x256xf32>
    %163 = arith.negf %162 : vector<2x1x256xf32>
    %164 = math.exp %163 : vector<2x1x256xf32>
    %cst_91 = arith.constant 1.000000e+00 : f32
    %165 = vector.broadcast %cst_91 : f32 to vector<2x1x256xf32>
    %166 = arith.addf %165, %164 : vector<2x1x256xf32>
    %167 = arith.divf %165, %166 : vector<2x1x256xf32>
    %c0_92 = arith.constant 0 : index
    %c0_93 = arith.constant 0 : index
    %c0_94 = arith.constant 0 : index
    %c0_95 = arith.constant 0 : index
    %168 = vector.load %arg6[%c0_92, %c0_93, %c0_94, %c0_95] : memref<1x2x8x256xbf16, #tpu.memory_space<vmem>>, vector<1x2x8x256xbf16>
    %169 = vector.shape_cast %168 : vector<1x2x8x256xbf16> to vector<2x8x256xbf16>
    %170 = arith.extf %169 : vector<2x8x256xbf16> to vector<2x8x256xf32>
    %171 = vector.broadcast %167 : vector<2x1x256xf32> to vector<2x8x256xf32>
    %172 = arith.mulf %171, %170 : vector<2x8x256xf32>
    %173 = arith.addf %157, %172 : vector<2x8x256xf32>
    %c0_96 = arith.constant 0 : index
    %c0_97 = arith.constant 0 : index
    %c0_98 = arith.constant 0 : index
    %174 = vector.load %arg23[%c0_96, %c0_97, %c0_98] : memref<2x8x256xf32, #tpu.memory_space<vmem>>, vector<2x8x256xf32>
    tpu.vector_store %arg23[%c0_96, %c0_97, %c0_98], %173 {strides = array<i32>} : memref<2x8x256xf32, #tpu.memory_space<vmem>>, vector<2x8x256xf32>,
    return
  }
  func.func @transform_0(%arg0: i32, %arg1: i32) -> (i32, i32, i32) {
    %c0_i32 = arith.constant 0 : i32
    %c0_i32_0 = arith.constant 0 : i32
    %c0_i32_1 = arith.constant 0 : i32
    return %arg0, %c0_i32, %c0_i32_0 : i32, i32, i32
  }
  func.func @transform_1(%arg0: i32, %arg1: i32) -> (i32, i32, i32) {
    %c0_i32 = arith.constant 0 : i32
    %c0_i32_0 = arith.constant 0 : i32
    %c0_i32_1 = arith.constant 0 : i32
    return %arg0, %c0_i32, %c0_i32_0 : i32, i32, i32
  }
  func.func @transform_2(%arg0: i32, %arg1: i32) -> (i32, i32, i32) {
    %c0_i32 = arith.constant 0 : i32
    %c0_i32_0 = arith.constant 0 : i32
    %c0_i32_1 = arith.constant 0 : i32
    %c0_i32_2 = arith.constant 0 : i32
    return %c0_i32, %c0_i32_0, %c0_i32_1 : i32, i32, i32
  }
  func.func @transform_3(%arg0: i32, %arg1: i32) -> (i32, i32, i32) {
    %c0_i32 = arith.constant 0 : i32
    %c0_i32_0 = arith.constant 0 : i32
    %c0_i32_1 = arith.constant 0 : i32
    %c0_i32_2 = arith.constant 0 : i32
    return %c0_i32, %c0_i32_0, %c0_i32_1 : i32, i32, i32
  }
  func.func @transform_4(%arg0: i32, %arg1: i32) -> (i32, i32, i32, i32) {
    %c0_i32 = arith.constant 0 : i32
    %c0_i32_0 = arith.constant 0 : i32
    %c0_i32_1 = arith.constant 0 : i32
    return %arg1, %arg0, %c0_i32, %c0_i32_0 : i32, i32, i32, i32
  }
  func.func @transform_5(%arg0: i32, %arg1: i32) -> (i32, i32, i32) {
    %c0_i32 = arith.constant 0 : i32
    %c0_i32_0 = arith.constant 0 : i32
    %c0_i32_1 = arith.constant 0 : i32
    return %arg1, %c0_i32, %c0_i32_0 : i32, i32, i32
  }
  func.func @transform_6(%arg0: i32, %arg1: i32) -> (i32, i32, i32) {
    %c0_i32 = arith.constant 0 : i32
    %c0_i32_0 = arith.constant 0 : i32
    %c0_i32_1 = arith.constant 0 : i32
    return %arg1, %c0_i32, %c0_i32_0 : i32, i32, i32
  }
  func.func @transform_7(%arg0: i32, %arg1: i32) -> (i32, i32, i32) {
    %c0_i32 = arith.constant 0 : i32
    %c0_i32_0 = arith.constant 0 : i32
    %c0_i32_1 = arith.constant 0 : i32
    return %arg1, %c0_i32, %c0_i32_0 : i32, i32, i32
  }
  func.func @transform_8(%arg0: i32, %arg1: i32) -> (i32, i32, i32) {
    %c0_i32 = arith.constant 0 : i32
    %c0_i32_0 = arith.constant 0 : i32
    %c0_i32_1 = arith.constant 0 : i32
    return %arg1, %c0_i32, %c0_i32_0 : i32, i32, i32
  }
  func.func @transform_9(%arg0: i32, %arg1: i32) -> (i32, i32, i32) {
    %c0_i32 = arith.constant 0 : i32
    %c0_i32_0 = arith.constant 0 : i32
    %c0_i32_1 = arith.constant 0 : i32
    return %arg1, %c0_i32, %c0_i32_0 : i32, i32, i32
  }
  func.func @transform_10(%arg0: i32, %arg1: i32) -> (i32, i32, i32) {
    %c0_i32 = arith.constant 0 : i32
    %c0_i32_0 = arith.constant 0 : i32
    %c0_i32_1 = arith.constant 0 : i32
    return %arg1, %c0_i32, %c0_i32_0 : i32, i32, i32
  }
  func.func @transform_11(%arg0: i32, %arg1: i32) -> (i32, i32, i32) {
    %c0_i32 = arith.constant 0 : i32
    %c0_i32_0 = arith.constant 0 : i32
    %c0_i32_1 = arith.constant 0 : i32
    return %arg1, %c0_i32, %c0_i32_0 : i32, i32, i32
  }
  func.func @transform_12(%arg0: i32, %arg1: i32) -> (i32, i32, i32) {
    %c0_i32 = arith.constant 0 : i32
    %c0_i32_0 = arith.constant 0 : i32
    %c0_i32_1 = arith.constant 0 : i32
    return %arg1, %c0_i32, %c0_i32_0 : i32, i32, i32
  }
  func.func @transform_13(%arg0: i32, %arg1: i32) -> (i32, i32, i32) {
    %c0_i32 = arith.constant 0 : i32
    %c0_i32_0 = arith.constant 0 : i32
    %c0_i32_1 = arith.constant 0 : i32
    return %arg1, %c0_i32, %c0_i32_0 : i32, i32, i32
  }
  func.func @transform_14(%arg0: i32, %arg1: i32) -> (i32, i32, i32) {
    %c0_i32 = arith.constant 0 : i32
    %c0_i32_0 = arith.constant 0 : i32
    %c0_i32_1 = arith.constant 0 : i32
    return %arg1, %c0_i32, %c0_i32_0 : i32, i32, i32
  }
  func.func @transform_15(%arg0: i32, %arg1: i32) -> (i32, i32, i32) {
    %c0_i32 = arith.constant 0 : i32
    %c0_i32_0 = arith.constant 0 : i32
    %c0_i32_1 = arith.constant 0 : i32
    return %arg1, %c0_i32, %c0_i32_0 : i32, i32, i32
  }
  func.func @transform_16(%arg0: i32, %arg1: i32) -> (i32, i32, i32) {
    %c0_i32 = arith.constant 0 : i32
    %c0_i32_0 = arith.constant 0 : i32
    %c0_i32_1 = arith.constant 0 : i32
    return %arg1, %c0_i32, %c0_i32_0 : i32, i32, i32
  }
  func.func @transform_17(%arg0: i32, %arg1: i32) -> (i32, i32, i32) {
    %c0_i32 = arith.constant 0 : i32
    %c0_i32_0 = arith.constant 0 : i32
    %c0_i32_1 = arith.constant 0 : i32
    return %arg1, %c0_i32, %c0_i32_0 : i32, i32, i32
  }
  func.func @transform_18(%arg0: i32, %arg1: i32) -> (i32, i32, i32) {
    %c0_i32 = arith.constant 0 : i32
    %c0_i32_0 = arith.constant 0 : i32
    %c0_i32_1 = arith.constant 0 : i32
    return %arg1, %c0_i32, %c0_i32_0 : i32, i32, i32
  }
  func.func @transform_19(%arg0: i32, %arg1: i32) -> (i32, i32, i32) {
    %c0_i32 = arith.constant 0 : i32
    %c0_i32_0 = arith.constant 0 : i32
    %c0_i32_1 = arith.constant 0 : i32
    return %arg1, %c0_i32, %c0_i32_0 : i32, i32, i32
  }
  func.func @transform_20(%arg0: i32, %arg1: i32) -> (i32, i32, i32) {
    %c0_i32 = arith.constant 0 : i32
    %c0_i32_0 = arith.constant 0 : i32
    %c0_i32_1 = arith.constant 0 : i32
    return %arg1, %c0_i32, %c0_i32_0 : i32, i32, i32
  }
  func.func @transform_21(%arg0: i32, %arg1: i32) -> (i32, i32, i32) {
    %c0_i32 = arith.constant 0 : i32
    %c0_i32_0 = arith.constant 0 : i32
    %c0_i32_1 = arith.constant 0 : i32
    return %arg0, %c0_i32, %c0_i32_0 : i32, i32, i32
  }
}

module attributes {stable_mosaic.version = 11 : i64} {
  func.func @kernel(%arg0: i32, %arg1: i32, %arg2: memref<2x8x256xbf16, #tpu.memory_space<vmem>>, %arg3: memref<2x1x8xf32, #tpu.memory_space<vmem>>, %arg4: memref<1x1x256xf32, #tpu.memory_space<vmem>>, %arg5: memref<1x1x256xf32, #tpu.memory_space<vmem>>, %arg6: memref<1x2x8x256xbf16, #tpu.memory_space<vmem>>, %arg7: memref<1x256x256xbf16, #tpu.memory_space<vmem>>, %arg8: memref<1x1x256xf32, #tpu.memory_space<vmem>>, %arg9: memref<1x256x256xbf16, #tpu.memory_space<vmem>>, %arg10: memref<1x1x256xf32, #tpu.memory_space<vmem>>, %arg11: memref<1x256x256xbf16, #tpu.memory_space<vmem>>, %arg12: memref<1x1x256xf32, #tpu.memory_space<vmem>>, %arg13: memref<1x256x256xbf16, #tpu.memory_space<vmem>>, %arg14: memref<1x1x256xf32, #tpu.memory_space<vmem>>, %arg15: memref<1x1x256xf32, #tpu.memory_space<vmem>>, %arg16: memref<1x1x256xf32, #tpu.memory_space<vmem>>, %arg17: memref<1x256x1024xbf16, #tpu.memory_space<vmem>>, %arg18: memref<1x1x1024xf32, #tpu.memory_space<vmem>>, %arg19: memref<1x1024x256xbf16, #tpu.memory_space<vmem>>, %arg20: memref<1x1x256xf32, #tpu.memory_space<vmem>>, %arg21: memref<1x1x256xf32, #tpu.memory_space<vmem>>, %arg22: memref<1x1x256xf32, #tpu.memory_space<vmem>>, %arg23: memref<2x8x256xf32, #tpu.memory_space<vmem>>, %arg24: memref<2x8x1xf32, #tpu.memory_space<vmem>>, %arg25: memref<2x1x8xf32, #tpu.memory_space<vmem>>, %arg26: memref<2x1x1xf32, #tpu.memory_space<vmem>>, %arg27: memref<16x256xbf16, #tpu.memory_space<vmem>>) attributes {dimension_semantics = [#tpu.dimension_semantics<parallel>, #tpu.dimension_semantics<arbitrary>], iteration_bounds = array<i64: 1, 2>, scalar_prefetch = 0 : i64, scratch_operands = 4 : i64, tpu.core_type = #tpu.core_type<tc>, window_params = [{transform_indices = @transform_0, window_bounds = array<i64: 2, 8, 256>}, {transform_indices = @transform_1, window_bounds = array<i64: 2, 1, 8>}, {pipeline_mode = #tpu.pipeline_mode<synchronous>, transform_indices = @transform_2, window_bounds = array<i64: 1, 1, 256>}, {pipeline_mode = #tpu.pipeline_mode<synchronous>, transform_indices = @transform_3, window_bounds = array<i64: 1, 1, 256>}, {transform_indices = @transform_4, window_bounds = array<i64: 1, 2, 8, 256>}, {transform_indices = @transform_5, window_bounds = array<i64: 1, 256, 256>}, {transform_indices = @transform_6, window_bounds = array<i64: 1, 1, 256>}, {transform_indices = @transform_7, window_bounds = array<i64: 1, 256, 256>}, {transform_indices = @transform_8, window_bounds = array<i64: 1, 1, 256>}, {transform_indices = @transform_9, window_bounds = array<i64: 1, 256, 256>}, {transform_indices = @transform_10, window_bounds = array<i64: 1, 1, 256>}, {transform_indices = @transform_11, window_bounds = array<i64: 1, 256, 256>}, {transform_indices = @transform_12, window_bounds = array<i64: 1, 1, 256>}, {transform_indices = @transform_13, window_bounds = array<i64: 1, 1, 256>}, {transform_indices = @transform_14, window_bounds = array<i64: 1, 1, 256>}, {transform_indices = @transform_15, window_bounds = array<i64: 1, 256, 1024>}, {transform_indices = @transform_16, window_bounds = array<i64: 1, 1, 1024>}, {transform_indices = @transform_17, window_bounds = array<i64: 1, 1024, 256>}, {transform_indices = @transform_18, window_bounds = array<i64: 1, 1, 256>}, {transform_indices = @transform_19, window_bounds = array<i64: 1, 1, 256>}, {transform_indices = @transform_20, window_bounds = array<i64: 1, 1, 256>}, {transform_indices = @transform_21, window_bounds = array<i64: 2, 8, 256>}]} {
    %c0_i32 = arith.constant 0 : i32
    %0 = arith.cmpi eq, %arg1, %c0_i32 : i32
    %1 = arith.extui %0 : i1 to i32
    %c0_i32_0 = arith.constant 0 : i32
    %2 = arith.cmpi ne, %1, %c0_i32_0 : i32
    scf.if %2 {
      %c0_99 = arith.constant 0 : index
      %c0_100 = arith.constant 0 : index
      %c0_101 = arith.constant 0 : index
      %175 = vector.load %arg3[%c0_99, %c0_100, %c0_101] : memref<2x1x8xf32, #tpu.memory_space<vmem>>, vector<2x1x8xf32>
      %cst_102 = arith.constant dense<0.000000e+00> : vector<2x1xf32>
      %176 = vector.multi_reduction <add>, %175, %cst_102 [2] : vector<2x1x8xf32> to vector<2x1xf32>
      %177 = vector.shape_cast %176 : vector<2x1xf32> to vector<2x1x1xf32>
      %178 = tpu.iota {dimensions = array<i32: 1>} : vector<2x8x1xi32>
      %179 = arith.sitofp %178 : vector<2x8x1xi32> to vector<2x8x1xf32>
      %180 = vector.broadcast %177 : vector<2x1x1xf32> to vector<2x8x1xf32>
      %181 = arith.cmpf olt, %179, %180 : vector<2x8x1xf32>
      %182 = arith.extui %181 : vector<2x8x1xi1> to vector<2x8x1xi32>
      %183 = arith.sitofp %182 : vector<2x8x1xi32> to vector<2x8x1xf32>
      %c0_103 = arith.constant 0 : index
      %c0_104 = arith.constant 0 : index
      %c0_105 = arith.constant 0 : index
      %184 = vector.load %arg24[%c0_103, %c0_104, %c0_105] : memref<2x8x1xf32, #tpu.memory_space<vmem>>, vector<2x8x1xf32>
      tpu.vector_store %arg24[%c0_103, %c0_104, %c0_105], %183 {strides = array<i32>} : memref<2x8x1xf32, #tpu.memory_space<vmem>>, vector<2x8x1xf32>,
      %cst_106 = arith.constant 0.000000e+00 : f32
      %185 = vector.broadcast %cst_106 : f32 to vector<2x1x8xf32>
      %186 = arith.cmpf ogt, %175, %185 : vector<2x1x8xf32>
      %cst_107 = arith.constant 0.000000e+00 : f32
      %cst_108 = arith.constant -1.000000e+30 : f32
      %187 = vector.broadcast %cst_107 : f32 to vector<2x1x8xf32>
      %188 = vector.broadcast %cst_108 : f32 to vector<2x1x8xf32>
      %189 = arith.select %186, %187, %188 : vector<2x1x8xi1>, vector<2x1x8xf32>
      %c0_109 = arith.constant 0 : index
      %c0_110 = arith.constant 0 : index
      %c0_111 = arith.constant 0 : index
      %190 = vector.load %arg25[%c0_109, %c0_110, %c0_111] : memref<2x1x8xf32, #tpu.memory_space<vmem>>, vector<2x1x8xf32>
      tpu.vector_store %arg25[%c0_109, %c0_110, %c0_111], %189 {strides = array<i32>} : memref<2x1x8xf32, #tpu.memory_space<vmem>>, vector<2x1x8xf32>,
      %cst_112 = arith.constant 1.000000e+00 : f32
      %191 = vector.broadcast %cst_112 : f32 to vector<2x1x1xf32>
      %192 = arith.divf %191, %177 : vector<2x1x1xf32>
      %c0_113 = arith.constant 0 : index
      %c0_114 = arith.constant 0 : index
      %c0_115 = arith.constant 0 : index
      %193 = vector.load %arg26[%c0_113, %c0_114, %c0_115] : memref<2x1x1xf32, #tpu.memory_space<vmem>>, vector<2x1x1xf32>
      tpu.vector_store %arg26[%c0_113, %c0_114, %c0_115], %192 {strides = array<i32>} : memref<2x1x1xf32, #tpu.memory_space<vmem>>, vector<2x1x1xf32>,
      %c0_116 = arith.constant 0 : index
      %c0_117 = arith.constant 0 : index
      %c0_118 = arith.constant 0 : index
      %194 = vector.load %arg2[%c0_116, %c0_117, %c0_118] : memref<2x8x256xbf16, #tpu.memory_space<vmem>>, vector<2x8x256xbf16>
      %195 = arith.extf %194 : vector<2x8x256xbf16> to vector<2x8x256xf32>
      %c0_119 = arith.constant 0 : index
      %c0_120 = arith.constant 0 : index
      %c0_121 = arith.constant 0 : index
      %196 = vector.load %arg4[%c0_119, %c0_120, %c0_121] : memref<1x1x256xf32, #tpu.memory_space<vmem>>, vector<1x1x256xf32>
      %c0_122 = arith.constant 0 : index
      %c0_123 = arith.constant 0 : index
      %c0_124 = arith.constant 0 : index
      %197 = vector.load %arg5[%c0_122, %c0_123, %c0_124] : memref<1x1x256xf32, #tpu.memory_space<vmem>>, vector<1x1x256xf32>
      %cst_125 = arith.constant dense<0.000000e+00> : vector<2x8xf32>
      %198 = vector.multi_reduction <add>, %195, %cst_125 [2] : vector<2x8x256xf32> to vector<2x8xf32>
      %199 = vector.shape_cast %198 : vector<2x8xf32> to vector<2x8x1xf32>
      %cst_126 = arith.constant 2.560000e+02 : f32
      %200 = vector.broadcast %cst_126 : f32 to vector<2x8x1xf32>
      %201 = arith.divf %199, %200 : vector<2x8x1xf32>
      %202 = vector.broadcast %201 : vector<2x8x1xf32> to vector<2x8x256xf32>
      %203 = arith.subf %195, %202 : vector<2x8x256xf32>
      %204 = arith.mulf %203, %203 : vector<2x8x256xf32>
      %cst_127 = arith.constant dense<0.000000e+00> : vector<2x8xf32>
      %205 = vector.multi_reduction <add>, %204, %cst_127 [2] : vector<2x8x256xf32> to vector<2x8xf32>
      %206 = vector.shape_cast %205 : vector<2x8xf32> to vector<2x8x1xf32>
      %cst_128 = arith.constant 2.560000e+02 : f32
      %207 = vector.broadcast %cst_128 : f32 to vector<2x8x1xf32>
      %208 = arith.divf %206, %207 : vector<2x8x1xf32>
      %cst_129 = arith.constant 9.99999996E-13 : f32
      %209 = vector.broadcast %cst_129 : f32 to vector<2x8x1xf32>
      %210 = arith.addf %208, %209 : vector<2x8x1xf32>
      %211 = math.rsqrt %210 : vector<2x8x1xf32>
      %212 = vector.broadcast %211 : vector<2x8x1xf32> to vector<2x8x256xf32>
      %213 = arith.mulf %203, %212 : vector<2x8x256xf32>
      %214 = vector.broadcast %196 : vector<1x1x256xf32> to vector<2x8x256xf32>
      %215 = arith.mulf %213, %214 : vector<2x8x256xf32>
      %216 = vector.broadcast %197 : vector<1x1x256xf32> to vector<2x8x256xf32>
      %217 = arith.addf %215, %216 : vector<2x8x256xf32>
      %c0_130 = arith.constant 0 : index
      %c0_131 = arith.constant 0 : index
      %c0_132 = arith.constant 0 : index
      %218 = vector.load %arg24[%c0_130, %c0_131, %c0_132] : memref<2x8x1xf32, #tpu.memory_space<vmem>>, vector<2x8x1xf32>
      %219 = vector.broadcast %218 : vector<2x8x1xf32> to vector<2x8x256xf32>
      %220 = arith.mulf %217, %219 : vector<2x8x256xf32>
      %c0_133 = arith.constant 0 : index
      %c0_134 = arith.constant 0 : index
      %c0_135 = arith.constant 0 : index
      %221 = vector.load %arg23[%c0_133, %c0_134, %c0_135] : memref<2x8x256xf32, #tpu.memory_space<vmem>>, vector<2x8x256xf32>
      tpu.vector_store %arg23[%c0_133, %c0_134, %c0_135], %220 {strides = array<i32>} : memref<2x8x256xf32, #tpu.memory_space<vmem>>, vector<2x8x256xf32>,
    } else {
    }
    %c0 = arith.constant 0 : index
    %c0_1 = arith.constant 0 : index
    %c0_2 = arith.constant 0 : index
    %3 = vector.load %arg24[%c0, %c0_1, %c0_2] : memref<2x8x1xf32, #tpu.memory_space<vmem>>, vector<2x8x1xf32>
    %c0_3 = arith.constant 0 : index
    %c0_4 = arith.constant 0 : index
    %c0_5 = arith.constant 0 : index
    %4 = vector.load %arg25[%c0_3, %c0_4, %c0_5] : memref<2x1x8xf32, #tpu.memory_space<vmem>>, vector<2x1x8xf32>
    %c0_6 = arith.constant 0 : index
    %c0_7 = arith.constant 0 : index
    %c0_8 = arith.constant 0 : index
    %5 = vector.load %arg23[%c0_6, %c0_7, %c0_8] : memref<2x8x256xf32, #tpu.memory_space<vmem>>, vector<2x8x256xf32>
    %6 = vector.shape_cast %5 : vector<2x8x256xf32> to vector<16x256xf32>
    %7 = arith.truncf %6 : vector<16x256xf32> to vector<16x256xbf16>
    %c0_9 = arith.constant 0 : index
    %c0_10 = arith.constant 0 : index
    %c0_11 = arith.constant 0 : index
    %8 = vector.load %arg7[%c0_9, %c0_10, %c0_11] : memref<1x256x256xbf16, #tpu.memory_space<vmem>>, vector<1x256x256xbf16>
    %9 = vector.shape_cast %8 : vector<1x256x256xbf16> to vector<256x256xbf16>
    %cst = arith.constant dense<0.000000e+00> : vector<16x256xf32>
    %10 = tpu.matmul %7, %9, %cst {dimension_numbers = #tpu.dot_dimension_numbers<[1], [0], [0], [1], [0, 0, 1, 1], [], []>} : vector<16x256xbf16>, vector<256x256xbf16>, vector<16x256xf32> -> vector<16x256xf32>
    %c0_12 = arith.constant 0 : index
    %c0_13 = arith.constant 0 : index
    %c0_14 = arith.constant 0 : index
    %11 = vector.load %arg8[%c0_12, %c0_13, %c0_14] : memref<1x1x256xf32, #tpu.memory_space<vmem>>, vector<1x1x256xf32>
    %12 = vector.shape_cast %11 : vector<1x1x256xf32> to vector<1x256xf32>
    %13 = vector.broadcast %12 : vector<1x256xf32> to vector<16x256xf32>
    %14 = arith.addf %10, %13 : vector<16x256xf32>
    %cst_15 = arith.constant 0.0883883461 : f32
    %15 = vector.broadcast %cst_15 : f32 to vector<16x256xf32>
    %16 = arith.mulf %14, %15 : vector<16x256xf32>
    %17 = arith.truncf %16 : vector<16x256xf32> to vector<16x256xbf16>
    %18 = vector.shape_cast %17 : vector<16x256xbf16> to vector<2x8x256xbf16>
    %c0_16 = arith.constant 0 : index
    %c0_17 = arith.constant 0 : index
    %c0_18 = arith.constant 0 : index
    %19 = vector.load %arg9[%c0_16, %c0_17, %c0_18] : memref<1x256x256xbf16, #tpu.memory_space<vmem>>, vector<1x256x256xbf16>
    %20 = vector.shape_cast %19 : vector<1x256x256xbf16> to vector<256x256xbf16>
    %cst_19 = arith.constant dense<0.000000e+00> : vector<16x256xf32>
    %21 = tpu.matmul %7, %20, %cst_19 {dimension_numbers = #tpu.dot_dimension_numbers<[1], [0], [0], [1], [0, 0, 1, 1], [], []>} : vector<16x256xbf16>, vector<256x256xbf16>, vector<16x256xf32> -> vector<16x256xf32>
    %c0_20 = arith.constant 0 : index
    %c0_21 = arith.constant 0 : index
    %c0_22 = arith.constant 0 : index
    %22 = vector.load %arg10[%c0_20, %c0_21, %c0_22] : memref<1x1x256xf32, #tpu.memory_space<vmem>>, vector<1x1x256xf32>
    %23 = vector.shape_cast %22 : vector<1x1x256xf32> to vector<1x256xf32>
    %24 = vector.broadcast %23 : vector<1x256xf32> to vector<16x256xf32>
    %25 = arith.addf %21, %24 : vector<16x256xf32>
    %26 = arith.truncf %25 : vector<16x256xf32> to vector<16x256xbf16>
    %27 = vector.shape_cast %26 : vector<16x256xbf16> to vector<2x8x256xbf16>
    %c0_23 = arith.constant 0 : index
    %c0_24 = arith.constant 0 : index
    %c0_25 = arith.constant 0 : index
    %28 = vector.load %arg11[%c0_23, %c0_24, %c0_25] : memref<1x256x256xbf16, #tpu.memory_space<vmem>>, vector<1x256x256xbf16>
    %29 = vector.shape_cast %28 : vector<1x256x256xbf16> to vector<256x256xbf16>
    %cst_26 = arith.constant dense<0.000000e+00> : vector<16x256xf32>
    %30 = tpu.matmul %7, %29, %cst_26 {dimension_numbers = #tpu.dot_dimension_numbers<[1], [0], [0], [1], [0, 0, 1, 1], [], []>} : vector<16x256xbf16>, vector<256x256xbf16>, vector<16x256xf32> -> vector<16x256xf32>
    %c0_27 = arith.constant 0 : index
    %c0_28 = arith.constant 0 : index
    %c0_29 = arith.constant 0 : index
    %31 = vector.load %arg12[%c0_27, %c0_28, %c0_29] : memref<1x1x256xf32, #tpu.memory_space<vmem>>, vector<1x1x256xf32>
    %32 = vector.shape_cast %31 : vector<1x1x256xf32> to vector<1x256xf32>
    %33 = vector.broadcast %32 : vector<1x256xf32> to vector<16x256xf32>
    %34 = arith.addf %30, %33 : vector<16x256xf32>
    %35 = arith.truncf %34 : vector<16x256xf32> to vector<16x256xbf16>
    %36 = vector.shape_cast %35 : vector<16x256xbf16> to vector<2x8x256xbf16>
    %37 = vector.extract_strided_slice %18 {offsets = [0, 0, 0], sizes = [2, 8, 128], strides = [1, 1, 1]} : vector<2x8x256xbf16> to vector<2x8x128xbf16>
    %38 = vector.extract_strided_slice %27 {offsets = [0, 0, 0], sizes = [2, 8, 128], strides = [1, 1, 1]} : vector<2x8x256xbf16> to vector<2x8x128xbf16>
    %39 = vector.extract_strided_slice %36 {offsets = [0, 0, 0], sizes = [2, 8, 128], strides = [1, 1, 1]} : vector<2x8x256xbf16> to vector<2x8x128xbf16>
    "tpu.trace_start"() <{level = 10 : i32, message = "bqd,bkd->bqk"}> : () -> ()
    %cst_30 = arith.constant dense<0.000000e+00> : vector<2x8x8xf32>
    %40 = tpu.matmul %37, %38, %cst_30 {dimension_numbers = #tpu.dot_dimension_numbers<[2], [2], [1], [1], [0, 0, 0, 1, 1, 1], [0], [0]>} : vector<2x8x128xbf16>, vector<2x8x128xbf16>, vector<2x8x8xf32> -> vector<2x8x8xf32>
    "tpu.trace_stop"() : () -> ()
    %41 = vector.broadcast %4 : vector<2x1x8xf32> to vector<2x8x8xf32>
    %42 = arith.addf %40, %41 : vector<2x8x8xf32>
    %cst_31 = arith.constant dense<0xFF800000> : vector<2x8xf32>
    %43 = vector.multi_reduction <maximumf>, %42, %cst_31 [2] : vector<2x8x8xf32> to vector<2x8xf32>
    %44 = vector.shape_cast %43 : vector<2x8xf32> to vector<2x8x1xf32>
    %45 = vector.broadcast %44 : vector<2x8x1xf32> to vector<2x8x8xf32>
    %46 = arith.subf %42, %45 : vector<2x8x8xf32>
    %47 = math.exp %46 : vector<2x8x8xf32>
    %cst_32 = arith.constant dense<0.000000e+00> : vector<2x8xf32>
    %48 = vector.multi_reduction <add>, %47, %cst_32 [2] : vector<2x8x8xf32> to vector<2x8xf32>
    %49 = vector.shape_cast %48 : vector<2x8xf32> to vector<2x8x1xf32>
    %50 = tpu.reciprocal %49 {approx = true} : vector<2x8x1xf32> -> vector<2x8x1xf32>
    %51 = vector.broadcast %50 : vector<2x8x1xf32> to vector<2x8x8xf32>
    %52 = arith.mulf %47, %51 : vector<2x8x8xf32>
    %53 = arith.truncf %52 : vector<2x8x8xf32> to vector<2x8x8xbf16>
    "tpu.trace_start"() <{level = 10 : i32, message = "bqk,bkd->bqd"}> : () -> ()
    %cst_33 = arith.constant dense<0.000000e+00> : vector<2x8x128xf32>
    %54 = tpu.matmul %53, %39, %cst_33 {dimension_numbers = #tpu.dot_dimension_numbers<[2], [1], [1], [2], [0, 0, 0, 1, 1, 2], [0], [0]>} : vector<2x8x8xbf16>, vector<2x8x128xbf16>, vector<2x8x128xf32> -> vector<2x8x128xf32>
    "tpu.trace_stop"() : () -> ()
    %55 = vector.shape_cast %54 : vector<2x8x128xf32> to vector<16x128xf32>
    %56 = arith.truncf %55 : vector<16x128xf32> to vector<16x128xbf16>
    %c0_34 = arith.constant 0 : index
    %c0_35 = arith.constant 0 : index
    %57 = vector.load %arg27[%c0_34, %c0_35] : memref<16x256xbf16, #tpu.memory_space<vmem>>, vector<16x128xbf16>
    tpu.vector_store %arg27[%c0_34, %c0_35], %56 {strides = array<i32>} : memref<16x256xbf16, #tpu.memory_space<vmem>>, vector<16x128xbf16>,
    %58 = vector.extract_strided_slice %18 {offsets = [0, 0, 128], sizes = [2, 8, 128], strides = [1, 1, 1]} : vector<2x8x256xbf16> to vector<2x8x128xbf16>
    %59 = vector.extract_strided_slice %27 {offsets = [0, 0, 128], sizes = [2, 8, 128], strides = [1, 1, 1]} : vector<2x8x256xbf16> to vector<2x8x128xbf16>
    %60 = vector.extract_strided_slice %36 {offsets = [0, 0, 128], sizes = [2, 8, 128], strides = [1, 1, 1]} : vector<2x8x256xbf16> to vector<2x8x128xbf16>
    "tpu.trace_start"() <{level = 10 : i32, message = "bqd,bkd->bqk"}> : () -> ()
    %cst_36 = arith.constant dense<0.000000e+00> : vector<2x8x8xf32>
    %61 = tpu.matmul %58, %59, %cst_36 {dimension_numbers = #tpu.dot_dimension_numbers<[2], [2], [1], [1], [0, 0, 0, 1, 1, 1], [0], [0]>} : vector<2x8x128xbf16>, vector<2x8x128xbf16>, vector<2x8x8xf32> -> vector<2x8x8xf32>
    "tpu.trace_stop"() : () -> ()
    %62 = vector.broadcast %4 : vector<2x1x8xf32> to vector<2x8x8xf32>
    %63 = arith.addf %61, %62 : vector<2x8x8xf32>
    %cst_37 = arith.constant dense<0xFF800000> : vector<2x8xf32>
    %64 = vector.multi_reduction <maximumf>, %63, %cst_37 [2] : vector<2x8x8xf32> to vector<2x8xf32>
    %65 = vector.shape_cast %64 : vector<2x8xf32> to vector<2x8x1xf32>
    %66 = vector.broadcast %65 : vector<2x8x1xf32> to vector<2x8x8xf32>
    %67 = arith.subf %63, %66 : vector<2x8x8xf32>
    %68 = math.exp %67 : vector<2x8x8xf32>
    %cst_38 = arith.constant dense<0.000000e+00> : vector<2x8xf32>
    %69 = vector.multi_reduction <add>, %68, %cst_38 [2] : vector<2x8x8xf32> to vector<2x8xf32>
    %70 = vector.shape_cast %69 : vector<2x8xf32> to vector<2x8x1xf32>
    %71 = tpu.reciprocal %70 {approx = true} : vector<2x8x1xf32> -> vector<2x8x1xf32>
    %72 = vector.broadcast %71 : vector<2x8x1xf32> to vector<2x8x8xf32>
    %73 = arith.mulf %68, %72 : vector<2x8x8xf32>
    %74 = arith.truncf %73 : vector<2x8x8xf32> to vector<2x8x8xbf16>
    "tpu.trace_start"() <{level = 10 : i32, message = "bqk,bkd->bqd"}> : () -> ()
    %cst_39 = arith.constant dense<0.000000e+00> : vector<2x8x128xf32>
    %75 = tpu.matmul %74, %60, %cst_39 {dimension_numbers = #tpu.dot_dimension_numbers<[2], [1], [1], [2], [0, 0, 0, 1, 1, 2], [0], [0]>} : vector<2x8x8xbf16>, vector<2x8x128xbf16>, vector<2x8x128xf32> -> vector<2x8x128xf32>
    "tpu.trace_stop"() : () -> ()
    %76 = vector.shape_cast %75 : vector<2x8x128xf32> to vector<16x128xf32>
    %77 = arith.truncf %76 : vector<16x128xf32> to vector<16x128xbf16>
    %c0_40 = arith.constant 0 : index
    %c128 = arith.constant 128 : index
    %78 = vector.load %arg27[%c0_40, %c128] : memref<16x256xbf16, #tpu.memory_space<vmem>>, vector<16x128xbf16>
    tpu.vector_store %arg27[%c0_40, %c128], %77 {strides = array<i32>} : memref<16x256xbf16, #tpu.memory_space<vmem>>, vector<16x128xbf16>,
    %c0_41 = arith.constant 0 : index
    %c0_42 = arith.constant 0 : index
    %79 = vector.load %arg27[%c0_41, %c0_42] : memref<16x256xbf16, #tpu.memory_space<vmem>>, vector<16x256xbf16>
    %c0_43 = arith.constant 0 : index
    %c0_44 = arith.constant 0 : index
    %c0_45 = arith.constant 0 : index
    %80 = vector.load %arg13[%c0_43, %c0_44, %c0_45] : memref<1x256x256xbf16, #tpu.memory_space<vmem>>, vector<1x256x256xbf16>
    %81 = vector.shape_cast %80 : vector<1x256x256xbf16> to vector<256x256xbf16>
    %cst_46 = arith.constant dense<0.000000e+00> : vector<16x256xf32>
    %82 = tpu.matmul %79, %81, %cst_46 {dimension_numbers = #tpu.dot_dimension_numbers<[1], [0], [0], [1], [0, 0, 1, 1], [], []>} : vector<16x256xbf16>, vector<256x256xbf16>, vector<16x256xf32> -> vector<16x256xf32>
    %c0_47 = arith.constant 0 : index
    %c0_48 = arith.constant 0 : index
    %c0_49 = arith.constant 0 : index
    %83 = vector.load %arg14[%c0_47, %c0_48, %c0_49] : memref<1x1x256xf32, #tpu.memory_space<vmem>>, vector<1x1x256xf32>
    %84 = vector.shape_cast %83 : vector<1x1x256xf32> to vector<1x256xf32>
    %85 = vector.broadcast %84 : vector<1x256xf32> to vector<16x256xf32>
    %86 = arith.addf %82, %85 : vector<16x256xf32>
    %87 = arith.addf %6, %86 : vector<16x256xf32>
    %c0_50 = arith.constant 0 : index
    %c0_51 = arith.constant 0 : index
    %c0_52 = arith.constant 0 : index
    %88 = vector.load %arg15[%c0_50, %c0_51, %c0_52] : memref<1x1x256xf32, #tpu.memory_space<vmem>>, vector<1x1x256xf32>
    %89 = vector.shape_cast %88 : vector<1x1x256xf32> to vector<1x256xf32>
    %c0_53 = arith.constant 0 : index
    %c0_54 = arith.constant 0 : index
    %c0_55 = arith.constant 0 : index
    %90 = vector.load %arg16[%c0_53, %c0_54, %c0_55] : memref<1x1x256xf32, #tpu.memory_space<vmem>>, vector<1x1x256xf32>
    %91 = vector.shape_cast %90 : vector<1x1x256xf32> to vector<1x256xf32>
    %cst_56 = arith.constant dense<0.000000e+00> : vector<16xf32>
    %92 = vector.multi_reduction <add>, %87, %cst_56 [1] : vector<16x256xf32> to vector<16xf32>
    %93 = vector.shape_cast %92 : vector<16xf32> to vector<16x1xf32>
    %cst_57 = arith.constant 2.560000e+02 : f32
    %94 = vector.broadcast %cst_57 : f32 to vector<16x1xf32>
    %95 = arith.divf %93, %94 : vector<16x1xf32>
    %96 = vector.broadcast %95 : vector<16x1xf32> to vector<16x256xf32>
    %97 = arith.subf %87, %96 : vector<16x256xf32>
    %98 = arith.mulf %97, %97 : vector<16x256xf32>
    %cst_58 = arith.constant dense<0.000000e+00> : vector<16xf32>
    %99 = vector.multi_reduction <add>, %98, %cst_58 [1] : vector<16x256xf32> to vector<16xf32>
    %100 = vector.shape_cast %99 : vector<16xf32> to vector<16x1xf32>
    %cst_59 = arith.constant 2.560000e+02 : f32
    %101 = vector.broadcast %cst_59 : f32 to vector<16x1xf32>
    %102 = arith.divf %100, %101 : vector<16x1xf32>
    %cst_60 = arith.constant 9.99999996E-13 : f32
    %103 = vector.broadcast %cst_60 : f32 to vector<16x1xf32>
    %104 = arith.addf %102, %103 : vector<16x1xf32>
    %105 = math.rsqrt %104 : vector<16x1xf32>
    %106 = vector.broadcast %105 : vector<16x1xf32> to vector<16x256xf32>
    %107 = arith.mulf %97, %106 : vector<16x256xf32>
    %108 = vector.broadcast %89 : vector<1x256xf32> to vector<16x256xf32>
    %109 = arith.mulf %107, %108 : vector<16x256xf32>
    %110 = vector.broadcast %91 : vector<1x256xf32> to vector<16x256xf32>
    %111 = arith.addf %109, %110 : vector<16x256xf32>
    %112 = arith.truncf %111 : vector<16x256xf32> to vector<16x256xbf16>
    %c0_61 = arith.constant 0 : index
    %c0_62 = arith.constant 0 : index
    %c0_63 = arith.constant 0 : index
    %113 = vector.load %arg17[%c0_61, %c0_62, %c0_63] : memref<1x256x1024xbf16, #tpu.memory_space<vmem>>, vector<1x256x1024xbf16>
    %114 = vector.shape_cast %113 : vector<1x256x1024xbf16> to vector<256x1024xbf16>
    %cst_64 = arith.constant dense<0.000000e+00> : vector<16x1024xf32>
    %115 = tpu.matmul %112, %114, %cst_64 {dimension_numbers = #tpu.dot_dimension_numbers<[1], [0], [0], [1], [0, 0, 1, 1], [], []>} : vector<16x256xbf16>, vector<256x1024xbf16>, vector<16x1024xf32> -> vector<16x1024xf32>
    %c0_65 = arith.constant 0 : index
    %c0_66 = arith.constant 0 : index
    %c0_67 = arith.constant 0 : index
    %116 = vector.load %arg18[%c0_65, %c0_66, %c0_67] : memref<1x1x1024xf32, #tpu.memory_space<vmem>>, vector<1x1x1024xf32>
    %117 = vector.shape_cast %116 : vector<1x1x1024xf32> to vector<1x1024xf32>
    %118 = vector.broadcast %117 : vector<1x1024xf32> to vector<16x1024xf32>
    %119 = arith.addf %115, %118 : vector<16x1024xf32>
    %cst_68 = arith.constant 0.000000e+00 : f32
    %120 = vector.broadcast %cst_68 : f32 to vector<16x1024xf32>
    %121 = arith.maximumf %119, %120 : vector<16x1024xf32>
    %122 = arith.truncf %121 : vector<16x1024xf32> to vector<16x1024xbf16>
    %c0_69 = arith.constant 0 : index
    %c0_70 = arith.constant 0 : index
    %c0_71 = arith.constant 0 : index
    %123 = vector.load %arg19[%c0_69, %c0_70, %c0_71] : memref<1x1024x256xbf16, #tpu.memory_space<vmem>>, vector<1x1024x256xbf16>
    %124 = vector.shape_cast %123 : vector<1x1024x256xbf16> to vector<1024x256xbf16>
    %cst_72 = arith.constant dense<0.000000e+00> : vector<16x256xf32>
    %125 = tpu.matmul %122, %124, %cst_72 {dimension_numbers = #tpu.dot_dimension_numbers<[1], [0], [0], [1], [0, 0, 1, 1], [], []>} : vector<16x1024xbf16>, vector<1024x256xbf16>, vector<16x256xf32> -> vector<16x256xf32>
    %c0_73 = arith.constant 0 : index
    %c0_74 = arith.constant 0 : index
    %c0_75 = arith.constant 0 : index
    %126 = vector.load %arg20[%c0_73, %c0_74, %c0_75] : memref<1x1x256xf32, #tpu.memory_space<vmem>>, vector<1x1x256xf32>
    %127 = vector.shape_cast %126 : vector<1x1x256xf32> to vector<1x256xf32>
    %128 = vector.broadcast %127 : vector<1x256xf32> to vector<16x256xf32>
    %129 = arith.addf %125, %128 : vector<16x256xf32>
    %130 = arith.addf %111, %129 : vector<16x256xf32>
    %c0_76 = arith.constant 0 : index
    %c0_77 = arith.constant 0 : index
    %c0_78 = arith.constant 0 : index
    %131 = vector.load %arg21[%c0_76, %c0_77, %c0_78] : memref<1x1x256xf32, #tpu.memory_space<vmem>>, vector<1x1x256xf32>
    %132 = vector.shape_cast %131 : vector<1x1x256xf32> to vector<1x256xf32>
    %c0_79 = arith.constant 0 : index
    %c0_80 = arith.constant 0 : index
    %c0_81 = arith.constant 0 : index
    %133 = vector.load %arg22[%c0_79, %c0_80, %c0_81] : memref<1x1x256xf32, #tpu.memory_space<vmem>>, vector<1x1x256xf32>
    %134 = vector.shape_cast %133 : vector<1x1x256xf32> to vector<1x256xf32>
    %cst_82 = arith.constant dense<0.000000e+00> : vector<16xf32>
    %135 = vector.multi_reduction <add>, %130, %cst_82 [1] : vector<16x256xf32> to vector<16xf32>
    %136 = vector.shape_cast %135 : vector<16xf32> to vector<16x1xf32>
    %cst_83 = arith.constant 2.560000e+02 : f32
    %137 = vector.broadcast %cst_83 : f32 to vector<16x1xf32>
    %138 = arith.divf %136, %137 : vector<16x1xf32>
    %139 = vector.broadcast %138 : vector<16x1xf32> to vector<16x256xf32>
    %140 = arith.subf %130, %139 : vector<16x256xf32>
    %141 = arith.mulf %140, %140 : vector<16x256xf32>
    %cst_84 = arith.constant dense<0.000000e+00> : vector<16xf32>
    %142 = vector.multi_reduction <add>, %141, %cst_84 [1] : vector<16x256xf32> to vector<16xf32>
    %143 = vector.shape_cast %142 : vector<16xf32> to vector<16x1xf32>
    %cst_85 = arith.constant 2.560000e+02 : f32
    %144 = vector.broadcast %cst_85 : f32 to vector<16x1xf32>
    %145 = arith.divf %143, %144 : vector<16x1xf32>
    %cst_86 = arith.constant 9.99999996E-13 : f32
    %146 = vector.broadcast %cst_86 : f32 to vector<16x1xf32>
    %147 = arith.addf %145, %146 : vector<16x1xf32>
    %148 = math.rsqrt %147 : vector<16x1xf32>
    %149 = vector.broadcast %148 : vector<16x1xf32> to vector<16x256xf32>
    %150 = arith.mulf %140, %149 : vector<16x256xf32>
    %151 = vector.broadcast %132 : vector<1x256xf32> to vector<16x256xf32>
    %152 = arith.mulf %150, %151 : vector<16x256xf32>
    %153 = vector.broadcast %134 : vector<1x256xf32> to vector<16x256xf32>
    %154 = arith.addf %152, %153 : vector<16x256xf32>
    %155 = vector.shape_cast %154 : vector<16x256xf32> to vector<2x8x256xf32>
    %156 = vector.broadcast %3 : vector<2x8x1xf32> to vector<2x8x256xf32>
    %157 = arith.mulf %155, %156 : vector<2x8x256xf32>
    %cst_87 = arith.constant dense<0.000000e+00> : vector<2x256xf32>
    %158 = vector.multi_reduction <add>, %157, %cst_87 [1] : vector<2x8x256xf32> to vector<2x256xf32>
    %159 = vector.shape_cast %158 : vector<2x256xf32> to vector<2x1x256xf32>
    %c0_88 = arith.constant 0 : index
    %c0_89 = arith.constant 0 : index
    %c0_90 = arith.constant 0 : index
    %160 = vector.load %arg26[%c0_88, %c0_89, %c0_90] : memref<2x1x1xf32, #tpu.memory_space<vmem>>, vector<2x1x1xf32>
    %161 = vector.broadcast %160 : vector<2x1x1xf32> to vector<2x1x256xf32>
    %162 = arith.mulf %159, %161 : vector<2x1x256xf32>
    %163 = arith.negf %162 : vector<2x1x256xf32>
    %164 = math.exp %163 : vector<2x1x256xf32>
    %cst_91 = arith.constant 1.000000e+00 : f32
    %165 = vector.broadcast %cst_91 : f32 to vector<2x1x256xf32>
    %166 = arith.addf %165, %164 : vector<2x1x256xf32>
    %167 = arith.divf %165, %166 : vector<2x1x256xf32>
    %c0_92 = arith.constant 0 : index
    %c0_93 = arith.constant 0 : index
    %c0_94 = arith.constant 0 : index
    %c0_95 = arith.constant 0 : index
    %168 = vector.load %arg6[%c0_92, %c0_93, %c0_94, %c0_95] : memref<1x2x8x256xbf16, #tpu.memory_space<vmem>>, vector<1x2x8x256xbf16>
    %169 = vector.shape_cast %168 : vector<1x2x8x256xbf16> to vector<2x8x256xbf16>
    %170 = arith.extf %169 : vector<2x8x256xbf16> to vector<2x8x256xf32>
    %171 = vector.broadcast %167 : vector<2x1x256xf32> to vector<2x8x256xf32>
    %172 = arith.mulf %171, %170 : vector<2x8x256xf32>
    %173 = arith.addf %157, %172 : vector<2x8x256xf32>
    %c0_96 = arith.constant 0 : index
    %c0_97 = arith.constant 0 : index
    %c0_98 = arith.constant 0 : index
    %174 = vector.load %arg23[%c0_96, %c0_97, %c0_98] : memref<2x8x256xf32, #tpu.memory_space<vmem>>, vector<2x8x256xf32>
    tpu.vector_store %arg23[%c0_96, %c0_97, %c0_98], %173 {strides = array<i32>} : memref<2x8x256xf32, #tpu.memory_space<vmem>>, vector<2x8x256xf32>,
    return
  }
  func.func @transform_0(%arg0: i32, %arg1: i32) -> (i32, i32, i32) {
    %c0_i32 = arith.constant 0 : i32
    %c0_i32_0 = arith.constant 0 : i32
    %c0_i32_1 = arith.constant 0 : i32
    return %arg0, %c0_i32, %c0_i32_0 : i32, i32, i32
  }
  func.func @transform_1(%arg0: i32, %arg1: i32) -> (i32, i32, i32) {
    %c0_i32 = arith.constant 0 : i32
    %c0_i32_0 = arith.constant 0 : i32
    %c0_i32_1 = arith.constant 0 : i32
    return %arg0, %c0_i32, %c0_i32_0 : i32, i32, i32
  }
  func.func @transform_2(%arg0: i32, %arg1: i32) -> (i32, i32, i32) {
    %c0_i32 = arith.constant 0 : i32
    %c0_i32_0 = arith.constant 0 : i32
    %c0_i32_1 = arith.constant 0 : i32
    %c0_i32_2 = arith.constant 0 : i32
    return %c0_i32, %c0_i32_0, %c0_i32_1 : i32, i32, i32
  }
  func.func @transform_3(%arg0: i32, %arg1: i32) -> (i32, i32, i32) {
    %c0_i32 = arith.constant 0 : i32
    %c0_i32_0 = arith.constant 0 : i32
    %c0_i32_1 = arith.constant 0 : i32
    %c0_i32_2 = arith.constant 0 : i32
    return %c0_i32, %c0_i32_0, %c0_i32_1 : i32, i32, i32
  }
  func.func @transform_4(%arg0: i32, %arg1: i32) -> (i32, i32, i32, i32) {
    %c0_i32 = arith.constant 0 : i32
    %c0_i32_0 = arith.constant 0 : i32
    %c0_i32_1 = arith.constant 0 : i32
    return %arg1, %arg0, %c0_i32, %c0_i32_0 : i32, i32, i32, i32
  }
  func.func @transform_5(%arg0: i32, %arg1: i32) -> (i32, i32, i32) {
    %c0_i32 = arith.constant 0 : i32
    %c0_i32_0 = arith.constant 0 : i32
    %c0_i32_1 = arith.constant 0 : i32
    return %arg1, %c0_i32, %c0_i32_0 : i32, i32, i32
  }
  func.func @transform_6(%arg0: i32, %arg1: i32) -> (i32, i32, i32) {
    %c0_i32 = arith.constant 0 : i32
    %c0_i32_0 = arith.constant 0 : i32
    %c0_i32_1 = arith.constant 0 : i32
    return %arg1, %c0_i32, %c0_i32_0 : i32, i32, i32
  }
  func.func @transform_7(%arg0: i32, %arg1: i32) -> (i32, i32, i32) {
    %c0_i32 = arith.constant 0 : i32
    %c0_i32_0 = arith.constant 0 : i32
    %c0_i32_1 = arith.constant 0 : i32
    return %arg1, %c0_i32, %c0_i32_0 : i32, i32, i32
  }
  func.func @transform_8(%arg0: i32, %arg1: i32) -> (i32, i32, i32) {
    %c0_i32 = arith.constant 0 : i32
    %c0_i32_0 = arith.constant 0 : i32
    %c0_i32_1 = arith.constant 0 : i32
    return %arg1, %c0_i32, %c0_i32_0 : i32, i32, i32
  }
  func.func @transform_9(%arg0: i32, %arg1: i32) -> (i32, i32, i32) {
    %c0_i32 = arith.constant 0 : i32
    %c0_i32_0 = arith.constant 0 : i32
    %c0_i32_1 = arith.constant 0 : i32
    return %arg1, %c0_i32, %c0_i32_0 : i32, i32, i32
  }
  func.func @transform_10(%arg0: i32, %arg1: i32) -> (i32, i32, i32) {
    %c0_i32 = arith.constant 0 : i32
    %c0_i32_0 = arith.constant 0 : i32
    %c0_i32_1 = arith.constant 0 : i32
    return %arg1, %c0_i32, %c0_i32_0 : i32, i32, i32
  }
  func.func @transform_11(%arg0: i32, %arg1: i32) -> (i32, i32, i32) {
    %c0_i32 = arith.constant 0 : i32
    %c0_i32_0 = arith.constant 0 : i32
    %c0_i32_1 = arith.constant 0 : i32
    return %arg1, %c0_i32, %c0_i32_0 : i32, i32, i32
  }
  func.func @transform_12(%arg0: i32, %arg1: i32) -> (i32, i32, i32) {
    %c0_i32 = arith.constant 0 : i32
    %c0_i32_0 = arith.constant 0 : i32
    %c0_i32_1 = arith.constant 0 : i32
    return %arg1, %c0_i32, %c0_i32_0 : i32, i32, i32
  }
  func.func @transform_13(%arg0: i32, %arg1: i32) -> (i32, i32, i32) {
    %c0_i32 = arith.constant 0 : i32
    %c0_i32_0 = arith.constant 0 : i32
    %c0_i32_1 = arith.constant 0 : i32
    return %arg1, %c0_i32, %c0_i32_0 : i32, i32, i32
  }
  func.func @transform_14(%arg0: i32, %arg1: i32) -> (i32, i32, i32) {
    %c0_i32 = arith.constant 0 : i32
    %c0_i32_0 = arith.constant 0 : i32
    %c0_i32_1 = arith.constant 0 : i32
    return %arg1, %c0_i32, %c0_i32_0 : i32, i32, i32
  }
  func.func @transform_15(%arg0: i32, %arg1: i32) -> (i32, i32, i32) {
    %c0_i32 = arith.constant 0 : i32
    %c0_i32_0 = arith.constant 0 : i32
    %c0_i32_1 = arith.constant 0 : i32
    return %arg1, %c0_i32, %c0_i32_0 : i32, i32, i32
  }
  func.func @transform_16(%arg0: i32, %arg1: i32) -> (i32, i32, i32) {
    %c0_i32 = arith.constant 0 : i32
    %c0_i32_0 = arith.constant 0 : i32
    %c0_i32_1 = arith.constant 0 : i32
    return %arg1, %c0_i32, %c0_i32_0 : i32, i32, i32
  }
  func.func @transform_17(%arg0: i32, %arg1: i32) -> (i32, i32, i32) {
    %c0_i32 = arith.constant 0 : i32
    %c0_i32_0 = arith.constant 0 : i32
    %c0_i32_1 = arith.constant 0 : i32
    return %arg1, %c0_i32, %c0_i32_0 : i32, i32, i32
  }
  func.func @transform_18(%arg0: i32, %arg1: i32) -> (i32, i32, i32) {
    %c0_i32 = arith.constant 0 : i32
    %c0_i32_0 = arith.constant 0 : i32
    %c0_i32_1 = arith.constant 0 : i32
    return %arg1, %c0_i32, %c0_i32_0 : i32, i32, i32
  }
  func.func @transform_19(%arg0: i32, %arg1: i32) -> (i32, i32, i32) {
    %c0_i32 = arith.constant 0 : i32
    %c0_i32_0 = arith.constant 0 : i32
    %c0_i32_1 = arith.constant 0 : i32
    return %arg1, %c0_i32, %c0_i32_0 : i32, i32, i32
  }
  func.func @transform_20(%arg0: i32, %arg1: i32) -> (i32, i32, i32) {
    %c0_i32 = arith.constant 0 : i32
    %c0_i32_0 = arith.constant 0 : i32
    %c0_i32_1 = arith.constant 0 : i32
    return %arg1, %c0_i32, %c0_i32_0 : i32, i32, i32
  }
  func.func @transform_21(%arg0: i32, %arg1: i32) -> (i32, i32, i32) {
    %c0_i32 = arith.constant 0 : i32
    %c0_i32_0 = arith.constant 0 : i32
    %c0_i32_1 = arith.constant 0 : i32
    return %arg0, %c0_i32, %c0_i32_0 : i32, i32, i32
  }
}

</mosaic_0001>

<llo_original>
// kernel: tpu_custom_call.1
$region0: #{tpu_custom_call.1}
  #allocation0 [shape = 'u32[]', space=smem, size = 0x4, offset = 0x4, fixed_abs, tag = 'smem constant byte address 0x4 - core index']
  #allocation1 [shape = 'u32[72,128]{1,0:T(1,128)}', space=vmem, size = 0x9000, scoped, tag = 'internal scratch']
  #allocation2 [shape = 'f32[2,8,1]{2,1,0:T(8,128)}', space=vmem, size = 0x2000, scoped, tag = 'scratch operand']
  #allocation3 [shape = 'f32[2,1,8]{2,1,0:T(1,128)}', space=vmem, size = 0x400, scoped, tag = 'scratch operand']
  #allocation4 [shape = 'f32[2,1,1]{2,1,0:T(1,128)}', space=vmem, size = 0x400, scoped, tag = 'scratch operand']
  #allocation5 [shape = 'bf16[16,256]{1,0:T(8,128)(2,1)}', space=vmem, size = 0x2000, scoped, tag = 'scratch operand']
  %s0 = inlined_call_operand.hbm [shape: bf16[2,8,256], index: 0, kind: input, shape index: {}]
  %s1 = inlined_call_operand.hbm [shape: f32[2,1,8], index: 1, kind: input, shape index: {}]
  %s2 = inlined_call_operand.hbm [shape: f32[1,1,256], index: 2, kind: input, shape index: {}]
  %s3 = inlined_call_operand.hbm [shape: f32[1,1,256], index: 3, kind: input, shape index: {}]
  %s4 = inlined_call_operand.hbm [shape: bf16[2,2,8,256], index: 4, kind: input, shape index: {}]
  %s5 = inlined_call_operand.hbm [shape: bf16[2,256,256], index: 5, kind: input, shape index: {}]
  %s6 = inlined_call_operand.vmem [shape: f32[2,1,256], index: 6, kind: input, shape index: {}]
  %s7 = inlined_call_operand.hbm [shape: bf16[2,256,256], index: 7, kind: input, shape index: {}]
  %s8 = inlined_call_operand.hbm [shape: f32[2,1,256], index: 8, kind: input, shape index: {}]
  %s9 = inlined_call_operand.hbm [shape: bf16[2,256,256], index: 9, kind: input, shape index: {}]
  %s10 = inlined_call_operand.vmem [shape: f32[2,1,256], index: 10, kind: input, shape index: {}]
  %s11 = inlined_call_operand.hbm [shape: bf16[2,256,256], index: 11, kind: input, shape index: {}]
  %s12 = inlined_call_operand.hbm [shape: f32[2,1,256], index: 12, kind: input, shape index: {}]
  %s13 = inlined_call_operand.vmem [shape: f32[2,1,256], index: 13, kind: input, shape index: {}]
  %s14 = inlined_call_operand.hbm [shape: f32[2,1,256], index: 14, kind: input, shape index: {}]
  %s15 = inlined_call_operand.hbm [shape: bf16[2,256,1024], index: 15, kind: input, shape index: {}]
  %s16 = inlined_call_operand.hbm [shape: f32[2,1,1024], index: 16, kind: input, shape index: {}]
  %s17 = inlined_call_operand.hbm [shape: bf16[2,1024,256], index: 17, kind: input, shape index: {}]
  %s18 = inlined_call_operand.vmem [shape: f32[2,1,256], index: 18, kind: input, shape index: {}]
  %s19 = inlined_call_operand.hbm [shape: f32[2,1,256], index: 19, kind: input, shape index: {}]
  %s20 = inlined_call_operand.hbm [shape: f32[2,1,256], index: 20, kind: input, shape index: {}]
  %s21 = inlined_call_operand.hbm [shape: f32[2,8,256], index: 21, kind: output, shape index: {}]
  %s22 = sld [smem:[#allocation0]]
  $region189: #{tpu_custom_call.1} parent=0
    _
  %s24 = ssub.s32 1, %s22
  %s25 = scalar_select 0, %s24, %s22
  $region1: #{tpu_custom_call.1} parent=0
    #allocation6 [shape = 'u8[8192]{0}', space=vmem, size = 0x2000, scoped, tag = 'input window, operand 0, single buffered']
    #allocation7 [shape = 's32[2]{0}', space=sflag, size = 0x8, scoped, tag = 'scoped memory for tpu_custom_call.1']
    #allocation8 [shape = 's32[2]{0}', space=sflag, size = 0x8, scoped, tag = 'scoped memory for tpu_custom_call.1']
    #allocation9 [shape = 'u8[1024]{0}', space=vmem, size = 0x400, scoped, tag = 'input window, operand 1, single buffered']
    #allocation10 [shape = 's32[1]{0}', space=sflag, size = 0x4, scoped, tag = 'scoped memory for tpu_custom_call.1']
    #allocation11 [shape = 'u8[1024]{0}', space=vmem, size = 0x400, scoped, tag = 'input window, operand 2, single buffered']
    #allocation12 [shape = 'u8[1024]{0}', space=vmem, size = 0x400, scoped, tag = 'input window, operand 3, single buffered']
    #allocation13 [shape = 's32[1]{0}', space=sflag, size = 0x4, scoped, tag = 'scoped memory for tpu_custom_call.1']
    #allocation14 [shape = 'u8[16384]{0}', space=vmem, size = 0x4000, scoped, tag = 'input window, operand 4']
    #allocation15 [shape = 'u8[262144]{0}', space=vmem, size = 0x40000, scoped, tag = 'input window, operand 5']
    #allocation16 [shape = 'u8[262144]{0}', space=vmem, size = 0x40000, scoped, tag = 'input window, operand 7']
    #allocation17 [shape = 'u8[2048]{0}', space=vmem, size = 0x800, scoped, tag = 'input window, operand 8']
    #allocation18 [shape = 'u8[262144]{0}', space=vmem, size = 0x40000, scoped, tag = 'input window, operand 9']
    #allocation19 [shape = 'u8[262144]{0}', space=vmem, size = 0x40000, scoped, tag = 'input window, operand 11']
    #allocation20 [shape = 'u8[2048]{0}', space=vmem, size = 0x800, scoped, tag = 'input window, operand 12']
    #allocation21 [shape = 'u8[2048]{0}', space=vmem, size = 0x800, scoped, tag = 'input window, operand 14']
    #allocation22 [shape = 'u8[1048576]{0}', space=vmem, size = 0x100000, scoped, tag = 'input window, operand 15']
    #allocation23 [shape = 'u8[8192]{0}', space=vmem, size = 0x2000, scoped, tag = 'input window, operand 16']
    #allocation24 [shape = 'u8[1048576]{0}', space=vmem, size = 0x100000, scoped, tag = 'input window, operand 17']
    #allocation25 [shape = 'u8[2048]{0}', space=vmem, size = 0x800, scoped, tag = 'input window, operand 19']
    #allocation26 [shape = 'u8[2048]{0}', space=vmem, size = 0x800, scoped, tag = 'input window, operand 20']
    #allocation27 [shape = 'u8[16384]{0}', space=vmem, size = 0x4000, scoped, tag = 'output window, operand 0, single buffered']
    %26 = vsyncpa [#allocation7], 0
    %27 = vsyncpa [#allocation10], 0
    %28 = vsyncpa [#allocation13], 0
    %29 = vsyncpa [#allocation8], 0
    loop: start=0, step=1, limit=4
    $region2: #{tpu_custom_call.1} parent=1 // loop_pre_header
      _
    $region3: #{tpu_custom_call.1} parent=1 // loop_header
      %s31 = sphi 0, %s35
      %p32 = scmp.ge.s32.totalorder %s31, 4
      %s38 = sphi 0, %s50
      %s39 = sphi 0, %s46
      %s40 = sphi 0, %s38
      %s41 = sphi 0, %s39
      %s42 = sphi 0, %s40
      %s43 = sphi 0, %s41
      %s53 = sphi 0, %s55
      %s56 = sphi 0, %s53
      %s57 = sphi 0, %s56
      %s73 = sphi 0, %s57
      %s79 = sphi 0, %s81
      %s82 = sphi 0, %s79
      %s83 = sphi 0, %s82
      %s99 = sphi 0, %s83
      %s103 = sphi 0, %s103
      %s105 = sphi 0, %s103
      %s106 = sphi 0, %s105
      %s120 = sphi 0, %s106
      %s124 = sphi 0, %s124
      %s126 = sphi 0, %s124
      %s127 = sphi 0, %s126
      %s141 = sphi 0, %s127
      %s149 = sphi 0, %s151
      %s152 = sphi 0, %s149
      %s153 = sphi 0, %s152
      %s169 = sphi 0, %s153
      %s175 = sphi 0, %s177
      %s178 = sphi 0, %s175
      %s179 = sphi 0, %s178
      %s195 = sphi 0, %s179
      %s201 = sphi 0, %s203
      %s204 = sphi 0, %s201
      %s205 = sphi 0, %s204
      %s221 = sphi 0, %s205
      %s227 = sphi 0, %s229
      %s230 = sphi 0, %s227
      %s231 = sphi 0, %s230
      %s247 = sphi 0, %s231
      %s253 = sphi 0, %s255
      %s256 = sphi 0, %s253
      %s257 = sphi 0, %s256
      %s273 = sphi 0, %s257
      %s279 = sphi 0, %s281
      %s282 = sphi 0, %s279
      %s283 = sphi 0, %s282
      %s299 = sphi 0, %s283
      %s305 = sphi 0, %s307
      %s308 = sphi 0, %s305
      %s309 = sphi 0, %s308
      %s325 = sphi 0, %s309
      %s331 = sphi 0, %s333
      %s334 = sphi 0, %s331
      %s335 = sphi 0, %s334
      %s351 = sphi 0, %s335
      %s357 = sphi 0, %s359
      %s360 = sphi 0, %s357
      %s361 = sphi 0, %s360
      %s377 = sphi 0, %s361
      %s383 = sphi 0, %s385
      %s386 = sphi 0, %s383
      %s387 = sphi 0, %s386
      %s403 = sphi 0, %s387
      %s409 = sphi 0, %s411
      %s412 = sphi 0, %s409
      %s413 = sphi 0, %s412
      %s429 = sphi 0, %s413
      %s435 = sphi 0, %s437
      %s438 = sphi 0, %s435
      %s439 = sphi 0, %s438
      %s455 = sphi 0, %s439
      %s461 = sphi 0, %s463
      %s464 = sphi 0, %s461
      %s465 = sphi 0, %s464
      %s481 = sphi 0, %s465
      %s487 = sphi 0, %s489
      %s490 = sphi 0, %s487
      %s491 = sphi 0, %s490
      %s507 = sphi 0, %s491
      %s513 = sphi 0, %s515
      %s516 = sphi 0, %s513
      %s517 = sphi 0, %s516
      %s533 = sphi 0, %s517
      %s539 = sphi 0, %s541
      %s542 = sphi 0, %s539
      %s543 = sphi 0, %s542
      %s559 = sphi 0, %s543
      %s565 = sphi 0, %s567
      %s568 = sphi 0, %s565
      %s569 = sphi 0, %s568
      %s585 = sphi 0, %s569
      %s591 = sphi 0, %s593
      %s594 = sphi 0, %s591
      %s595 = sphi 0, %s594
      %s611 = sphi 0, %s595
    $region4: #{tpu_custom_call.1} parent=1 // loop_header_branch
      %34 = sbr.rel (%p32) target = $region8
    $region5: #{tpu_custom_call.1} parent=1 // loop_body
      %s36 = ssub.s32 %s31, 1
      %s37 = ssub.s32 %s31, 2
      %s44 = sadd.s32 1, %s39
      %p45 = scmp.ge.s32.totalorder %s44, 2
      %s46 = scalar_select %p45, 0, %s44
      %s47 = sadd.s32 1, %s38
      %s48 = scalar_select %p45, %s47, %s38
      %p49 = scmp.ge.s32.totalorder %s48, 1
      %s50 = scalar_select %p49, 0, %s48
      %s51 = ssub.s32 %s38, %s50
      %p52 = scmp.eq.s32.totalorder %s51, 0
      %s54 = sadd.s32 %s53, 1
      %s55 = scalar_select %p52, %s53, %s54
      %p58 = pneg %p52
      %p59 = scmp.eq.s32.totalorder %s31, 1
      %p60 = por %p58, %p59
      %p61 = scmp.ne.s32.totalorder %s53, %s56
      %p62 = scmp.eq.s32.totalorder %s31, 0
      %p63 = por %p61, %p62
      %p64 = scmp.ne.s32.totalorder %s53, %s56
      %p65 = scmp.eq.s32.totalorder %s36, 1
      %p66 = por %p64, %p65
      %p67 = scmp.ne.s32.totalorder %s56, %s57
      %p68 = scmp.eq.s32.totalorder %s36, 0
      %p69 = por %p67, %p68
      %p70 = scmp.ne.s32.totalorder %s56, %s57
      %p71 = scmp.eq.s32.totalorder %s37, 1
      %p72 = por %p70, %p71
      %p74 = scmp.ne.s32.totalorder %s57, %s73
      %p75 = scmp.eq.s32.totalorder %s37, 0
      %p76 = por %p74, %p75
      %s77 = ssub.s32 %s38, %s50
      %p78 = scmp.eq.s32.totalorder %s77, 0
      %s80 = sadd.s32 %s79, 1
      %s81 = scalar_select %p78, %s79, %s80
      %p84 = pneg %p78
      %p85 = scmp.eq.s32.totalorder %s31, 1
      %p86 = por %p84, %p85
      %p87 = scmp.ne.s32.totalorder %s79, %s82
      %p88 = scmp.eq.s32.totalorder %s31, 0
      %p89 = por %p87, %p88
      %p90 = scmp.ne.s32.totalorder %s79, %s82
      %p91 = scmp.eq.s32.totalorder %s36, 1
      %p92 = por %p90, %p91
      %p93 = scmp.ne.s32.totalorder %s82, %s83
      %p94 = scmp.eq.s32.totalorder %s36, 0
      %p95 = por %p93, %p94
      %p96 = scmp.ne.s32.totalorder %s82, %s83
      %p97 = scmp.eq.s32.totalorder %s37, 1
      %p98 = por %p96, %p97
      %p100 = scmp.ne.s32.totalorder %s83, %s99
      %p101 = scmp.eq.s32.totalorder %s37, 0
      %p102 = por %p100, %p101
      %s104 = sadd.s32 %s103, 1
      %p107 = scmp.eq.s32.totalorder %s31, 1
      %p108 = scmp.ne.s32.totalorder %s103, %s105
      %p109 = scmp.eq.s32.totalorder %s31, 0
      %p110 = por %p108, %p109
      %p111 = scmp.ne.s32.totalorder %s103, %s105
      %p112 = scmp.eq.s32.totalorder %s36, 1
      %p113 = por %p111, %p112
      %p114 = scmp.ne.s32.totalorder %s105, %s106
      %p115 = scmp.eq.s32.totalorder %s36, 0
      %p116 = por %p114, %p115
      %p117 = scmp.ne.s32.totalorder %s105, %s106
      %p118 = scmp.eq.s32.totalorder %s37, 1
      %p119 = por %p117, %p118
      %p121 = scmp.ne.s32.totalorder %s106, %s120
      %p122 = scmp.eq.s32.totalorder %s37, 0
      %p123 = por %p121, %p122
      %s125 = sadd.s32 %s124, 1
      %p128 = scmp.eq.s32.totalorder %s31, 1
      %p129 = scmp.ne.s32.totalorder %s124, %s126
      %p130 = scmp.eq.s32.totalorder %s31, 0
      %p131 = por %p129, %p130
      %p132 = scmp.ne.s32.totalorder %s124, %s126
      %p133 = scmp.eq.s32.totalorder %s36, 1
      %p134 = por %p132, %p133
      %p135 = scmp.ne.s32.totalorder %s126, %s127
      %p136 = scmp.eq.s32.totalorder %s36, 0
      %p137 = por %p135, %p136
      %p138 = scmp.ne.s32.totalorder %s126, %s127
      %p139 = scmp.eq.s32.totalorder %s37, 1
      %p140 = por %p138, %p139
      %p142 = scmp.ne.s32.totalorder %s127, %s141
      %p143 = scmp.eq.s32.totalorder %s37, 0
      %p144 = por %p142, %p143
      %s145 = ssub.s32 %s39, %s46
      %s146 = ssub.s32 %s38, %s50
      %s147 = sor.u32 %s145, %s146
      %p148 = scmp.eq.s32.totalorder %s147, 0
      %s150 = sadd.s32 %s149, 1
      %s151 = scalar_select %p148, %s149, %s150
      %p154 = pneg %p148
      %p155 = scmp.eq.s32.totalorder %s31, 1
      %p156 = por %p154, %p155
      %p157 = scmp.ne.s32.totalorder %s149, %s152
      %p158 = scmp.eq.s32.totalorder %s31, 0
      %p159 = por %p157, %p158
      %p160 = scmp.ne.s32.totalorder %s149, %s152
      %p161 = scmp.eq.s32.totalorder %s36, 1
      %p162 = por %p160, %p161
      %p163 = scmp.ne.s32.totalorder %s152, %s153
      %p164 = scmp.eq.s32.totalorder %s36, 0
      %p165 = por %p163, %p164
      %p166 = scmp.ne.s32.totalorder %s152, %s153
      %p167 = scmp.eq.s32.totalorder %s37, 1
      %p168 = por %p166, %p167
      %p170 = scmp.ne.s32.totalorder %s153, %s169
      %p171 = scmp.eq.s32.totalorder %s37, 0
      %p172 = por %p170, %p171
      %s173 = ssub.s32 %s39, %s46
      %p174 = scmp.eq.s32.totalorder %s173, 0
      %s176 = sadd.s32 %s175, 1
      %s177 = scalar_select %p174, %s175, %s176
      %p180 = pneg %p174
      %p181 = scmp.eq.s32.totalorder %s31, 1
      %p182 = por %p180, %p181
      %p183 = scmp.ne.s32.totalorder %s175, %s178
      %p184 = scmp.eq.s32.totalorder %s31, 0
      %p185 = por %p183, %p184
      %p186 = scmp.ne.s32.totalorder %s175, %s178
      %p187 = scmp.eq.s32.totalorder %s36, 1
      %p188 = por %p186, %p187
      %p189 = scmp.ne.s32.totalorder %s178, %s179
      %p190 = scmp.eq.s32.totalorder %s36, 0
      %p191 = por %p189, %p190
      %p192 = scmp.ne.s32.totalorder %s178, %s179
      %p193 = scmp.eq.s32.totalorder %s37, 1
      %p194 = por %p192, %p193
      %p196 = scmp.ne.s32.totalorder %s179, %s195
      %p197 = scmp.eq.s32.totalorder %s37, 0
      %p198 = por %p196, %p197
      %s199 = ssub.s32 %s39, %s46
      %p200 = scmp.eq.s32.totalorder %s199, 0
      %s202 = sadd.s32 %s201, 1
      %s203 = scalar_select %p200, %s201, %s202
      %p206 = pneg %p200
      %p207 = scmp.eq.s32.totalorder %s31, 1
      %p208 = por %p206, %p207
      %p209 = scmp.ne.s32.totalorder %s201, %s204
      %p210 = scmp.eq.s32.totalorder %s31, 0
      %p211 = por %p209, %p210
      %p212 = scmp.ne.s32.totalorder %s201, %s204
      %p213 = scmp.eq.s32.totalorder %s36, 1
      %p214 = por %p212, %p213
      %p215 = scmp.ne.s32.totalorder %s204, %s205
      %p216 = scmp.eq.s32.totalorder %s36, 0
      %p217 = por %p215, %p216
      %p218 = scmp.ne.s32.totalorder %s204, %s205
      %p219 = scmp.eq.s32.totalorder %s37, 1
      %p220 = por %p218, %p219
      %p222 = scmp.ne.s32.totalorder %s205, %s221
      %p223 = scmp.eq.s32.totalorder %s37, 0
      %p224 = por %p222, %p223
      %s225 = ssub.s32 %s39, %s46
      %p226 = scmp.eq.s32.totalorder %s225, 0
      %s228 = sadd.s32 %s227, 1
      %s229 = scalar_select %p226, %s227, %s228
      %p232 = pneg %p226
      %p233 = scmp.eq.s32.totalorder %s31, 1
      %p234 = por %p232, %p233
      %p235 = scmp.ne.s32.totalorder %s227, %s230
      %p236 = scmp.eq.s32.totalorder %s31, 0
      %p237 = por %p235, %p236
      %p238 = scmp.ne.s32.totalorder %s227, %s230
      %p239 = scmp.eq.s32.totalorder %s36, 1
      %p240 = por %p238, %p239
      %p241 = scmp.ne.s32.totalorder %s230, %s231
      %p242 = scmp.eq.s32.totalorder %s36, 0
      %p243 = por %p241, %p242
      %p244 = scmp.ne.s32.totalorder %s230, %s231
      %p245 = scmp.eq.s32.totalorder %s37, 1
      %p246 = por %p244, %p245
      %p248 = scmp.ne.s32.totalorder %s231, %s247
      %p249 = scmp.eq.s32.totalorder %s37, 0
      %p250 = por %p248, %p249
      %s251 = ssub.s32 %s39, %s46
      %p252 = scmp.eq.s32.totalorder %s251, 0
      %s254 = sadd.s32 %s253, 1
      %s255 = scalar_select %p252, %s253, %s254
      %p258 = pneg %p252
      %p259 = scmp.eq.s32.totalorder %s31, 1
      %p260 = por %p258, %p259
      %p261 = scmp.ne.s32.totalorder %s253, %s256
      %p262 = scmp.eq.s32.totalorder %s31, 0
      %p263 = por %p261, %p262
      %p264 = scmp.ne.s32.totalorder %s253, %s256
      %p265 = scmp.eq.s32.totalorder %s36, 1
      %p266 = por %p264, %p265
      %p267 = scmp.ne.s32.totalorder %s256, %s257
      %p268 = scmp.eq.s32.totalorder %s36, 0
      %p269 = por %p267, %p268
      %p270 = scmp.ne.s32.totalorder %s256, %s257
      %p271 = scmp.eq.s32.totalorder %s37, 1
      %p272 = por %p270, %p271
      %p274 = scmp.ne.s32.totalorder %s257, %s273
      %p275 = scmp.eq.s32.totalorder %s37, 0
      %p276 = por %p274, %p275
      %s277 = ssub.s32 %s39, %s46
      %p278 = scmp.eq.s32.totalorder %s277, 0
      %s280 = sadd.s32 %s279, 1
      %s281 = scalar_select %p278, %s279, %s280
      %p284 = pneg %p278
      %p285 = scmp.eq.s32.totalorder %s31, 1
      %p286 = por %p284, %p285
      %p287 = scmp.ne.s32.totalorder %s279, %s282
      %p288 = scmp.eq.s32.totalorder %s31, 0
      %p289 = por %p287, %p288
      %p290 = scmp.ne.s32.totalorder %s279, %s282
      %p291 = scmp.eq.s32.totalorder %s36, 1
      %p292 = por %p290, %p291
      %p293 = scmp.ne.s32.totalorder %s282, %s283
      %p294 = scmp.eq.s32.totalorder %s36, 0
      %p295 = por %p293, %p294
      %p296 = scmp.ne.s32.totalorder %s282, %s283
      %p297 = scmp.eq.s32.totalorder %s37, 1
      %p298 = por %p296, %p297
      %p300 = scmp.ne.s32.totalorder %s283, %s299
      %p301 = scmp.eq.s32.totalorder %s37, 0
      %p302 = por %p300, %p301
      %s303 = ssub.s32 %s39, %s46
      %p304 = scmp.eq.s32.totalorder %s303, 0
      %s306 = sadd.s32 %s305, 1
      %s307 = scalar_select %p304, %s305, %s306
      %p310 = pneg %p304
      %p311 = scmp.eq.s32.totalorder %s31, 1
      %p312 = por %p310, %p311
      %p313 = scmp.ne.s32.totalorder %s305, %s308
      %p314 = scmp.eq.s32.totalorder %s31, 0
      %p315 = por %p313, %p314
      %p316 = scmp.ne.s32.totalorder %s305, %s308
      %p317 = scmp.eq.s32.totalorder %s36, 1
      %p318 = por %p316, %p317
      %p319 = scmp.ne.s32.totalorder %s308, %s309
      %p320 = scmp.eq.s32.totalorder %s36, 0
      %p321 = por %p319, %p320
      %p322 = scmp.ne.s32.totalorder %s308, %s309
      %p323 = scmp.eq.s32.totalorder %s37, 1
      %p324 = por %p322, %p323
      %p326 = scmp.ne.s32.totalorder %s309, %s325
      %p327 = scmp.eq.s32.totalorder %s37, 0
      %p328 = por %p326, %p327
      %s329 = ssub.s32 %s39, %s46
      %p330 = scmp.eq.s32.totalorder %s329, 0
      %s332 = sadd.s32 %s331, 1
      %s333 = scalar_select %p330, %s331, %s332
      %p336 = pneg %p330
      %p337 = scmp.eq.s32.totalorder %s31, 1
      %p338 = por %p336, %p337
      %p339 = scmp.ne.s32.totalorder %s331, %s334
      %p340 = scmp.eq.s32.totalorder %s31, 0
      %p341 = por %p339, %p340
      %p342 = scmp.ne.s32.totalorder %s331, %s334
      %p343 = scmp.eq.s32.totalorder %s36, 1
      %p344 = por %p342, %p343
      %p345 = scmp.ne.s32.totalorder %s334, %s335
      %p346 = scmp.eq.s32.totalorder %s36, 0
      %p347 = por %p345, %p346
      %p348 = scmp.ne.s32.totalorder %s334, %s335
      %p349 = scmp.eq.s32.totalorder %s37, 1
      %p350 = por %p348, %p349
      %p352 = scmp.ne.s32.totalorder %s335, %s351
      %p353 = scmp.eq.s32.totalorder %s37, 0
      %p354 = por %p352, %p353
      %s355 = ssub.s32 %s39, %s46
      %p356 = scmp.eq.s32.totalorder %s355, 0
      %s358 = sadd.s32 %s357, 1
      %s359 = scalar_select %p356, %s357, %s358
      %p362 = pneg %p356
      %p363 = scmp.eq.s32.totalorder %s31, 1
      %p364 = por %p362, %p363
      %p365 = scmp.ne.s32.totalorder %s357, %s360
      %p366 = scmp.eq.s32.totalorder %s31, 0
      %p367 = por %p365, %p366
      %p368 = scmp.ne.s32.totalorder %s357, %s360
      %p369 = scmp.eq.s32.totalorder %s36, 1
      %p370 = por %p368, %p369
      %p371 = scmp.ne.s32.totalorder %s360, %s361
      %p372 = scmp.eq.s32.totalorder %s36, 0
      %p373 = por %p371, %p372
      %p374 = scmp.ne.s32.totalorder %s360, %s361
      %p375 = scmp.eq.s32.totalorder %s37, 1
      %p376 = por %p374, %p375
      %p378 = scmp.ne.s32.totalorder %s361, %s377
      %p379 = scmp.eq.s32.totalorder %s37, 0
      %p380 = por %p378, %p379
      %s381 = ssub.s32 %s39, %s46
      %p382 = scmp.eq.s32.totalorder %s381, 0
      %s384 = sadd.s32 %s383, 1
      %s385 = scalar_select %p382, %s383, %s384
      %p388 = pneg %p382
      %p389 = scmp.eq.s32.totalorder %s31, 1
      %p390 = por %p388, %p389
      %p391 = scmp.ne.s32.totalorder %s383, %s386
      %p392 = scmp.eq.s32.totalorder %s31, 0
      %p393 = por %p391, %p392
      %p394 = scmp.ne.s32.totalorder %s383, %s386
      %p395 = scmp.eq.s32.totalorder %s36, 1
      %p396 = por %p394, %p395
      %p397 = scmp.ne.s32.totalorder %s386, %s387
      %p398 = scmp.eq.s32.totalorder %s36, 0
      %p399 = por %p397, %p398
      %p400 = scmp.ne.s32.totalorder %s386, %s387
      %p401 = scmp.eq.s32.totalorder %s37, 1
      %p402 = por %p400, %p401
      %p404 = scmp.ne.s32.totalorder %s387, %s403
      %p405 = scmp.eq.s32.totalorder %s37, 0
      %p406 = por %p404, %p405
      %s407 = ssub.s32 %s39, %s46
      %p408 = scmp.eq.s32.totalorder %s407, 0
      %s410 = sadd.s32 %s409, 1
      %s411 = scalar_select %p408, %s409, %s410
      %p414 = pneg %p408
      %p415 = scmp.eq.s32.totalorder %s31, 1
      %p416 = por %p414, %p415
      %p417 = scmp.ne.s32.totalorder %s409, %s412
      %p418 = scmp.eq.s32.totalorder %s31, 0
      %p419 = por %p417, %p418
      %p420 = scmp.ne.s32.totalorder %s409, %s412
      %p421 = scmp.eq.s32.totalorder %s36, 1
      %p422 = por %p420, %p421
      %p423 = scmp.ne.s32.totalorder %s412, %s413
      %p424 = scmp.eq.s32.totalorder %s36, 0
      %p425 = por %p423, %p424
      %p426 = scmp.ne.s32.totalorder %s412, %s413
      %p427 = scmp.eq.s32.totalorder %s37, 1
      %p428 = por %p426, %p427
      %p430 = scmp.ne.s32.totalorder %s413, %s429
      %p431 = scmp.eq.s32.totalorder %s37, 0
      %p432 = por %p430, %p431
      %s433 = ssub.s32 %s39, %s46
      %p434 = scmp.eq.s32.totalorder %s433, 0
      %s436 = sadd.s32 %s435, 1
      %s437 = scalar_select %p434, %s435, %s436
      %p440 = pneg %p434
      %p441 = scmp.eq.s32.totalorder %s31, 1
      %p442 = por %p440, %p441
      %p443 = scmp.ne.s32.totalorder %s435, %s438
      %p444 = scmp.eq.s32.totalorder %s31, 0
      %p445 = por %p443, %p444
      %p446 = scmp.ne.s32.totalorder %s435, %s438
      %p447 = scmp.eq.s32.totalorder %s36, 1
      %p448 = por %p446, %p447
      %p449 = scmp.ne.s32.totalorder %s438, %s439
      %p450 = scmp.eq.s32.totalorder %s36, 0
      %p451 = por %p449, %p450
      %p452 = scmp.ne.s32.totalorder %s438, %s439
      %p453 = scmp.eq.s32.totalorder %s37, 1
      %p454 = por %p452, %p453
      %p456 = scmp.ne.s32.totalorder %s439, %s455
      %p457 = scmp.eq.s32.totalorder %s37, 0
      %p458 = por %p456, %p457
      %s459 = ssub.s32 %s39, %s46
      %p460 = scmp.eq.s32.totalorder %s459, 0
      %s462 = sadd.s32 %s461, 1
      %s463 = scalar_select %p460, %s461, %s462
      %p466 = pneg %p460
      %p467 = scmp.eq.s32.totalorder %s31, 1
      %p468 = por %p466, %p467
      %p469 = scmp.ne.s32.totalorder %s461, %s464
      %p470 = scmp.eq.s32.totalorder %s31, 0
      %p471 = por %p469, %p470
      %p472 = scmp.ne.s32.totalorder %s461, %s464
      %p473 = scmp.eq.s32.totalorder %s36, 1
      %p474 = por %p472, %p473
      %p475 = scmp.ne.s32.totalorder %s464, %s465
      %p476 = scmp.eq.s32.totalorder %s36, 0
      %p477 = por %p475, %p476
      %p478 = scmp.ne.s32.totalorder %s464, %s465
      %p479 = scmp.eq.s32.totalorder %s37, 1
      %p480 = por %p478, %p479
      %p482 = scmp.ne.s32.totalorder %s465, %s481
      %p483 = scmp.eq.s32.totalorder %s37, 0
      %p484 = por %p482, %p483
      %s485 = ssub.s32 %s39, %s46
      %p486 = scmp.eq.s32.totalorder %s485, 0
      %s488 = sadd.s32 %s487, 1
      %s489 = scalar_select %p486, %s487, %s488
      %p492 = pneg %p486
      %p493 = scmp.eq.s32.totalorder %s31, 1
      %p494 = por %p492, %p493
      %p495 = scmp.ne.s32.totalorder %s487, %s490
      %p496 = scmp.eq.s32.totalorder %s31, 0
      %p497 = por %p495, %p496
      %p498 = scmp.ne.s32.totalorder %s487, %s490
      %p499 = scmp.eq.s32.totalorder %s36, 1
      %p500 = por %p498, %p499
      %p501 = scmp.ne.s32.totalorder %s490, %s491
      %p502 = scmp.eq.s32.totalorder %s36, 0
      %p503 = por %p501, %p502
      %p504 = scmp.ne.s32.totalorder %s490, %s491
      %p505 = scmp.eq.s32.totalorder %s37, 1
      %p506 = por %p504, %p505
      %p508 = scmp.ne.s32.totalorder %s491, %s507
      %p509 = scmp.eq.s32.totalorder %s37, 0
      %p510 = por %p508, %p509
      %s511 = ssub.s32 %s39, %s46
      %p512 = scmp.eq.s32.totalorder %s511, 0
      %s514 = sadd.s32 %s513, 1
      %s515 = scalar_select %p512, %s513, %s514
      %p518 = pneg %p512
      %p519 = scmp.eq.s32.totalorder %s31, 1
      %p520 = por %p518, %p519
      %p521 = scmp.ne.s32.totalorder %s513, %s516
      %p522 = scmp.eq.s32.totalorder %s31, 0
      %p523 = por %p521, %p522
      %p524 = scmp.ne.s32.totalorder %s513, %s516
      %p525 = scmp.eq.s32.totalorder %s36, 1
      %p526 = por %p524, %p525
      %p527 = scmp.ne.s32.totalorder %s516, %s517
      %p528 = scmp.eq.s32.totalorder %s36, 0
      %p529 = por %p527, %p528
      %p530 = scmp.ne.s32.totalorder %s516, %s517
      %p531 = scmp.eq.s32.totalorder %s37, 1
      %p532 = por %p530, %p531
      %p534 = scmp.ne.s32.totalorder %s517, %s533
      %p535 = scmp.eq.s32.totalorder %s37, 0
      %p536 = por %p534, %p535
      %s537 = ssub.s32 %s39, %s46
      %p538 = scmp.eq.s32.totalorder %s537, 0
      %s540 = sadd.s32 %s539, 1
      %s541 = scalar_select %p538, %s539, %s540
      %p544 = pneg %p538
      %p545 = scmp.eq.s32.totalorder %s31, 1
      %p546 = por %p544, %p545
      %p547 = scmp.ne.s32.totalorder %s539, %s542
      %p548 = scmp.eq.s32.totalorder %s31, 0
      %p549 = por %p547, %p548
      %p550 = scmp.ne.s32.totalorder %s539, %s542
      %p551 = scmp.eq.s32.totalorder %s36, 1
      %p552 = por %p550, %p551
      %p553 = scmp.ne.s32.totalorder %s542, %s543
      %p554 = scmp.eq.s32.totalorder %s36, 0
      %p555 = por %p553, %p554
      %p556 = scmp.ne.s32.totalorder %s542, %s543
      %p557 = scmp.eq.s32.totalorder %s37, 1
      %p558 = por %p556, %p557
      %p560 = scmp.ne.s32.totalorder %s543, %s559
      %p561 = scmp.eq.s32.totalorder %s37, 0
      %p562 = por %p560, %p561
      %s563 = ssub.s32 %s39, %s46
      %p564 = scmp.eq.s32.totalorder %s563, 0
      %s566 = sadd.s32 %s565, 1
      %s567 = scalar_select %p564, %s565, %s566
      %p570 = pneg %p564
      %p571 = scmp.eq.s32.totalorder %s31, 1
      %p572 = por %p570, %p571
      %p573 = scmp.ne.s32.totalorder %s565, %s568
      %p574 = scmp.eq.s32.totalorder %s31, 0
      %p575 = por %p573, %p574
      %p576 = scmp.ne.s32.totalorder %s565, %s568
      %p577 = scmp.eq.s32.totalorder %s36, 1
      %p578 = por %p576, %p577
      %p579 = scmp.ne.s32.totalorder %s568, %s569
      %p580 = scmp.eq.s32.totalorder %s36, 0
      %p581 = por %p579, %p580
      %p582 = scmp.ne.s32.totalorder %s568, %s569
      %p583 = scmp.eq.s32.totalorder %s37, 1
      %p584 = por %p582, %p583
      %p586 = scmp.ne.s32.totalorder %s569, %s585
      %p587 = scmp.eq.s32.totalorder %s37, 0
      %p588 = por %p586, %p587
      %s589 = ssub.s32 %s38, %s50
      %p590 = scmp.eq.s32.totalorder %s589, 0
      %s592 = sadd.s32 %s591, 1
      %s593 = scalar_select %p590, %s591, %s592
      %p596 = pneg %p590
      %p597 = scmp.eq.s32.totalorder %s31, 1
      %p598 = por %p596, %p597
      %p599 = scmp.ne.s32.totalorder %s591, %s594
      %p600 = scmp.eq.s32.totalorder %s31, 0
      %p601 = por %p599, %p600
      %p602 = scmp.ne.s32.totalorder %s591, %s594
      %p603 = scmp.eq.s32.totalorder %s36, 1
      %p604 = por %p602, %p603
      %p605 = scmp.ne.s32.totalorder %s594, %s595
      %p606 = scmp.eq.s32.totalorder %s36, 0
      %p607 = por %p605, %p606
      %p608 = scmp.ne.s32.totalorder %s594, %s595
      %p609 = scmp.eq.s32.totalorder %s37, 1
      %p610 = por %p608, %p609
      %p612 = scmp.ne.s32.totalorder %s595, %s611
      %p613 = scmp.eq.s32.totalorder %s37, 0
      %p614 = por %p612, %p613
      %p615 = scmp.le.s32.totalorder 1, %s31
      %p616 = scmp.lt.s32.totalorder %s31, 3
      %p617 = pnand %p615, %p616
      %p618 = pneg %p617
      // Predicated region
      $region9: #{tpu_custom_call.1} parent=5 // pred_check
        _
      $region10: #{tpu_custom_call.1} parent=5 // pred_check_branch
        %620 = sbr.rel (%p617) target = $region12
      $region11: #{tpu_custom_call.1} parent=5 // pred_region
        %s621 = ssub.s32 %s31, 1
        // Predicated region
        $region13: #{tpu_custom_call.1} parent=11 // pred_check
          %p622 = pneg %p69
        $region14: #{tpu_custom_call.1} parent=11 // pred_check_branch
          %624 = sbr.rel (%p622) target = $region16
        $region15: #{tpu_custom_call.1} parent=11 // pred_region
          %s625 = smul.u32 2, %s40
          %627 = vsyncadd [#allocation7], 0
          %s628 = smul.addr %s625, 2
          %s629 = smul.addr %s628, 4
          %s630 = scalar_lea.hbm %s0, %s629
          %s631 = sshll.u32 %s630, 4
          %s632 = int_to_ptr.hbm [resolvable:$true] %s631
          %s633 = sshll.u32 [#allocation6], 4
          %s634 = int_to_ptr.vmem [resolvable:$true] %s633
          %639 = dma.hbm_to_vmem [thread:$0]  %s632, 256, %s634, [#allocation7], 128, 128, 8
        $region16: #{tpu_custom_call.1} parent=11 // pred_fallthru
          _
        // Predicated region
        $region17: #{tpu_custom_call.1} parent=11 // pred_check
          %p640 = pneg %p95
        $region18: #{tpu_custom_call.1} parent=11 // pred_check_branch
          %642 = sbr.rel (%p640) target = $region20
        $region19: #{tpu_custom_call.1} parent=11 // pred_region
          %s643 = smul.u32 2, %s40
          %645 = vsyncadd [#allocation10], 0
          %s646 = scalar_lea.hbm %s1, %s643
          %s647 = sshll.u32 %s646, 4
          %s648 = int_to_ptr.hbm [resolvable:$true] %s647
          %s649 = sshll.u32 [#allocation9], 4
          %s650 = int_to_ptr.vmem [resolvable:$true] %s649
          %655 = dma.hbm_to_vmem [thread:$0]  %s648, 32, %s650, [#allocation10], 16, 16, 1
        $region20: #{tpu_custom_call.1} parent=11 // pred_fallthru
          _
        // Predicated region
        $region21: #{tpu_custom_call.1} parent=11 // pred_check
          %p656 = pneg %p116
        $region22: #{tpu_custom_call.1} parent=11 // pred_check_branch
          %658 = sbr.rel (%p656) target = $region24
        $region23: #{tpu_custom_call.1} parent=11 // pred_region
          %660 = vsyncadd [#allocation10], 0
          %s662 = sshll.u32 %s2, 4
          %s663 = int_to_ptr.hbm [resolvable:$true] %s662
          %s664 = sshll.u32 [#allocation11], 4
          %s665 = int_to_ptr.vmem [resolvable:$true] %s664
          %667 = dma.hbm_to_vmem [thread:$0]  %s663, 32, %s665, [#allocation10]
        $region24: #{tpu_custom_call.1} parent=11 // pred_fallthru
          _
        // Predicated region
        $region25: #{tpu_custom_call.1} parent=11 // pred_check
          %p668 = pneg %p137
        $region26: #{tpu_custom_call.1} parent=11 // pred_check_branch
          %670 = sbr.rel (%p668) target = $region28
        $region27: #{tpu_custom_call.1} parent=11 // pred_region
          %672 = vsyncadd [#allocation13], 0
          %s674 = sshll.u32 %s3, 4
          %s675 = int_to_ptr.hbm [resolvable:$true] %s674
          %s676 = sshll.u32 [#allocation12], 4
          %s677 = int_to_ptr.vmem [resolvable:$true] %s676
          %679 = dma.hbm_to_vmem [thread:$0]  %s675, 32, %s677, [#allocation13]
        $region28: #{tpu_custom_call.1} parent=11 // pred_fallthru
          _
      $region12: #{tpu_custom_call.1} parent=5 // pred_fallthru
        _
      %p680 = scmp.lt.s32.totalorder %s31, 2
      // Predicated region
      $region29: #{tpu_custom_call.1} parent=5 // pred_check
        %p681 = pneg %p680
      $region30: #{tpu_custom_call.1} parent=5 // pred_check_branch
        %683 = sbr.rel (%p681) target = $region32
      $region31: #{tpu_custom_call.1} parent=5 // pred_region
        // Predicated region
        $region33: #{tpu_custom_call.1} parent=31 // pred_check
          %p684 = pneg %p159
        $region34: #{tpu_custom_call.1} parent=31 // pred_check_branch
          %686 = sbr.rel (%p684) target = $region36
        $region35: #{tpu_custom_call.1} parent=31 // pred_region
          %s687 = sand.u32 %s31, 1
          %s688 = scalar_lea.sflag [#allocation7], %s687
          %s689 = sand.u32 %s149, 1
          %s690 = smul.addr %s689, 16
          %s691 = scalar_lea.vmem [#allocation14], %s690
          %s692 = smul.u32 2, %s38
          %694 = vsyncadd %s688, 0
          %s695 = smul.addr %s692, 2
          %s696 = smul.addr %s39, 4
          %s697 = sadd.s32 %s695, %s696
          %s698 = smul.addr %s697, 4
          %s699 = scalar_lea.hbm %s4, %s698
          %s700 = sshll.u32 %s699, 4
          %s701 = int_to_ptr.hbm [resolvable:$true] %s700
          %s702 = sshll.u32 %s691, 4
          %s703 = int_to_ptr.vmem [resolvable:$true] %s702
          %708 = dma.hbm_to_vmem [thread:$0]  %s701, 256, %s703, %s688, 128, 128, 8
        $region36: #{tpu_custom_call.1} parent=31 // pred_fallthru
          _
        // Predicated region
        $region37: #{tpu_custom_call.1} parent=31 // pred_check
          %p709 = pneg %p185
        $region38: #{tpu_custom_call.1} parent=31 // pred_check_branch
          %711 = sbr.rel (%p709) target = $region40
        $region39: #{tpu_custom_call.1} parent=31 // pred_region
          %s712 = sand.u32 %s31, 1
          %s713 = scalar_lea.sflag [#allocation7], %s712
          %s714 = sand.u32 %s175, 1
          %s715 = smul.addr %s714, 256
          %s716 = scalar_lea.vmem [#allocation15], %s715
          %718 = vsyncadd %s713, 0
          %s719 = smul.addr %s39, 64
          %s720 = smul.addr %s719, 4
          %s721 = scalar_lea.hbm %s5, %s720
          %s722 = sshll.u32 %s721, 4
          %s723 = int_to_ptr.hbm [resolvable:$true] %s722
          %s724 = sshll.u32 %s716, 4
          %s725 = int_to_ptr.vmem [resolvable:$true] %s724
          %730 = dma.hbm_to_vmem [thread:$0]  %s723, 4096, %s725, %s713, 128, 128, 8
        $region40: #{tpu_custom_call.1} parent=31 // pred_fallthru
          _
        // Predicated region
        $region41: #{tpu_custom_call.1} parent=31 // pred_check
          %p731 = pneg %p211
        $region42: #{tpu_custom_call.1} parent=31 // pred_check_branch
          %733 = sbr.rel (%p731) target = $region44
        $region43: #{tpu_custom_call.1} parent=31 // pred_region
          %p734 = scmp.lt.s32.totalorder %s39, 1
          %s735 = scalar_select %p734, %s39, 1
          %s736 = smul.addr %s735, 2
          %s737 = scalar_lea.vmem %s6, %s736
        $region44: #{tpu_custom_call.1} parent=31 // pred_fallthru
          _
        // Predicated region
        $region45: #{tpu_custom_call.1} parent=31 // pred_check
          %p738 = pneg %p237
        $region46: #{tpu_custom_call.1} parent=31 // pred_check_branch
          %740 = sbr.rel (%p738) target = $region48
        $region47: #{tpu_custom_call.1} parent=31 // pred_region
          %s741 = sand.u32 %s31, 1
          %s742 = scalar_lea.sflag [#allocation7], %s741
          %s743 = sand.u32 %s227, 1
          %s744 = smul.addr %s743, 256
          %s745 = scalar_lea.vmem [#allocation16], %s744
          %747 = vsyncadd %s742, 0
          %s748 = smul.addr %s39, 64
          %s749 = smul.addr %s748, 4
          %s750 = scalar_lea.hbm %s7, %s749
          %s751 = sshll.u32 %s750, 4
          %s752 = int_to_ptr.hbm [resolvable:$true] %s751
          %s753 = sshll.u32 %s745, 4
          %s754 = int_to_ptr.vmem [resolvable:$true] %s753
          %759 = dma.hbm_to_vmem [thread:$0]  %s752, 4096, %s754, %s742, 128, 128, 8
        $region48: #{tpu_custom_call.1} parent=31 // pred_fallthru
          _
        // Predicated region
        $region49: #{tpu_custom_call.1} parent=31 // pred_check
          %p760 = pneg %p263
        $region50: #{tpu_custom_call.1} parent=31 // pred_check_branch
          %762 = sbr.rel (%p760) target = $region52
        $region51: #{tpu_custom_call.1} parent=31 // pred_region
          %s763 = sand.u32 %s31, 1
          %s764 = scalar_lea.sflag [#allocation7], %s763
          %s765 = sand.u32 %s253, 1
          %s766 = smul.addr %s765, 2
          %s767 = scalar_lea.vmem [#allocation17], %s766
          %769 = vsyncadd %s764, 0
          %s770 = smul.addr %s39, 2
          %s771 = scalar_lea.hbm %s8, %s770
          %s773 = sshll.u32 %s771, 4
          %s774 = int_to_ptr.hbm [resolvable:$true] %s773
          %s775 = sshll.u32 %s767, 4
          %s776 = int_to_ptr.vmem [resolvable:$true] %s775
          %778 = dma.hbm_to_vmem [thread:$0]  %s774, 32, %s776, %s764
        $region52: #{tpu_custom_call.1} parent=31 // pred_fallthru
          _
        // Predicated region
        $region53: #{tpu_custom_call.1} parent=31 // pred_check
          %p779 = pneg %p289
        $region54: #{tpu_custom_call.1} parent=31 // pred_check_branch
          %781 = sbr.rel (%p779) target = $region56
        $region55: #{tpu_custom_call.1} parent=31 // pred_region
          %s782 = sand.u32 %s31, 1
          %s783 = scalar_lea.sflag [#allocation7], %s782
          %s784 = sand.u32 %s279, 1
          %s785 = smul.addr %s784, 256
          %s786 = scalar_lea.vmem [#allocation18], %s785
          %788 = vsyncadd %s783, 0
          %s789 = smul.addr %s39, 64
          %s790 = smul.addr %s789, 4
          %s791 = scalar_lea.hbm %s9, %s790
          %s792 = sshll.u32 %s791, 4
          %s793 = int_to_ptr.hbm [resolvable:$true] %s792
          %s794 = sshll.u32 %s786, 4
          %s795 = int_to_ptr.vmem [resolvable:$true] %s794
          %800 = dma.hbm_to_vmem [thread:$0]  %s793, 4096, %s795, %s783, 128, 128, 8
        $region56: #{tpu_custom_call.1} parent=31 // pred_fallthru
          _
        // Predicated region
        $region57: #{tpu_custom_call.1} parent=31 // pred_check
          %p801 = pneg %p315
        $region58: #{tpu_custom_call.1} parent=31 // pred_check_branch
          %803 = sbr.rel (%p801) target = $region60
        $region59: #{tpu_custom_call.1} parent=31 // pred_region
          %p804 = scmp.lt.s32.totalorder %s39, 1
          %s805 = scalar_select %p804, %s39, 1
          %s806 = smul.addr %s805, 2
          %s807 = scalar_lea.vmem %s10, %s806
        $region60: #{tpu_custom_call.1} parent=31 // pred_fallthru
          _
        // Predicated region
        $region61: #{tpu_custom_call.1} parent=31 // pred_check
          %p808 = pneg %p341
        $region62: #{tpu_custom_call.1} parent=31 // pred_check_branch
          %810 = sbr.rel (%p808) target = $region64
        $region63: #{tpu_custom_call.1} parent=31 // pred_region
          %s811 = sand.u32 %s31, 1
          %s812 = scalar_lea.sflag [#allocation7], %s811
          %s813 = sand.u32 %s331, 1
          %s814 = smul.addr %s813, 256
          %s815 = scalar_lea.vmem [#allocation19], %s814
          %817 = vsyncadd %s812, 0
          %s818 = smul.addr %s39, 64
          %s819 = smul.addr %s818, 4
          %s820 = scalar_lea.hbm %s11, %s819
          %s821 = sshll.u32 %s820, 4
          %s822 = int_to_ptr.hbm [resolvable:$true] %s821
          %s823 = sshll.u32 %s815, 4
          %s824 = int_to_ptr.vmem [resolvable:$true] %s823
          %829 = dma.hbm_to_vmem [thread:$0]  %s822, 4096, %s824, %s812, 128, 128, 8
        $region64: #{tpu_custom_call.1} parent=31 // pred_fallthru
          _
        // Predicated region
        $region65: #{tpu_custom_call.1} parent=31 // pred_check
          %p830 = pneg %p367
        $region66: #{tpu_custom_call.1} parent=31 // pred_check_branch
          %832 = sbr.rel (%p830) target = $region68
        $region67: #{tpu_custom_call.1} parent=31 // pred_region
          %s833 = sand.u32 %s31, 1
          %s834 = scalar_lea.sflag [#allocation7], %s833
          %s835 = sand.u32 %s357, 1
          %s836 = smul.addr %s835, 2
          %s837 = scalar_lea.vmem [#allocation20], %s836
          %839 = vsyncadd %s834, 0
          %s840 = smul.addr %s39, 2
          %s841 = scalar_lea.hbm %s12, %s840
          %s843 = sshll.u32 %s841, 4
          %s844 = int_to_ptr.hbm [resolvable:$true] %s843
          %s845 = sshll.u32 %s837, 4
          %s846 = int_to_ptr.vmem [resolvable:$true] %s845
          %848 = dma.hbm_to_vmem [thread:$0]  %s844, 32, %s846, %s834
        $region68: #{tpu_custom_call.1} parent=31 // pred_fallthru
          _
        // Predicated region
        $region69: #{tpu_custom_call.1} parent=31 // pred_check
          %p849 = pneg %p393
        $region70: #{tpu_custom_call.1} parent=31 // pred_check_branch
          %851 = sbr.rel (%p849) target = $region72
        $region71: #{tpu_custom_call.1} parent=31 // pred_region
          %p852 = scmp.lt.s32.totalorder %s39, 1
          %s853 = scalar_select %p852, %s39, 1
          %s854 = smul.addr %s853, 2
          %s855 = scalar_lea.vmem %s13, %s854
        $region72: #{tpu_custom_call.1} parent=31 // pred_fallthru
          _
        // Predicated region
        $region73: #{tpu_custom_call.1} parent=31 // pred_check
          %p856 = pneg %p419
        $region74: #{tpu_custom_call.1} parent=31 // pred_check_branch
          %858 = sbr.rel (%p856) target = $region76
        $region75: #{tpu_custom_call.1} parent=31 // pred_region
          %s859 = sand.u32 %s31, 1
          %s860 = scalar_lea.sflag [#allocation7], %s859
          %s861 = sand.u32 %s409, 1
          %s862 = smul.addr %s861, 2
          %s863 = scalar_lea.vmem [#allocation21], %s862
          %865 = vsyncadd %s860, 0
          %s866 = smul.addr %s39, 2
          %s867 = scalar_lea.hbm %s14, %s866
          %s869 = sshll.u32 %s867, 4
          %s870 = int_to_ptr.hbm [resolvable:$true] %s869
          %s871 = sshll.u32 %s863, 4
          %s872 = int_to_ptr.vmem [resolvable:$true] %s871
          %874 = dma.hbm_to_vmem [thread:$0]  %s870, 32, %s872, %s860
        $region76: #{tpu_custom_call.1} parent=31 // pred_fallthru
          _
        // Predicated region
        $region77: #{tpu_custom_call.1} parent=31 // pred_check
          %p875 = pneg %p445
        $region78: #{tpu_custom_call.1} parent=31 // pred_check_branch
          %877 = sbr.rel (%p875) target = $region80
        $region79: #{tpu_custom_call.1} parent=31 // pred_region
          %s878 = sand.u32 %s31, 1
          %s879 = scalar_lea.sflag [#allocation7], %s878
          %s880 = sand.u32 %s435, 1
          %s881 = smul.addr %s880, 1024
          %s882 = scalar_lea.vmem [#allocation22], %s881
          %884 = vsyncadd %s879, 0
          %s885 = smul.addr %s39, 256
          %s886 = smul.addr %s885, 4
          %s887 = scalar_lea.hbm %s15, %s886
          %s888 = sshll.u32 %s887, 4
          %s889 = int_to_ptr.hbm [resolvable:$true] %s888
          %s890 = sshll.u32 %s882, 4
          %s891 = int_to_ptr.vmem [resolvable:$true] %s890
          %896 = dma.hbm_to_vmem [thread:$0]  %s889, 16384, %s891, %s879, 512, 512, 32
        $region80: #{tpu_custom_call.1} parent=31 // pred_fallthru
          _
        // Predicated region
        $region81: #{tpu_custom_call.1} parent=31 // pred_check
          %p897 = pneg %p471
        $region82: #{tpu_custom_call.1} parent=31 // pred_check_branch
          %899 = sbr.rel (%p897) target = $region84
        $region83: #{tpu_custom_call.1} parent=31 // pred_region
          %s900 = sand.u32 %s31, 1
          %s901 = scalar_lea.sflag [#allocation7], %s900
          %s902 = sand.u32 %s461, 1
          %s903 = smul.addr %s902, 8
          %s904 = scalar_lea.vmem [#allocation23], %s903
          %906 = vsyncadd %s901, 0
          %s907 = smul.addr %s39, 8
          %s908 = scalar_lea.hbm %s16, %s907
          %s910 = sshll.u32 %s908, 4
          %s911 = int_to_ptr.hbm [resolvable:$true] %s910
          %s912 = sshll.u32 %s904, 4
          %s913 = int_to_ptr.vmem [resolvable:$true] %s912
          %915 = dma.hbm_to_vmem [thread:$0]  %s911, 128, %s913, %s901
        $region84: #{tpu_custom_call.1} parent=31 // pred_fallthru
          _
        // Predicated region
        $region85: #{tpu_custom_call.1} parent=31 // pred_check
          %p916 = pneg %p497
        $region86: #{tpu_custom_call.1} parent=31 // pred_check_branch
          %918 = sbr.rel (%p916) target = $region88
        $region87: #{tpu_custom_call.1} parent=31 // pred_region
          %s919 = sand.u32 %s31, 1
          %s920 = scalar_lea.sflag [#allocation7], %s919
          %s921 = sand.u32 %s487, 1
          %s922 = smul.addr %s921, 1024
          %s923 = scalar_lea.vmem [#allocation24], %s922
          %925 = vsyncadd %s920, 0
          %s926 = smul.addr %s39, 256
          %s927 = smul.addr %s926, 4
          %s928 = scalar_lea.hbm %s17, %s927
          %s929 = sshll.u32 %s928, 4
          %s930 = int_to_ptr.hbm [resolvable:$true] %s929
          %s931 = sshll.u32 %s923, 4
          %s932 = int_to_ptr.vmem [resolvable:$true] %s931
          %937 = dma.hbm_to_vmem [thread:$0]  %s930, 16384, %s932, %s920, 128, 128, 8
        $region88: #{tpu_custom_call.1} parent=31 // pred_fallthru
          _
        // Predicated region
        $region89: #{tpu_custom_call.1} parent=31 // pred_check
          %p938 = pneg %p523
        $region90: #{tpu_custom_call.1} parent=31 // pred_check_branch
          %940 = sbr.rel (%p938) target = $region92
        $region91: #{tpu_custom_call.1} parent=31 // pred_region
          %p941 = scmp.lt.s32.totalorder %s39, 1
          %s942 = scalar_select %p941, %s39, 1
          %s943 = smul.addr %s942, 2
          %s944 = scalar_lea.vmem %s18, %s943
        $region92: #{tpu_custom_call.1} parent=31 // pred_fallthru
          _
        // Predicated region
        $region93: #{tpu_custom_call.1} parent=31 // pred_check
          %p945 = pneg %p549
        $region94: #{tpu_custom_call.1} parent=31 // pred_check_branch
          %947 = sbr.rel (%p945) target = $region96
        $region95: #{tpu_custom_call.1} parent=31 // pred_region
          %s948 = sand.u32 %s31, 1
          %s949 = scalar_lea.sflag [#allocation7], %s948
          %s950 = sand.u32 %s539, 1
          %s951 = smul.addr %s950, 2
          %s952 = scalar_lea.vmem [#allocation25], %s951
          %954 = vsyncadd %s949, 0
          %s955 = smul.addr %s39, 2
          %s956 = scalar_lea.hbm %s19, %s955
          %s958 = sshll.u32 %s956, 4
          %s959 = int_to_ptr.hbm [resolvable:$true] %s958
          %s960 = sshll.u32 %s952, 4
          %s961 = int_to_ptr.vmem [resolvable:$true] %s960
          %963 = dma.hbm_to_vmem [thread:$0]  %s959, 32, %s961, %s949
        $region96: #{tpu_custom_call.1} parent=31 // pred_fallthru
          _
        // Predicated region
        $region97: #{tpu_custom_call.1} parent=31 // pred_check
          %p964 = pneg %p575
        $region98: #{tpu_custom_call.1} parent=31 // pred_check_branch
          %966 = sbr.rel (%p964) target = $region100
        $region99: #{tpu_custom_call.1} parent=31 // pred_region
          %s967 = sand.u32 %s31, 1
          %s968 = scalar_lea.sflag [#allocation7], %s967
          %s969 = sand.u32 %s565, 1
          %s970 = smul.addr %s969, 2
          %s971 = scalar_lea.vmem [#allocation26], %s970
          %973 = vsyncadd %s968, 0
          %s974 = smul.addr %s39, 2
          %s975 = scalar_lea.hbm %s20, %s974
          %s977 = sshll.u32 %s975, 4
          %s978 = int_to_ptr.hbm [resolvable:$true] %s977
          %s979 = sshll.u32 %s971, 4
          %s980 = int_to_ptr.vmem [resolvable:$true] %s979
          %982 = dma.hbm_to_vmem [thread:$0]  %s978, 32, %s980, %s968
        $region100: #{tpu_custom_call.1} parent=31 // pred_fallthru
          _
      $region32: #{tpu_custom_call.1} parent=5 // pred_fallthru
        _
      %p983 = scmp.le.s32.totalorder 1, %s31
      %p984 = scmp.lt.s32.totalorder %s31, 3
      %p985 = pnand %p983, %p984
      %p986 = pneg %p985
      // Predicated region
      $region101: #{tpu_custom_call.1} parent=5 // pred_check
        _
      $region102: #{tpu_custom_call.1} parent=5 // pred_check_branch
        %988 = sbr.rel (%p985) target = $region104
      $region103: #{tpu_custom_call.1} parent=5 // pred_region
        %s989 = ssub.s32 %s31, 1
        // Predicated region
        $region105: #{tpu_custom_call.1} parent=103 // pred_check
          %p990 = pneg %p69
        $region106: #{tpu_custom_call.1} parent=103 // pred_check_branch
          %992 = sbr.rel (%p990) target = $region108
        $region107: #{tpu_custom_call.1} parent=103 // pred_region
          %994 = dma.done [#allocation7], 256
        $region108: #{tpu_custom_call.1} parent=103 // pred_fallthru
          _
        // Predicated region
        $region109: #{tpu_custom_call.1} parent=103 // pred_check
          %p995 = pneg %p95
        $region110: #{tpu_custom_call.1} parent=103 // pred_check_branch
          %997 = sbr.rel (%p995) target = $region112
        $region111: #{tpu_custom_call.1} parent=103 // pred_region
          %999 = dma.done [#allocation10], 32
        $region112: #{tpu_custom_call.1} parent=103 // pred_fallthru
          _
        // Predicated region
        $region113: #{tpu_custom_call.1} parent=103 // pred_check
          %p1000 = pneg %p116
        $region114: #{tpu_custom_call.1} parent=103 // pred_check_branch
          %1002 = sbr.rel (%p1000) target = $region116
        $region115: #{tpu_custom_call.1} parent=103 // pred_region
          %1004 = dma.done [#allocation10], 32
        $region116: #{tpu_custom_call.1} parent=103 // pred_fallthru
          _
        // Predicated region
        $region117: #{tpu_custom_call.1} parent=103 // pred_check
          %p1005 = pneg %p137
        $region118: #{tpu_custom_call.1} parent=103 // pred_check_branch
          %1007 = sbr.rel (%p1005) target = $region120
        $region119: #{tpu_custom_call.1} parent=103 // pred_region
          %1009 = dma.done [#allocation13], 32
        $region120: #{tpu_custom_call.1} parent=103 // pred_fallthru
          _
        %s1010 = sand.u32 %s36, 1
        %s1011 = scalar_lea.sflag [#allocation7], %s1010
        %s1012 = sand.u32 %s152, 1
        %s1013 = smul.addr %s1012, 16
        %s1014 = scalar_lea.vmem [#allocation14], %s1013
        // Predicated region
        $region121: #{tpu_custom_call.1} parent=103 // pred_check
          %p1015 = pneg %p165
        $region122: #{tpu_custom_call.1} parent=103 // pred_check_branch
          %1017 = sbr.rel (%p1015) target = $region124
        $region123: #{tpu_custom_call.1} parent=103 // pred_region
          %1019 = dma.done %s1011, 256
        $region124: #{tpu_custom_call.1} parent=103 // pred_fallthru
          _
        %s1020 = sand.u32 %s36, 1
        %s1021 = scalar_lea.sflag [#allocation7], %s1020
        %s1022 = sand.u32 %s178, 1
        %s1023 = smul.addr %s1022, 256
        %s1024 = scalar_lea.vmem [#allocation15], %s1023
        // Predicated region
        $region125: #{tpu_custom_call.1} parent=103 // pred_check
          %p1025 = pneg %p191
        $region126: #{tpu_custom_call.1} parent=103 // pred_check_branch
          %1027 = sbr.rel (%p1025) target = $region128
        $region127: #{tpu_custom_call.1} parent=103 // pred_region
          %1029 = dma.done %s1021, 4096
        $region128: #{tpu_custom_call.1} parent=103 // pred_fallthru
          _
        %s1030 = sand.u32 %s36, 1
        %s1031 = scalar_lea.sflag [#allocation7], %s1030
        %s1032 = sand.u32 %s230, 1
        %s1033 = smul.addr %s1032, 256
        %s1034 = scalar_lea.vmem [#allocation16], %s1033
        // Predicated region
        $region129: #{tpu_custom_call.1} parent=103 // pred_check
          %p1035 = pneg %p243
        $region130: #{tpu_custom_call.1} parent=103 // pred_check_branch
          %1037 = sbr.rel (%p1035) target = $region132
        $region131: #{tpu_custom_call.1} parent=103 // pred_region
          %1039 = dma.done %s1031, 4096
        $region132: #{tpu_custom_call.1} parent=103 // pred_fallthru
          _
        %s1040 = sand.u32 %s36, 1
        %s1041 = scalar_lea.sflag [#allocation7], %s1040
        %s1042 = sand.u32 %s256, 1
        %s1043 = smul.addr %s1042, 2
        %s1044 = scalar_lea.vmem [#allocation17], %s1043
        // Predicated region
        $region133: #{tpu_custom_call.1} parent=103 // pred_check
          %p1045 = pneg %p269
        $region134: #{tpu_custom_call.1} parent=103 // pred_check_branch
          %1047 = sbr.rel (%p1045) target = $region136
        $region135: #{tpu_custom_call.1} parent=103 // pred_region
          %1049 = dma.done %s1041, 32
        $region136: #{tpu_custom_call.1} parent=103 // pred_fallthru
          _
        %s1050 = sand.u32 %s36, 1
        %s1051 = scalar_lea.sflag [#allocation7], %s1050
        %s1052 = sand.u32 %s282, 1
        %s1053 = smul.addr %s1052, 256
        %s1054 = scalar_lea.vmem [#allocation18], %s1053
        // Predicated region
        $region137: #{tpu_custom_call.1} parent=103 // pred_check
          %p1055 = pneg %p295
        $region138: #{tpu_custom_call.1} parent=103 // pred_check_branch
          %1057 = sbr.rel (%p1055) target = $region140
        $region139: #{tpu_custom_call.1} parent=103 // pred_region
          %1059 = dma.done %s1051, 4096
        $region140: #{tpu_custom_call.1} parent=103 // pred_fallthru
          _
        %s1060 = sand.u32 %s36, 1
        %s1061 = scalar_lea.sflag [#allocation7], %s1060
        %s1062 = sand.u32 %s334, 1
        %s1063 = smul.addr %s1062, 256
        %s1064 = scalar_lea.vmem [#allocation19], %s1063
        // Predicated region
        $region141: #{tpu_custom_call.1} parent=103 // pred_check
          %p1065 = pneg %p347
        $region142: #{tpu_custom_call.1} parent=103 // pred_check_branch
          %1067 = sbr.rel (%p1065) target = $region144
        $region143: #{tpu_custom_call.1} parent=103 // pred_region
          %1069 = dma.done %s1061, 4096
        $region144: #{tpu_custom_call.1} parent=103 // pred_fallthru
          _
        %s1070 = sand.u32 %s36, 1
        %s1071 = scalar_lea.sflag [#allocation7], %s1070
        %s1072 = sand.u32 %s360, 1
        %s1073 = smul.addr %s1072, 2
        %s1074 = scalar_lea.vmem [#allocation20], %s1073
        // Predicated region
        $region145: #{tpu_custom_call.1} parent=103 // pred_check
          %p1075 = pneg %p373
        $region146: #{tpu_custom_call.1} parent=103 // pred_check_branch
          %1077 = sbr.rel (%p1075) target = $region148
        $region147: #{tpu_custom_call.1} parent=103 // pred_region
          %1079 = dma.done %s1071, 32
        $region148: #{tpu_custom_call.1} parent=103 // pred_fallthru
          _
        %s1080 = sand.u32 %s36, 1
        %s1081 = scalar_lea.sflag [#allocation7], %s1080
        %s1082 = sand.u32 %s412, 1
        %s1083 = smul.addr %s1082, 2
        %s1084 = scalar_lea.vmem [#allocation21], %s1083
        // Predicated region
        $region149: #{tpu_custom_call.1} parent=103 // pred_check
          %p1085 = pneg %p425
        $region150: #{tpu_custom_call.1} parent=103 // pred_check_branch
          %1087 = sbr.rel (%p1085) target = $region152
        $region151: #{tpu_custom_call.1} parent=103 // pred_region
          %1089 = dma.done %s1081, 32
        $region152: #{tpu_custom_call.1} parent=103 // pred_fallthru
          _
        %s1090 = sand.u32 %s36, 1
        %s1091 = scalar_lea.sflag [#allocation7], %s1090
        %s1092 = sand.u32 %s438, 1
        %s1093 = smul.addr %s1092, 1024
        %s1094 = scalar_lea.vmem [#allocation22], %s1093
        // Predicated region
        $region153: #{tpu_custom_call.1} parent=103 // pred_check
          %p1095 = pneg %p451
        $region154: #{tpu_custom_call.1} parent=103 // pred_check_branch
          %1097 = sbr.rel (%p1095) target = $region156
        $region155: #{tpu_custom_call.1} parent=103 // pred_region
          %1099 = dma.done %s1091, 16384
        $region156: #{tpu_custom_call.1} parent=103 // pred_fallthru
          _
        %s1100 = sand.u32 %s36, 1
        %s1101 = scalar_lea.sflag [#allocation7], %s1100
        %s1102 = sand.u32 %s464, 1
        %s1103 = smul.addr %s1102, 8
        %s1104 = scalar_lea.vmem [#allocation23], %s1103
        // Predicated region
        $region157: #{tpu_custom_call.1} parent=103 // pred_check
          %p1105 = pneg %p477
        $region158: #{tpu_custom_call.1} parent=103 // pred_check_branch
          %1107 = sbr.rel (%p1105) target = $region160
        $region159: #{tpu_custom_call.1} parent=103 // pred_region
          %1109 = dma.done %s1101, 128
        $region160: #{tpu_custom_call.1} parent=103 // pred_fallthru
          _
        %s1110 = sand.u32 %s36, 1
        %s1111 = scalar_lea.sflag [#allocation7], %s1110
        %s1112 = sand.u32 %s490, 1
        %s1113 = smul.addr %s1112, 1024
        %s1114 = scalar_lea.vmem [#allocation24], %s1113
        // Predicated region
        $region161: #{tpu_custom_call.1} parent=103 // pred_check
          %p1115 = pneg %p503
        $region162: #{tpu_custom_call.1} parent=103 // pred_check_branch
          %1117 = sbr.rel (%p1115) target = $region164
        $region163: #{tpu_custom_call.1} parent=103 // pred_region
          %1119 = dma.done %s1111, 16384
        $region164: #{tpu_custom_call.1} parent=103 // pred_fallthru
          _
        %s1120 = sand.u32 %s36, 1
        %s1121 = scalar_lea.sflag [#allocation7], %s1120
        %s1122 = sand.u32 %s542, 1
        %s1123 = smul.addr %s1122, 2
        %s1124 = scalar_lea.vmem [#allocation25], %s1123
        // Predicated region
        $region165: #{tpu_custom_call.1} parent=103 // pred_check
          %p1125 = pneg %p555
        $region166: #{tpu_custom_call.1} parent=103 // pred_check_branch
          %1127 = sbr.rel (%p1125) target = $region168
        $region167: #{tpu_custom_call.1} parent=103 // pred_region
          %1129 = dma.done %s1121, 32
        $region168: #{tpu_custom_call.1} parent=103 // pred_fallthru
          _
        %s1130 = sand.u32 %s36, 1
        %s1131 = scalar_lea.sflag [#allocation7], %s1130
        %s1132 = sand.u32 %s568, 1
        %s1133 = smul.addr %s1132, 2
        %s1134 = scalar_lea.vmem [#allocation26], %s1133
        // Predicated region
        $region169: #{tpu_custom_call.1} parent=103 // pred_check
          %p1135 = pneg %p581
        $region170: #{tpu_custom_call.1} parent=103 // pred_check_branch
          %1137 = sbr.rel (%p1135) target = $region172
        $region171: #{tpu_custom_call.1} parent=103 // pred_region
          %1139 = dma.done %s1131, 32
        $region172: #{tpu_custom_call.1} parent=103 // pred_fallthru
          _
        %p1140 = pneg %p69
        %p1141 = pneg %p66
        %p1142 = pneg %p95
        %p1143 = pneg %p92
        %p1144 = pneg %p116
        %p1145 = pneg %p113
        %p1146 = pneg %p137
        %p1147 = pneg %p134
        %s1148 = sand.u32 %s36, 1
        %s1149 = scalar_lea.sflag [#allocation7], %s1148
        %s1150 = sand.u32 %s152, 1
        %s1151 = smul.addr %s1150, 16
        %s1152 = scalar_lea.vmem [#allocation14], %s1151
        %p1153 = pneg %p165
        %p1154 = pneg %p162
        %s1155 = sand.u32 %s36, 1
        %s1156 = scalar_lea.sflag [#allocation7], %s1155
        %s1157 = sand.u32 %s178, 1
        %s1158 = smul.addr %s1157, 256
        %s1159 = scalar_lea.vmem [#allocation15], %s1158
        %p1160 = pneg %p191
        %p1161 = pneg %p188
        %p1162 = scmp.lt.s32.totalorder %s41, 1
        %s1163 = scalar_select %p1162, %s41, 1
        %s1164 = smul.addr %s1163, 2
        %s1165 = scalar_lea.vmem %s6, %s1164
        %p1166 = pneg %p217
        %p1167 = pneg %p214
        %s1168 = sand.u32 %s36, 1
        %s1169 = scalar_lea.sflag [#allocation7], %s1168
        %s1170 = sand.u32 %s230, 1
        %s1171 = smul.addr %s1170, 256
        %s1172 = scalar_lea.vmem [#allocation16], %s1171
        %p1173 = pneg %p243
        %p1174 = pneg %p240
        %s1175 = sand.u32 %s36, 1
        %s1176 = scalar_lea.sflag [#allocation7], %s1175
        %s1177 = sand.u32 %s256, 1
        %s1178 = smul.addr %s1177, 2
        %s1179 = scalar_lea.vmem [#allocation17], %s1178
        %p1180 = pneg %p269
        %p1181 = pneg %p266
        %s1182 = sand.u32 %s36, 1
        %s1183 = scalar_lea.sflag [#allocation7], %s1182
        %s1184 = sand.u32 %s282, 1
        %s1185 = smul.addr %s1184, 256
        %s1186 = scalar_lea.vmem [#allocation18], %s1185
        %p1187 = pneg %p295
        %p1188 = pneg %p292
        %p1189 = scmp.lt.s32.totalorder %s41, 1
        %s1190 = scalar_select %p1189, %s41, 1
        %s1191 = smul.addr %s1190, 2
        %s1192 = scalar_lea.vmem %s10, %s1191
        %p1193 = pneg %p321
        %p1194 = pneg %p318
        %s1195 = sand.u32 %s36, 1
        %s1196 = scalar_lea.sflag [#allocation7], %s1195
        %s1197 = sand.u32 %s334, 1
        %s1198 = smul.addr %s1197, 256
        %s1199 = scalar_lea.vmem [#allocation19], %s1198
        %p1200 = pneg %p347
        %p1201 = pneg %p344
        %s1202 = sand.u32 %s36, 1
        %s1203 = scalar_lea.sflag [#allocation7], %s1202
        %s1204 = sand.u32 %s360, 1
        %s1205 = smul.addr %s1204, 2
        %s1206 = scalar_lea.vmem [#allocation20], %s1205
        %p1207 = pneg %p373
        %p1208 = pneg %p370
        %p1209 = scmp.lt.s32.totalorder %s41, 1
        %s1210 = scalar_select %p1209, %s41, 1
        %s1211 = smul.addr %s1210, 2
        %s1212 = scalar_lea.vmem %s13, %s1211
        %p1213 = pneg %p399
        %p1214 = pneg %p396
        %s1215 = sand.u32 %s36, 1
        %s1216 = scalar_lea.sflag [#allocation7], %s1215
        %s1217 = sand.u32 %s412, 1
        %s1218 = smul.addr %s1217, 2
        %s1219 = scalar_lea.vmem [#allocation21], %s1218
        %p1220 = pneg %p425
        %p1221 = pneg %p422
        %s1222 = sand.u32 %s36, 1
        %s1223 = scalar_lea.sflag [#allocation7], %s1222
        %s1224 = sand.u32 %s438, 1
        %s1225 = smul.addr %s1224, 1024
        %s1226 = scalar_lea.vmem [#allocation22], %s1225
        %p1227 = pneg %p451
        %p1228 = pneg %p448
        %s1229 = sand.u32 %s36, 1
        %s1230 = scalar_lea.sflag [#allocation7], %s1229
        %s1231 = sand.u32 %s464, 1
        %s1232 = smul.addr %s1231, 8
        %s1233 = scalar_lea.vmem [#allocation23], %s1232
        %p1234 = pneg %p477
        %p1235 = pneg %p474
        %s1236 = sand.u32 %s36, 1
        %s1237 = scalar_lea.sflag [#allocation7], %s1236
        %s1238 = sand.u32 %s490, 1
        %s1239 = smul.addr %s1238, 1024
        %s1240 = scalar_lea.vmem [#allocation24], %s1239
        %p1241 = pneg %p503
        %p1242 = pneg %p500
        %p1243 = scmp.lt.s32.totalorder %s41, 1
        %s1244 = scalar_select %p1243, %s41, 1
        %s1245 = smul.addr %s1244, 2
        %s1246 = scalar_lea.vmem %s18, %s1245
        %p1247 = pneg %p529
        %p1248 = pneg %p526
        %s1249 = sand.u32 %s36, 1
        %s1250 = scalar_lea.sflag [#allocation7], %s1249
        %s1251 = sand.u32 %s542, 1
        %s1252 = smul.addr %s1251, 2
        %s1253 = scalar_lea.vmem [#allocation25], %s1252
        %p1254 = pneg %p555
        %p1255 = pneg %p552
        %s1256 = sand.u32 %s36, 1
        %s1257 = scalar_lea.sflag [#allocation7], %s1256
        %s1258 = sand.u32 %s568, 1
        %s1259 = smul.addr %s1258, 2
        %s1260 = scalar_lea.vmem [#allocation26], %s1259
        %p1261 = pneg %p581
        %p1262 = pneg %p578
        %p1263 = pneg %p607
        %p1264 = pneg %p604
        %s1265 = smul.u32 2, %s40
        %s1266 = smul.u32 2, %s40
        %s1267 = smul.u32 2, %s40
        %p1268 = scmp.lt.s32.totalorder %s41, 1
        %s1269 = scalar_select %p1268, %s41, 1
        %s1270 = smul.addr %s1269, 2
        %s1271 = scalar_lea.vmem %s6, %s1270
        %p1272 = scmp.lt.s32.totalorder %s41, 1
        %s1273 = scalar_select %p1272, %s41, 1
        %s1274 = smul.addr %s1273, 2
        %s1275 = scalar_lea.vmem %s10, %s1274
        %p1276 = scmp.lt.s32.totalorder %s41, 1
        %s1277 = scalar_select %p1276, %s41, 1
        %s1278 = smul.addr %s1277, 2
        %s1279 = scalar_lea.vmem %s13, %s1278
        %p1280 = scmp.lt.s32.totalorder %s41, 1
        %s1281 = scalar_select %p1280, %s41, 1
        %s1282 = smul.addr %s1281, 2
        %s1283 = scalar_lea.vmem %s18, %s1282
        %s1284 = smul.u32 2, %s40
        %p1286 = scmp.eq.s32.totalorder %s41, 0
        // Predicated region
        $region173: #{tpu_custom_call.1} parent=103 // pred_check
          %p1287 = pneg %p1286
        $region174: #{tpu_custom_call.1} parent=103 // pred_check_branch
          %1289 = sbr.rel (%p1287) target = $region176
        $region175: #{tpu_custom_call.1} parent=103 // pred_region
          %v1290 = vld [vmem:[#allocation9] sm:$0x1]
          %v1291 = vld [vmem:[#allocation9 + $0x1] sm:$0x1]
          %vm1292 = vcmask 57344
          %v1293 = vsel %vm1292, %v1290, 0.0
          %1294 = vadd.xlane.f32.xlu0 %v1293
          %v1295 = vpop.xlane.xlu0 %1294
          %v1296 = vsel %vm1292, %v1291, 0.0
          %1297 = vadd.xlane.f32.xlu0 %v1296
          %v1298 = vpop.xlane.xlu0 %1297
          %v1299 = vlaneseq
          %v1300 = vshrl.u32 %v1299, 7
          %v1301 = vcvt.s32.f32 %v1300
          %v1302 = vperm.slane %v1295, 0
          %v1303 = vperm.slane %v1298, 0
          %vm1304 = vcmp.lt.f32.partialorder %v1301, %v1302
          %vm1305 = vcmp.lt.f32.partialorder %v1301, %v1303
          %v1306 = vsel %vm1304, 1, 0
          %v1307 = vsel %vm1305, 1, 0
          %v1308 = vcvt.s32.f32 %v1306
          %v1309 = vcvt.s32.f32 %v1307
          %vm1310 = vcmask 7168
          %1311 = vst.msk [vmem:[#allocation2] sm:$0xff] %vm1310, %v1308
          %1312 = vst.msk [vmem:[#allocation2 + $0x8] sm:$0xff] %vm1310, %v1309
          %vm1313 = vcmp.gt.f32.partialorder %v1290, 0.0
          %vm1314 = vcmp.gt.f32.partialorder %v1291, 0.0
          %v1315 = vsel %vm1313, 0.0, -1e+30
          %v1316 = vsel %vm1314, 0.0, -1e+30
          %1317 = vst.msk [vmem:[#allocation3] sm:$0x1] %vm1292, %v1315
          %1318 = vst.msk [vmem:[#allocation3 + $0x1] sm:$0x1] %vm1292, %v1316
          %v1319 = vrcp.pop %v1295
          %v1320 = vmul.f32 %v1295, %v1319
          %v1321 = vsub.f32 1.0, %v1320
          %v1322 = vmul.f32 %v1319, %v1321
          %v1323 = vadd.f32 %v1319, %v1322
          %vm1324 = vweird.f32 %v1295
          %vm1325 = vweird.f32 %v1319
          %vm1326 = vmor %vm1324, %vm1325
          %v1327 = vsel %vm1326, %v1319, %v1323
          %v1328 = vand.u32 2147483647, %v1295
          %vm1329 = vcmp.eq.f32.partialorder %v1328, 8.507059e+37
          %v1330 = vand.u32 %v1295, 2147483648
          %v1331 = vor.u32 1.1754944e-38, %v1330
          %v1332 = vsel %vm1329, %v1331, %v1327
          %v1333 = vmul.f32 1.0, %v1332
          %v1334 = vrcp.pop %v1298
          %v1335 = vmul.f32 %v1298, %v1334
          %v1336 = vsub.f32 1.0, %v1335
          %v1337 = vmul.f32 %v1334, %v1336
          %v1338 = vadd.f32 %v1334, %v1337
          %vm1339 = vweird.f32 %v1298
          %vm1340 = vweird.f32 %v1334
          %vm1341 = vmor %vm1339, %vm1340
          %v1342 = vsel %vm1341, %v1334, %v1338
          %v1343 = vand.u32 2147483647, %v1298
          %vm1344 = vcmp.eq.f32.partialorder %v1343, 8.507059e+37
          %v1345 = vand.u32 %v1298, 2147483648
          %v1346 = vor.u32 1.1754944e-38, %v1345
          %v1347 = vsel %vm1344, %v1346, %v1342
          %v1348 = vmul.f32 1.0, %v1347
          %vm1349 = vcmask 0
          %1350 = vst.msk [vmem:[#allocation4] sm:$0x1] %vm1349, %v1333
          %1351 = vst.msk [vmem:[#allocation4 + $0x1] sm:$0x1] %vm1349, %v1348
          %v1352 = vld [vmem:[#allocation6] sm:$0xff]
          %v1353 = vld [vmem:[#allocation6 + $0x8] sm:$0xff]
          %v1354 = vunpack.c.l.bf16 %v1352
          %v1355 = vunpack.c.h.bf16 %v1352
          %v1356 = vunpack.c.l.bf16 %v1353
          %v1357 = vunpack.c.h.bf16 %v1353
          %v1358 = vld [vmem:[#allocation11] sm:$0x3]
          %v1359 = vld [vmem:[#allocation12] sm:$0x3]
          %v1360 = vadd.f32 %v1354, %v1355
          %1361 = vadd.xlane.f32.xlu0 %v1360
          %v1362 = vpop.xlane.xlu0 %1361
          %v1363 = vadd.f32 %v1356, %v1357
          %1364 = vadd.xlane.f32.xlu0 %v1363
          %v1365 = vpop.xlane.xlu0 %1364
          %v1366 = vrcp.pop 256.0
          %v1367 = vmul.f32 256.0, %v1366
          %v1368 = vsub.f32 1.0, %v1367
          %v1369 = vmul.f32 %v1366, %v1368
          %v1370 = vadd.f32 %v1366, %v1369
          %vm1371 = vweird.f32 %v1366
          %v1372 = vsel %vm1371, %v1366, %v1370
          %v1373 = vmul.f32 %v1362, %v1372
          %v1374 = vmul.f32 %v1365, %v1372
          %v1375 = vsub.f32 %v1354, %v1373
          %v1376 = vsub.f32 %v1355, %v1373
          %v1377 = vsub.f32 %v1356, %v1374
          %v1378 = vsub.f32 %v1357, %v1374
          %v1379 = vmul.f32 %v1375, %v1375
          %v1380 = vmul.f32 %v1376, %v1376
          %v1381 = vmul.f32 %v1377, %v1377
          %v1382 = vmul.f32 %v1378, %v1378
          %v1383 = vadd.f32 %v1379, %v1380
          %1384 = vadd.xlane.f32.xlu0 %v1383
          %v1385 = vpop.xlane.xlu0 %1384
          %v1386 = vadd.f32 %v1381, %v1382
          %1387 = vadd.xlane.f32.xlu0 %v1386
          %v1388 = vpop.xlane.xlu0 %1387
          %v1389 = vmul.f32 %v1385, %v1372
          %v1390 = vmul.f32 %v1388, %v1372
          %v1391 = vadd.f32 %v1389, 1e-12
          %v1392 = vadd.f32 %v1390, 1e-12
          %v1393 = vrsqrt.pop %v1391
          %v1394 = vmul.f32 %v1393, %v1391
          %v1395 = vmul.f32 %v1394, %v1393
          %v1396 = vmul.f32 0.5, %v1395
          %v1397 = vsub.f32 1.5, %v1396
          %v1398 = vmul.f32 %v1393, %v1397
          %vm1399 = vweird.f32 %v1391
          %vm1400 = vweird.f32 %v1393
          %vm1401 = vmor %vm1399, %vm1400
          %v1402 = vsel %vm1401, %v1393, %v1398
          %v1403 = vrsqrt.pop %v1392
          %v1404 = vmul.f32 %v1403, %v1392
          %v1405 = vmul.f32 %v1404, %v1403
          %v1406 = vmul.f32 0.5, %v1405
          %v1407 = vsub.f32 1.5, %v1406
          %v1408 = vmul.f32 %v1403, %v1407
          %vm1409 = vweird.f32 %v1392
          %vm1410 = vweird.f32 %v1403
          %vm1411 = vmor %vm1409, %vm1410
          %v1412 = vsel %vm1411, %v1403, %v1408
          %v1413 = vmul.f32 %v1375, %v1402
          %v1414 = vmul.f32 %v1376, %v1402
          %v1415 = vmul.f32 %v1377, %v1412
          %v1416 = vmul.f32 %v1378, %v1412
          %v1418 = vperm.slane %v1358, 0
          %v1419 = vperm.slane %v1358, 1
          %v1422 = vmul.f32 %v1413, %v1418
          %v1423 = vmul.f32 %v1414, %v1419
          %v1424 = vmul.f32 %v1415, %v1418
          %v1425 = vmul.f32 %v1416, %v1419
          %v1427 = vperm.slane %v1359, 0
          %v1428 = vperm.slane %v1359, 1
          %v1431 = vadd.f32 %v1422, %v1427
          %v1432 = vadd.f32 %v1423, %v1428
          %v1433 = vadd.f32 %v1424, %v1427
          %v1434 = vadd.f32 %v1425, %v1428
          %v1435 = vld [vmem:[#allocation2] sm:$0xff]
          %v1436 = vld [vmem:[#allocation2 + $0x8] sm:$0xff]
          %1438 = vset.pattern.permute.xlu0 0
          %1439 = vperm.xlu0 %1438, %v1435
          %v1440 = vpop.permute.xlu0 %1439
          %1443 = vset.pattern.permute.xlu0 0
          %1444 = vperm.xlu0 %1443, %v1436
          %v1445 = vpop.permute.xlu0 %1444
          %v1447 = vmul.f32 %v1431, %v1440
          %v1448 = vmul.f32 %v1432, %v1440
          %v1449 = vmul.f32 %v1433, %v1445
          %v1450 = vmul.f32 %v1434, %v1445
          %1451 = vst [vmem:[#allocation27] sm:$0xff] %v1447
          %1452 = vst [vmem:[#allocation27 + $0x8] sm:$0xff] %v1448
          %1453 = vst [vmem:[#allocation27 + $0x10] sm:$0xff] %v1449
          %1454 = vst [vmem:[#allocation27 + $0x18] sm:$0xff] %v1450
        $region176: #{tpu_custom_call.1} parent=103 // pred_fallthru
          _
        %v1455 = vld [vmem:[#allocation2] sm:$0xff]
        %v1456 = vld [vmem:[#allocation2 + $0x8] sm:$0xff]
        %v1457 = vld [vmem:[#allocation3] sm:$0x1]
        %v1458 = vld [vmem:[#allocation3 + $0x1] sm:$0x1]
        %v1459 = vld [vmem:[#allocation27] sm:$0xff]
        %v1460 = vld [vmem:[#allocation27 + $0x8] sm:$0xff]
        %v1461 = vld [vmem:[#allocation27 + $0x10] sm:$0xff]
        %v1462 = vld [vmem:[#allocation27 + $0x18] sm:$0xff]
        %v1463 = vpack.c.bf16 %v1461, %v1459
        %v1464 = vpack.c.bf16 %v1462, %v1460
        %v1465 = vld [vmem:[%s1024] sm:$0xff]
        %v1466 = vld [vmem:[%s1024 + $0x8] sm:$0xff]
        %v1467 = vld [vmem:[%s1024 + $0x10] sm:$0xff]
        %v1468 = vld [vmem:[%s1024 + $0x18] sm:$0xff]
        %v1469 = vld [vmem:[%s1024 + $0x20] sm:$0xff]
        %v1470 = vld [vmem:[%s1024 + $0x28] sm:$0xff]
        %v1471 = vld [vmem:[%s1024 + $0x30] sm:$0xff]
        %v1472 = vld [vmem:[%s1024 + $0x38] sm:$0xff]
        %v1473 = vld [vmem:[%s1024 + $0x40] sm:$0xff]
        %v1474 = vld [vmem:[%s1024 + $0x48] sm:$0xff]
        %v1475 = vld [vmem:[%s1024 + $0x50] sm:$0xff]
        %v1476 = vld [vmem:[%s1024 + $0x58] sm:$0xff]
        %v1477 = vld [vmem:[%s1024 + $0x60] sm:$0xff]
        %v1478 = vld [vmem:[%s1024 + $0x68] sm:$0xff]
        %v1479 = vld [vmem:[%s1024 + $0x70] sm:$0xff]
        %v1480 = vld [vmem:[%s1024 + $0x78] sm:$0xff]
        %v1481 = vld [vmem:[%s1024 + $0x80] sm:$0xff]
        %v1482 = vld [vmem:[%s1024 + $0x88] sm:$0xff]
        %v1483 = vld [vmem:[%s1024 + $0x90] sm:$0xff]
        %v1484 = vld [vmem:[%s1024 + $0x98] sm:$0xff]
        %v1485 = vld [vmem:[%s1024 + $0xa0] sm:$0xff]
        %v1486 = vld [vmem:[%s1024 + $0xa8] sm:$0xff]
        %v1487 = vld [vmem:[%s1024 + $0xb0] sm:$0xff]
        %v1488 = vld [vmem:[%s1024 + $0xb8] sm:$0xff]
        %v1489 = vld [vmem:[%s1024 + $0xc0] sm:$0xff]
        %v1490 = vld [vmem:[%s1024 + $0xc8] sm:$0xff]
        %v1491 = vld [vmem:[%s1024 + $0xd0] sm:$0xff]
        %v1492 = vld [vmem:[%s1024 + $0xd8] sm:$0xff]
        %v1493 = vld [vmem:[%s1024 + $0xe0] sm:$0xff]
        %v1494 = vld [vmem:[%s1024 + $0xe8] sm:$0xff]
        %v1495 = vld [vmem:[%s1024 + $0xf0] sm:$0xff]
        %v1496 = vld [vmem:[%s1024 + $0xf8] sm:$0xff]
        %v1497 = vld [vmem:[%s1271] sm:$0x3]
        %v1499 = vperm.slane %v1497, 0
        %v1500 = vperm.slane %v1497, 1
        %v1535 = vunpack.c.l.b16 %v1465
        %v1536 = vunpack.c.h.b16 %v1465
        %v1537 = vunpack.c.l.b16 %v1466
        %v1538 = vunpack.c.h.b16 %v1466
        %v1539 = vunpack.c.l.b16 %v1467
        %v1540 = vunpack.c.h.b16 %v1467
        %v1541 = vunpack.c.l.b16 %v1468
        %v1542 = vunpack.c.h.b16 %v1468
        %v1543 = vunpack.c.l.b16 %v1469
        %v1544 = vunpack.c.h.b16 %v1469
        %v1545 = vunpack.c.l.b16 %v1470
        %v1546 = vunpack.c.h.b16 %v1470
        %v1547 = vunpack.c.l.b16 %v1471
        %v1548 = vunpack.c.h.b16 %v1471
        %v1549 = vunpack.c.l.b16 %v1472
        %v1550 = vunpack.c.h.b16 %v1472
        %v1551 = vunpack.c.l.b16 %v1473
        %v1552 = vunpack.c.h.b16 %v1473
        %v1553 = vunpack.c.l.b16 %v1474
        %v1554 = vunpack.c.h.b16 %v1474
        %v1555 = vunpack.c.l.b16 %v1475
        %v1556 = vunpack.c.h.b16 %v1475
        %v1557 = vunpack.c.l.b16 %v1476
        %v1558 = vunpack.c.h.b16 %v1476
        %v1559 = vunpack.c.l.b16 %v1477
        %v1560 = vunpack.c.h.b16 %v1477
        %v1561 = vunpack.c.l.b16 %v1478
        %v1562 = vunpack.c.h.b16 %v1478
        %v1563 = vunpack.c.l.b16 %v1479
        %v1564 = vunpack.c.h.b16 %v1479
        %v1565 = vunpack.c.l.b16 %v1480
        %v1566 = vunpack.c.h.b16 %v1480
        %v1567 = vunpack.c.l.b16 %v1481
        %v1568 = vunpack.c.h.b16 %v1481
        %v1569 = vunpack.c.l.b16 %v1482
        %v1570 = vunpack.c.h.b16 %v1482
        %v1571 = vunpack.c.l.b16 %v1483
        %v1572 = vunpack.c.h.b16 %v1483
        %v1573 = vunpack.c.l.b16 %v1484
        %v1574 = vunpack.c.h.b16 %v1484
        %v1575 = vunpack.c.l.b16 %v1485
        %v1576 = vunpack.c.h.b16 %v1485
        %v1577 = vunpack.c.l.b16 %v1486
        %v1578 = vunpack.c.h.b16 %v1486
        %v1579 = vunpack.c.l.b16 %v1487
        %v1580 = vunpack.c.h.b16 %v1487
        %v1581 = vunpack.c.l.b16 %v1488
        %v1582 = vunpack.c.h.b16 %v1488
        %v1583 = vunpack.c.l.b16 %v1489
        %v1584 = vunpack.c.h.b16 %v1489
        %v1585 = vunpack.c.l.b16 %v1490
        %v1586 = vunpack.c.h.b16 %v1490
        %v1587 = vunpack.c.l.b16 %v1491
        %v1588 = vunpack.c.h.b16 %v1491
        %v1589 = vunpack.c.l.b16 %v1492
        %v1590 = vunpack.c.h.b16 %v1492
        %v1591 = vunpack.c.l.b16 %v1493
        %v1592 = vunpack.c.h.b16 %v1493
        %v1593 = vunpack.c.l.b16 %v1494
        %v1594 = vunpack.c.h.b16 %v1494
        %v1595 = vunpack.c.l.b16 %v1495
        %v1596 = vunpack.c.h.b16 %v1495
        %v1597 = vunpack.c.l.b16 %v1496
        %v1598 = vunpack.c.h.b16 %v1496
        %v1599 = vpack.c.b16 %v1537, %v1535
        %v1600 = vpack.c.b16 %v1538, %v1536
        %v1601 = vpack.c.b16 %v1541, %v1539
        %v1602 = vpack.c.b16 %v1542, %v1540
        %v1603 = vpack.c.b16 %v1545, %v1543
        %v1604 = vpack.c.b16 %v1546, %v1544
        %v1605 = vpack.c.b16 %v1549, %v1547
        %v1606 = vpack.c.b16 %v1550, %v1548
        %v1607 = vpack.c.b16 %v1553, %v1551
        %v1608 = vpack.c.b16 %v1554, %v1552
        %v1609 = vpack.c.b16 %v1557, %v1555
        %v1610 = vpack.c.b16 %v1558, %v1556
        %v1611 = vpack.c.b16 %v1561, %v1559
        %v1612 = vpack.c.b16 %v1562, %v1560
        %v1613 = vpack.c.b16 %v1565, %v1563
        %v1614 = vpack.c.b16 %v1566, %v1564
        %v1615 = vpack.c.b16 %v1569, %v1567
        %v1616 = vpack.c.b16 %v1570, %v1568
        %v1617 = vpack.c.b16 %v1573, %v1571
        %v1618 = vpack.c.b16 %v1574, %v1572
        %v1619 = vpack.c.b16 %v1577, %v1575
        %v1620 = vpack.c.b16 %v1578, %v1576
        %v1621 = vpack.c.b16 %v1581, %v1579
        %v1622 = vpack.c.b16 %v1582, %v1580
        %v1623 = vpack.c.b16 %v1585, %v1583
        %v1624 = vpack.c.b16 %v1586, %v1584
        %v1625 = vpack.c.b16 %v1589, %v1587
        %v1626 = vpack.c.b16 %v1590, %v1588
        %v1627 = vpack.c.b16 %v1593, %v1591
        %v1628 = vpack.c.b16 %v1594, %v1592
        %v1629 = vpack.c.b16 %v1597, %v1595
        %v1630 = vpack.c.b16 %v1598, %v1596
        %1663 = vmatpush.bf16.msra.mxu0 %v1613
        %1664 = vmatpush.bf16.msra.mxu0 %v1611
        %1665 = vmatpush.bf16.msra.mxu0 %v1609
        %1666 = vmatpush.bf16.msra.mxu0 %v1607
        %1667 = vmatpush.bf16.msra.mxu0 %v1605
        %1668 = vmatpush.bf16.msra.mxu0 %v1603
        %1669 = vmatpush.bf16.msra.mxu0 %v1601
        %1670 = vmatpush.bf16.msra.mxu0 %v1599
        %1671 = vmatmul.bf16.gmra.mxu0 %v1463
        %v1672 = vpop.f32.mrf.mxu0
        %v1673 = vadd.f32 %v1499, %v1672
        %v1674 = vpop.f32.mrf.mxu0
        %v1675 = vadd.f32 %v1499, %v1674
        %1676 = vdwg.mxu0
        %1677 = vmatpush.bf16.msra.mxu0 %v1629
        %1678 = vmatpush.bf16.msra.mxu0 %v1627
        %1679 = vmatpush.bf16.msra.mxu0 %v1625
        %1680 = vmatpush.bf16.msra.mxu0 %v1623
        %1681 = vmatpush.bf16.msra.mxu0 %v1621
        %1682 = vmatpush.bf16.msra.mxu0 %v1619
        %1683 = vmatpush.bf16.msra.mxu0 %v1617
        %1684 = vmatpush.bf16.msra.mxu0 %v1615
        %1685 = vmatmul.bf16.gmra.mxu0 %v1464
        %v1686 = vpop.f32.mrf.mxu0
        %v1687 = vadd.f32 %v1673, %v1686
        %v1688 = vpop.f32.mrf.mxu0
        %v1689 = vadd.f32 %v1675, %v1688
        %1690 = vdwg.mxu0
        %1691 = vmatpush.bf16.msra.mxu0 %v1614
        %1692 = vmatpush.bf16.msra.mxu0 %v1612
        %1693 = vmatpush.bf16.msra.mxu0 %v1610
        %1694 = vmatpush.bf16.msra.mxu0 %v1608
        %1695 = vmatpush.bf16.msra.mxu0 %v1606
        %1696 = vmatpush.bf16.msra.mxu0 %v1604
        %1697 = vmatpush.bf16.msra.mxu0 %v1602
        %1698 = vmatpush.bf16.msra.mxu0 %v1600
        %1699 = vmatmul.bf16.gmra.mxu0 %v1463
        %v1700 = vpop.f32.mrf.mxu0
        %v1701 = vadd.f32 %v1500, %v1700
        %v1702 = vpop.f32.mrf.mxu0
        %v1703 = vadd.f32 %v1500, %v1702
        %1704 = vdwg.mxu0
        %1705 = vmatpush.bf16.msra.mxu0 %v1630
        %1706 = vmatpush.bf16.msra.mxu0 %v1628
        %1707 = vmatpush.bf16.msra.mxu0 %v1626
        %1708 = vmatpush.bf16.msra.mxu0 %v1624
        %1709 = vmatpush.bf16.msra.mxu0 %v1622
        %1710 = vmatpush.bf16.msra.mxu0 %v1620
        %1711 = vmatpush.bf16.msra.mxu0 %v1618
        %1712 = vmatpush.bf16.msra.mxu0 %v1616
        %1713 = vmatmul.bf16.gmra.mxu0 %v1464
        %v1714 = vpop.f32.mrf.mxu0
        %v1715 = vadd.f32 %v1701, %v1714
        %v1716 = vpop.f32.mrf.mxu0
        %v1717 = vadd.f32 %v1703, %v1716
        %1718 = vdwg.mxu0
        %v1719 = vmul.f32 %v1687, 0.088388346
        %v1720 = vmul.f32 %v1715, 0.088388346
        %v1721 = vmul.f32 %v1689, 0.088388346
        %v1722 = vmul.f32 %v1717, 0.088388346
        %v1723 = vpack.c.bf16 %v1720, %v1719
        %v1724 = vpack.c.bf16 %v1722, %v1721
        %v1725 = vld [vmem:[%s1034] sm:$0xff]
        %v1726 = vld [vmem:[%s1034 + $0x8] sm:$0xff]
        %v1727 = vld [vmem:[%s1034 + $0x10] sm:$0xff]
        %v1728 = vld [vmem:[%s1034 + $0x18] sm:$0xff]
        %v1729 = vld [vmem:[%s1034 + $0x20] sm:$0xff]
        %v1730 = vld [vmem:[%s1034 + $0x28] sm:$0xff]
        %v1731 = vld [vmem:[%s1034 + $0x30] sm:$0xff]
        %v1732 = vld [vmem:[%s1034 + $0x38] sm:$0xff]
        %v1733 = vld [vmem:[%s1034 + $0x40] sm:$0xff]
        %v1734 = vld [vmem:[%s1034 + $0x48] sm:$0xff]
        %v1735 = vld [vmem:[%s1034 + $0x50] sm:$0xff]
        %v1736 = vld [vmem:[%s1034 + $0x58] sm:$0xff]
        %v1737 = vld [vmem:[%s1034 + $0x60] sm:$0xff]
        %v1738 = vld [vmem:[%s1034 + $0x68] sm:$0xff]
        %v1739 = vld [vmem:[%s1034 + $0x70] sm:$0xff]
        %v1740 = vld [vmem:[%s1034 + $0x78] sm:$0xff]
        %v1741 = vld [vmem:[%s1034 + $0x80] sm:$0xff]
        %v1742 = vld [vmem:[%s1034 + $0x88] sm:$0xff]
        %v1743 = vld [vmem:[%s1034 + $0x90] sm:$0xff]
        %v1744 = vld [vmem:[%s1034 + $0x98] sm:$0xff]
        %v1745 = vld [vmem:[%s1034 + $0xa0] sm:$0xff]
        %v1746 = vld [vmem:[%s1034 + $0xa8] sm:$0xff]
        %v1747 = vld [vmem:[%s1034 + $0xb0] sm:$0xff]
        %v1748 = vld [vmem:[%s1034 + $0xb8] sm:$0xff]
        %v1749 = vld [vmem:[%s1034 + $0xc0] sm:$0xff]
        %v1750 = vld [vmem:[%s1034 + $0xc8] sm:$0xff]
        %v1751 = vld [vmem:[%s1034 + $0xd0] sm:$0xff]
        %v1752 = vld [vmem:[%s1034 + $0xd8] sm:$0xff]
        %v1753 = vld [vmem:[%s1034 + $0xe0] sm:$0xff]
        %v1754 = vld [vmem:[%s1034 + $0xe8] sm:$0xff]
        %v1755 = vld [vmem:[%s1034 + $0xf0] sm:$0xff]
        %v1756 = vld [vmem:[%s1034 + $0xf8] sm:$0xff]
        %v1757 = vld [vmem:[%s1044] sm:$0x3]
        %v1759 = vperm.slane %v1757, 0
        %v1760 = vperm.slane %v1757, 1
        %v1795 = vunpack.c.l.b16 %v1725
        %v1796 = vunpack.c.h.b16 %v1725
        %v1797 = vunpack.c.l.b16 %v1726
        %v1798 = vunpack.c.h.b16 %v1726
        %v1799 = vunpack.c.l.b16 %v1727
        %v1800 = vunpack.c.h.b16 %v1727
        %v1801 = vunpack.c.l.b16 %v1728
        %v1802 = vunpack.c.h.b16 %v1728
        %v1803 = vunpack.c.l.b16 %v1729
        %v1804 = vunpack.c.h.b16 %v1729
        %v1805 = vunpack.c.l.b16 %v1730
        %v1806 = vunpack.c.h.b16 %v1730
        %v1807 = vunpack.c.l.b16 %v1731
        %v1808 = vunpack.c.h.b16 %v1731
        %v1809 = vunpack.c.l.b16 %v1732
        %v1810 = vunpack.c.h.b16 %v1732
        %v1811 = vunpack.c.l.b16 %v1733
        %v1812 = vunpack.c.h.b16 %v1733
        %v1813 = vunpack.c.l.b16 %v1734
        %v1814 = vunpack.c.h.b16 %v1734
        %v1815 = vunpack.c.l.b16 %v1735
        %v1816 = vunpack.c.h.b16 %v1735
        %v1817 = vunpack.c.l.b16 %v1736
        %v1818 = vunpack.c.h.b16 %v1736
        %v1819 = vunpack.c.l.b16 %v1737
        %v1820 = vunpack.c.h.b16 %v1737
        %v1821 = vunpack.c.l.b16 %v1738
        %v1822 = vunpack.c.h.b16 %v1738
        %v1823 = vunpack.c.l.b16 %v1739
        %v1824 = vunpack.c.h.b16 %v1739
        %v1825 = vunpack.c.l.b16 %v1740
        %v1826 = vunpack.c.h.b16 %v1740
        %v1827 = vunpack.c.l.b16 %v1741
        %v1828 = vunpack.c.h.b16 %v1741
        %v1829 = vunpack.c.l.b16 %v1742
        %v1830 = vunpack.c.h.b16 %v1742
        %v1831 = vunpack.c.l.b16 %v1743
        %v1832 = vunpack.c.h.b16 %v1743
        %v1833 = vunpack.c.l.b16 %v1744
        %v1834 = vunpack.c.h.b16 %v1744
        %v1835 = vunpack.c.l.b16 %v1745
        %v1836 = vunpack.c.h.b16 %v1745
        %v1837 = vunpack.c.l.b16 %v1746
        %v1838 = vunpack.c.h.b16 %v1746
        %v1839 = vunpack.c.l.b16 %v1747
        %v1840 = vunpack.c.h.b16 %v1747
        %v1841 = vunpack.c.l.b16 %v1748
        %v1842 = vunpack.c.h.b16 %v1748
        %v1843 = vunpack.c.l.b16 %v1749
        %v1844 = vunpack.c.h.b16 %v1749
        %v1845 = vunpack.c.l.b16 %v1750
        %v1846 = vunpack.c.h.b16 %v1750
        %v1847 = vunpack.c.l.b16 %v1751
        %v1848 = vunpack.c.h.b16 %v1751
        %v1849 = vunpack.c.l.b16 %v1752
        %v1850 = vunpack.c.h.b16 %v1752
        %v1851 = vunpack.c.l.b16 %v1753
        %v1852 = vunpack.c.h.b16 %v1753
        %v1853 = vunpack.c.l.b16 %v1754
        %v1854 = vunpack.c.h.b16 %v1754
        %v1855 = vunpack.c.l.b16 %v1755
        %v1856 = vunpack.c.h.b16 %v1755
        %v1857 = vunpack.c.l.b16 %v1756
        %v1858 = vunpack.c.h.b16 %v1756
        %v1859 = vpack.c.b16 %v1797, %v1795
        %v1860 = vpack.c.b16 %v1798, %v1796
        %v1861 = vpack.c.b16 %v1801, %v1799
        %v1862 = vpack.c.b16 %v1802, %v1800
        %v1863 = vpack.c.b16 %v1805, %v1803
        %v1864 = vpack.c.b16 %v1806, %v1804
        %v1865 = vpack.c.b16 %v1809, %v1807
        %v1866 = vpack.c.b16 %v1810, %v1808
        %v1867 = vpack.c.b16 %v1813, %v1811
        %v1868 = vpack.c.b16 %v1814, %v1812
        %v1869 = vpack.c.b16 %v1817, %v1815
        %v1870 = vpack.c.b16 %v1818, %v1816
        %v1871 = vpack.c.b16 %v1821, %v1819
        %v1872 = vpack.c.b16 %v1822, %v1820
        %v1873 = vpack.c.b16 %v1825, %v1823
        %v1874 = vpack.c.b16 %v1826, %v1824
        %v1875 = vpack.c.b16 %v1829, %v1827
        %v1876 = vpack.c.b16 %v1830, %v1828
        %v1877 = vpack.c.b16 %v1833, %v1831
        %v1878 = vpack.c.b16 %v1834, %v1832
        %v1879 = vpack.c.b16 %v1837, %v1835
        %v1880 = vpack.c.b16 %v1838, %v1836
        %v1881 = vpack.c.b16 %v1841, %v1839
        %v1882 = vpack.c.b16 %v1842, %v1840
        %v1883 = vpack.c.b16 %v1845, %v1843
        %v1884 = vpack.c.b16 %v1846, %v1844
        %v1885 = vpack.c.b16 %v1849, %v1847
        %v1886 = vpack.c.b16 %v1850, %v1848
        %v1887 = vpack.c.b16 %v1853, %v1851
        %v1888 = vpack.c.b16 %v1854, %v1852
        %v1889 = vpack.c.b16 %v1857, %v1855
        %v1890 = vpack.c.b16 %v1858, %v1856
        %1923 = vmatpush.bf16.msra.mxu0 %v1873
        %1924 = vmatpush.bf16.msra.mxu0 %v1871
        %1925 = vmatpush.bf16.msra.mxu0 %v1869
        %1926 = vmatpush.bf16.msra.mxu0 %v1867
        %1927 = vmatpush.bf16.msra.mxu0 %v1865
        %1928 = vmatpush.bf16.msra.mxu0 %v1863
        %1929 = vmatpush.bf16.msra.mxu0 %v1861
        %1930 = vmatpush.bf16.msra.mxu0 %v1859
        %1931 = vmatmul.bf16.gmra.mxu0 %v1463
        %v1932 = vpop.f32.mrf.mxu0
        %v1933 = vadd.f32 %v1759, %v1932
        %v1934 = vpop.f32.mrf.mxu0
        %v1935 = vadd.f32 %v1759, %v1934
        %1936 = vdwg.mxu0
        %1937 = vmatpush.bf16.msra.mxu0 %v1889
        %1938 = vmatpush.bf16.msra.mxu0 %v1887
        %1939 = vmatpush.bf16.msra.mxu0 %v1885
        %1940 = vmatpush.bf16.msra.mxu0 %v1883
        %1941 = vmatpush.bf16.msra.mxu0 %v1881
        %1942 = vmatpush.bf16.msra.mxu0 %v1879
        %1943 = vmatpush.bf16.msra.mxu0 %v1877
        %1944 = vmatpush.bf16.msra.mxu0 %v1875
        %1945 = vmatmul.bf16.gmra.mxu0 %v1464
        %v1946 = vpop.f32.mrf.mxu0
        %v1947 = vadd.f32 %v1933, %v1946
        %v1948 = vpop.f32.mrf.mxu0
        %v1949 = vadd.f32 %v1935, %v1948
        %1950 = vdwg.mxu0
        %1951 = vmatpush.bf16.msra.mxu0 %v1874
        %1952 = vmatpush.bf16.msra.mxu0 %v1872
        %1953 = vmatpush.bf16.msra.mxu0 %v1870
        %1954 = vmatpush.bf16.msra.mxu0 %v1868
        %1955 = vmatpush.bf16.msra.mxu0 %v1866
        %1956 = vmatpush.bf16.msra.mxu0 %v1864
        %1957 = vmatpush.bf16.msra.mxu0 %v1862
        %1958 = vmatpush.bf16.msra.mxu0 %v1860
        %1959 = vmatmul.bf16.gmra.mxu0 %v1463
        %v1960 = vpop.f32.mrf.mxu0
        %v1961 = vadd.f32 %v1760, %v1960
        %v1962 = vpop.f32.mrf.mxu0
        %v1963 = vadd.f32 %v1760, %v1962
        %1964 = vdwg.mxu0
        %1965 = vmatpush.bf16.msra.mxu0 %v1890
        %1966 = vmatpush.bf16.msra.mxu0 %v1888
        %1967 = vmatpush.bf16.msra.mxu0 %v1886
        %1968 = vmatpush.bf16.msra.mxu0 %v1884
        %1969 = vmatpush.bf16.msra.mxu0 %v1882
        %1970 = vmatpush.bf16.msra.mxu0 %v1880
        %1971 = vmatpush.bf16.msra.mxu0 %v1878
        %1972 = vmatpush.bf16.msra.mxu0 %v1876
        %1973 = vmatmul.bf16.gmra.mxu0 %v1464
        %v1974 = vpop.f32.mrf.mxu0
        %v1975 = vadd.f32 %v1961, %v1974
        %v1976 = vpop.f32.mrf.mxu0
        %v1977 = vadd.f32 %v1963, %v1976
        %1978 = vdwg.mxu0
        %v1979 = vpack.c.bf16 %v1975, %v1947
        %v1980 = vpack.c.bf16 %v1977, %v1949
        %v1981 = vld [vmem:[%s1054] sm:$0xff]
        %v1982 = vld [vmem:[%s1054 + $0x8] sm:$0xff]
        %v1983 = vld [vmem:[%s1054 + $0x10] sm:$0xff]
        %v1984 = vld [vmem:[%s1054 + $0x18] sm:$0xff]
        %v1985 = vld [vmem:[%s1054 + $0x20] sm:$0xff]
        %v1986 = vld [vmem:[%s1054 + $0x28] sm:$0xff]
        %v1987 = vld [vmem:[%s1054 + $0x30] sm:$0xff]
        %v1988 = vld [vmem:[%s1054 + $0x38] sm:$0xff]
        %v1989 = vld [vmem:[%s1054 + $0x40] sm:$0xff]
        %v1990 = vld [vmem:[%s1054 + $0x48] sm:$0xff]
        %v1991 = vld [vmem:[%s1054 + $0x50] sm:$0xff]
        %v1992 = vld [vmem:[%s1054 + $0x58] sm:$0xff]
        %v1993 = vld [vmem:[%s1054 + $0x60] sm:$0xff]
        %v1994 = vld [vmem:[%s1054 + $0x68] sm:$0xff]
        %v1995 = vld [vmem:[%s1054 + $0x70] sm:$0xff]
        %v1996 = vld [vmem:[%s1054 + $0x78] sm:$0xff]
        %v1997 = vld [vmem:[%s1054 + $0x80] sm:$0xff]
        %v1998 = vld [vmem:[%s1054 + $0x88] sm:$0xff]
        %v1999 = vld [vmem:[%s1054 + $0x90] sm:$0xff]
        %v2000 = vld [vmem:[%s1054 + $0x98] sm:$0xff]
        %v2001 = vld [vmem:[%s1054 + $0xa0] sm:$0xff]
        %v2002 = vld [vmem:[%s1054 + $0xa8] sm:$0xff]
        %v2003 = vld [vmem:[%s1054 + $0xb0] sm:$0xff]
        %v2004 = vld [vmem:[%s1054 + $0xb8] sm:$0xff]
        %v2005 = vld [vmem:[%s1054 + $0xc0] sm:$0xff]
        %v2006 = vld [vmem:[%s1054 + $0xc8] sm:$0xff]
        %v2007 = vld [vmem:[%s1054 + $0xd0] sm:$0xff]
        %v2008 = vld [vmem:[%s1054 + $0xd8] sm:$0xff]
        %v2009 = vld [vmem:[%s1054 + $0xe0] sm:$0xff]
        %v2010 = vld [vmem:[%s1054 + $0xe8] sm:$0xff]
        %v2011 = vld [vmem:[%s1054 + $0xf0] sm:$0xff]
        %v2012 = vld [vmem:[%s1054 + $0xf8] sm:$0xff]
        %v2013 = vld [vmem:[%s1275] sm:$0x3]
        %v2015 = vperm.slane %v2013, 0
        %v2016 = vperm.slane %v2013, 1
        %v2051 = vunpack.c.l.b16 %v1981
        %v2052 = vunpack.c.h.b16 %v1981
        %v2053 = vunpack.c.l.b16 %v1982
        %v2054 = vunpack.c.h.b16 %v1982
        %v2055 = vunpack.c.l.b16 %v1983
        %v2056 = vunpack.c.h.b16 %v1983
        %v2057 = vunpack.c.l.b16 %v1984
        %v2058 = vunpack.c.h.b16 %v1984
        %v2059 = vunpack.c.l.b16 %v1985
        %v2060 = vunpack.c.h.b16 %v1985
        %v2061 = vunpack.c.l.b16 %v1986
        %v2062 = vunpack.c.h.b16 %v1986
        %v2063 = vunpack.c.l.b16 %v1987
        %v2064 = vunpack.c.h.b16 %v1987
        %v2065 = vunpack.c.l.b16 %v1988
        %v2066 = vunpack.c.h.b16 %v1988
        %v2067 = vunpack.c.l.b16 %v1989
        %v2068 = vunpack.c.h.b16 %v1989
        %v2069 = vunpack.c.l.b16 %v1990
        %v2070 = vunpack.c.h.b16 %v1990
        %v2071 = vunpack.c.l.b16 %v1991
        %v2072 = vunpack.c.h.b16 %v1991
        %v2073 = vunpack.c.l.b16 %v1992
        %v2074 = vunpack.c.h.b16 %v1992
        %v2075 = vunpack.c.l.b16 %v1993
        %v2076 = vunpack.c.h.b16 %v1993
        %v2077 = vunpack.c.l.b16 %v1994
        %v2078 = vunpack.c.h.b16 %v1994
        %v2079 = vunpack.c.l.b16 %v1995
        %v2080 = vunpack.c.h.b16 %v1995
        %v2081 = vunpack.c.l.b16 %v1996
        %v2082 = vunpack.c.h.b16 %v1996
        %v2083 = vunpack.c.l.b16 %v1997
        %v2084 = vunpack.c.h.b16 %v1997
        %v2085 = vunpack.c.l.b16 %v1998
        %v2086 = vunpack.c.h.b16 %v1998
        %v2087 = vunpack.c.l.b16 %v1999
        %v2088 = vunpack.c.h.b16 %v1999
        %v2089 = vunpack.c.l.b16 %v2000
        %v2090 = vunpack.c.h.b16 %v2000
        %v2091 = vunpack.c.l.b16 %v2001
        %v2092 = vunpack.c.h.b16 %v2001
        %v2093 = vunpack.c.l.b16 %v2002
        %v2094 = vunpack.c.h.b16 %v2002
        %v2095 = vunpack.c.l.b16 %v2003
        %v2096 = vunpack.c.h.b16 %v2003
        %v2097 = vunpack.c.l.b16 %v2004
        %v2098 = vunpack.c.h.b16 %v2004
        %v2099 = vunpack.c.l.b16 %v2005
        %v2100 = vunpack.c.h.b16 %v2005
        %v2101 = vunpack.c.l.b16 %v2006
        %v2102 = vunpack.c.h.b16 %v2006
        %v2103 = vunpack.c.l.b16 %v2007
        %v2104 = vunpack.c.h.b16 %v2007
        %v2105 = vunpack.c.l.b16 %v2008
        %v2106 = vunpack.c.h.b16 %v2008
        %v2107 = vunpack.c.l.b16 %v2009
        %v2108 = vunpack.c.h.b16 %v2009
        %v2109 = vunpack.c.l.b16 %v2010
        %v2110 = vunpack.c.h.b16 %v2010
        %v2111 = vunpack.c.l.b16 %v2011
        %v2112 = vunpack.c.h.b16 %v2011
        %v2113 = vunpack.c.l.b16 %v2012
        %v2114 = vunpack.c.h.b16 %v2012
        %v2115 = vpack.c.b16 %v2053, %v2051
        %v2116 = vpack.c.b16 %v2054, %v2052
        %v2117 = vpack.c.b16 %v2057, %v2055
        %v2118 = vpack.c.b16 %v2058, %v2056
        %v2119 = vpack.c.b16 %v2061, %v2059
        %v2120 = vpack.c.b16 %v2062, %v2060
        %v2121 = vpack.c.b16 %v2065, %v2063
        %v2122 = vpack.c.b16 %v2066, %v2064
        %v2123 = vpack.c.b16 %v2069, %v2067
        %v2124 = vpack.c.b16 %v2070, %v2068
        %v2125 = vpack.c.b16 %v2073, %v2071
        %v2126 = vpack.c.b16 %v2074, %v2072
        %v2127 = vpack.c.b16 %v2077, %v2075
        %v2128 = vpack.c.b16 %v2078, %v2076
        %v2129 = vpack.c.b16 %v2081, %v2079
        %v2130 = vpack.c.b16 %v2082, %v2080
        %v2131 = vpack.c.b16 %v2085, %v2083
        %v2132 = vpack.c.b16 %v2086, %v2084
        %v2133 = vpack.c.b16 %v2089, %v2087
        %v2134 = vpack.c.b16 %v2090, %v2088
        %v2135 = vpack.c.b16 %v2093, %v2091
        %v2136 = vpack.c.b16 %v2094, %v2092
        %v2137 = vpack.c.b16 %v2097, %v2095
        %v2138 = vpack.c.b16 %v2098, %v2096
        %v2139 = vpack.c.b16 %v2101, %v2099
        %v2140 = vpack.c.b16 %v2102, %v2100
        %v2141 = vpack.c.b16 %v2105, %v2103
        %v2142 = vpack.c.b16 %v2106, %v2104
        %v2143 = vpack.c.b16 %v2109, %v2107
        %v2144 = vpack.c.b16 %v2110, %v2108
        %v2145 = vpack.c.b16 %v2113, %v2111
        %v2146 = vpack.c.b16 %v2114, %v2112
        %2179 = vmatpush.bf16.msra.mxu0 %v2129
        %2180 = vmatpush.bf16.msra.mxu0 %v2127
        %2181 = vmatpush.bf16.msra.mxu0 %v2125
        %2182 = vmatpush.bf16.msra.mxu0 %v2123
        %2183 = vmatpush.bf16.msra.mxu0 %v2121
        %2184 = vmatpush.bf16.msra.mxu0 %v2119
        %2185 = vmatpush.bf16.msra.mxu0 %v2117
        %2186 = vmatpush.bf16.msra.mxu0 %v2115
        %2187 = vmatmul.bf16.gmra.mxu0 %v1463
        %v2188 = vpop.f32.mrf.mxu0
        %v2189 = vadd.f32 %v2015, %v2188
        %v2190 = vpop.f32.mrf.mxu0
        %v2191 = vadd.f32 %v2015, %v2190
        %2192 = vdwg.mxu0
        %2193 = vmatpush.bf16.msra.mxu0 %v2145
        %2194 = vmatpush.bf16.msra.mxu0 %v2143
        %2195 = vmatpush.bf16.msra.mxu0 %v2141
        %2196 = vmatpush.bf16.msra.mxu0 %v2139
        %2197 = vmatpush.bf16.msra.mxu0 %v2137
        %2198 = vmatpush.bf16.msra.mxu0 %v2135
        %2199 = vmatpush.bf16.msra.mxu0 %v2133
        %2200 = vmatpush.bf16.msra.mxu0 %v2131
        %2201 = vmatmul.bf16.gmra.mxu0 %v1464
        %v2202 = vpop.f32.mrf.mxu0
        %v2203 = vadd.f32 %v2189, %v2202
        %v2204 = vpop.f32.mrf.mxu0
        %v2205 = vadd.f32 %v2191, %v2204
        %2206 = vdwg.mxu0
        %2207 = vmatpush.bf16.msra.mxu0 %v2130
        %2208 = vmatpush.bf16.msra.mxu0 %v2128
        %2209 = vmatpush.bf16.msra.mxu0 %v2126
        %2210 = vmatpush.bf16.msra.mxu0 %v2124
        %2211 = vmatpush.bf16.msra.mxu0 %v2122
        %2212 = vmatpush.bf16.msra.mxu0 %v2120
        %2213 = vmatpush.bf16.msra.mxu0 %v2118
        %2214 = vmatpush.bf16.msra.mxu0 %v2116
        %2215 = vmatmul.bf16.gmra.mxu0 %v1463
        %v2216 = vpop.f32.mrf.mxu0
        %v2217 = vadd.f32 %v2016, %v2216
        %v2218 = vpop.f32.mrf.mxu0
        %v2219 = vadd.f32 %v2016, %v2218
        %2220 = vdwg.mxu0
        %2221 = vmatpush.bf16.msra.mxu0 %v2146
        %2222 = vmatpush.bf16.msra.mxu0 %v2144
        %2223 = vmatpush.bf16.msra.mxu0 %v2142
        %2224 = vmatpush.bf16.msra.mxu0 %v2140
        %2225 = vmatpush.bf16.msra.mxu0 %v2138
        %2226 = vmatpush.bf16.msra.mxu0 %v2136
        %2227 = vmatpush.bf16.msra.mxu0 %v2134
        %2228 = vmatpush.bf16.msra.mxu0 %v2132
        %2229 = vmatmul.bf16.gmra.mxu0 %v1464
        %v2230 = vpop.f32.mrf.mxu0
        %v2231 = vadd.f32 %v2217, %v2230
        %v2232 = vpop.f32.mrf.mxu0
        %v2233 = vadd.f32 %v2219, %v2232
        %2234 = vdwg.mxu0
        %v2235 = vpack.c.bf16 %v2231, %v2203
        %v2236 = vpack.c.bf16 %v2233, %v2205
        %v2239 = vperm.slane %v1457, 0
        %v2240 = vperm.slane %v1458, 0
        %2243 = vmatpush.bf16.xpose.msra.mxu0 0
        %2244 = vmatpush.bf16.xpose.msra.mxu0 0
        %2245 = vmatpush.bf16.xpose.msra.mxu0 0
        %2246 = vmatpush.bf16.xpose.msra.mxu0 0
        %2247 = vmatpush.bf16.xpose.msra.mxu0 0
        %2248 = vmatpush.bf16.xpose.msra.mxu0 0
        %2249 = vmatpush.bf16.xpose.msra.mxu0 0
        %2250 = vmatpush.bf16.xpose.msra.mxu0 %v1979
        %2251 = vmatmul.bf16.gmra.mxu0 %v1723
        %v2252 = vpop.f32.mrf.mxu0
        %v2253 = vadd.f32 %v2239, %v2252
        %v2254 = vpop.f32.mrf.mxu0
        %2255 = vdwg.mxu0
        %2256 = vmatpush.bf16.xpose.msra.mxu0 0
        %2257 = vmatpush.bf16.xpose.msra.mxu0 0
        %2258 = vmatpush.bf16.xpose.msra.mxu0 0
        %2259 = vmatpush.bf16.xpose.msra.mxu0 0
        %2260 = vmatpush.bf16.xpose.msra.mxu0 0
        %2261 = vmatpush.bf16.xpose.msra.mxu0 0
        %2262 = vmatpush.bf16.xpose.msra.mxu0 0
        %2263 = vmatpush.bf16.xpose.msra.mxu0 %v1980
        %2264 = vmatmul.bf16.gmra.mxu0 %v1724
        %v2265 = vpop.f32.mrf.mxu0
        %v2266 = vadd.f32 %v2240, %v2265
        %v2267 = vpop.f32.mrf.mxu0
        %2268 = vdwg.mxu0
        %vm2269 = vcmask 64512
        %v2270 = vsel %vm2269, %v2253, -inf
        %2271 = vmax.xlane.f32.xlu0 %v2270
        %v2272 = vpop.xlane.xlu0 %2271
        %v2273 = vsel %vm2269, %v2266, -inf
        %2274 = vmax.xlane.f32.xlu0 %v2273
        %v2275 = vpop.xlane.xlu0 %2274
        %v2276 = vsub.f32 %v2253, %v2272
        %v2277 = vsub.f32 %v2266, %v2275
        %v2278 = vmul.f32 %v2276, 1.442695
        %v2279 = vpow.pop %v2278
        %v2280 = vmul.f32 %v2277, 1.442695
        %v2281 = vpow.pop %v2280
        %v2282 = vsel %vm2269, %v2279, 0.0
        %2283 = vadd.xlane.f32.xlu0 %v2282
        %v2284 = vpop.xlane.xlu0 %2283
        %v2285 = vsel %vm2269, %v2281, 0.0
        %2286 = vadd.xlane.f32.xlu0 %v2285
        %v2287 = vpop.xlane.xlu0 %2286
        %v2288 = vrcp.pop %v2284
        %v2289 = vrcp.pop %v2287
        %v2290 = vmul.f32 %v2279, %v2288
        %v2291 = vmul.f32 %v2281, %v2289
        %v2292 = vpack.c.bf16 %v2290, %v2290
        %v2293 = vpack.c.bf16 %v2291, %v2291
        %v2295 = vsel %vm2269, %v2292, 0
        %vm2297 = vcmask 1043456
        %v2299 = vsel %vm2297, %v2235, 0
        %2301 = vmatpush.bf16.msra.mxu0 0
        %2302 = vmatpush.bf16.msra.mxu0 0
        %2303 = vmatpush.bf16.msra.mxu0 0
        %2304 = vmatpush.bf16.msra.mxu0 0
        %2305 = vmatpush.bf16.msra.mxu0 0
        %2306 = vmatpush.bf16.msra.mxu0 0
        %2307 = vmatpush.bf16.msra.mxu0 0
        %2308 = vmatpush.bf16.msra.mxu0 %v2299
        %2309 = vmatmul.bf16.gmra.mxu0 %v2295
        %v2310 = vpop.f32.mrf.mxu0
        %v2311 = vadd.f32 0.0, %v2310
        %v2312 = vpop.f32.mrf.mxu0
        %2313 = vdwg.mxu0
        %v2315 = vsel %vm2269, %v2293, 0
        %v2318 = vsel %vm2297, %v2236, 0
        %2320 = vmatpush.bf16.msra.mxu0 0
        %2321 = vmatpush.bf16.msra.mxu0 0
        %2322 = vmatpush.bf16.msra.mxu0 0
        %2323 = vmatpush.bf16.msra.mxu0 0
        %2324 = vmatpush.bf16.msra.mxu0 0
        %2325 = vmatpush.bf16.msra.mxu0 0
        %2326 = vmatpush.bf16.msra.mxu0 0
        %2327 = vmatpush.bf16.msra.mxu0 %v2318
        %2328 = vmatmul.bf16.gmra.mxu0 %v2315
        %v2329 = vpop.f32.mrf.mxu0
        %v2330 = vadd.f32 0.0, %v2329
        %v2331 = vpop.f32.mrf.mxu0
        %2332 = vdwg.mxu0
        %v2333 = vpack.c.bf16 %v2311, %v2311
        %v2334 = vpack.c.bf16 %v2330, %v2330
        %2335 = vst [vmem:[#allocation5] sm:$0xf] %v2333
        %2336 = vst [vmem:[#allocation5 + $0x8] sm:$0xf] %v2334
        %v2338 = vrot.slane %v1723, 4
        %v2341 = vrot.slane %v1979, 4
        %2343 = vmatpush.bf16.xpose.msra.mxu0 0
        %2344 = vmatpush.bf16.xpose.msra.mxu0 0
        %2345 = vmatpush.bf16.xpose.msra.mxu0 0
        %2346 = vmatpush.bf16.xpose.msra.mxu0 0
        %2347 = vmatpush.bf16.xpose.msra.mxu0 0
        %2348 = vmatpush.bf16.xpose.msra.mxu0 0
        %2349 = vmatpush.bf16.xpose.msra.mxu0 0
        %2350 = vmatpush.bf16.xpose.msra.mxu0 %v2341
        %2351 = vmatmul.bf16.gmra.mxu0 %v2338
        %v2352 = vpop.f32.mrf.mxu0
        %v2353 = vadd.f32 %v2239, %v2352
        %v2354 = vpop.f32.mrf.mxu0
        %2355 = vdwg.mxu0
        %v2357 = vrot.slane %v1724, 4
        %v2360 = vrot.slane %v1980, 4
        %2362 = vmatpush.bf16.xpose.msra.mxu0 0
        %2363 = vmatpush.bf16.xpose.msra.mxu0 0
        %2364 = vmatpush.bf16.xpose.msra.mxu0 0
        %2365 = vmatpush.bf16.xpose.msra.mxu0 0
        %2366 = vmatpush.bf16.xpose.msra.mxu0 0
        %2367 = vmatpush.bf16.xpose.msra.mxu0 0
        %2368 = vmatpush.bf16.xpose.msra.mxu0 0
        %2369 = vmatpush.bf16.xpose.msra.mxu0 %v2360
        %2370 = vmatmul.bf16.gmra.mxu0 %v2357
        %v2371 = vpop.f32.mrf.mxu0
        %v2372 = vadd.f32 %v2240, %v2371
        %v2373 = vpop.f32.mrf.mxu0
        %2374 = vdwg.mxu0
        %v2375 = vsel %vm2269, %v2353, -inf
        %2376 = vmax.xlane.f32.xlu0 %v2375
        %v2377 = vpop.xlane.xlu0 %2376
        %v2378 = vsel %vm2269, %v2372, -inf
        %2379 = vmax.xlane.f32.xlu0 %v2378
        %v2380 = vpop.xlane.xlu0 %2379
        %v2381 = vsub.f32 %v2353, %v2377
        %v2382 = vsub.f32 %v2372, %v2380
        %v2383 = vmul.f32 %v2381, 1.442695
        %v2384 = vpow.pop %v2383
        %v2385 = vmul.f32 %v2382, 1.442695
        %v2386 = vpow.pop %v2385
        %v2387 = vsel %vm2269, %v2384, 0.0
        %2388 = vadd.xlane.f32.xlu0 %v2387
        %v2389 = vpop.xlane.xlu0 %2388
        %v2390 = vsel %vm2269, %v2386, 0.0
        %2391 = vadd.xlane.f32.xlu0 %v2390
        %v2392 = vpop.xlane.xlu0 %2391
        %v2393 = vrcp.pop %v2389
        %v2394 = vrcp.pop %v2392
        %v2395 = vmul.f32 %v2384, %v2393
        %v2396 = vmul.f32 %v2386, %v2394
        %v2397 = vpack.c.bf16 %v2395, %v2395
        %v2398 = vpack.c.bf16 %v2396, %v2396
        %v2400 = vrot.slane %v2235, 4
        %v2402 = vsel %vm2269, %v2397, 0
        %v2405 = vsel %vm2297, %v2400, 0
        %2407 = vmatpush.bf16.msra.mxu0 0
        %2408 = vmatpush.bf16.msra.mxu0 0
        %2409 = vmatpush.bf16.msra.mxu0 0
        %2410 = vmatpush.bf16.msra.mxu0 0
        %2411 = vmatpush.bf16.msra.mxu0 0
        %2412 = vmatpush.bf16.msra.mxu0 0
        %2413 = vmatpush.bf16.msra.mxu0 0
        %2414 = vmatpush.bf16.msra.mxu0 %v2405
        %2415 = vmatmul.bf16.gmra.mxu0 %v2402
        %v2416 = vpop.f32.mrf.mxu0
        %v2417 = vadd.f32 0.0, %v2416
        %v2418 = vpop.f32.mrf.mxu0
        %2419 = vdwg.mxu0
        %v2421 = vrot.slane %v2236, 4
        %v2423 = vsel %vm2269, %v2398, 0
        %v2426 = vsel %vm2297, %v2421, 0
        %2428 = vmatpush.bf16.msra.mxu0 0
        %2429 = vmatpush.bf16.msra.mxu0 0
        %2430 = vmatpush.bf16.msra.mxu0 0
        %2431 = vmatpush.bf16.msra.mxu0 0
        %2432 = vmatpush.bf16.msra.mxu0 0
        %2433 = vmatpush.bf16.msra.mxu0 0
        %2434 = vmatpush.bf16.msra.mxu0 0
        %2435 = vmatpush.bf16.msra.mxu0 %v2426
        %2436 = vmatmul.bf16.gmra.mxu0 %v2423
        %v2437 = vpop.f32.mrf.mxu0
        %v2438 = vadd.f32 0.0, %v2437
        %v2439 = vpop.f32.mrf.mxu0
        %2440 = vdwg.mxu0
        %v2441 = vpack.c.bf16 %v2417, %v2417
        %v2442 = vpack.c.bf16 %v2438, %v2438
        %2443 = vst [vmem:[#allocation5 + $0x4] sm:$0xf] %v2441
        %2444 = vst [vmem:[#allocation5 + $0xc] sm:$0xf] %v2442
        %v2445 = vld [vmem:[#allocation5] sm:$0xff]
        %v2446 = vld [vmem:[#allocation5 + $0x8] sm:$0xff]
        %v2447 = vld [vmem:[%s1064] sm:$0xff]
        %v2448 = vld [vmem:[%s1064 + $0x8] sm:$0xff]
        %v2449 = vld [vmem:[%s1064 + $0x10] sm:$0xff]
        %v2450 = vld [vmem:[%s1064 + $0x18] sm:$0xff]
        %v2451 = vld [vmem:[%s1064 + $0x20] sm:$0xff]
        %v2452 = vld [vmem:[%s1064 + $0x28] sm:$0xff]
        %v2453 = vld [vmem:[%s1064 + $0x30] sm:$0xff]
        %v2454 = vld [vmem:[%s1064 + $0x38] sm:$0xff]
        %v2455 = vld [vmem:[%s1064 + $0x40] sm:$0xff]
        %v2456 = vld [vmem:[%s1064 + $0x48] sm:$0xff]
        %v2457 = vld [vmem:[%s1064 + $0x50] sm:$0xff]
        %v2458 = vld [vmem:[%s1064 + $0x58] sm:$0xff]
        %v2459 = vld [vmem:[%s1064 + $0x60] sm:$0xff]
        %v2460 = vld [vmem:[%s1064 + $0x68] sm:$0xff]
        %v2461 = vld [vmem:[%s1064 + $0x70] sm:$0xff]
        %v2462 = vld [vmem:[%s1064 + $0x78] sm:$0xff]
        %v2463 = vld [vmem:[%s1064 + $0x80] sm:$0xff]
        %v2464 = vld [vmem:[%s1064 + $0x88] sm:$0xff]
        %v2465 = vld [vmem:[%s1064 + $0x90] sm:$0xff]
        %v2466 = vld [vmem:[%s1064 + $0x98] sm:$0xff]
        %v2467 = vld [vmem:[%s1064 + $0xa0] sm:$0xff]
        %v2468 = vld [vmem:[%s1064 + $0xa8] sm:$0xff]
        %v2469 = vld [vmem:[%s1064 + $0xb0] sm:$0xff]
        %v2470 = vld [vmem:[%s1064 + $0xb8] sm:$0xff]
        %v2471 = vld [vmem:[%s1064 + $0xc0] sm:$0xff]
        %v2472 = vld [vmem:[%s1064 + $0xc8] sm:$0xff]
        %v2473 = vld [vmem:[%s1064 + $0xd0] sm:$0xff]
        %v2474 = vld [vmem:[%s1064 + $0xd8] sm:$0xff]
        %v2475 = vld [vmem:[%s1064 + $0xe0] sm:$0xff]
        %v2476 = vld [vmem:[%s1064 + $0xe8] sm:$0xff]
        %v2477 = vld [vmem:[%s1064 + $0xf0] sm:$0xff]
        %v2478 = vld [vmem:[%s1064 + $0xf8] sm:$0xff]
        %v2479 = vld [vmem:[%s1074] sm:$0x3]
        %v2481 = vperm.slane %v2479, 0
        %v2482 = vperm.slane %v2479, 1
        %v2487 = vunpack.c.l.b16 %v2445
        %v2488 = vunpack.c.h.b16 %v2445
        %v2489 = vunpack.c.l.b16 %v2446
        %v2490 = vunpack.c.h.b16 %v2446
        %v2491 = vpack.c.b16 %v2489, %v2487
        %v2492 = vpack.c.b16 %v2490, %v2488
        %v2527 = vunpack.c.l.b16 %v2447
        %v2528 = vunpack.c.h.b16 %v2447
        %v2529 = vunpack.c.l.b16 %v2448
        %v2530 = vunpack.c.h.b16 %v2448
        %v2531 = vunpack.c.l.b16 %v2449
        %v2532 = vunpack.c.h.b16 %v2449
        %v2533 = vunpack.c.l.b16 %v2450
        %v2534 = vunpack.c.h.b16 %v2450
        %v2535 = vunpack.c.l.b16 %v2451
        %v2536 = vunpack.c.h.b16 %v2451
        %v2537 = vunpack.c.l.b16 %v2452
        %v2538 = vunpack.c.h.b16 %v2452
        %v2539 = vunpack.c.l.b16 %v2453
        %v2540 = vunpack.c.h.b16 %v2453
        %v2541 = vunpack.c.l.b16 %v2454
        %v2542 = vunpack.c.h.b16 %v2454
        %v2543 = vunpack.c.l.b16 %v2455
        %v2544 = vunpack.c.h.b16 %v2455
        %v2545 = vunpack.c.l.b16 %v2456
        %v2546 = vunpack.c.h.b16 %v2456
        %v2547 = vunpack.c.l.b16 %v2457
        %v2548 = vunpack.c.h.b16 %v2457
        %v2549 = vunpack.c.l.b16 %v2458
        %v2550 = vunpack.c.h.b16 %v2458
        %v2551 = vunpack.c.l.b16 %v2459
        %v2552 = vunpack.c.h.b16 %v2459
        %v2553 = vunpack.c.l.b16 %v2460
        %v2554 = vunpack.c.h.b16 %v2460
        %v2555 = vunpack.c.l.b16 %v2461
        %v2556 = vunpack.c.h.b16 %v2461
        %v2557 = vunpack.c.l.b16 %v2462
        %v2558 = vunpack.c.h.b16 %v2462
        %v2559 = vunpack.c.l.b16 %v2463
        %v2560 = vunpack.c.h.b16 %v2463
        %v2561 = vunpack.c.l.b16 %v2464
        %v2562 = vunpack.c.h.b16 %v2464
        %v2563 = vunpack.c.l.b16 %v2465
        %v2564 = vunpack.c.h.b16 %v2465
        %v2565 = vunpack.c.l.b16 %v2466
        %v2566 = vunpack.c.h.b16 %v2466
        %v2567 = vunpack.c.l.b16 %v2467
        %v2568 = vunpack.c.h.b16 %v2467
        %v2569 = vunpack.c.l.b16 %v2468
        %v2570 = vunpack.c.h.b16 %v2468
        %v2571 = vunpack.c.l.b16 %v2469
        %v2572 = vunpack.c.h.b16 %v2469
        %v2573 = vunpack.c.l.b16 %v2470
        %v2574 = vunpack.c.h.b16 %v2470
        %v2575 = vunpack.c.l.b16 %v2471
        %v2576 = vunpack.c.h.b16 %v2471
        %v2577 = vunpack.c.l.b16 %v2472
        %v2578 = vunpack.c.h.b16 %v2472
        %v2579 = vunpack.c.l.b16 %v2473
        %v2580 = vunpack.c.h.b16 %v2473
        %v2581 = vunpack.c.l.b16 %v2474
        %v2582 = vunpack.c.h.b16 %v2474
        %v2583 = vunpack.c.l.b16 %v2475
        %v2584 = vunpack.c.h.b16 %v2475
        %v2585 = vunpack.c.l.b16 %v2476
        %v2586 = vunpack.c.h.b16 %v2476
        %v2587 = vunpack.c.l.b16 %v2477
        %v2588 = vunpack.c.h.b16 %v2477
        %v2589 = vunpack.c.l.b16 %v2478
        %v2590 = vunpack.c.h.b16 %v2478
        %v2591 = vpack.c.b16 %v2529, %v2527
        %v2592 = vpack.c.b16 %v2530, %v2528
        %v2593 = vpack.c.b16 %v2533, %v2531
        %v2594 = vpack.c.b16 %v2534, %v2532
        %v2595 = vpack.c.b16 %v2537, %v2535
        %v2596 = vpack.c.b16 %v2538, %v2536
        %v2597 = vpack.c.b16 %v2541, %v2539
        %v2598 = vpack.c.b16 %v2542, %v2540
        %v2599 = vpack.c.b16 %v2545, %v2543
        %v2600 = vpack.c.b16 %v2546, %v2544
        %v2601 = vpack.c.b16 %v2549, %v2547
        %v2602 = vpack.c.b16 %v2550, %v2548
        %v2603 = vpack.c.b16 %v2553, %v2551
        %v2604 = vpack.c.b16 %v2554, %v2552
        %v2605 = vpack.c.b16 %v2557, %v2555
        %v2606 = vpack.c.b16 %v2558, %v2556
        %v2607 = vpack.c.b16 %v2561, %v2559
        %v2608 = vpack.c.b16 %v2562, %v2560
        %v2609 = vpack.c.b16 %v2565, %v2563
        %v2610 = vpack.c.b16 %v2566, %v2564
        %v2611 = vpack.c.b16 %v2569, %v2567
        %v2612 = vpack.c.b16 %v2570, %v2568
        %v2613 = vpack.c.b16 %v2573, %v2571
        %v2614 = vpack.c.b16 %v2574, %v2572
        %v2615 = vpack.c.b16 %v2577, %v2575
        %v2616 = vpack.c.b16 %v2578, %v2576
        %v2617 = vpack.c.b16 %v2581, %v2579
        %v2618 = vpack.c.b16 %v2582, %v2580
        %v2619 = vpack.c.b16 %v2585, %v2583
        %v2620 = vpack.c.b16 %v2586, %v2584
        %v2621 = vpack.c.b16 %v2589, %v2587
        %v2622 = vpack.c.b16 %v2590, %v2588
        %2655 = vmatpush.bf16.msra.mxu0 %v2605
        %2656 = vmatpush.bf16.msra.mxu0 %v2603
        %2657 = vmatpush.bf16.msra.mxu0 %v2601
        %2658 = vmatpush.bf16.msra.mxu0 %v2599
        %2659 = vmatpush.bf16.msra.mxu0 %v2597
        %2660 = vmatpush.bf16.msra.mxu0 %v2595
        %2661 = vmatpush.bf16.msra.mxu0 %v2593
        %2662 = vmatpush.bf16.msra.mxu0 %v2591
        %2663 = vmatmul.bf16.gmra.mxu0 %v2491
        %v2664 = vpop.f32.mrf.mxu0
        %v2665 = vadd.f32 %v2481, %v2664
        %v2666 = vpop.f32.mrf.mxu0
        %v2667 = vadd.f32 %v2481, %v2666
        %2668 = vdwg.mxu0
        %2669 = vmatpush.bf16.msra.mxu0 %v2621
        %2670 = vmatpush.bf16.msra.mxu0 %v2619
        %2671 = vmatpush.bf16.msra.mxu0 %v2617
        %2672 = vmatpush.bf16.msra.mxu0 %v2615
        %2673 = vmatpush.bf16.msra.mxu0 %v2613
        %2674 = vmatpush.bf16.msra.mxu0 %v2611
        %2675 = vmatpush.bf16.msra.mxu0 %v2609
        %2676 = vmatpush.bf16.msra.mxu0 %v2607
        %2677 = vmatmul.bf16.gmra.mxu0 %v2492
        %v2678 = vpop.f32.mrf.mxu0
        %v2679 = vadd.f32 %v2665, %v2678
        %v2680 = vpop.f32.mrf.mxu0
        %v2681 = vadd.f32 %v2667, %v2680
        %2682 = vdwg.mxu0
        %2683 = vmatpush.bf16.msra.mxu0 %v2606
        %2684 = vmatpush.bf16.msra.mxu0 %v2604
        %2685 = vmatpush.bf16.msra.mxu0 %v2602
        %2686 = vmatpush.bf16.msra.mxu0 %v2600
        %2687 = vmatpush.bf16.msra.mxu0 %v2598
        %2688 = vmatpush.bf16.msra.mxu0 %v2596
        %2689 = vmatpush.bf16.msra.mxu0 %v2594
        %2690 = vmatpush.bf16.msra.mxu0 %v2592
        %2691 = vmatmul.bf16.gmra.mxu0 %v2491
        %v2692 = vpop.f32.mrf.mxu0
        %v2693 = vadd.f32 %v2482, %v2692
        %v2694 = vpop.f32.mrf.mxu0
        %v2695 = vadd.f32 %v2482, %v2694
        %2696 = vdwg.mxu0
        %2697 = vmatpush.bf16.msra.mxu0 %v2622
        %2698 = vmatpush.bf16.msra.mxu0 %v2620
        %2699 = vmatpush.bf16.msra.mxu0 %v2618
        %2700 = vmatpush.bf16.msra.mxu0 %v2616
        %2701 = vmatpush.bf16.msra.mxu0 %v2614
        %2702 = vmatpush.bf16.msra.mxu0 %v2612
        %2703 = vmatpush.bf16.msra.mxu0 %v2610
        %2704 = vmatpush.bf16.msra.mxu0 %v2608
        %2705 = vmatmul.bf16.gmra.mxu0 %v2492
        %v2706 = vpop.f32.mrf.mxu0
        %v2707 = vadd.f32 %v2693, %v2706
        %v2708 = vpop.f32.mrf.mxu0
        %v2709 = vadd.f32 %v2695, %v2708
        %2710 = vdwg.mxu0
        %v2711 = vadd.f32 %v1459, %v2679
        %v2712 = vadd.f32 %v1460, %v2707
        %v2713 = vadd.f32 %v1461, %v2681
        %v2714 = vadd.f32 %v1462, %v2709
        %v2715 = vld [vmem:[%s1279] sm:$0x3]
        %v2716 = vld [vmem:[%s1084] sm:$0x3]
        %v2717 = vadd.f32 %v2711, %v2712
        %2718 = vadd.xlane.f32.xlu0 %v2717
        %v2719 = vpop.xlane.xlu0 %2718
        %v2720 = vadd.f32 %v2713, %v2714
        %2721 = vadd.xlane.f32.xlu0 %v2720
        %v2722 = vpop.xlane.xlu0 %2721
        %v2723 = vrcp.pop 256.0
        %v2724 = vmul.f32 256.0, %v2723
        %v2725 = vsub.f32 1.0, %v2724
        %v2726 = vmul.f32 %v2723, %v2725
        %v2727 = vadd.f32 %v2723, %v2726
        %vm2728 = vweird.f32 %v2723
        %v2729 = vsel %vm2728, %v2723, %v2727
        %v2730 = vmul.f32 %v2719, %v2729
        %v2731 = vmul.f32 %v2722, %v2729
        %v2732 = vsub.f32 %v2711, %v2730
        %v2733 = vsub.f32 %v2712, %v2730
        %v2734 = vsub.f32 %v2713, %v2731
        %v2735 = vsub.f32 %v2714, %v2731
        %v2736 = vmul.f32 %v2732, %v2732
        %v2737 = vmul.f32 %v2733, %v2733
        %v2738 = vmul.f32 %v2734, %v2734
        %v2739 = vmul.f32 %v2735, %v2735
        %v2740 = vadd.f32 %v2736, %v2737
        %2741 = vadd.xlane.f32.xlu0 %v2740
        %v2742 = vpop.xlane.xlu0 %2741
        %v2743 = vadd.f32 %v2738, %v2739
        %2744 = vadd.xlane.f32.xlu0 %v2743
        %v2745 = vpop.xlane.xlu0 %2744
        %v2746 = vmul.f32 %v2742, %v2729
        %v2747 = vmul.f32 %v2745, %v2729
        %v2748 = vadd.f32 %v2746, 1e-12
        %v2749 = vadd.f32 %v2747, 1e-12
        %v2750 = vrsqrt.pop %v2748
        %v2751 = vmul.f32 %v2750, %v2748
        %v2752 = vmul.f32 %v2751, %v2750
        %v2753 = vmul.f32 0.5, %v2752
        %v2754 = vsub.f32 1.5, %v2753
        %v2755 = vmul.f32 %v2750, %v2754
        %vm2756 = vweird.f32 %v2748
        %vm2757 = vweird.f32 %v2750
        %vm2758 = vmor %vm2756, %vm2757
        %v2759 = vsel %vm2758, %v2750, %v2755
        %v2760 = vrsqrt.pop %v2749
        %v2761 = vmul.f32 %v2760, %v2749
        %v2762 = vmul.f32 %v2761, %v2760
        %v2763 = vmul.f32 0.5, %v2762
        %v2764 = vsub.f32 1.5, %v2763
        %v2765 = vmul.f32 %v2760, %v2764
        %vm2766 = vweird.f32 %v2749
        %vm2767 = vweird.f32 %v2760
        %vm2768 = vmor %vm2766, %vm2767
        %v2769 = vsel %vm2768, %v2760, %v2765
        %v2770 = vmul.f32 %v2732, %v2759
        %v2771 = vmul.f32 %v2733, %v2759
        %v2772 = vmul.f32 %v2734, %v2769
        %v2773 = vmul.f32 %v2735, %v2769
        %v2775 = vperm.slane %v2715, 0
        %v2776 = vperm.slane %v2715, 1
        %v2779 = vmul.f32 %v2770, %v2775
        %v2780 = vmul.f32 %v2771, %v2776
        %v2781 = vmul.f32 %v2772, %v2775
        %v2782 = vmul.f32 %v2773, %v2776
        %v2784 = vperm.slane %v2716, 0
        %v2785 = vperm.slane %v2716, 1
        %v2788 = vadd.f32 %v2779, %v2784
        %v2789 = vadd.f32 %v2780, %v2785
        %v2790 = vadd.f32 %v2781, %v2784
        %v2791 = vadd.f32 %v2782, %v2785
        %v2792 = vpack.c.bf16 %v2790, %v2788
        %v2793 = vpack.c.bf16 %v2791, %v2789
        %v2794 = vld [vmem:[%s1094] sm:$0xff]
        %v2795 = vld [vmem:[%s1094 + $0x8] sm:$0xff]
        %v2796 = vld [vmem:[%s1094 + $0x10] sm:$0xff]
        %v2797 = vld [vmem:[%s1094 + $0x18] sm:$0xff]
        %v2798 = vld [vmem:[%s1094 + $0x20] sm:$0xff]
        %v2799 = vld [vmem:[%s1094 + $0x28] sm:$0xff]
        %v2800 = vld [vmem:[%s1094 + $0x30] sm:$0xff]
        %v2801 = vld [vmem:[%s1094 + $0x38] sm:$0xff]
        %v2802 = vld [vmem:[%s1094 + $0x40] sm:$0xff]
        %v2803 = vld [vmem:[%s1094 + $0x48] sm:$0xff]
        %v2804 = vld [vmem:[%s1094 + $0x50] sm:$0xff]
        %v2805 = vld [vmem:[%s1094 + $0x58] sm:$0xff]
        %v2806 = vld [vmem:[%s1094 + $0x60] sm:$0xff]
        %v2807 = vld [vmem:[%s1094 + $0x68] sm:$0xff]
        %v2808 = vld [vmem:[%s1094 + $0x70] sm:$0xff]
        %v2809 = vld [vmem:[%s1094 + $0x78] sm:$0xff]
        %v2810 = vld [vmem:[%s1094 + $0x80] sm:$0xff]
        %v2811 = vld [vmem:[%s1094 + $0x88] sm:$0xff]
        %v2812 = vld [vmem:[%s1094 + $0x90] sm:$0xff]
        %v2813 = vld [vmem:[%s1094 + $0x98] sm:$0xff]
        %v2814 = vld [vmem:[%s1094 + $0xa0] sm:$0xff]
        %v2815 = vld [vmem:[%s1094 + $0xa8] sm:$0xff]
        %v2816 = vld [vmem:[%s1094 + $0xb0] sm:$0xff]
        %v2817 = vld [vmem:[%s1094 + $0xb8] sm:$0xff]
        %v2818 = vld [vmem:[%s1094 + $0xc0] sm:$0xff]
        %v2819 = vld [vmem:[%s1094 + $0xc8] sm:$0xff]
        %v2820 = vld [vmem:[%s1094 + $0xd0] sm:$0xff]
        %v2821 = vld [vmem:[%s1094 + $0xd8] sm:$0xff]
        %v2822 = vld [vmem:[%s1094 + $0xe0] sm:$0xff]
        %v2823 = vld [vmem:[%s1094 + $0xe8] sm:$0xff]
        %v2824 = vld [vmem:[%s1094 + $0xf0] sm:$0xff]
        %v2825 = vld [vmem:[%s1094 + $0xf8] sm:$0xff]
        %v2826 = vld [vmem:[%s1094 + $0x100] sm:$0xff]
        %v2827 = vld [vmem:[%s1094 + $0x108] sm:$0xff]
        %v2828 = vld [vmem:[%s1094 + $0x110] sm:$0xff]
        %v2829 = vld [vmem:[%s1094 + $0x118] sm:$0xff]
        %v2830 = vld [vmem:[%s1094 + $0x120] sm:$0xff]
        %v2831 = vld [vmem:[%s1094 + $0x128] sm:$0xff]
        %v2832 = vld [vmem:[%s1094 + $0x130] sm:$0xff]
        %v2833 = vld [vmem:[%s1094 + $0x138] sm:$0xff]
        %v2834 = vld [vmem:[%s1094 + $0x140] sm:$0xff]
        %v2835 = vld [vmem:[%s1094 + $0x148] sm:$0xff]
        %v2836 = vld [vmem:[%s1094 + $0x150] sm:$0xff]
        %v2837 = vld [vmem:[%s1094 + $0x158] sm:$0xff]
        %v2838 = vld [vmem:[%s1094 + $0x160] sm:$0xff]
        %v2839 = vld [vmem:[%s1094 + $0x168] sm:$0xff]
        %v2840 = vld [vmem:[%s1094 + $0x170] sm:$0xff]
        %v2841 = vld [vmem:[%s1094 + $0x178] sm:$0xff]
        %v2842 = vld [vmem:[%s1094 + $0x180] sm:$0xff]
        %v2843 = vld [vmem:[%s1094 + $0x188] sm:$0xff]
        %v2844 = vld [vmem:[%s1094 + $0x190] sm:$0xff]
        %v2845 = vld [vmem:[%s1094 + $0x198] sm:$0xff]
        %v2846 = vld [vmem:[%s1094 + $0x1a0] sm:$0xff]
        %v2847 = vld [vmem:[%s1094 + $0x1a8] sm:$0xff]
        %v2848 = vld [vmem:[%s1094 + $0x1b0] sm:$0xff]
        %v2849 = vld [vmem:[%s1094 + $0x1b8] sm:$0xff]
        %v2850 = vld [vmem:[%s1094 + $0x1c0] sm:$0xff]
        %v2851 = vld [vmem:[%s1094 + $0x1c8] sm:$0xff]
        %v2852 = vld [vmem:[%s1094 + $0x1d0] sm:$0xff]
        %v2853 = vld [vmem:[%s1094 + $0x1d8] sm:$0xff]
        %v2854 = vld [vmem:[%s1094 + $0x1e0] sm:$0xff]
        %v2855 = vld [vmem:[%s1094 + $0x1e8] sm:$0xff]
        %v2856 = vld [vmem:[%s1094 + $0x1f0] sm:$0xff]
        %v2857 = vld [vmem:[%s1094 + $0x1f8] sm:$0xff]
        %v2858 = vld [vmem:[%s1094 + $0x200] sm:$0xff]
        %v2859 = vld [vmem:[%s1094 + $0x208] sm:$0xff]
        %v2860 = vld [vmem:[%s1094 + $0x210] sm:$0xff]
        %v2861 = vld [vmem:[%s1094 + $0x218] sm:$0xff]
        %v2862 = vld [vmem:[%s1094 + $0x220] sm:$0xff]
        %v2863 = vld [vmem:[%s1094 + $0x228] sm:$0xff]
        %v2864 = vld [vmem:[%s1094 + $0x230] sm:$0xff]
        %v2865 = vld [vmem:[%s1094 + $0x238] sm:$0xff]
        %v2866 = vld [vmem:[%s1094 + $0x240] sm:$0xff]
        %v2867 = vld [vmem:[%s1094 + $0x248] sm:$0xff]
        %v2868 = vld [vmem:[%s1094 + $0x250] sm:$0xff]
        %v2869 = vld [vmem:[%s1094 + $0x258] sm:$0xff]
        %v2870 = vld [vmem:[%s1094 + $0x260] sm:$0xff]
        %v2871 = vld [vmem:[%s1094 + $0x268] sm:$0xff]
        %v2872 = vld [vmem:[%s1094 + $0x270] sm:$0xff]
        %v2873 = vld [vmem:[%s1094 + $0x278] sm:$0xff]
        %v2874 = vld [vmem:[%s1094 + $0x280] sm:$0xff]
        %v2875 = vld [vmem:[%s1094 + $0x288] sm:$0xff]
        %v2876 = vld [vmem:[%s1094 + $0x290] sm:$0xff]
        %v2877 = vld [vmem:[%s1094 + $0x298] sm:$0xff]
        %v2878 = vld [vmem:[%s1094 + $0x2a0] sm:$0xff]
        %v2879 = vld [vmem:[%s1094 + $0x2a8] sm:$0xff]
        %v2880 = vld [vmem:[%s1094 + $0x2b0] sm:$0xff]
        %v2881 = vld [vmem:[%s1094 + $0x2b8] sm:$0xff]
        %v2882 = vld [vmem:[%s1094 + $0x2c0] sm:$0xff]
        %v2883 = vld [vmem:[%s1094 + $0x2c8] sm:$0xff]
        %v2884 = vld [vmem:[%s1094 + $0x2d0] sm:$0xff]
        %v2885 = vld [vmem:[%s1094 + $0x2d8] sm:$0xff]
        %v2886 = vld [vmem:[%s1094 + $0x2e0] sm:$0xff]
        %v2887 = vld [vmem:[%s1094 + $0x2e8] sm:$0xff]
        %v2888 = vld [vmem:[%s1094 + $0x2f0] sm:$0xff]
        %v2889 = vld [vmem:[%s1094 + $0x2f8] sm:$0xff]
        %v2890 = vld [vmem:[%s1094 + $0x300] sm:$0xff]
        %v2891 = vld [vmem:[%s1094 + $0x308] sm:$0xff]
        %v2892 = vld [vmem:[%s1094 + $0x310] sm:$0xff]
        %v2893 = vld [vmem:[%s1094 + $0x318] sm:$0xff]
        %v2894 = vld [vmem:[%s1094 + $0x320] sm:$0xff]
        %v2895 = vld [vmem:[%s1094 + $0x328] sm:$0xff]
        %v2896 = vld [vmem:[%s1094 + $0x330] sm:$0xff]
        %v2897 = vld [vmem:[%s1094 + $0x338] sm:$0xff]
        %v2898 = vld [vmem:[%s1094 + $0x340] sm:$0xff]
        %v2899 = vld [vmem:[%s1094 + $0x348] sm:$0xff]
        %v2900 = vld [vmem:[%s1094 + $0x350] sm:$0xff]
        %v2901 = vld [vmem:[%s1094 + $0x358] sm:$0xff]
        %v2902 = vld [vmem:[%s1094 + $0x360] sm:$0xff]
        %v2903 = vld [vmem:[%s1094 + $0x368] sm:$0xff]
        %v2904 = vld [vmem:[%s1094 + $0x370] sm:$0xff]
        %v2905 = vld [vmem:[%s1094 + $0x378] sm:$0xff]
        %v2906 = vld [vmem:[%s1094 + $0x380] sm:$0xff]
        %v2907 = vld [vmem:[%s1094 + $0x388] sm:$0xff]
        %v2908 = vld [vmem:[%s1094 + $0x390] sm:$0xff]
        %v2909 = vld [vmem:[%s1094 + $0x398] sm:$0xff]
        %v2910 = vld [vmem:[%s1094 + $0x3a0] sm:$0xff]
        %v2911 = vld [vmem:[%s1094 + $0x3a8] sm:$0xff]
        %v2912 = vld [vmem:[%s1094 + $0x3b0] sm:$0xff]
        %v2913 = vld [vmem:[%s1094 + $0x3b8] sm:$0xff]
        %v2914 = vld [vmem:[%s1094 + $0x3c0] sm:$0xff]
        %v2915 = vld [vmem:[%s1094 + $0x3c8] sm:$0xff]
        %v2916 = vld [vmem:[%s1094 + $0x3d0] sm:$0xff]
        %v2917 = vld [vmem:[%s1094 + $0x3d8] sm:$0xff]
        %v2918 = vld [vmem:[%s1094 + $0x3e0] sm:$0xff]
        %v2919 = vld [vmem:[%s1094 + $0x3e8] sm:$0xff]
        %v2920 = vld [vmem:[%s1094 + $0x3f0] sm:$0xff]
        %v2921 = vld [vmem:[%s1094 + $0x3f8] sm:$0xff]
        %v2922 = vld [vmem:[%s1104] sm:$0xff]
        %v2924 = vperm.slane %v2922, 0
        %v2925 = vperm.slane %v2922, 1
        %v2926 = vperm.slane %v2922, 2
        %v2927 = vperm.slane %v2922, 3
        %v2928 = vperm.slane %v2922, 4
        %v2929 = vperm.slane %v2922, 5
        %v2930 = vperm.slane %v2922, 6
        %v2931 = vperm.slane %v2922, 7
        %v3068 = vunpack.c.l.b16 %v2794
        %v3069 = vunpack.c.h.b16 %v2794
        %v3070 = vunpack.c.l.b16 %v2795
        %v3071 = vunpack.c.h.b16 %v2795
        %v3072 = vunpack.c.l.b16 %v2796
        %v3073 = vunpack.c.h.b16 %v2796
        %v3074 = vunpack.c.l.b16 %v2797
        %v3075 = vunpack.c.h.b16 %v2797
        %v3076 = vunpack.c.l.b16 %v2798
        %v3077 = vunpack.c.h.b16 %v2798
        %v3078 = vunpack.c.l.b16 %v2799
        %v3079 = vunpack.c.h.b16 %v2799
        %v3080 = vunpack.c.l.b16 %v2800
        %v3081 = vunpack.c.h.b16 %v2800
        %v3082 = vunpack.c.l.b16 %v2801
        %v3083 = vunpack.c.h.b16 %v2801
        %v3084 = vunpack.c.l.b16 %v2802
        %v3085 = vunpack.c.h.b16 %v2802
        %v3086 = vunpack.c.l.b16 %v2803
        %v3087 = vunpack.c.h.b16 %v2803
        %v3088 = vunpack.c.l.b16 %v2804
        %v3089 = vunpack.c.h.b16 %v2804
        %v3090 = vunpack.c.l.b16 %v2805
        %v3091 = vunpack.c.h.b16 %v2805
        %v3092 = vunpack.c.l.b16 %v2806
        %v3093 = vunpack.c.h.b16 %v2806
        %v3094 = vunpack.c.l.b16 %v2807
        %v3095 = vunpack.c.h.b16 %v2807
        %v3096 = vunpack.c.l.b16 %v2808
        %v3097 = vunpack.c.h.b16 %v2808
        %v3098 = vunpack.c.l.b16 %v2809
        %v3099 = vunpack.c.h.b16 %v2809
        %v3100 = vunpack.c.l.b16 %v2810
        %v3101 = vunpack.c.h.b16 %v2810
        %v3102 = vunpack.c.l.b16 %v2811
        %v3103 = vunpack.c.h.b16 %v2811
        %v3104 = vunpack.c.l.b16 %v2812
        %v3105 = vunpack.c.h.b16 %v2812
        %v3106 = vunpack.c.l.b16 %v2813
        %v3107 = vunpack.c.h.b16 %v2813
        %v3108 = vunpack.c.l.b16 %v2814
        %v3109 = vunpack.c.h.b16 %v2814
        %v3110 = vunpack.c.l.b16 %v2815
        %v3111 = vunpack.c.h.b16 %v2815
        %v3112 = vunpack.c.l.b16 %v2816
        %v3113 = vunpack.c.h.b16 %v2816
        %v3114 = vunpack.c.l.b16 %v2817
        %v3115 = vunpack.c.h.b16 %v2817
        %v3116 = vunpack.c.l.b16 %v2818
        %v3117 = vunpack.c.h.b16 %v2818
        %v3118 = vunpack.c.l.b16 %v2819
        %v3119 = vunpack.c.h.b16 %v2819
        %v3120 = vunpack.c.l.b16 %v2820
        %v3121 = vunpack.c.h.b16 %v2820
        %v3122 = vunpack.c.l.b16 %v2821
        %v3123 = vunpack.c.h.b16 %v2821
        %v3124 = vunpack.c.l.b16 %v2822
        %v3125 = vunpack.c.h.b16 %v2822
        %v3126 = vunpack.c.l.b16 %v2823
        %v3127 = vunpack.c.h.b16 %v2823
        %v3128 = vunpack.c.l.b16 %v2824
        %v3129 = vunpack.c.h.b16 %v2824
        %v3130 = vunpack.c.l.b16 %v2825
        %v3131 = vunpack.c.h.b16 %v2825
        %v3132 = vunpack.c.l.b16 %v2826
        %v3133 = vunpack.c.h.b16 %v2826
        %v3134 = vunpack.c.l.b16 %v2827
        %v3135 = vunpack.c.h.b16 %v2827
        %v3136 = vunpack.c.l.b16 %v2828
        %v3137 = vunpack.c.h.b16 %v2828
        %v3138 = vunpack.c.l.b16 %v2829
        %v3139 = vunpack.c.h.b16 %v2829
        %v3140 = vunpack.c.l.b16 %v2830
        %v3141 = vunpack.c.h.b16 %v2830
        %v3142 = vunpack.c.l.b16 %v2831
        %v3143 = vunpack.c.h.b16 %v2831
        %v3144 = vunpack.c.l.b16 %v2832
        %v3145 = vunpack.c.h.b16 %v2832
        %v3146 = vunpack.c.l.b16 %v2833
        %v3147 = vunpack.c.h.b16 %v2833
        %v3148 = vunpack.c.l.b16 %v2834
        %v3149 = vunpack.c.h.b16 %v2834
        %v3150 = vunpack.c.l.b16 %v2835
        %v3151 = vunpack.c.h.b16 %v2835
        %v3152 = vunpack.c.l.b16 %v2836
        %v3153 = vunpack.c.h.b16 %v2836
        %v3154 = vunpack.c.l.b16 %v2837
        %v3155 = vunpack.c.h.b16 %v2837
        %v3156 = vunpack.c.l.b16 %v2838
        %v3157 = vunpack.c.h.b16 %v2838
        %v3158 = vunpack.c.l.b16 %v2839
        %v3159 = vunpack.c.h.b16 %v2839
        %v3160 = vunpack.c.l.b16 %v2840
        %v3161 = vunpack.c.h.b16 %v2840
        %v3162 = vunpack.c.l.b16 %v2841
        %v3163 = vunpack.c.h.b16 %v2841
        %v3164 = vunpack.c.l.b16 %v2842
        %v3165 = vunpack.c.h.b16 %v2842
        %v3166 = vunpack.c.l.b16 %v2843
        %v3167 = vunpack.c.h.b16 %v2843
        %v3168 = vunpack.c.l.b16 %v2844
        %v3169 = vunpack.c.h.b16 %v2844
        %v3170 = vunpack.c.l.b16 %v2845
        %v3171 = vunpack.c.h.b16 %v2845
        %v3172 = vunpack.c.l.b16 %v2846
        %v3173 = vunpack.c.h.b16 %v2846
        %v3174 = vunpack.c.l.b16 %v2847
        %v3175 = vunpack.c.h.b16 %v2847
        %v3176 = vunpack.c.l.b16 %v2848
        %v3177 = vunpack.c.h.b16 %v2848
        %v3178 = vunpack.c.l.b16 %v2849
        %v3179 = vunpack.c.h.b16 %v2849
        %v3180 = vunpack.c.l.b16 %v2850
        %v3181 = vunpack.c.h.b16 %v2850
        %v3182 = vunpack.c.l.b16 %v2851
        %v3183 = vunpack.c.h.b16 %v2851
        %v3184 = vunpack.c.l.b16 %v2852
        %v3185 = vunpack.c.h.b16 %v2852
        %v3186 = vunpack.c.l.b16 %v2853
        %v3187 = vunpack.c.h.b16 %v2853
        %v3188 = vunpack.c.l.b16 %v2854
        %v3189 = vunpack.c.h.b16 %v2854
        %v3190 = vunpack.c.l.b16 %v2855
        %v3191 = vunpack.c.h.b16 %v2855
        %v3192 = vunpack.c.l.b16 %v2856
        %v3193 = vunpack.c.h.b16 %v2856
        %v3194 = vunpack.c.l.b16 %v2857
        %v3195 = vunpack.c.h.b16 %v2857
        %v3196 = vunpack.c.l.b16 %v2858
        %v3197 = vunpack.c.h.b16 %v2858
        %v3198 = vunpack.c.l.b16 %v2859
        %v3199 = vunpack.c.h.b16 %v2859
        %v3200 = vunpack.c.l.b16 %v2860
        %v3201 = vunpack.c.h.b16 %v2860
        %v3202 = vunpack.c.l.b16 %v2861
        %v3203 = vunpack.c.h.b16 %v2861
        %v3204 = vunpack.c.l.b16 %v2862
        %v3205 = vunpack.c.h.b16 %v2862
        %v3206 = vunpack.c.l.b16 %v2863
        %v3207 = vunpack.c.h.b16 %v2863
        %v3208 = vunpack.c.l.b16 %v2864
        %v3209 = vunpack.c.h.b16 %v2864
        %v3210 = vunpack.c.l.b16 %v2865
        %v3211 = vunpack.c.h.b16 %v2865
        %v3212 = vunpack.c.l.b16 %v2866
        %v3213 = vunpack.c.h.b16 %v2866
        %v3214 = vunpack.c.l.b16 %v2867
        %v3215 = vunpack.c.h.b16 %v2867
        %v3216 = vunpack.c.l.b16 %v2868
        %v3217 = vunpack.c.h.b16 %v2868
        %v3218 = vunpack.c.l.b16 %v2869
        %v3219 = vunpack.c.h.b16 %v2869
        %v3220 = vunpack.c.l.b16 %v2870
        %v3221 = vunpack.c.h.b16 %v2870
        %v3222 = vunpack.c.l.b16 %v2871
        %v3223 = vunpack.c.h.b16 %v2871
        %v3224 = vunpack.c.l.b16 %v2872
        %v3225 = vunpack.c.h.b16 %v2872
        %v3226 = vunpack.c.l.b16 %v2873
        %v3227 = vunpack.c.h.b16 %v2873
        %v3228 = vunpack.c.l.b16 %v2874
        %v3229 = vunpack.c.h.b16 %v2874
        %v3230 = vunpack.c.l.b16 %v2875
        %v3231 = vunpack.c.h.b16 %v2875
        %v3232 = vunpack.c.l.b16 %v2876
        %v3233 = vunpack.c.h.b16 %v2876
        %v3234 = vunpack.c.l.b16 %v2877
        %v3235 = vunpack.c.h.b16 %v2877
        %v3236 = vunpack.c.l.b16 %v2878
        %v3237 = vunpack.c.h.b16 %v2878
        %v3238 = vunpack.c.l.b16 %v2879
        %v3239 = vunpack.c.h.b16 %v2879
        %v3240 = vunpack.c.l.b16 %v2880
        %v3241 = vunpack.c.h.b16 %v2880
        %v3242 = vunpack.c.l.b16 %v2881
        %v3243 = vunpack.c.h.b16 %v2881
        %v3244 = vunpack.c.l.b16 %v2882
        %v3245 = vunpack.c.h.b16 %v2882
        %v3246 = vunpack.c.l.b16 %v2883
        %v3247 = vunpack.c.h.b16 %v2883
        %v3248 = vunpack.c.l.b16 %v2884
        %v3249 = vunpack.c.h.b16 %v2884
        %v3250 = vunpack.c.l.b16 %v2885
        %v3251 = vunpack.c.h.b16 %v2885
        %v3252 = vunpack.c.l.b16 %v2886
        %v3253 = vunpack.c.h.b16 %v2886
        %v3254 = vunpack.c.l.b16 %v2887
        %v3255 = vunpack.c.h.b16 %v2887
        %v3256 = vunpack.c.l.b16 %v2888
        %v3257 = vunpack.c.h.b16 %v2888
        %v3258 = vunpack.c.l.b16 %v2889
        %v3259 = vunpack.c.h.b16 %v2889
        %v3260 = vunpack.c.l.b16 %v2890
        %v3261 = vunpack.c.h.b16 %v2890
        %v3262 = vunpack.c.l.b16 %v2891
        %v3263 = vunpack.c.h.b16 %v2891
        %v3264 = vunpack.c.l.b16 %v2892
        %v3265 = vunpack.c.h.b16 %v2892
        %v3266 = vunpack.c.l.b16 %v2893
        %v3267 = vunpack.c.h.b16 %v2893
        %v3268 = vunpack.c.l.b16 %v2894
        %v3269 = vunpack.c.h.b16 %v2894
        %v3270 = vunpack.c.l.b16 %v2895
        %v3271 = vunpack.c.h.b16 %v2895
        %v3272 = vunpack.c.l.b16 %v2896
        %v3273 = vunpack.c.h.b16 %v2896
        %v3274 = vunpack.c.l.b16 %v2897
        %v3275 = vunpack.c.h.b16 %v2897
        %v3276 = vunpack.c.l.b16 %v2898
        %v3277 = vunpack.c.h.b16 %v2898
        %v3278 = vunpack.c.l.b16 %v2899
        %v3279 = vunpack.c.h.b16 %v2899
        %v3280 = vunpack.c.l.b16 %v2900
        %v3281 = vunpack.c.h.b16 %v2900
        %v3282 = vunpack.c.l.b16 %v2901
        %v3283 = vunpack.c.h.b16 %v2901
        %v3284 = vunpack.c.l.b16 %v2902
        %v3285 = vunpack.c.h.b16 %v2902
        %v3286 = vunpack.c.l.b16 %v2903
        %v3287 = vunpack.c.h.b16 %v2903
        %v3288 = vunpack.c.l.b16 %v2904
        %v3289 = vunpack.c.h.b16 %v2904
        %v3290 = vunpack.c.l.b16 %v2905
        %v3291 = vunpack.c.h.b16 %v2905
        %v3292 = vunpack.c.l.b16 %v2906
        %v3293 = vunpack.c.h.b16 %v2906
        %v3294 = vunpack.c.l.b16 %v2907
        %v3295 = vunpack.c.h.b16 %v2907
        %v3296 = vunpack.c.l.b16 %v2908
        %v3297 = vunpack.c.h.b16 %v2908
        %v3298 = vunpack.c.l.b16 %v2909
        %v3299 = vunpack.c.h.b16 %v2909
        %v3300 = vunpack.c.l.b16 %v2910
        %v3301 = vunpack.c.h.b16 %v2910
        %v3302 = vunpack.c.l.b16 %v2911
        %v3303 = vunpack.c.h.b16 %v2911
        %v3304 = vunpack.c.l.b16 %v2912
        %v3305 = vunpack.c.h.b16 %v2912
        %v3306 = vunpack.c.l.b16 %v2913
        %v3307 = vunpack.c.h.b16 %v2913
        %v3308 = vunpack.c.l.b16 %v2914
        %v3309 = vunpack.c.h.b16 %v2914
        %v3310 = vunpack.c.l.b16 %v2915
        %v3311 = vunpack.c.h.b16 %v2915
        %v3312 = vunpack.c.l.b16 %v2916
        %v3313 = vunpack.c.h.b16 %v2916
        %v3314 = vunpack.c.l.b16 %v2917
        %v3315 = vunpack.c.h.b16 %v2917
        %v3316 = vunpack.c.l.b16 %v2918
        %v3317 = vunpack.c.h.b16 %v2918
        %v3318 = vunpack.c.l.b16 %v2919
        %v3319 = vunpack.c.h.b16 %v2919
        %v3320 = vunpack.c.l.b16 %v2920
        %v3321 = vunpack.c.h.b16 %v2920
        %v3322 = vunpack.c.l.b16 %v2921
        %v3323 = vunpack.c.h.b16 %v2921
        %v3324 = vpack.c.b16 %v3076, %v3068
        %v3325 = vpack.c.b16 %v3077, %v3069
        %v3326 = vpack.c.b16 %v3078, %v3070
        %v3327 = vpack.c.b16 %v3079, %v3071
        %v3328 = vpack.c.b16 %v3080, %v3072
        %v3329 = vpack.c.b16 %v3081, %v3073
        %v3330 = vpack.c.b16 %v3082, %v3074
        %v3331 = vpack.c.b16 %v3083, %v3075
        %v3332 = vpack.c.b16 %v3092, %v3084
        %v3333 = vpack.c.b16 %v3093, %v3085
        %v3334 = vpack.c.b16 %v3094, %v3086
        %v3335 = vpack.c.b16 %v3095, %v3087
        %v3336 = vpack.c.b16 %v3096, %v3088
        %v3337 = vpack.c.b16 %v3097, %v3089
        %v3338 = vpack.c.b16 %v3098, %v3090
        %v3339 = vpack.c.b16 %v3099, %v3091
        %v3340 = vpack.c.b16 %v3108, %v3100
        %v3341 = vpack.c.b16 %v3109, %v3101
        %v3342 = vpack.c.b16 %v3110, %v3102
        %v3343 = vpack.c.b16 %v3111, %v3103
        %v3344 = vpack.c.b16 %v3112, %v3104
        %v3345 = vpack.c.b16 %v3113, %v3105
        %v3346 = vpack.c.b16 %v3114, %v3106
        %v3347 = vpack.c.b16 %v3115, %v3107
        %v3348 = vpack.c.b16 %v3124, %v3116
        %v3349 = vpack.c.b16 %v3125, %v3117
        %v3350 = vpack.c.b16 %v3126, %v3118
        %v3351 = vpack.c.b16 %v3127, %v3119
        %v3352 = vpack.c.b16 %v3128, %v3120
        %v3353 = vpack.c.b16 %v3129, %v3121
        %v3354 = vpack.c.b16 %v3130, %v3122
        %v3355 = vpack.c.b16 %v3131, %v3123
        %v3356 = vpack.c.b16 %v3140, %v3132
        %v3357 = vpack.c.b16 %v3141, %v3133
        %v3358 = vpack.c.b16 %v3142, %v3134
        %v3359 = vpack.c.b16 %v3143, %v3135
        %v3360 = vpack.c.b16 %v3144, %v3136
        %v3361 = vpack.c.b16 %v3145, %v3137
        %v3362 = vpack.c.b16 %v3146, %v3138
        %v3363 = vpack.c.b16 %v3147, %v3139
        %v3364 = vpack.c.b16 %v3156, %v3148
        %v3365 = vpack.c.b16 %v3157, %v3149
        %v3366 = vpack.c.b16 %v3158, %v3150
        %v3367 = vpack.c.b16 %v3159, %v3151
        %v3368 = vpack.c.b16 %v3160, %v3152
        %v3369 = vpack.c.b16 %v3161, %v3153
        %v3370 = vpack.c.b16 %v3162, %v3154
        %v3371 = vpack.c.b16 %v3163, %v3155
        %v3372 = vpack.c.b16 %v3172, %v3164
        %v3373 = vpack.c.b16 %v3173, %v3165
        %v3374 = vpack.c.b16 %v3174, %v3166
        %v3375 = vpack.c.b16 %v3175, %v3167
        %v3376 = vpack.c.b16 %v3176, %v3168
        %v3377 = vpack.c.b16 %v3177, %v3169
        %v3378 = vpack.c.b16 %v3178, %v3170
        %v3379 = vpack.c.b16 %v3179, %v3171
        %v3380 = vpack.c.b16 %v3188, %v3180
        %v3381 = vpack.c.b16 %v3189, %v3181
        %v3382 = vpack.c.b16 %v3190, %v3182
        %v3383 = vpack.c.b16 %v3191, %v3183
        %v3384 = vpack.c.b16 %v3192, %v3184
        %v3385 = vpack.c.b16 %v3193, %v3185
        %v3386 = vpack.c.b16 %v3194, %v3186
        %v3387 = vpack.c.b16 %v3195, %v3187
        %v3388 = vpack.c.b16 %v3204, %v3196
        %v3389 = vpack.c.b16 %v3205, %v3197
        %v3390 = vpack.c.b16 %v3206, %v3198
        %v3391 = vpack.c.b16 %v3207, %v3199
        %v3392 = vpack.c.b16 %v3208, %v3200
        %v3393 = vpack.c.b16 %v3209, %v3201
        %v3394 = vpack.c.b16 %v3210, %v3202
        %v3395 = vpack.c.b16 %v3211, %v3203
        %v3396 = vpack.c.b16 %v3220, %v3212
        %v3397 = vpack.c.b16 %v3221, %v3213
        %v3398 = vpack.c.b16 %v3222, %v3214
        %v3399 = vpack.c.b16 %v3223, %v3215
        %v3400 = vpack.c.b16 %v3224, %v3216
        %v3401 = vpack.c.b16 %v3225, %v3217
        %v3402 = vpack.c.b16 %v3226, %v3218
        %v3403 = vpack.c.b16 %v3227, %v3219
        %v3404 = vpack.c.b16 %v3236, %v3228
        %v3405 = vpack.c.b16 %v3237, %v3229
        %v3406 = vpack.c.b16 %v3238, %v3230
        %v3407 = vpack.c.b16 %v3239, %v3231
        %v3408 = vpack.c.b16 %v3240, %v3232
        %v3409 = vpack.c.b16 %v3241, %v3233
        %v3410 = vpack.c.b16 %v3242, %v3234
        %v3411 = vpack.c.b16 %v3243, %v3235
        %v3412 = vpack.c.b16 %v3252, %v3244
        %v3413 = vpack.c.b16 %v3253, %v3245
        %v3414 = vpack.c.b16 %v3254, %v3246
        %v3415 = vpack.c.b16 %v3255, %v3247
        %v3416 = vpack.c.b16 %v3256, %v3248
        %v3417 = vpack.c.b16 %v3257, %v3249
        %v3418 = vpack.c.b16 %v3258, %v3250
        %v3419 = vpack.c.b16 %v3259, %v3251
        %v3420 = vpack.c.b16 %v3268, %v3260
        %v3421 = vpack.c.b16 %v3269, %v3261
        %v3422 = vpack.c.b16 %v3270, %v3262
        %v3423 = vpack.c.b16 %v3271, %v3263
        %v3424 = vpack.c.b16 %v3272, %v3264
        %v3425 = vpack.c.b16 %v3273, %v3265
        %v3426 = vpack.c.b16 %v3274, %v3266
        %v3427 = vpack.c.b16 %v3275, %v3267
        %v3428 = vpack.c.b16 %v3284, %v3276
        %v3429 = vpack.c.b16 %v3285, %v3277
        %v3430 = vpack.c.b16 %v3286, %v3278
        %v3431 = vpack.c.b16 %v3287, %v3279
        %v3432 = vpack.c.b16 %v3288, %v3280
        %v3433 = vpack.c.b16 %v3289, %v3281
        %v3434 = vpack.c.b16 %v3290, %v3282
        %v3435 = vpack.c.b16 %v3291, %v3283
        %v3436 = vpack.c.b16 %v3300, %v3292
        %v3437 = vpack.c.b16 %v3301, %v3293
        %v3438 = vpack.c.b16 %v3302, %v3294
        %v3439 = vpack.c.b16 %v3303, %v3295
        %v3440 = vpack.c.b16 %v3304, %v3296
        %v3441 = vpack.c.b16 %v3305, %v3297
        %v3442 = vpack.c.b16 %v3306, %v3298
        %v3443 = vpack.c.b16 %v3307, %v3299
        %v3444 = vpack.c.b16 %v3316, %v3308
        %v3445 = vpack.c.b16 %v3317, %v3309
        %v3446 = vpack.c.b16 %v3318, %v3310
        %v3447 = vpack.c.b16 %v3319, %v3311
        %v3448 = vpack.c.b16 %v3320, %v3312
        %v3449 = vpack.c.b16 %v3321, %v3313
        %v3450 = vpack.c.b16 %v3322, %v3314
        %v3451 = vpack.c.b16 %v3323, %v3315
        %3580 = vmatpush.bf16.msra.mxu0 %v3380
        %3581 = vmatpush.bf16.msra.mxu0 %v3372
        %3582 = vmatpush.bf16.msra.mxu0 %v3364
        %3583 = vmatpush.bf16.msra.mxu0 %v3356
        %3584 = vmatpush.bf16.msra.mxu0 %v3348
        %3585 = vmatpush.bf16.msra.mxu0 %v3340
        %3586 = vmatpush.bf16.msra.mxu0 %v3332
        %3587 = vmatpush.bf16.msra.mxu0 %v3324
        %3588 = vmatmul.bf16.gmra.mxu0 %v2792
        %v3589 = vpop.f32.mrf.mxu0
        %v3590 = vadd.f32 %v2924, %v3589
        %v3591 = vpop.f32.mrf.mxu0
        %v3592 = vadd.f32 %v2924, %v3591
        %3593 = vdwg.mxu0
        %3594 = vmatpush.bf16.msra.mxu0 %v3444
        %3595 = vmatpush.bf16.msra.mxu0 %v3436
        %3596 = vmatpush.bf16.msra.mxu0 %v3428
        %3597 = vmatpush.bf16.msra.mxu0 %v3420
        %3598 = vmatpush.bf16.msra.mxu0 %v3412
        %3599 = vmatpush.bf16.msra.mxu0 %v3404
        %3600 = vmatpush.bf16.msra.mxu0 %v3396
        %3601 = vmatpush.bf16.msra.mxu0 %v3388
        %3602 = vmatmul.bf16.gmra.mxu0 %v2793
        %v3603 = vpop.f32.mrf.mxu0
        %v3604 = vadd.f32 %v3590, %v3603
        %v3605 = vpop.f32.mrf.mxu0
        %v3606 = vadd.f32 %v3592, %v3605
        %3607 = vdwg.mxu0
        %3608 = vmatpush.bf16.msra.mxu0 %v3381
        %3609 = vmatpush.bf16.msra.mxu0 %v3373
        %3610 = vmatpush.bf16.msra.mxu0 %v3365
        %3611 = vmatpush.bf16.msra.mxu0 %v3357
        %3612 = vmatpush.bf16.msra.mxu0 %v3349
        %3613 = vmatpush.bf16.msra.mxu0 %v3341
        %3614 = vmatpush.bf16.msra.mxu0 %v3333
        %3615 = vmatpush.bf16.msra.mxu0 %v3325
        %3616 = vmatmul.bf16.gmra.mxu0 %v2792
        %v3617 = vpop.f32.mrf.mxu0
        %v3618 = vadd.f32 %v2925, %v3617
        %v3619 = vpop.f32.mrf.mxu0
        %v3620 = vadd.f32 %v2925, %v3619
        %3621 = vdwg.mxu0
        %3622 = vmatpush.bf16.msra.mxu0 %v3445
        %3623 = vmatpush.bf16.msra.mxu0 %v3437
        %3624 = vmatpush.bf16.msra.mxu0 %v3429
        %3625 = vmatpush.bf16.msra.mxu0 %v3421
        %3626 = vmatpush.bf16.msra.mxu0 %v3413
        %3627 = vmatpush.bf16.msra.mxu0 %v3405
        %3628 = vmatpush.bf16.msra.mxu0 %v3397
        %3629 = vmatpush.bf16.msra.mxu0 %v3389
        %3630 = vmatmul.bf16.gmra.mxu0 %v2793
        %v3631 = vpop.f32.mrf.mxu0
        %v3632 = vadd.f32 %v3618, %v3631
        %v3633 = vpop.f32.mrf.mxu0
        %v3634 = vadd.f32 %v3620, %v3633
        %3635 = vdwg.mxu0
        %3636 = vmatpush.bf16.msra.mxu0 %v3382
        %3637 = vmatpush.bf16.msra.mxu0 %v3374
        %3638 = vmatpush.bf16.msra.mxu0 %v3366
        %3639 = vmatpush.bf16.msra.mxu0 %v3358
        %3640 = vmatpush.bf16.msra.mxu0 %v3350
        %3641 = vmatpush.bf16.msra.mxu0 %v3342
        %3642 = vmatpush.bf16.msra.mxu0 %v3334
        %3643 = vmatpush.bf16.msra.mxu0 %v3326
        %3644 = vmatmul.bf16.gmra.mxu0 %v2792
        %v3645 = vpop.f32.mrf.mxu0
        %v3646 = vadd.f32 %v2926, %v3645
        %v3647 = vpop.f32.mrf.mxu0
        %v3648 = vadd.f32 %v2926, %v3647
        %3649 = vdwg.mxu0
        %3650 = vmatpush.bf16.msra.mxu0 %v3446
        %3651 = vmatpush.bf16.msra.mxu0 %v3438
        %3652 = vmatpush.bf16.msra.mxu0 %v3430
        %3653 = vmatpush.bf16.msra.mxu0 %v3422
        %3654 = vmatpush.bf16.msra.mxu0 %v3414
        %3655 = vmatpush.bf16.msra.mxu0 %v3406
        %3656 = vmatpush.bf16.msra.mxu0 %v3398
        %3657 = vmatpush.bf16.msra.mxu0 %v3390
        %3658 = vmatmul.bf16.gmra.mxu0 %v2793
        %v3659 = vpop.f32.mrf.mxu0
        %v3660 = vadd.f32 %v3646, %v3659
        %v3661 = vpop.f32.mrf.mxu0
        %v3662 = vadd.f32 %v3648, %v3661
        %3663 = vdwg.mxu0
        %3664 = vmatpush.bf16.msra.mxu0 %v3383
        %3665 = vmatpush.bf16.msra.mxu0 %v3375
        %3666 = vmatpush.bf16.msra.mxu0 %v3367
        %3667 = vmatpush.bf16.msra.mxu0 %v3359
        %3668 = vmatpush.bf16.msra.mxu0 %v3351
        %3669 = vmatpush.bf16.msra.mxu0 %v3343
        %3670 = vmatpush.bf16.msra.mxu0 %v3335
        %3671 = vmatpush.bf16.msra.mxu0 %v3327
        %3672 = vmatmul.bf16.gmra.mxu0 %v2792
        %v3673 = vpop.f32.mrf.mxu0
        %v3674 = vadd.f32 %v2927, %v3673
        %v3675 = vpop.f32.mrf.mxu0
        %v3676 = vadd.f32 %v2927, %v3675
        %3677 = vdwg.mxu0
        %3678 = vmatpush.bf16.msra.mxu0 %v3447
        %3679 = vmatpush.bf16.msra.mxu0 %v3439
        %3680 = vmatpush.bf16.msra.mxu0 %v3431
        %3681 = vmatpush.bf16.msra.mxu0 %v3423
        %3682 = vmatpush.bf16.msra.mxu0 %v3415
        %3683 = vmatpush.bf16.msra.mxu0 %v3407
        %3684 = vmatpush.bf16.msra.mxu0 %v3399
        %3685 = vmatpush.bf16.msra.mxu0 %v3391
        %3686 = vmatmul.bf16.gmra.mxu0 %v2793
        %v3687 = vpop.f32.mrf.mxu0
        %v3688 = vadd.f32 %v3674, %v3687
        %v3689 = vpop.f32.mrf.mxu0
        %v3690 = vadd.f32 %v3676, %v3689
        %3691 = vdwg.mxu0
        %3692 = vmatpush.bf16.msra.mxu0 %v3384
        %3693 = vmatpush.bf16.msra.mxu0 %v3376
        %3694 = vmatpush.bf16.msra.mxu0 %v3368
        %3695 = vmatpush.bf16.msra.mxu0 %v3360
        %3696 = vmatpush.bf16.msra.mxu0 %v3352
        %3697 = vmatpush.bf16.msra.mxu0 %v3344
        %3698 = vmatpush.bf16.msra.mxu0 %v3336
        %3699 = vmatpush.bf16.msra.mxu0 %v3328
        %3700 = vmatmul.bf16.gmra.mxu0 %v2792
        %v3701 = vpop.f32.mrf.mxu0
        %v3702 = vadd.f32 %v2928, %v3701
        %v3703 = vpop.f32.mrf.mxu0
        %v3704 = vadd.f32 %v2928, %v3703
        %3705 = vdwg.mxu0
        %3706 = vmatpush.bf16.msra.mxu0 %v3448
        %3707 = vmatpush.bf16.msra.mxu0 %v3440
        %3708 = vmatpush.bf16.msra.mxu0 %v3432
        %3709 = vmatpush.bf16.msra.mxu0 %v3424
        %3710 = vmatpush.bf16.msra.mxu0 %v3416
        %3711 = vmatpush.bf16.msra.mxu0 %v3408
        %3712 = vmatpush.bf16.msra.mxu0 %v3400
        %3713 = vmatpush.bf16.msra.mxu0 %v3392
        %3714 = vmatmul.bf16.gmra.mxu0 %v2793
        %v3715 = vpop.f32.mrf.mxu0
        %v3716 = vadd.f32 %v3702, %v3715
        %v3717 = vpop.f32.mrf.mxu0
        %v3718 = vadd.f32 %v3704, %v3717
        %3719 = vdwg.mxu0
        %3720 = vmatpush.bf16.msra.mxu0 %v3385
        %3721 = vmatpush.bf16.msra.mxu0 %v3377
        %3722 = vmatpush.bf16.msra.mxu0 %v3369
        %3723 = vmatpush.bf16.msra.mxu0 %v3361
        %3724 = vmatpush.bf16.msra.mxu0 %v3353
        %3725 = vmatpush.bf16.msra.mxu0 %v3345
        %3726 = vmatpush.bf16.msra.mxu0 %v3337
        %3727 = vmatpush.bf16.msra.mxu0 %v3329
        %3728 = vmatmul.bf16.gmra.mxu0 %v2792
        %v3729 = vpop.f32.mrf.mxu0
        %v3730 = vadd.f32 %v2929, %v3729
        %v3731 = vpop.f32.mrf.mxu0
        %v3732 = vadd.f32 %v2929, %v3731
        %3733 = vdwg.mxu0
        %3734 = vmatpush.bf16.msra.mxu0 %v3449
        %3735 = vmatpush.bf16.msra.mxu0 %v3441
        %3736 = vmatpush.bf16.msra.mxu0 %v3433
        %3737 = vmatpush.bf16.msra.mxu0 %v3425
        %3738 = vmatpush.bf16.msra.mxu0 %v3417
        %3739 = vmatpush.bf16.msra.mxu0 %v3409
        %3740 = vmatpush.bf16.msra.mxu0 %v3401
        %3741 = vmatpush.bf16.msra.mxu0 %v3393
        %3742 = vmatmul.bf16.gmra.mxu0 %v2793
        %v3743 = vpop.f32.mrf.mxu0
        %v3744 = vadd.f32 %v3730, %v3743
        %v3745 = vpop.f32.mrf.mxu0
        %v3746 = vadd.f32 %v3732, %v3745
        %3747 = vdwg.mxu0
        %3748 = vmatpush.bf16.msra.mxu0 %v3386
        %3749 = vmatpush.bf16.msra.mxu0 %v3378
        %3750 = vmatpush.bf16.msra.mxu0 %v3370
        %3751 = vmatpush.bf16.msra.mxu0 %v3362
        %3752 = vmatpush.bf16.msra.mxu0 %v3354
        %3753 = vmatpush.bf16.msra.mxu0 %v3346
        %3754 = vmatpush.bf16.msra.mxu0 %v3338
        %3755 = vmatpush.bf16.msra.mxu0 %v3330
        %3756 = vmatmul.bf16.gmra.mxu0 %v2792
        %v3757 = vpop.f32.mrf.mxu0
        %v3758 = vadd.f32 %v2930, %v3757
        %v3759 = vpop.f32.mrf.mxu0
        %v3760 = vadd.f32 %v2930, %v3759
        %3761 = vdwg.mxu0
        %3762 = vmatpush.bf16.msra.mxu0 %v3450
        %3763 = vmatpush.bf16.msra.mxu0 %v3442
        %3764 = vmatpush.bf16.msra.mxu0 %v3434
        %3765 = vmatpush.bf16.msra.mxu0 %v3426
        %3766 = vmatpush.bf16.msra.mxu0 %v3418
        %3767 = vmatpush.bf16.msra.mxu0 %v3410
        %3768 = vmatpush.bf16.msra.mxu0 %v3402
        %3769 = vmatpush.bf16.msra.mxu0 %v3394
        %3770 = vmatmul.bf16.gmra.mxu0 %v2793
        %v3771 = vpop.f32.mrf.mxu0
        %v3772 = vadd.f32 %v3758, %v3771
        %v3773 = vpop.f32.mrf.mxu0
        %v3774 = vadd.f32 %v3760, %v3773
        %3775 = vdwg.mxu0
        %3776 = vmatpush.bf16.msra.mxu0 %v3387
        %3777 = vmatpush.bf16.msra.mxu0 %v3379
        %3778 = vmatpush.bf16.msra.mxu0 %v3371
        %3779 = vmatpush.bf16.msra.mxu0 %v3363
        %3780 = vmatpush.bf16.msra.mxu0 %v3355
        %3781 = vmatpush.bf16.msra.mxu0 %v3347
        %3782 = vmatpush.bf16.msra.mxu0 %v3339
        %3783 = vmatpush.bf16.msra.mxu0 %v3331
        %3784 = vmatmul.bf16.gmra.mxu0 %v2792
        %v3785 = vpop.f32.mrf.mxu0
        %v3786 = vadd.f32 %v2931, %v3785
        %v3787 = vpop.f32.mrf.mxu0
        %v3788 = vadd.f32 %v2931, %v3787
        %3789 = vdwg.mxu0
        %3790 = vmatpush.bf16.msra.mxu0 %v3451
        %3791 = vmatpush.bf16.msra.mxu0 %v3443
        %3792 = vmatpush.bf16.msra.mxu0 %v3435
        %3793 = vmatpush.bf16.msra.mxu0 %v3427
        %3794 = vmatpush.bf16.msra.mxu0 %v3419
        %3795 = vmatpush.bf16.msra.mxu0 %v3411
        %3796 = vmatpush.bf16.msra.mxu0 %v3403
        %3797 = vmatpush.bf16.msra.mxu0 %v3395
        %3798 = vmatmul.bf16.gmra.mxu0 %v2793
        %v3799 = vpop.f32.mrf.mxu0
        %v3800 = vadd.f32 %v3786, %v3799
        %v3801 = vpop.f32.mrf.mxu0
        %v3802 = vadd.f32 %v3788, %v3801
        %3803 = vdwg.mxu0
        %v3804 = vmax.f32 %v3604, 0.0
        %v3805 = vmax.f32 %v3632, 0.0
        %v3806 = vmax.f32 %v3660, 0.0
        %v3807 = vmax.f32 %v3688, 0.0
        %v3808 = vmax.f32 %v3716, 0.0
        %v3809 = vmax.f32 %v3744, 0.0
        %v3810 = vmax.f32 %v3772, 0.0
        %v3811 = vmax.f32 %v3800, 0.0
        %v3812 = vmax.f32 %v3606, 0.0
        %v3813 = vmax.f32 %v3634, 0.0
        %v3814 = vmax.f32 %v3662, 0.0
        %v3815 = vmax.f32 %v3690, 0.0
        %v3816 = vmax.f32 %v3718, 0.0
        %v3817 = vmax.f32 %v3746, 0.0
        %v3818 = vmax.f32 %v3774, 0.0
        %v3819 = vmax.f32 %v3802, 0.0
        %v3820 = vpack.c.bf16 %v3812, %v3804
        %v3821 = vpack.c.bf16 %v3813, %v3805
        %v3822 = vpack.c.bf16 %v3814, %v3806
        %v3823 = vpack.c.bf16 %v3815, %v3807
        %v3824 = vpack.c.bf16 %v3816, %v3808
        %v3825 = vpack.c.bf16 %v3817, %v3809
        %v3826 = vpack.c.bf16 %v3818, %v3810
        %v3827 = vpack.c.bf16 %v3819, %v3811
        %v3828 = vld [vmem:[%s1114] sm:$0xff]
        %v3829 = vld [vmem:[%s1114 + $0x8] sm:$0xff]
        %v3830 = vld [vmem:[%s1114 + $0x10] sm:$0xff]
        %v3831 = vld [vmem:[%s1114 + $0x18] sm:$0xff]
        %v3832 = vld [vmem:[%s1114 + $0x20] sm:$0xff]
        %v3833 = vld [vmem:[%s1114 + $0x28] sm:$0xff]
        %v3834 = vld [vmem:[%s1114 + $0x30] sm:$0xff]
        %v3835 = vld [vmem:[%s1114 + $0x38] sm:$0xff]
        %v3836 = vld [vmem:[%s1114 + $0x40] sm:$0xff]
        %v3837 = vld [vmem:[%s1114 + $0x48] sm:$0xff]
        %v3838 = vld [vmem:[%s1114 + $0x50] sm:$0xff]
        %v3839 = vld [vmem:[%s1114 + $0x58] sm:$0xff]
        %v3840 = vld [vmem:[%s1114 + $0x60] sm:$0xff]
        %v3841 = vld [vmem:[%s1114 + $0x68] sm:$0xff]
        %v3842 = vld [vmem:[%s1114 + $0x70] sm:$0xff]
        %v3843 = vld [vmem:[%s1114 + $0x78] sm:$0xff]
        %v3844 = vld [vmem:[%s1114 + $0x80] sm:$0xff]
        %v3845 = vld [vmem:[%s1114 + $0x88] sm:$0xff]
        %v3846 = vld [vmem:[%s1114 + $0x90] sm:$0xff]
        %v3847 = vld [vmem:[%s1114 + $0x98] sm:$0xff]
        %v3848 = vld [vmem:[%s1114 + $0xa0] sm:$0xff]
        %v3849 = vld [vmem:[%s1114 + $0xa8] sm:$0xff]
        %v3850 = vld [vmem:[%s1114 + $0xb0] sm:$0xff]
        %v3851 = vld [vmem:[%s1114 + $0xb8] sm:$0xff]
        %v3852 = vld [vmem:[%s1114 + $0xc0] sm:$0xff]
        %v3853 = vld [vmem:[%s1114 + $0xc8] sm:$0xff]
        %v3854 = vld [vmem:[%s1114 + $0xd0] sm:$0xff]
        %v3855 = vld [vmem:[%s1114 + $0xd8] sm:$0xff]
        %v3856 = vld [vmem:[%s1114 + $0xe0] sm:$0xff]
        %v3857 = vld [vmem:[%s1114 + $0xe8] sm:$0xff]
        %v3858 = vld [vmem:[%s1114 + $0xf0] sm:$0xff]
        %v3859 = vld [vmem:[%s1114 + $0xf8] sm:$0xff]
        %v3860 = vld [vmem:[%s1114 + $0x100] sm:$0xff]
        %v3861 = vld [vmem:[%s1114 + $0x108] sm:$0xff]
        %v3862 = vld [vmem:[%s1114 + $0x110] sm:$0xff]
        %v3863 = vld [vmem:[%s1114 + $0x118] sm:$0xff]
        %v3864 = vld [vmem:[%s1114 + $0x120] sm:$0xff]
        %v3865 = vld [vmem:[%s1114 + $0x128] sm:$0xff]
        %v3866 = vld [vmem:[%s1114 + $0x130] sm:$0xff]
        %v3867 = vld [vmem:[%s1114 + $0x138] sm:$0xff]
        %v3868 = vld [vmem:[%s1114 + $0x140] sm:$0xff]
        %v3869 = vld [vmem:[%s1114 + $0x148] sm:$0xff]
        %v3870 = vld [vmem:[%s1114 + $0x150] sm:$0xff]
        %v3871 = vld [vmem:[%s1114 + $0x158] sm:$0xff]
        %v3872 = vld [vmem:[%s1114 + $0x160] sm:$0xff]
        %v3873 = vld [vmem:[%s1114 + $0x168] sm:$0xff]
        %v3874 = vld [vmem:[%s1114 + $0x170] sm:$0xff]
        %v3875 = vld [vmem:[%s1114 + $0x178] sm:$0xff]
        %v3876 = vld [vmem:[%s1114 + $0x180] sm:$0xff]
        %v3877 = vld [vmem:[%s1114 + $0x188] sm:$0xff]
        %v3878 = vld [vmem:[%s1114 + $0x190] sm:$0xff]
        %v3879 = vld [vmem:[%s1114 + $0x198] sm:$0xff]
        %v3880 = vld [vmem:[%s1114 + $0x1a0] sm:$0xff]
        %v3881 = vld [vmem:[%s1114 + $0x1a8] sm:$0xff]
        %v3882 = vld [vmem:[%s1114 + $0x1b0] sm:$0xff]
        %v3883 = vld [vmem:[%s1114 + $0x1b8] sm:$0xff]
        %v3884 = vld [vmem:[%s1114 + $0x1c0] sm:$0xff]
        %v3885 = vld [vmem:[%s1114 + $0x1c8] sm:$0xff]
        %v3886 = vld [vmem:[%s1114 + $0x1d0] sm:$0xff]
        %v3887 = vld [vmem:[%s1114 + $0x1d8] sm:$0xff]
        %v3888 = vld [vmem:[%s1114 + $0x1e0] sm:$0xff]
        %v3889 = vld [vmem:[%s1114 + $0x1e8] sm:$0xff]
        %v3890 = vld [vmem:[%s1114 + $0x1f0] sm:$0xff]
        %v3891 = vld [vmem:[%s1114 + $0x1f8] sm:$0xff]
        %v3892 = vld [vmem:[%s1114 + $0x200] sm:$0xff]
        %v3893 = vld [vmem:[%s1114 + $0x208] sm:$0xff]
        %v3894 = vld [vmem:[%s1114 + $0x210] sm:$0xff]
        %v3895 = vld [vmem:[%s1114 + $0x218] sm:$0xff]
        %v3896 = vld [vmem:[%s1114 + $0x220] sm:$0xff]
        %v3897 = vld [vmem:[%s1114 + $0x228] sm:$0xff]
        %v3898 = vld [vmem:[%s1114 + $0x230] sm:$0xff]
        %v3899 = vld [vmem:[%s1114 + $0x238] sm:$0xff]
        %v3900 = vld [vmem:[%s1114 + $0x240] sm:$0xff]
        %v3901 = vld [vmem:[%s1114 + $0x248] sm:$0xff]
        %v3902 = vld [vmem:[%s1114 + $0x250] sm:$0xff]
        %v3903 = vld [vmem:[%s1114 + $0x258] sm:$0xff]
        %v3904 = vld [vmem:[%s1114 + $0x260] sm:$0xff]
        %v3905 = vld [vmem:[%s1114 + $0x268] sm:$0xff]
        %v3906 = vld [vmem:[%s1114 + $0x270] sm:$0xff]
        %v3907 = vld [vmem:[%s1114 + $0x278] sm:$0xff]
        %v3908 = vld [vmem:[%s1114 + $0x280] sm:$0xff]
        %v3909 = vld [vmem:[%s1114 + $0x288] sm:$0xff]
        %v3910 = vld [vmem:[%s1114 + $0x290] sm:$0xff]
        %v3911 = vld [vmem:[%s1114 + $0x298] sm:$0xff]
        %v3912 = vld [vmem:[%s1114 + $0x2a0] sm:$0xff]
        %v3913 = vld [vmem:[%s1114 + $0x2a8] sm:$0xff]
        %v3914 = vld [vmem:[%s1114 + $0x2b0] sm:$0xff]
        %v3915 = vld [vmem:[%s1114 + $0x2b8] sm:$0xff]
        %v3916 = vld [vmem:[%s1114 + $0x2c0] sm:$0xff]
        %v3917 = vld [vmem:[%s1114 + $0x2c8] sm:$0xff]
        %v3918 = vld [vmem:[%s1114 + $0x2d0] sm:$0xff]
        %v3919 = vld [vmem:[%s1114 + $0x2d8] sm:$0xff]
        %v3920 = vld [vmem:[%s1114 + $0x2e0] sm:$0xff]
        %v3921 = vld [vmem:[%s1114 + $0x2e8] sm:$0xff]
        %v3922 = vld [vmem:[%s1114 + $0x2f0] sm:$0xff]
        %v3923 = vld [vmem:[%s1114 + $0x2f8] sm:$0xff]
        %v3924 = vld [vmem:[%s1114 + $0x300] sm:$0xff]
        %v3925 = vld [vmem:[%s1114 + $0x308] sm:$0xff]
        %v3926 = vld [vmem:[%s1114 + $0x310] sm:$0xff]
        %v3927 = vld [vmem:[%s1114 + $0x318] sm:$0xff]
        %v3928 = vld [vmem:[%s1114 + $0x320] sm:$0xff]
        %v3929 = vld [vmem:[%s1114 + $0x328] sm:$0xff]
        %v3930 = vld [vmem:[%s1114 + $0x330] sm:$0xff]
        %v3931 = vld [vmem:[%s1114 + $0x338] sm:$0xff]
        %v3932 = vld [vmem:[%s1114 + $0x340] sm:$0xff]
        %v3933 = vld [vmem:[%s1114 + $0x348] sm:$0xff]
        %v3934 = vld [vmem:[%s1114 + $0x350] sm:$0xff]
        %v3935 = vld [vmem:[%s1114 + $0x358] sm:$0xff]
        %v3936 = vld [vmem:[%s1114 + $0x360] sm:$0xff]
        %v3937 = vld [vmem:[%s1114 + $0x368] sm:$0xff]
        %v3938 = vld [vmem:[%s1114 + $0x370] sm:$0xff]
        %v3939 = vld [vmem:[%s1114 + $0x378] sm:$0xff]
        %v3940 = vld [vmem:[%s1114 + $0x380] sm:$0xff]
        %v3941 = vld [vmem:[%s1114 + $0x388] sm:$0xff]
        %v3942 = vld [vmem:[%s1114 + $0x390] sm:$0xff]
        %v3943 = vld [vmem:[%s1114 + $0x398] sm:$0xff]
        %v3944 = vld [vmem:[%s1114 + $0x3a0] sm:$0xff]
        %v3945 = vld [vmem:[%s1114 + $0x3a8] sm:$0xff]
        %v3946 = vld [vmem:[%s1114 + $0x3b0] sm:$0xff]
        %v3947 = vld [vmem:[%s1114 + $0x3b8] sm:$0xff]
        %v3948 = vld [vmem:[%s1114 + $0x3c0] sm:$0xff]
        %v3949 = vld [vmem:[%s1114 + $0x3c8] sm:$0xff]
        %v3950 = vld [vmem:[%s1114 + $0x3d0] sm:$0xff]
        %v3951 = vld [vmem:[%s1114 + $0x3d8] sm:$0xff]
        %v3952 = vld [vmem:[%s1114 + $0x3e0] sm:$0xff]
        %v3953 = vld [vmem:[%s1114 + $0x3e8] sm:$0xff]
        %v3954 = vld [vmem:[%s1114 + $0x3f0] sm:$0xff]
        %v3955 = vld [vmem:[%s1114 + $0x3f8] sm:$0xff]
        %v3956 = vld [vmem:[%s1283] sm:$0x3]
        %v3958 = vperm.slane %v3956, 0
        %v3959 = vperm.slane %v3956, 1
        %v4090 = vunpack.c.l.b16 %v3828
        %v4091 = vunpack.c.h.b16 %v3828
        %v4092 = vunpack.c.l.b16 %v3829
        %v4093 = vunpack.c.h.b16 %v3829
        %v4094 = vunpack.c.l.b16 %v3830
        %v4095 = vunpack.c.h.b16 %v3830
        %v4096 = vunpack.c.l.b16 %v3831
        %v4097 = vunpack.c.h.b16 %v3831
        %v4098 = vunpack.c.l.b16 %v3832
        %v4099 = vunpack.c.h.b16 %v3832
        %v4100 = vunpack.c.l.b16 %v3833
        %v4101 = vunpack.c.h.b16 %v3833
        %v4102 = vunpack.c.l.b16 %v3834
        %v4103 = vunpack.c.h.b16 %v3834
        %v4104 = vunpack.c.l.b16 %v3835
        %v4105 = vunpack.c.h.b16 %v3835
        %v4106 = vunpack.c.l.b16 %v3836
        %v4107 = vunpack.c.h.b16 %v3836
        %v4108 = vunpack.c.l.b16 %v3837
        %v4109 = vunpack.c.h.b16 %v3837
        %v4110 = vunpack.c.l.b16 %v3838
        %v4111 = vunpack.c.h.b16 %v3838
        %v4112 = vunpack.c.l.b16 %v3839
        %v4113 = vunpack.c.h.b16 %v3839
        %v4114 = vunpack.c.l.b16 %v3840
        %v4115 = vunpack.c.h.b16 %v3840
        %v4116 = vunpack.c.l.b16 %v3841
        %v4117 = vunpack.c.h.b16 %v3841
        %v4118 = vunpack.c.l.b16 %v3842
        %v4119 = vunpack.c.h.b16 %v3842
        %v4120 = vunpack.c.l.b16 %v3843
        %v4121 = vunpack.c.h.b16 %v3843
        %v4122 = vunpack.c.l.b16 %v3844
        %v4123 = vunpack.c.h.b16 %v3844
        %v4124 = vunpack.c.l.b16 %v3845
        %v4125 = vunpack.c.h.b16 %v3845
        %v4126 = vunpack.c.l.b16 %v3846
        %v4127 = vunpack.c.h.b16 %v3846
        %v4128 = vunpack.c.l.b16 %v3847
        %v4129 = vunpack.c.h.b16 %v3847
        %v4130 = vunpack.c.l.b16 %v3848
        %v4131 = vunpack.c.h.b16 %v3848
        %v4132 = vunpack.c.l.b16 %v3849
        %v4133 = vunpack.c.h.b16 %v3849
        %v4134 = vunpack.c.l.b16 %v3850
        %v4135 = vunpack.c.h.b16 %v3850
        %v4136 = vunpack.c.l.b16 %v3851
        %v4137 = vunpack.c.h.b16 %v3851
        %v4138 = vunpack.c.l.b16 %v3852
        %v4139 = vunpack.c.h.b16 %v3852
        %v4140 = vunpack.c.l.b16 %v3853
        %v4141 = vunpack.c.h.b16 %v3853
        %v4142 = vunpack.c.l.b16 %v3854
        %v4143 = vunpack.c.h.b16 %v3854
        %v4144 = vunpack.c.l.b16 %v3855
        %v4145 = vunpack.c.h.b16 %v3855
        %v4146 = vunpack.c.l.b16 %v3856
        %v4147 = vunpack.c.h.b16 %v3856
        %v4148 = vunpack.c.l.b16 %v3857
        %v4149 = vunpack.c.h.b16 %v3857
        %v4150 = vunpack.c.l.b16 %v3858
        %v4151 = vunpack.c.h.b16 %v3858
        %v4152 = vunpack.c.l.b16 %v3859
        %v4153 = vunpack.c.h.b16 %v3859
        %v4154 = vunpack.c.l.b16 %v3860
        %v4155 = vunpack.c.h.b16 %v3860
        %v4156 = vunpack.c.l.b16 %v3861
        %v4157 = vunpack.c.h.b16 %v3861
        %v4158 = vunpack.c.l.b16 %v3862
        %v4159 = vunpack.c.h.b16 %v3862
        %v4160 = vunpack.c.l.b16 %v3863
        %v4161 = vunpack.c.h.b16 %v3863
        %v4162 = vunpack.c.l.b16 %v3864
        %v4163 = vunpack.c.h.b16 %v3864
        %v4164 = vunpack.c.l.b16 %v3865
        %v4165 = vunpack.c.h.b16 %v3865
        %v4166 = vunpack.c.l.b16 %v3866
        %v4167 = vunpack.c.h.b16 %v3866
        %v4168 = vunpack.c.l.b16 %v3867
        %v4169 = vunpack.c.h.b16 %v3867
        %v4170 = vunpack.c.l.b16 %v3868
        %v4171 = vunpack.c.h.b16 %v3868
        %v4172 = vunpack.c.l.b16 %v3869
        %v4173 = vunpack.c.h.b16 %v3869
        %v4174 = vunpack.c.l.b16 %v3870
        %v4175 = vunpack.c.h.b16 %v3870
        %v4176 = vunpack.c.l.b16 %v3871
        %v4177 = vunpack.c.h.b16 %v3871
        %v4178 = vunpack.c.l.b16 %v3872
        %v4179 = vunpack.c.h.b16 %v3872
        %v4180 = vunpack.c.l.b16 %v3873
        %v4181 = vunpack.c.h.b16 %v3873
        %v4182 = vunpack.c.l.b16 %v3874
        %v4183 = vunpack.c.h.b16 %v3874
        %v4184 = vunpack.c.l.b16 %v3875
        %v4185 = vunpack.c.h.b16 %v3875
        %v4186 = vunpack.c.l.b16 %v3876
        %v4187 = vunpack.c.h.b16 %v3876
        %v4188 = vunpack.c.l.b16 %v3877
        %v4189 = vunpack.c.h.b16 %v3877
        %v4190 = vunpack.c.l.b16 %v3878
        %v4191 = vunpack.c.h.b16 %v3878
        %v4192 = vunpack.c.l.b16 %v3879
        %v4193 = vunpack.c.h.b16 %v3879
        %v4194 = vunpack.c.l.b16 %v3880
        %v4195 = vunpack.c.h.b16 %v3880
        %v4196 = vunpack.c.l.b16 %v3881
        %v4197 = vunpack.c.h.b16 %v3881
        %v4198 = vunpack.c.l.b16 %v3882
        %v4199 = vunpack.c.h.b16 %v3882
        %v4200 = vunpack.c.l.b16 %v3883
        %v4201 = vunpack.c.h.b16 %v3883
        %v4202 = vunpack.c.l.b16 %v3884
        %v4203 = vunpack.c.h.b16 %v3884
        %v4204 = vunpack.c.l.b16 %v3885
        %v4205 = vunpack.c.h.b16 %v3885
        %v4206 = vunpack.c.l.b16 %v3886
        %v4207 = vunpack.c.h.b16 %v3886
        %v4208 = vunpack.c.l.b16 %v3887
        %v4209 = vunpack.c.h.b16 %v3887
        %v4210 = vunpack.c.l.b16 %v3888
        %v4211 = vunpack.c.h.b16 %v3888
        %v4212 = vunpack.c.l.b16 %v3889
        %v4213 = vunpack.c.h.b16 %v3889
        %v4214 = vunpack.c.l.b16 %v3890
        %v4215 = vunpack.c.h.b16 %v3890
        %v4216 = vunpack.c.l.b16 %v3891
        %v4217 = vunpack.c.h.b16 %v3891
        %v4218 = vunpack.c.l.b16 %v3892
        %v4219 = vunpack.c.h.b16 %v3892
        %v4220 = vunpack.c.l.b16 %v3893
        %v4221 = vunpack.c.h.b16 %v3893
        %v4222 = vunpack.c.l.b16 %v3894
        %v4223 = vunpack.c.h.b16 %v3894
        %v4224 = vunpack.c.l.b16 %v3895
        %v4225 = vunpack.c.h.b16 %v3895
        %v4226 = vunpack.c.l.b16 %v3896
        %v4227 = vunpack.c.h.b16 %v3896
        %v4228 = vunpack.c.l.b16 %v3897
        %v4229 = vunpack.c.h.b16 %v3897
        %v4230 = vunpack.c.l.b16 %v3898
        %v4231 = vunpack.c.h.b16 %v3898
        %v4232 = vunpack.c.l.b16 %v3899
        %v4233 = vunpack.c.h.b16 %v3899
        %v4234 = vunpack.c.l.b16 %v3900
        %v4235 = vunpack.c.h.b16 %v3900
        %v4236 = vunpack.c.l.b16 %v3901
        %v4237 = vunpack.c.h.b16 %v3901
        %v4238 = vunpack.c.l.b16 %v3902
        %v4239 = vunpack.c.h.b16 %v3902
        %v4240 = vunpack.c.l.b16 %v3903
        %v4241 = vunpack.c.h.b16 %v3903
        %v4242 = vunpack.c.l.b16 %v3904
        %v4243 = vunpack.c.h.b16 %v3904
        %v4244 = vunpack.c.l.b16 %v3905
        %v4245 = vunpack.c.h.b16 %v3905
        %v4246 = vunpack.c.l.b16 %v3906
        %v4247 = vunpack.c.h.b16 %v3906
        %v4248 = vunpack.c.l.b16 %v3907
        %v4249 = vunpack.c.h.b16 %v3907
        %v4250 = vunpack.c.l.b16 %v3908
        %v4251 = vunpack.c.h.b16 %v3908
        %v4252 = vunpack.c.l.b16 %v3909
        %v4253 = vunpack.c.h.b16 %v3909
        %v4254 = vunpack.c.l.b16 %v3910
        %v4255 = vunpack.c.h.b16 %v3910
        %v4256 = vunpack.c.l.b16 %v3911
        %v4257 = vunpack.c.h.b16 %v3911
        %v4258 = vunpack.c.l.b16 %v3912
        %v4259 = vunpack.c.h.b16 %v3912
        %v4260 = vunpack.c.l.b16 %v3913
        %v4261 = vunpack.c.h.b16 %v3913
        %v4262 = vunpack.c.l.b16 %v3914
        %v4263 = vunpack.c.h.b16 %v3914
        %v4264 = vunpack.c.l.b16 %v3915
        %v4265 = vunpack.c.h.b16 %v3915
        %v4266 = vunpack.c.l.b16 %v3916
        %v4267 = vunpack.c.h.b16 %v3916
        %v4268 = vunpack.c.l.b16 %v3917
        %v4269 = vunpack.c.h.b16 %v3917
        %v4270 = vunpack.c.l.b16 %v3918
        %v4271 = vunpack.c.h.b16 %v3918
        %v4272 = vunpack.c.l.b16 %v3919
        %v4273 = vunpack.c.h.b16 %v3919
        %v4274 = vunpack.c.l.b16 %v3920
        %v4275 = vunpack.c.h.b16 %v3920
        %v4276 = vunpack.c.l.b16 %v3921
        %v4277 = vunpack.c.h.b16 %v3921
        %v4278 = vunpack.c.l.b16 %v3922
        %v4279 = vunpack.c.h.b16 %v3922
        %v4280 = vunpack.c.l.b16 %v3923
        %v4281 = vunpack.c.h.b16 %v3923
        %v4282 = vunpack.c.l.b16 %v3924
        %v4283 = vunpack.c.h.b16 %v3924
        %v4284 = vunpack.c.l.b16 %v3925
        %v4285 = vunpack.c.h.b16 %v3925
        %v4286 = vunpack.c.l.b16 %v3926
        %v4287 = vunpack.c.h.b16 %v3926
        %v4288 = vunpack.c.l.b16 %v3927
        %v4289 = vunpack.c.h.b16 %v3927
        %v4290 = vunpack.c.l.b16 %v3928
        %v4291 = vunpack.c.h.b16 %v3928
        %v4292 = vunpack.c.l.b16 %v3929
        %v4293 = vunpack.c.h.b16 %v3929
        %v4294 = vunpack.c.l.b16 %v3930
        %v4295 = vunpack.c.h.b16 %v3930
        %v4296 = vunpack.c.l.b16 %v3931
        %v4297 = vunpack.c.h.b16 %v3931
        %v4298 = vunpack.c.l.b16 %v3932
        %v4299 = vunpack.c.h.b16 %v3932
        %v4300 = vunpack.c.l.b16 %v3933
        %v4301 = vunpack.c.h.b16 %v3933
        %v4302 = vunpack.c.l.b16 %v3934
        %v4303 = vunpack.c.h.b16 %v3934
        %v4304 = vunpack.c.l.b16 %v3935
        %v4305 = vunpack.c.h.b16 %v3935
        %v4306 = vunpack.c.l.b16 %v3936
        %v4307 = vunpack.c.h.b16 %v3936
        %v4308 = vunpack.c.l.b16 %v3937
        %v4309 = vunpack.c.h.b16 %v3937
        %v4310 = vunpack.c.l.b16 %v3938
        %v4311 = vunpack.c.h.b16 %v3938
        %v4312 = vunpack.c.l.b16 %v3939
        %v4313 = vunpack.c.h.b16 %v3939
        %v4314 = vunpack.c.l.b16 %v3940
        %v4315 = vunpack.c.h.b16 %v3940
        %v4316 = vunpack.c.l.b16 %v3941
        %v4317 = vunpack.c.h.b16 %v3941
        %v4318 = vunpack.c.l.b16 %v3942
        %v4319 = vunpack.c.h.b16 %v3942
        %v4320 = vunpack.c.l.b16 %v3943
        %v4321 = vunpack.c.h.b16 %v3943
        %v4322 = vunpack.c.l.b16 %v3944
        %v4323 = vunpack.c.h.b16 %v3944
        %v4324 = vunpack.c.l.b16 %v3945
        %v4325 = vunpack.c.h.b16 %v3945
        %v4326 = vunpack.c.l.b16 %v3946
        %v4327 = vunpack.c.h.b16 %v3946
        %v4328 = vunpack.c.l.b16 %v3947
        %v4329 = vunpack.c.h.b16 %v3947
        %v4330 = vunpack.c.l.b16 %v3948
        %v4331 = vunpack.c.h.b16 %v3948
        %v4332 = vunpack.c.l.b16 %v3949
        %v4333 = vunpack.c.h.b16 %v3949
        %v4334 = vunpack.c.l.b16 %v3950
        %v4335 = vunpack.c.h.b16 %v3950
        %v4336 = vunpack.c.l.b16 %v3951
        %v4337 = vunpack.c.h.b16 %v3951
        %v4338 = vunpack.c.l.b16 %v3952
        %v4339 = vunpack.c.h.b16 %v3952
        %v4340 = vunpack.c.l.b16 %v3953
        %v4341 = vunpack.c.h.b16 %v3953
        %v4342 = vunpack.c.l.b16 %v3954
        %v4343 = vunpack.c.h.b16 %v3954
        %v4344 = vunpack.c.l.b16 %v3955
        %v4345 = vunpack.c.h.b16 %v3955
        %v4346 = vpack.c.b16 %v4092, %v4090
        %v4347 = vpack.c.b16 %v4093, %v4091
        %v4348 = vpack.c.b16 %v4096, %v4094
        %v4349 = vpack.c.b16 %v4097, %v4095
        %v4350 = vpack.c.b16 %v4100, %v4098
        %v4351 = vpack.c.b16 %v4101, %v4099
        %v4352 = vpack.c.b16 %v4104, %v4102
        %v4353 = vpack.c.b16 %v4105, %v4103
        %v4354 = vpack.c.b16 %v4108, %v4106
        %v4355 = vpack.c.b16 %v4109, %v4107
        %v4356 = vpack.c.b16 %v4112, %v4110
        %v4357 = vpack.c.b16 %v4113, %v4111
        %v4358 = vpack.c.b16 %v4116, %v4114
        %v4359 = vpack.c.b16 %v4117, %v4115
        %v4360 = vpack.c.b16 %v4120, %v4118
        %v4361 = vpack.c.b16 %v4121, %v4119
        %v4362 = vpack.c.b16 %v4124, %v4122
        %v4363 = vpack.c.b16 %v4125, %v4123
        %v4364 = vpack.c.b16 %v4128, %v4126
        %v4365 = vpack.c.b16 %v4129, %v4127
        %v4366 = vpack.c.b16 %v4132, %v4130
        %v4367 = vpack.c.b16 %v4133, %v4131
        %v4368 = vpack.c.b16 %v4136, %v4134
        %v4369 = vpack.c.b16 %v4137, %v4135
        %v4370 = vpack.c.b16 %v4140, %v4138
        %v4371 = vpack.c.b16 %v4141, %v4139
        %v4372 = vpack.c.b16 %v4144, %v4142
        %v4373 = vpack.c.b16 %v4145, %v4143
        %v4374 = vpack.c.b16 %v4148, %v4146
        %v4375 = vpack.c.b16 %v4149, %v4147
        %v4376 = vpack.c.b16 %v4152, %v4150
        %v4377 = vpack.c.b16 %v4153, %v4151
        %v4378 = vpack.c.b16 %v4156, %v4154
        %v4379 = vpack.c.b16 %v4157, %v4155
        %v4380 = vpack.c.b16 %v4160, %v4158
        %v4381 = vpack.c.b16 %v4161, %v4159
        %v4382 = vpack.c.b16 %v4164, %v4162
        %v4383 = vpack.c.b16 %v4165, %v4163
        %v4384 = vpack.c.b16 %v4168, %v4166
        %v4385 = vpack.c.b16 %v4169, %v4167
        %v4386 = vpack.c.b16 %v4172, %v4170
        %v4387 = vpack.c.b16 %v4173, %v4171
        %v4388 = vpack.c.b16 %v4176, %v4174
        %v4389 = vpack.c.b16 %v4177, %v4175
        %v4390 = vpack.c.b16 %v4180, %v4178
        %v4391 = vpack.c.b16 %v4181, %v4179
        %v4392 = vpack.c.b16 %v4184, %v4182
        %v4393 = vpack.c.b16 %v4185, %v4183
        %v4394 = vpack.c.b16 %v4188, %v4186
        %v4395 = vpack.c.b16 %v4189, %v4187
        %v4396 = vpack.c.b16 %v4192, %v4190
        %v4397 = vpack.c.b16 %v4193, %v4191
        %v4398 = vpack.c.b16 %v4196, %v4194
        %v4399 = vpack.c.b16 %v4197, %v4195
        %v4400 = vpack.c.b16 %v4200, %v4198
        %v4401 = vpack.c.b16 %v4201, %v4199
        %v4402 = vpack.c.b16 %v4204, %v4202
        %v4403 = vpack.c.b16 %v4205, %v4203
        %v4404 = vpack.c.b16 %v4208, %v4206
        %v4405 = vpack.c.b16 %v4209, %v4207
        %v4406 = vpack.c.b16 %v4212, %v4210
        %v4407 = vpack.c.b16 %v4213, %v4211
        %v4408 = vpack.c.b16 %v4216, %v4214
        %v4409 = vpack.c.b16 %v4217, %v4215
        %v4410 = vpack.c.b16 %v4220, %v4218
        %v4411 = vpack.c.b16 %v4221, %v4219
        %v4412 = vpack.c.b16 %v4224, %v4222
        %v4413 = vpack.c.b16 %v4225, %v4223
        %v4414 = vpack.c.b16 %v4228, %v4226
        %v4415 = vpack.c.b16 %v4229, %v4227
        %v4416 = vpack.c.b16 %v4232, %v4230
        %v4417 = vpack.c.b16 %v4233, %v4231
        %v4418 = vpack.c.b16 %v4236, %v4234
        %v4419 = vpack.c.b16 %v4237, %v4235
        %v4420 = vpack.c.b16 %v4240, %v4238
        %v4421 = vpack.c.b16 %v4241, %v4239
        %v4422 = vpack.c.b16 %v4244, %v4242
        %v4423 = vpack.c.b16 %v4245, %v4243
        %v4424 = vpack.c.b16 %v4248, %v4246
        %v4425 = vpack.c.b16 %v4249, %v4247
        %v4426 = vpack.c.b16 %v4252, %v4250
        %v4427 = vpack.c.b16 %v4253, %v4251
        %v4428 = vpack.c.b16 %v4256, %v4254
        %v4429 = vpack.c.b16 %v4257, %v4255
        %v4430 = vpack.c.b16 %v4260, %v4258
        %v4431 = vpack.c.b16 %v4261, %v4259
        %v4432 = vpack.c.b16 %v4264, %v4262
        %v4433 = vpack.c.b16 %v4265, %v4263
        %v4434 = vpack.c.b16 %v4268, %v4266
        %v4435 = vpack.c.b16 %v4269, %v4267
        %v4436 = vpack.c.b16 %v4272, %v4270
        %v4437 = vpack.c.b16 %v4273, %v4271
        %v4438 = vpack.c.b16 %v4276, %v4274
        %v4439 = vpack.c.b16 %v4277, %v4275
        %v4440 = vpack.c.b16 %v4280, %v4278
        %v4441 = vpack.c.b16 %v4281, %v4279
        %v4442 = vpack.c.b16 %v4284, %v4282
        %v4443 = vpack.c.b16 %v4285, %v4283
        %v4444 = vpack.c.b16 %v4288, %v4286
        %v4445 = vpack.c.b16 %v4289, %v4287
        %v4446 = vpack.c.b16 %v4292, %v4290
        %v4447 = vpack.c.b16 %v4293, %v4291
        %v4448 = vpack.c.b16 %v4296, %v4294
        %v4449 = vpack.c.b16 %v4297, %v4295
        %v4450 = vpack.c.b16 %v4300, %v4298
        %v4451 = vpack.c.b16 %v4301, %v4299
        %v4452 = vpack.c.b16 %v4304, %v4302
        %v4453 = vpack.c.b16 %v4305, %v4303
        %v4454 = vpack.c.b16 %v4308, %v4306
        %v4455 = vpack.c.b16 %v4309, %v4307
        %v4456 = vpack.c.b16 %v4312, %v4310
        %v4457 = vpack.c.b16 %v4313, %v4311
        %v4458 = vpack.c.b16 %v4316, %v4314
        %v4459 = vpack.c.b16 %v4317, %v4315
        %v4460 = vpack.c.b16 %v4320, %v4318
        %v4461 = vpack.c.b16 %v4321, %v4319
        %v4462 = vpack.c.b16 %v4324, %v4322
        %v4463 = vpack.c.b16 %v4325, %v4323
        %v4464 = vpack.c.b16 %v4328, %v4326
        %v4465 = vpack.c.b16 %v4329, %v4327
        %v4466 = vpack.c.b16 %v4332, %v4330
        %v4467 = vpack.c.b16 %v4333, %v4331
        %v4468 = vpack.c.b16 %v4336, %v4334
        %v4469 = vpack.c.b16 %v4337, %v4335
        %v4470 = vpack.c.b16 %v4340, %v4338
        %v4471 = vpack.c.b16 %v4341, %v4339
        %v4472 = vpack.c.b16 %v4344, %v4342
        %v4473 = vpack.c.b16 %v4345, %v4343
        %4602 = vmatpush.bf16.msra.mxu0 %v4360
        %4603 = vmatpush.bf16.msra.mxu0 %v4358
        %4604 = vmatpush.bf16.msra.mxu0 %v4356
        %4605 = vmatpush.bf16.msra.mxu0 %v4354
        %4606 = vmatpush.bf16.msra.mxu0 %v4352
        %4607 = vmatpush.bf16.msra.mxu0 %v4350
        %4608 = vmatpush.bf16.msra.mxu0 %v4348
        %4609 = vmatpush.bf16.msra.mxu0 %v4346
        %4610 = vmatmul.bf16.gmra.mxu0 %v3820
        %v4611 = vpop.f32.mrf.mxu0
        %v4612 = vadd.f32 %v3958, %v4611
        %v4613 = vpop.f32.mrf.mxu0
        %v4614 = vadd.f32 %v3958, %v4613
        %4615 = vdwg.mxu0
        %4616 = vmatpush.bf16.msra.mxu0 %v4376
        %4617 = vmatpush.bf16.msra.mxu0 %v4374
        %4618 = vmatpush.bf16.msra.mxu0 %v4372
        %4619 = vmatpush.bf16.msra.mxu0 %v4370
        %4620 = vmatpush.bf16.msra.mxu0 %v4368
        %4621 = vmatpush.bf16.msra.mxu0 %v4366
        %4622 = vmatpush.bf16.msra.mxu0 %v4364
        %4623 = vmatpush.bf16.msra.mxu0 %v4362
        %4624 = vmatmul.bf16.gmra.mxu0 %v3821
        %v4625 = vpop.f32.mrf.mxu0
        %v4626 = vadd.f32 %v4612, %v4625
        %v4627 = vpop.f32.mrf.mxu0
        %v4628 = vadd.f32 %v4614, %v4627
        %4629 = vdwg.mxu0
        %4630 = vmatpush.bf16.msra.mxu0 %v4392
        %4631 = vmatpush.bf16.msra.mxu0 %v4390
        %4632 = vmatpush.bf16.msra.mxu0 %v4388
        %4633 = vmatpush.bf16.msra.mxu0 %v4386
        %4634 = vmatpush.bf16.msra.mxu0 %v4384
        %4635 = vmatpush.bf16.msra.mxu0 %v4382
        %4636 = vmatpush.bf16.msra.mxu0 %v4380
        %4637 = vmatpush.bf16.msra.mxu0 %v4378
        %4638 = vmatmul.bf16.gmra.mxu0 %v3822
        %v4639 = vpop.f32.mrf.mxu0
        %v4640 = vadd.f32 %v4626, %v4639
        %v4641 = vpop.f32.mrf.mxu0
        %v4642 = vadd.f32 %v4628, %v4641
        %4643 = vdwg.mxu0
        %4644 = vmatpush.bf16.msra.mxu0 %v4408
        %4645 = vmatpush.bf16.msra.mxu0 %v4406
        %4646 = vmatpush.bf16.msra.mxu0 %v4404
        %4647 = vmatpush.bf16.msra.mxu0 %v4402
        %4648 = vmatpush.bf16.msra.mxu0 %v4400
        %4649 = vmatpush.bf16.msra.mxu0 %v4398
        %4650 = vmatpush.bf16.msra.mxu0 %v4396
        %4651 = vmatpush.bf16.msra.mxu0 %v4394
        %4652 = vmatmul.bf16.gmra.mxu0 %v3823
        %v4653 = vpop.f32.mrf.mxu0
        %v4654 = vadd.f32 %v4640, %v4653
        %v4655 = vpop.f32.mrf.mxu0
        %v4656 = vadd.f32 %v4642, %v4655
        %4657 = vdwg.mxu0
        %4658 = vmatpush.bf16.msra.mxu0 %v4424
        %4659 = vmatpush.bf16.msra.mxu0 %v4422
        %4660 = vmatpush.bf16.msra.mxu0 %v4420
        %4661 = vmatpush.bf16.msra.mxu0 %v4418
        %4662 = vmatpush.bf16.msra.mxu0 %v4416
        %4663 = vmatpush.bf16.msra.mxu0 %v4414
        %4664 = vmatpush.bf16.msra.mxu0 %v4412
        %4665 = vmatpush.bf16.msra.mxu0 %v4410
        %4666 = vmatmul.bf16.gmra.mxu0 %v3824
        %v4667 = vpop.f32.mrf.mxu0
        %v4668 = vadd.f32 %v4654, %v4667
        %v4669 = vpop.f32.mrf.mxu0
        %v4670 = vadd.f32 %v4656, %v4669
        %4671 = vdwg.mxu0
        %4672 = vmatpush.bf16.msra.mxu0 %v4440
        %4673 = vmatpush.bf16.msra.mxu0 %v4438
        %4674 = vmatpush.bf16.msra.mxu0 %v4436
        %4675 = vmatpush.bf16.msra.mxu0 %v4434
        %4676 = vmatpush.bf16.msra.mxu0 %v4432
        %4677 = vmatpush.bf16.msra.mxu0 %v4430
        %4678 = vmatpush.bf16.msra.mxu0 %v4428
        %4679 = vmatpush.bf16.msra.mxu0 %v4426
        %4680 = vmatmul.bf16.gmra.mxu0 %v3825
        %v4681 = vpop.f32.mrf.mxu0
        %v4682 = vadd.f32 %v4668, %v4681
        %v4683 = vpop.f32.mrf.mxu0
        %v4684 = vadd.f32 %v4670, %v4683
        %4685 = vdwg.mxu0
        %4686 = vmatpush.bf16.msra.mxu0 %v4456
        %4687 = vmatpush.bf16.msra.mxu0 %v4454
        %4688 = vmatpush.bf16.msra.mxu0 %v4452
        %4689 = vmatpush.bf16.msra.mxu0 %v4450
        %4690 = vmatpush.bf16.msra.mxu0 %v4448
        %4691 = vmatpush.bf16.msra.mxu0 %v4446
        %4692 = vmatpush.bf16.msra.mxu0 %v4444
        %4693 = vmatpush.bf16.msra.mxu0 %v4442
        %4694 = vmatmul.bf16.gmra.mxu0 %v3826
        %v4695 = vpop.f32.mrf.mxu0
        %v4696 = vadd.f32 %v4682, %v4695
        %v4697 = vpop.f32.mrf.mxu0
        %v4698 = vadd.f32 %v4684, %v4697
        %4699 = vdwg.mxu0
        %4700 = vmatpush.bf16.msra.mxu0 %v4472
        %4701 = vmatpush.bf16.msra.mxu0 %v4470
        %4702 = vmatpush.bf16.msra.mxu0 %v4468
        %4703 = vmatpush.bf16.msra.mxu0 %v4466
        %4704 = vmatpush.bf16.msra.mxu0 %v4464
        %4705 = vmatpush.bf16.msra.mxu0 %v4462
        %4706 = vmatpush.bf16.msra.mxu0 %v4460
        %4707 = vmatpush.bf16.msra.mxu0 %v4458
        %4708 = vmatmul.bf16.gmra.mxu0 %v3827
        %v4709 = vpop.f32.mrf.mxu0
        %v4710 = vadd.f32 %v4696, %v4709
        %v4711 = vpop.f32.mrf.mxu0
        %v4712 = vadd.f32 %v4698, %v4711
        %4713 = vdwg.mxu0
        %4714 = vmatpush.bf16.msra.mxu0 %v4361
        %4715 = vmatpush.bf16.msra.mxu0 %v4359
        %4716 = vmatpush.bf16.msra.mxu0 %v4357
        %4717 = vmatpush.bf16.msra.mxu0 %v4355
        %4718 = vmatpush.bf16.msra.mxu0 %v4353
        %4719 = vmatpush.bf16.msra.mxu0 %v4351
        %4720 = vmatpush.bf16.msra.mxu0 %v4349
        %4721 = vmatpush.bf16.msra.mxu0 %v4347
        %4722 = vmatmul.bf16.gmra.mxu0 %v3820
        %v4723 = vpop.f32.mrf.mxu0
        %v4724 = vadd.f32 %v3959, %v4723
        %v4725 = vpop.f32.mrf.mxu0
        %v4726 = vadd.f32 %v3959, %v4725
        %4727 = vdwg.mxu0
        %4728 = vmatpush.bf16.msra.mxu0 %v4377
        %4729 = vmatpush.bf16.msra.mxu0 %v4375
        %4730 = vmatpush.bf16.msra.mxu0 %v4373
        %4731 = vmatpush.bf16.msra.mxu0 %v4371
        %4732 = vmatpush.bf16.msra.mxu0 %v4369
        %4733 = vmatpush.bf16.msra.mxu0 %v4367
        %4734 = vmatpush.bf16.msra.mxu0 %v4365
        %4735 = vmatpush.bf16.msra.mxu0 %v4363
        %4736 = vmatmul.bf16.gmra.mxu0 %v3821
        %v4737 = vpop.f32.mrf.mxu0
        %v4738 = vadd.f32 %v4724, %v4737
        %v4739 = vpop.f32.mrf.mxu0
        %v4740 = vadd.f32 %v4726, %v4739
        %4741 = vdwg.mxu0
        %4742 = vmatpush.bf16.msra.mxu0 %v4393
        %4743 = vmatpush.bf16.msra.mxu0 %v4391
        %4744 = vmatpush.bf16.msra.mxu0 %v4389
        %4745 = vmatpush.bf16.msra.mxu0 %v4387
        %4746 = vmatpush.bf16.msra.mxu0 %v4385
        %4747 = vmatpush.bf16.msra.mxu0 %v4383
        %4748 = vmatpush.bf16.msra.mxu0 %v4381
        %4749 = vmatpush.bf16.msra.mxu0 %v4379
        %4750 = vmatmul.bf16.gmra.mxu0 %v3822
        %v4751 = vpop.f32.mrf.mxu0
        %v4752 = vadd.f32 %v4738, %v4751
        %v4753 = vpop.f32.mrf.mxu0
        %v4754 = vadd.f32 %v4740, %v4753
        %4755 = vdwg.mxu0
        %4756 = vmatpush.bf16.msra.mxu0 %v4409
        %4757 = vmatpush.bf16.msra.mxu0 %v4407
        %4758 = vmatpush.bf16.msra.mxu0 %v4405
        %4759 = vmatpush.bf16.msra.mxu0 %v4403
        %4760 = vmatpush.bf16.msra.mxu0 %v4401
        %4761 = vmatpush.bf16.msra.mxu0 %v4399
        %4762 = vmatpush.bf16.msra.mxu0 %v4397
        %4763 = vmatpush.bf16.msra.mxu0 %v4395
        %4764 = vmatmul.bf16.gmra.mxu0 %v3823
        %v4765 = vpop.f32.mrf.mxu0
        %v4766 = vadd.f32 %v4752, %v4765
        %v4767 = vpop.f32.mrf.mxu0
        %v4768 = vadd.f32 %v4754, %v4767
        %4769 = vdwg.mxu0
        %4770 = vmatpush.bf16.msra.mxu0 %v4425
        %4771 = vmatpush.bf16.msra.mxu0 %v4423
        %4772 = vmatpush.bf16.msra.mxu0 %v4421
        %4773 = vmatpush.bf16.msra.mxu0 %v4419
        %4774 = vmatpush.bf16.msra.mxu0 %v4417
        %4775 = vmatpush.bf16.msra.mxu0 %v4415
        %4776 = vmatpush.bf16.msra.mxu0 %v4413
        %4777 = vmatpush.bf16.msra.mxu0 %v4411
        %4778 = vmatmul.bf16.gmra.mxu0 %v3824
        %v4779 = vpop.f32.mrf.mxu0
        %v4780 = vadd.f32 %v4766, %v4779
        %v4781 = vpop.f32.mrf.mxu0
        %v4782 = vadd.f32 %v4768, %v4781
        %4783 = vdwg.mxu0
        %4784 = vmatpush.bf16.msra.mxu0 %v4441
        %4785 = vmatpush.bf16.msra.mxu0 %v4439
        %4786 = vmatpush.bf16.msra.mxu0 %v4437
        %4787 = vmatpush.bf16.msra.mxu0 %v4435
        %4788 = vmatpush.bf16.msra.mxu0 %v4433
        %4789 = vmatpush.bf16.msra.mxu0 %v4431
        %4790 = vmatpush.bf16.msra.mxu0 %v4429
        %4791 = vmatpush.bf16.msra.mxu0 %v4427
        %4792 = vmatmul.bf16.gmra.mxu0 %v3825
        %v4793 = vpop.f32.mrf.mxu0
        %v4794 = vadd.f32 %v4780, %v4793
        %v4795 = vpop.f32.mrf.mxu0
        %v4796 = vadd.f32 %v4782, %v4795
        %4797 = vdwg.mxu0
        %4798 = vmatpush.bf16.msra.mxu0 %v4457
        %4799 = vmatpush.bf16.msra.mxu0 %v4455
        %4800 = vmatpush.bf16.msra.mxu0 %v4453
        %4801 = vmatpush.bf16.msra.mxu0 %v4451
        %4802 = vmatpush.bf16.msra.mxu0 %v4449
        %4803 = vmatpush.bf16.msra.mxu0 %v4447
        %4804 = vmatpush.bf16.msra.mxu0 %v4445
        %4805 = vmatpush.bf16.msra.mxu0 %v4443
        %4806 = vmatmul.bf16.gmra.mxu0 %v3826
        %v4807 = vpop.f32.mrf.mxu0
        %v4808 = vadd.f32 %v4794, %v4807
        %v4809 = vpop.f32.mrf.mxu0
        %v4810 = vadd.f32 %v4796, %v4809
        %4811 = vdwg.mxu0
        %4812 = vmatpush.bf16.msra.mxu0 %v4473
        %4813 = vmatpush.bf16.msra.mxu0 %v4471
        %4814 = vmatpush.bf16.msra.mxu0 %v4469
        %4815 = vmatpush.bf16.msra.mxu0 %v4467
        %4816 = vmatpush.bf16.msra.mxu0 %v4465
        %4817 = vmatpush.bf16.msra.mxu0 %v4463
        %4818 = vmatpush.bf16.msra.mxu0 %v4461
        %4819 = vmatpush.bf16.msra.mxu0 %v4459
        %4820 = vmatmul.bf16.gmra.mxu0 %v3827
        %v4821 = vpop.f32.mrf.mxu0
        %v4822 = vadd.f32 %v4808, %v4821
        %v4823 = vpop.f32.mrf.mxu0
        %v4824 = vadd.f32 %v4810, %v4823
        %4825 = vdwg.mxu0
        %v4826 = vadd.f32 %v2788, %v4710
        %v4827 = vadd.f32 %v2789, %v4822
        %v4828 = vadd.f32 %v2790, %v4712
        %v4829 = vadd.f32 %v2791, %v4824
        %v4830 = vld [vmem:[%s1124] sm:$0x3]
        %v4831 = vld [vmem:[%s1134] sm:$0x3]
        %v4832 = vadd.f32 %v4826, %v4827
        %4833 = vadd.xlane.f32.xlu0 %v4832
        %v4834 = vpop.xlane.xlu0 %4833
        %v4835 = vadd.f32 %v4828, %v4829
        %4836 = vadd.xlane.f32.xlu0 %v4835
        %v4837 = vpop.xlane.xlu0 %4836
        %v4838 = vmul.f32 %v4834, %v2729
        %v4839 = vmul.f32 %v4837, %v2729
        %v4840 = vsub.f32 %v4826, %v4838
        %v4841 = vsub.f32 %v4827, %v4838
        %v4842 = vsub.f32 %v4828, %v4839
        %v4843 = vsub.f32 %v4829, %v4839
        %v4844 = vmul.f32 %v4840, %v4840
        %v4845 = vmul.f32 %v4841, %v4841
        %v4846 = vmul.f32 %v4842, %v4842
        %v4847 = vmul.f32 %v4843, %v4843
        %v4848 = vadd.f32 %v4844, %v4845
        %4849 = vadd.xlane.f32.xlu0 %v4848
        %v4850 = vpop.xlane.xlu0 %4849
        %v4851 = vadd.f32 %v4846, %v4847
        %4852 = vadd.xlane.f32.xlu0 %v4851
        %v4853 = vpop.xlane.xlu0 %4852
        %v4854 = vmul.f32 %v4850, %v2729
        %v4855 = vmul.f32 %v4853, %v2729
        %v4856 = vadd.f32 %v4854, 1e-12
        %v4857 = vadd.f32 %v4855, 1e-12
        %v4858 = vrsqrt.pop %v4856
        %v4859 = vmul.f32 %v4858, %v4856
        %v4860 = vmul.f32 %v4859, %v4858
        %v4861 = vmul.f32 0.5, %v4860
        %v4862 = vsub.f32 1.5, %v4861
        %v4863 = vmul.f32 %v4858, %v4862
        %vm4864 = vweird.f32 %v4856
        %vm4865 = vweird.f32 %v4858
        %vm4866 = vmor %vm4864, %vm4865
        %v4867 = vsel %vm4866, %v4858, %v4863
        %v4868 = vrsqrt.pop %v4857
        %v4869 = vmul.f32 %v4868, %v4857
        %v4870 = vmul.f32 %v4869, %v4868
        %v4871 = vmul.f32 0.5, %v4870
        %v4872 = vsub.f32 1.5, %v4871
        %v4873 = vmul.f32 %v4868, %v4872
        %vm4874 = vweird.f32 %v4857
        %vm4875 = vweird.f32 %v4868
        %vm4876 = vmor %vm4874, %vm4875
        %v4877 = vsel %vm4876, %v4868, %v4873
        %v4878 = vmul.f32 %v4840, %v4867
        %v4879 = vmul.f32 %v4841, %v4867
        %v4880 = vmul.f32 %v4842, %v4877
        %v4881 = vmul.f32 %v4843, %v4877
        %v4883 = vperm.slane %v4830, 0
        %v4884 = vperm.slane %v4830, 1
        %v4887 = vmul.f32 %v4878, %v4883
        %v4888 = vmul.f32 %v4879, %v4884
        %v4889 = vmul.f32 %v4880, %v4883
        %v4890 = vmul.f32 %v4881, %v4884
        %v4892 = vperm.slane %v4831, 0
        %v4893 = vperm.slane %v4831, 1
        %v4896 = vadd.f32 %v4887, %v4892
        %v4897 = vadd.f32 %v4888, %v4893
        %v4898 = vadd.f32 %v4889, %v4892
        %v4899 = vadd.f32 %v4890, %v4893
        %4901 = vset.pattern.permute.xlu0 0
        %4902 = vperm.xlu0 %4901, %v1455
        %v4903 = vpop.permute.xlu0 %4902
        %4906 = vset.pattern.permute.xlu0 0
        %4907 = vperm.xlu0 %4906, %v1456
        %v4908 = vpop.permute.xlu0 %4907
        %v4910 = vmul.f32 %v4896, %v4903
        %v4911 = vmul.f32 %v4897, %v4903
        %v4912 = vmul.f32 %v4898, %v4908
        %v4913 = vmul.f32 %v4899, %v4908
        %v4914 = vrot.slane %v4910, 4
        %v4915 = vadd.f32 %v4910, %v4914
        %v4916 = vrot.slane %v4915, 2
        %v4917 = vadd.f32 %v4915, %v4916
        %v4918 = vrot.slane %v4917, 1
        %v4919 = vadd.f32 %v4917, %v4918
        %v4920 = vrot.slane %v4911, 4
        %v4921 = vadd.f32 %v4911, %v4920
        %v4922 = vrot.slane %v4921, 2
        %v4923 = vadd.f32 %v4921, %v4922
        %v4924 = vrot.slane %v4923, 1
        %v4925 = vadd.f32 %v4923, %v4924
        %v4926 = vrot.slane %v4912, 4
        %v4927 = vadd.f32 %v4912, %v4926
        %v4928 = vrot.slane %v4927, 2
        %v4929 = vadd.f32 %v4927, %v4928
        %v4930 = vrot.slane %v4929, 1
        %v4931 = vadd.f32 %v4929, %v4930
        %v4932 = vrot.slane %v4913, 4
        %v4933 = vadd.f32 %v4913, %v4932
        %v4934 = vrot.slane %v4933, 2
        %v4935 = vadd.f32 %v4933, %v4934
        %v4936 = vrot.slane %v4935, 1
        %v4937 = vadd.f32 %v4935, %v4936
        %v4938 = vld [vmem:[#allocation4] sm:$0x1]
        %v4939 = vld [vmem:[#allocation4 + $0x1] sm:$0x1]
        %4941 = vset.pattern.permute.xlu0 0
        %4942 = vperm.xlu0 %4941, %v4938
        %v4943 = vpop.permute.xlu0 %4942
        %v4945 = vperm.slane %v4943, 0
        %4947 = vset.pattern.permute.xlu0 0
        %4948 = vperm.xlu0 %4947, %v4939
        %v4949 = vpop.permute.xlu0 %4948
        %v4951 = vperm.slane %v4949, 0
        %v4952 = vmul.f32 %v4919, %v4945
        %v4953 = vmul.f32 %v4925, %v4945
        %v4954 = vmul.f32 %v4931, %v4951
        %v4955 = vmul.f32 %v4937, %v4951
        %v4956 = vxor.u32 %v4952, 2147483648
        %v4957 = vxor.u32 %v4953, 2147483648
        %v4958 = vxor.u32 %v4954, 2147483648
        %v4959 = vxor.u32 %v4955, 2147483648
        %v4960 = vmul.f32 %v4956, 1.442695
        %v4961 = vpow.pop %v4960
        %v4962 = vmul.f32 %v4957, 1.442695
        %v4963 = vpow.pop %v4962
        %v4964 = vmul.f32 %v4958, 1.442695
        %v4965 = vpow.pop %v4964
        %v4966 = vmul.f32 %v4959, 1.442695
        %v4967 = vpow.pop %v4966
        %v4968 = vadd.f32 %v4961, 1.0
        %v4969 = vadd.f32 %v4963, 1.0
        %v4970 = vadd.f32 %v4965, 1.0
        %v4971 = vadd.f32 %v4967, 1.0
        %v4972 = vrcp.pop %v4968
        %v4973 = vmul.f32 %v4968, %v4972
        %v4974 = vsub.f32 1.0, %v4973
        %v4975 = vmul.f32 %v4972, %v4974
        %v4976 = vadd.f32 %v4972, %v4975
        %vm4977 = vweird.f32 %v4968
        %vm4978 = vweird.f32 %v4972
        %vm4979 = vmor %vm4977, %vm4978
        %v4980 = vsel %vm4979, %v4972, %v4976
        %v4981 = vand.u32 2147483647, %v4968
        %vm4982 = vcmp.eq.f32.partialorder %v4981, 8.507059e+37
        %v4983 = vand.u32 %v4968, 2147483648
        %v4984 = vor.u32 1.1754944e-38, %v4983
        %v4985 = vsel %vm4982, %v4984, %v4980
        %v4986 = vmul.f32 1.0, %v4985
        %v4987 = vrcp.pop %v4969
        %v4988 = vmul.f32 %v4969, %v4987
        %v4989 = vsub.f32 1.0, %v4988
        %v4990 = vmul.f32 %v4987, %v4989
        %v4991 = vadd.f32 %v4987, %v4990
        %vm4992 = vweird.f32 %v4969
        %vm4993 = vweird.f32 %v4987
        %vm4994 = vmor %vm4992, %vm4993
        %v4995 = vsel %vm4994, %v4987, %v4991
        %v4996 = vand.u32 2147483647, %v4969
        %vm4997 = vcmp.eq.f32.partialorder %v4996, 8.507059e+37
        %v4998 = vand.u32 %v4969, 2147483648
        %v4999 = vor.u32 1.1754944e-38, %v4998
        %v5000 = vsel %vm4997, %v4999, %v4995
        %v5001 = vmul.f32 1.0, %v5000
        %v5002 = vrcp.pop %v4970
        %v5003 = vmul.f32 %v4970, %v5002
        %v5004 = vsub.f32 1.0, %v5003
        %v5005 = vmul.f32 %v5002, %v5004
        %v5006 = vadd.f32 %v5002, %v5005
        %vm5007 = vweird.f32 %v4970
        %vm5008 = vweird.f32 %v5002
        %vm5009 = vmor %vm5007, %vm5008
        %v5010 = vsel %vm5009, %v5002, %v5006
        %v5011 = vand.u32 2147483647, %v4970
        %vm5012 = vcmp.eq.f32.partialorder %v5011, 8.507059e+37
        %v5013 = vand.u32 %v4970, 2147483648
        %v5014 = vor.u32 1.1754944e-38, %v5013
        %v5015 = vsel %vm5012, %v5014, %v5010
        %v5016 = vmul.f32 1.0, %v5015
        %v5017 = vrcp.pop %v4971
        %v5018 = vmul.f32 %v4971, %v5017
        %v5019 = vsub.f32 1.0, %v5018
        %v5020 = vmul.f32 %v5017, %v5019
        %v5021 = vadd.f32 %v5017, %v5020
        %vm5022 = vweird.f32 %v4971
        %vm5023 = vweird.f32 %v5017
        %vm5024 = vmor %vm5022, %vm5023
        %v5025 = vsel %vm5024, %v5017, %v5021
        %v5026 = vand.u32 2147483647, %v4971
        %vm5027 = vcmp.eq.f32.partialorder %v5026, 8.507059e+37
        %v5028 = vand.u32 %v4971, 2147483648
        %v5029 = vor.u32 1.1754944e-38, %v5028
        %v5030 = vsel %vm5027, %v5029, %v5025
        %v5031 = vmul.f32 1.0, %v5030
        %v5032 = vld [vmem:[%s1014] sm:$0xff]
        %v5033 = vld [vmem:[%s1014 + $0x8] sm:$0xff]
        %v5034 = vunpack.c.l.bf16 %v5032
        %v5035 = vunpack.c.h.bf16 %v5032
        %v5036 = vunpack.c.l.bf16 %v5033
        %v5037 = vunpack.c.h.bf16 %v5033
        %v5038 = vmul.f32 %v4986, %v5034
        %v5039 = vmul.f32 %v5001, %v5035
        %v5040 = vmul.f32 %v5016, %v5036
        %v5041 = vmul.f32 %v5031, %v5037
        %v5042 = vadd.f32 %v4910, %v5038
        %v5043 = vadd.f32 %v4911, %v5039
        %v5044 = vadd.f32 %v4912, %v5040
        %v5045 = vadd.f32 %v4913, %v5041
        %5046 = vst [vmem:[#allocation27] sm:$0xff] %v5042
        %5047 = vst [vmem:[#allocation27 + $0x8] sm:$0xff] %v5043
        %5048 = vst [vmem:[#allocation27 + $0x10] sm:$0xff] %v5044
        %5049 = vst [vmem:[#allocation27 + $0x18] sm:$0xff] %v5045
        // Predicated region
        $region177: #{tpu_custom_call.1} parent=103 // pred_check
          %p5050 = pneg %p604
        $region178: #{tpu_custom_call.1} parent=103 // pred_check_branch
          %5052 = sbr.rel (%p5050) target = $region180
        $region179: #{tpu_custom_call.1} parent=103 // pred_region
          %s5053 = smul.u32 2, %s40
          %5055 = vsyncadd [#allocation8], 0
          %s5056 = smul.addr %s5053, 2
          %s5057 = smul.addr %s5056, 8
          %s5058 = scalar_lea.hbm %s21, %s5057
          %s5059 = sshll.u32 [#allocation27], 4
          %s5060 = int_to_ptr.vmem [resolvable:$true] %s5059
          %s5061 = sshll.u32 %s5058, 4
          %s5062 = int_to_ptr.hbm [resolvable:$true] %s5061
          %5067 = dma.vmem_to_hbm [thread:$0]  %s5060, 512, %s5062, [#allocation8], 256, 256, 16
        $region180: #{tpu_custom_call.1} parent=103 // pred_fallthru
          _
        // Predicated region
        $region181: #{tpu_custom_call.1} parent=103 // pred_check
          %p5068 = pneg %p604
        $region182: #{tpu_custom_call.1} parent=103 // pred_check_branch
          %5070 = sbr.rel (%p5068) target = $region184
        $region183: #{tpu_custom_call.1} parent=103 // pred_region
          %5072 = dma.done [#allocation8], 512
        $region184: #{tpu_custom_call.1} parent=103 // pred_fallthru
          _
      $region104: #{tpu_custom_call.1} parent=5 // pred_fallthru
        _
      %p5073 = scmp.le.s32.totalorder 2, %s31
      // Predicated region
      $region185: #{tpu_custom_call.1} parent=5 // pred_check
        %p5074 = pneg %p5073
      $region186: #{tpu_custom_call.1} parent=5 // pred_check_branch
        %5076 = sbr.rel (%p5074) target = $region188
      $region187: #{tpu_custom_call.1} parent=5 // pred_region
        %s5077 = ssub.s32 %s31, 2
      $region188: #{tpu_custom_call.1} parent=5 // pred_fallthru
        _
    $region6: #{tpu_custom_call.1} parent=1 // loop_footer
      %s35 = sadd.s32 1, %s31
    $region7: #{tpu_custom_call.1} parent=1 // loop_footer_branch
      %30 = sbr.rel target = $region3
    $region8: #{tpu_custom_call.1} parent=1 // loop_exit
      _
    %5078 = vsyncpa [#allocation7], 1
    %s5079 = scalar_lea.sflag [#allocation7], 1
    %5080 = vsyncpa %s5079, 1
    %5081 = vsyncpa [#allocation10], 1
    %5082 = vsyncpa [#allocation13], 1
    %5083 = vsyncpa [#allocation8], 1
    %s5084 = scalar_lea.sflag [#allocation8], 1
    %5085 = vsyncpa %s5084, 1

// kernel: tpu_custom_call.1
$region0: #{tpu_custom_call.1}
  #allocation0 [shape = 'u32[]', space=smem, size = 0x4, offset = 0x4, fixed_abs, tag = 'smem constant byte address 0x4 - core index']
  #allocation1 [shape = 'u32[72,128]{1,0:T(1,128)}', space=vmem, size = 0x9000, scoped, tag = 'internal scratch']
  #allocation2 [shape = 'f32[2,8,1]{2,1,0:T(8,128)}', space=vmem, size = 0x2000, scoped, tag = 'scratch operand']
  #allocation3 [shape = 'f32[2,1,8]{2,1,0:T(1,128)}', space=vmem, size = 0x400, scoped, tag = 'scratch operand']
  #allocation4 [shape = 'f32[2,1,1]{2,1,0:T(1,128)}', space=vmem, size = 0x400, scoped, tag = 'scratch operand']
  #allocation5 [shape = 'bf16[16,256]{1,0:T(8,128)(2,1)}', space=vmem, size = 0x2000, scoped, tag = 'scratch operand']
  %s0 = inlined_call_operand.hbm [shape: bf16[2,8,256], index: 0, kind: input, shape index: {}]
  %s1 = inlined_call_operand.hbm [shape: f32[2,1,8], index: 1, kind: input, shape index: {}]
  %s2 = inlined_call_operand.hbm [shape: f32[1,1,256], index: 2, kind: input, shape index: {}]
  %s3 = inlined_call_operand.hbm [shape: f32[1,1,256], index: 3, kind: input, shape index: {}]
  %s4 = inlined_call_operand.hbm [shape: bf16[2,2,8,256], index: 4, kind: input, shape index: {}]
  %s5 = inlined_call_operand.hbm [shape: bf16[2,256,256], index: 5, kind: input, shape index: {}]
  %s6 = inlined_call_operand.vmem [shape: f32[2,1,256], index: 6, kind: input, shape index: {}]
  %s7 = inlined_call_operand.hbm [shape: bf16[2,256,256], index: 7, kind: input, shape index: {}]
  %s8 = inlined_call_operand.hbm [shape: f32[2,1,256], index: 8, kind: input, shape index: {}]
  %s9 = inlined_call_operand.hbm [shape: bf16[2,256,256], index: 9, kind: input, shape index: {}]
  %s10 = inlined_call_operand.vmem [shape: f32[2,1,256], index: 10, kind: input, shape index: {}]
  %s11 = inlined_call_operand.hbm [shape: bf16[2,256,256], index: 11, kind: input, shape index: {}]
  %s12 = inlined_call_operand.hbm [shape: f32[2,1,256], index: 12, kind: input, shape index: {}]
  %s13 = inlined_call_operand.vmem [shape: f32[2,1,256], index: 13, kind: input, shape index: {}]
  %s14 = inlined_call_operand.hbm [shape: f32[2,1,256], index: 14, kind: input, shape index: {}]
  %s15 = inlined_call_operand.hbm [shape: bf16[2,256,1024], index: 15, kind: input, shape index: {}]
  %s16 = inlined_call_operand.hbm [shape: f32[2,1,1024], index: 16, kind: input, shape index: {}]
  %s17 = inlined_call_operand.hbm [shape: bf16[2,1024,256], index: 17, kind: input, shape index: {}]
  %s18 = inlined_call_operand.vmem [shape: f32[2,1,256], index: 18, kind: input, shape index: {}]
  %s19 = inlined_call_operand.hbm [shape: f32[2,1,256], index: 19, kind: input, shape index: {}]
  %s20 = inlined_call_operand.hbm [shape: f32[2,1,256], index: 20, kind: input, shape index: {}]
  %s21 = inlined_call_operand.hbm [shape: f32[2,8,256], index: 21, kind: output, shape index: {}]
  %s22 = sld [smem:[#allocation0]]
  $region189: #{tpu_custom_call.1} parent=0
    _
  %s24 = ssub.s32 1, %s22
  %s25 = scalar_select 0, %s24, %s22
  $region1: #{tpu_custom_call.1} parent=0
    #allocation6 [shape = 'u8[8192]{0}', space=vmem, size = 0x2000, scoped, tag = 'input window, operand 0, single buffered']
    #allocation7 [shape = 's32[2]{0}', space=sflag, size = 0x8, scoped, tag = 'scoped memory for tpu_custom_call.1']
    #allocation8 [shape = 's32[2]{0}', space=sflag, size = 0x8, scoped, tag = 'scoped memory for tpu_custom_call.1']
    #allocation9 [shape = 'u8[1024]{0}', space=vmem, size = 0x400, scoped, tag = 'input window, operand 1, single buffered']
    #allocation10 [shape = 's32[1]{0}', space=sflag, size = 0x4, scoped, tag = 'scoped memory for tpu_custom_call.1']
    #allocation11 [shape = 'u8[1024]{0}', space=vmem, size = 0x400, scoped, tag = 'input window, operand 2, single buffered']
    #allocation12 [shape = 'u8[1024]{0}', space=vmem, size = 0x400, scoped, tag = 'input window, operand 3, single buffered']
    #allocation13 [shape = 's32[1]{0}', space=sflag, size = 0x4, scoped, tag = 'scoped memory for tpu_custom_call.1']
    #allocation14 [shape = 'u8[16384]{0}', space=vmem, size = 0x4000, scoped, tag = 'input window, operand 4']
    #allocation15 [shape = 'u8[262144]{0}', space=vmem, size = 0x40000, scoped, tag = 'input window, operand 5']
    #allocation16 [shape = 'u8[262144]{0}', space=vmem, size = 0x40000, scoped, tag = 'input window, operand 7']
    #allocation17 [shape = 'u8[2048]{0}', space=vmem, size = 0x800, scoped, tag = 'input window, operand 8']
    #allocation18 [shape = 'u8[262144]{0}', space=vmem, size = 0x40000, scoped, tag = 'input window, operand 9']
    #allocation19 [shape = 'u8[262144]{0}', space=vmem, size = 0x40000, scoped, tag = 'input window, operand 11']
    #allocation20 [shape = 'u8[2048]{0}', space=vmem, size = 0x800, scoped, tag = 'input window, operand 12']
    #allocation21 [shape = 'u8[2048]{0}', space=vmem, size = 0x800, scoped, tag = 'input window, operand 14']
    #allocation22 [shape = 'u8[1048576]{0}', space=vmem, size = 0x100000, scoped, tag = 'input window, operand 15']
    #allocation23 [shape = 'u8[8192]{0}', space=vmem, size = 0x2000, scoped, tag = 'input window, operand 16']
    #allocation24 [shape = 'u8[1048576]{0}', space=vmem, size = 0x100000, scoped, tag = 'input window, operand 17']
    #allocation25 [shape = 'u8[2048]{0}', space=vmem, size = 0x800, scoped, tag = 'input window, operand 19']
    #allocation26 [shape = 'u8[2048]{0}', space=vmem, size = 0x800, scoped, tag = 'input window, operand 20']
    #allocation27 [shape = 'u8[16384]{0}', space=vmem, size = 0x4000, scoped, tag = 'output window, operand 0, single buffered']
    %26 = vsyncpa [#allocation7], 0
    %27 = vsyncpa [#allocation10], 0
    %28 = vsyncpa [#allocation13], 0
    %29 = vsyncpa [#allocation8], 0
    loop: start=0, step=1, limit=4
    $region2: #{tpu_custom_call.1} parent=1 // loop_pre_header
      _
    $region3: #{tpu_custom_call.1} parent=1 // loop_header
      %s31 = sphi 0, %s35
      %p32 = scmp.ge.s32.totalorder %s31, 4
      %s38 = sphi 0, %s50
      %s39 = sphi 0, %s46
      %s40 = sphi 0, %s38
      %s41 = sphi 0, %s39
      %s42 = sphi 0, %s40
      %s43 = sphi 0, %s41
      %s53 = sphi 0, %s55
      %s56 = sphi 0, %s53
      %s57 = sphi 0, %s56
      %s73 = sphi 0, %s57
      %s79 = sphi 0, %s81
      %s82 = sphi 0, %s79
      %s83 = sphi 0, %s82
      %s99 = sphi 0, %s83
      %s103 = sphi 0, %s103
      %s105 = sphi 0, %s103
      %s106 = sphi 0, %s105
      %s120 = sphi 0, %s106
      %s124 = sphi 0, %s124
      %s126 = sphi 0, %s124
      %s127 = sphi 0, %s126
      %s141 = sphi 0, %s127
      %s149 = sphi 0, %s151
      %s152 = sphi 0, %s149
      %s153 = sphi 0, %s152
      %s169 = sphi 0, %s153
      %s175 = sphi 0, %s177
      %s178 = sphi 0, %s175
      %s179 = sphi 0, %s178
      %s195 = sphi 0, %s179
      %s201 = sphi 0, %s203
      %s204 = sphi 0, %s201
      %s205 = sphi 0, %s204
      %s221 = sphi 0, %s205
      %s227 = sphi 0, %s229
      %s230 = sphi 0, %s227
      %s231 = sphi 0, %s230
      %s247 = sphi 0, %s231
      %s253 = sphi 0, %s255
      %s256 = sphi 0, %s253
      %s257 = sphi 0, %s256
      %s273 = sphi 0, %s257
      %s279 = sphi 0, %s281
      %s282 = sphi 0, %s279
      %s283 = sphi 0, %s282
      %s299 = sphi 0, %s283
      %s305 = sphi 0, %s307
      %s308 = sphi 0, %s305
      %s309 = sphi 0, %s308
      %s325 = sphi 0, %s309
      %s331 = sphi 0, %s333
      %s334 = sphi 0, %s331
      %s335 = sphi 0, %s334
      %s351 = sphi 0, %s335
      %s357 = sphi 0, %s359
      %s360 = sphi 0, %s357
      %s361 = sphi 0, %s360
      %s377 = sphi 0, %s361
      %s383 = sphi 0, %s385
      %s386 = sphi 0, %s383
      %s387 = sphi 0, %s386
      %s403 = sphi 0, %s387
      %s409 = sphi 0, %s411
      %s412 = sphi 0, %s409
      %s413 = sphi 0, %s412
      %s429 = sphi 0, %s413
      %s435 = sphi 0, %s437
      %s438 = sphi 0, %s435
      %s439 = sphi 0, %s438
      %s455 = sphi 0, %s439
      %s461 = sphi 0, %s463
      %s464 = sphi 0, %s461
      %s465 = sphi 0, %s464
      %s481 = sphi 0, %s465
      %s487 = sphi 0, %s489
      %s490 = sphi 0, %s487
      %s491 = sphi 0, %s490
      %s507 = sphi 0, %s491
      %s513 = sphi 0, %s515
      %s516 = sphi 0, %s513
      %s517 = sphi 0, %s516
      %s533 = sphi 0, %s517
      %s539 = sphi 0, %s541
      %s542 = sphi 0, %s539
      %s543 = sphi 0, %s542
      %s559 = sphi 0, %s543
      %s565 = sphi 0, %s567
      %s568 = sphi 0, %s565
      %s569 = sphi 0, %s568
      %s585 = sphi 0, %s569
      %s591 = sphi 0, %s593
      %s594 = sphi 0, %s591
      %s595 = sphi 0, %s594
      %s611 = sphi 0, %s595
    $region4: #{tpu_custom_call.1} parent=1 // loop_header_branch
      %34 = sbr.rel (%p32) target = $region8
    $region5: #{tpu_custom_call.1} parent=1 // loop_body
      %s36 = ssub.s32 %s31, 1
      %s37 = ssub.s32 %s31, 2
      %s44 = sadd.s32 1, %s39
      %p45 = scmp.ge.s32.totalorder %s44, 2
      %s46 = scalar_select %p45, 0, %s44
      %s47 = sadd.s32 1, %s38
      %s48 = scalar_select %p45, %s47, %s38
      %p49 = scmp.ge.s32.totalorder %s48, 1
      %s50 = scalar_select %p49, 0, %s48
      %s51 = ssub.s32 %s38, %s50
      %p52 = scmp.eq.s32.totalorder %s51, 0
      %s54 = sadd.s32 %s53, 1
      %s55 = scalar_select %p52, %s53, %s54
      %p58 = pneg %p52
      %p59 = scmp.eq.s32.totalorder %s31, 1
      %p60 = por %p58, %p59
      %p61 = scmp.ne.s32.totalorder %s53, %s56
      %p62 = scmp.eq.s32.totalorder %s31, 0
      %p63 = por %p61, %p62
      %p64 = scmp.ne.s32.totalorder %s53, %s56
      %p65 = scmp.eq.s32.totalorder %s36, 1
      %p66 = por %p64, %p65
      %p67 = scmp.ne.s32.totalorder %s56, %s57
      %p68 = scmp.eq.s32.totalorder %s36, 0
      %p69 = por %p67, %p68
      %p70 = scmp.ne.s32.totalorder %s56, %s57
      %p71 = scmp.eq.s32.totalorder %s37, 1
      %p72 = por %p70, %p71
      %p74 = scmp.ne.s32.totalorder %s57, %s73
      %p75 = scmp.eq.s32.totalorder %s37, 0
      %p76 = por %p74, %p75
      %s77 = ssub.s32 %s38, %s50
      %p78 = scmp.eq.s32.totalorder %s77, 0
      %s80 = sadd.s32 %s79, 1
      %s81 = scalar_select %p78, %s79, %s80
      %p84 = pneg %p78
      %p85 = scmp.eq.s32.totalorder %s31, 1
      %p86 = por %p84, %p85
      %p87 = scmp.ne.s32.totalorder %s79, %s82
      %p88 = scmp.eq.s32.totalorder %s31, 0
      %p89 = por %p87, %p88
      %p90 = scmp.ne.s32.totalorder %s79, %s82
      %p91 = scmp.eq.s32.totalorder %s36, 1
      %p92 = por %p90, %p91
      %p93 = scmp.ne.s32.totalorder %s82, %s83
      %p94 = scmp.eq.s32.totalorder %s36, 0
      %p95 = por %p93, %p94
      %p96 = scmp.ne.s32.totalorder %s82, %s83
      %p97 = scmp.eq.s32.totalorder %s37, 1
      %p98 = por %p96, %p97
      %p100 = scmp.ne.s32.totalorder %s83, %s99
      %p101 = scmp.eq.s32.totalorder %s37, 0
      %p102 = por %p100, %p101
      %s104 = sadd.s32 %s103, 1
      %p107 = scmp.eq.s32.totalorder %s31, 1
      %p108 = scmp.ne.s32.totalorder %s103, %s105
      %p109 = scmp.eq.s32.totalorder %s31, 0
      %p110 = por %p108, %p109
      %p111 = scmp.ne.s32.totalorder %s103, %s105
      %p112 = scmp.eq.s32.totalorder %s36, 1
      %p113 = por %p111, %p112
      %p114 = scmp.ne.s32.totalorder %s105, %s106
      %p115 = scmp.eq.s32.totalorder %s36, 0
      %p116 = por %p114, %p115
      %p117 = scmp.ne.s32.totalorder %s105, %s106
      %p118 = scmp.eq.s32.totalorder %s37, 1
      %p119 = por %p117, %p118
      %p121 = scmp.ne.s32.totalorder %s106, %s120
      %p122 = scmp.eq.s32.totalorder %s37, 0
      %p123 = por %p121, %p122
      %s125 = sadd.s32 %s124, 1
      %p128 = scmp.eq.s32.totalorder %s31, 1
      %p129 = scmp.ne.s32.totalorder %s124, %s126
      %p130 = scmp.eq.s32.totalorder %s31, 0
      %p131 = por %p129, %p130
      %p132 = scmp.ne.s32.totalorder %s124, %s126
      %p133 = scmp.eq.s32.totalorder %s36, 1
      %p134 = por %p132, %p133
      %p135 = scmp.ne.s32.totalorder %s126, %s127
      %p136 = scmp.eq.s32.totalorder %s36, 0
      %p137 = por %p135, %p136
      %p138 = scmp.ne.s32.totalorder %s126, %s127
      %p139 = scmp.eq.s32.totalorder %s37, 1
      %p140 = por %p138, %p139
      %p142 = scmp.ne.s32.totalorder %s127, %s141
      %p143 = scmp.eq.s32.totalorder %s37, 0
      %p144 = por %p142, %p143
      %s145 = ssub.s32 %s39, %s46
      %s146 = ssub.s32 %s38, %s50
      %s147 = sor.u32 %s145, %s146
      %p148 = scmp.eq.s32.totalorder %s147, 0
      %s150 = sadd.s32 %s149, 1
      %s151 = scalar_select %p148, %s149, %s150
      %p154 = pneg %p148
      %p155 = scmp.eq.s32.totalorder %s31, 1
      %p156 = por %p154, %p155
      %p157 = scmp.ne.s32.totalorder %s149, %s152
      %p158 = scmp.eq.s32.totalorder %s31, 0
      %p159 = por %p157, %p158
      %p160 = scmp.ne.s32.totalorder %s149, %s152
      %p161 = scmp.eq.s32.totalorder %s36, 1
      %p162 = por %p160, %p161
      %p163 = scmp.ne.s32.totalorder %s152, %s153
      %p164 = scmp.eq.s32.totalorder %s36, 0
      %p165 = por %p163, %p164
      %p166 = scmp.ne.s32.totalorder %s152, %s153
      %p167 = scmp.eq.s32.totalorder %s37, 1
      %p168 = por %p166, %p167
      %p170 = scmp.ne.s32.totalorder %s153, %s169
      %p171 = scmp.eq.s32.totalorder %s37, 0
      %p172 = por %p170, %p171
      %s173 = ssub.s32 %s39, %s46
      %p174 = scmp.eq.s32.totalorder %s173, 0
      %s176 = sadd.s32 %s175, 1
      %s177 = scalar_select %p174, %s175, %s176
      %p180 = pneg %p174
      %p181 = scmp.eq.s32.totalorder %s31, 1
      %p182 = por %p180, %p181
      %p183 = scmp.ne.s32.totalorder %s175, %s178
      %p184 = scmp.eq.s32.totalorder %s31, 0
      %p185 = por %p183, %p184
      %p186 = scmp.ne.s32.totalorder %s175, %s178
      %p187 = scmp.eq.s32.totalorder %s36, 1
      %p188 = por %p186, %p187
      %p189 = scmp.ne.s32.totalorder %s178, %s179
      %p190 = scmp.eq.s32.totalorder %s36, 0
      %p191 = por %p189, %p190
      %p192 = scmp.ne.s32.totalorder %s178, %s179
      %p193 = scmp.eq.s32.totalorder %s37, 1
      %p194 = por %p192, %p193
      %p196 = scmp.ne.s32.totalorder %s179, %s195
      %p197 = scmp.eq.s32.totalorder %s37, 0
      %p198 = por %p196, %p197
      %s199 = ssub.s32 %s39, %s46
      %p200 = scmp.eq.s32.totalorder %s199, 0
      %s202 = sadd.s32 %s201, 1
      %s203 = scalar_select %p200, %s201, %s202
      %p206 = pneg %p200
      %p207 = scmp.eq.s32.totalorder %s31, 1
      %p208 = por %p206, %p207
      %p209 = scmp.ne.s32.totalorder %s201, %s204
      %p210 = scmp.eq.s32.totalorder %s31, 0
      %p211 = por %p209, %p210
      %p212 = scmp.ne.s32.totalorder %s201, %s204
      %p213 = scmp.eq.s32.totalorder %s36, 1
      %p214 = por %p212, %p213
      %p215 = scmp.ne.s32.totalorder %s204, %s205
      %p216 = scmp.eq.s32.totalorder %s36, 0
      %p217 = por %p215, %p216
      %p218 = scmp.ne.s32.totalorder %s204, %s205
      %p219 = scmp.eq.s32.totalorder %s37, 1
      %p220 = por %p218, %p219
      %p222 = scmp.ne.s32.totalorder %s205, %s221
      %p223 = scmp.eq.s32.totalorder %s37, 0
      %p224 = por %p222, %p223
      %s225 = ssub.s32 %s39, %s46
      %p226 = scmp.eq.s32.totalorder %s225, 0
      %s228 = sadd.s32 %s227, 1
      %s229 = scalar_select %p226, %s227, %s228
      %p232 = pneg %p226
      %p233 = scmp.eq.s32.totalorder %s31, 1
      %p234 = por %p232, %p233
      %p235 = scmp.ne.s32.totalorder %s227, %s230
      %p236 = scmp.eq.s32.totalorder %s31, 0
      %p237 = por %p235, %p236
      %p238 = scmp.ne.s32.totalorder %s227, %s230
      %p239 = scmp.eq.s32.totalorder %s36, 1
      %p240 = por %p238, %p239
      %p241 = scmp.ne.s32.totalorder %s230, %s231
      %p242 = scmp.eq.s32.totalorder %s36, 0
      %p243 = por %p241, %p242
      %p244 = scmp.ne.s32.totalorder %s230, %s231
      %p245 = scmp.eq.s32.totalorder %s37, 1
      %p246 = por %p244, %p245
      %p248 = scmp.ne.s32.totalorder %s231, %s247
      %p249 = scmp.eq.s32.totalorder %s37, 0
      %p250 = por %p248, %p249
      %s251 = ssub.s32 %s39, %s46
      %p252 = scmp.eq.s32.totalorder %s251, 0
      %s254 = sadd.s32 %s253, 1
      %s255 = scalar_select %p252, %s253, %s254
      %p258 = pneg %p252
      %p259 = scmp.eq.s32.totalorder %s31, 1
      %p260 = por %p258, %p259
      %p261 = scmp.ne.s32.totalorder %s253, %s256
      %p262 = scmp.eq.s32.totalorder %s31, 0
      %p263 = por %p261, %p262
      %p264 = scmp.ne.s32.totalorder %s253, %s256
      %p265 = scmp.eq.s32.totalorder %s36, 1
      %p266 = por %p264, %p265
      %p267 = scmp.ne.s32.totalorder %s256, %s257
      %p268 = scmp.eq.s32.totalorder %s36, 0
      %p269 = por %p267, %p268
      %p270 = scmp.ne.s32.totalorder %s256, %s257
      %p271 = scmp.eq.s32.totalorder %s37, 1
      %p272 = por %p270, %p271
      %p274 = scmp.ne.s32.totalorder %s257, %s273
      %p275 = scmp.eq.s32.totalorder %s37, 0
      %p276 = por %p274, %p275
      %s277 = ssub.s32 %s39, %s46
      %p278 = scmp.eq.s32.totalorder %s277, 0
      %s280 = sadd.s32 %s279, 1
      %s281 = scalar_select %p278, %s279, %s280
      %p284 = pneg %p278
      %p285 = scmp.eq.s32.totalorder %s31, 1
      %p286 = por %p284, %p285
      %p287 = scmp.ne.s32.totalorder %s279, %s282
      %p288 = scmp.eq.s32.totalorder %s31, 0
      %p289 = por %p287, %p288
      %p290 = scmp.ne.s32.totalorder %s279, %s282
      %p291 = scmp.eq.s32.totalorder %s36, 1
      %p292 = por %p290, %p291
      %p293 = scmp.ne.s32.totalorder %s282, %s283
      %p294 = scmp.eq.s32.totalorder %s36, 0
      %p295 = por %p293, %p294
      %p296 = scmp.ne.s32.totalorder %s282, %s283
      %p297 = scmp.eq.s32.totalorder %s37, 1
      %p298 = por %p296, %p297
      %p300 = scmp.ne.s32.totalorder %s283, %s299
      %p301 = scmp.eq.s32.totalorder %s37, 0
      %p302 = por %p300, %p301
      %s303 = ssub.s32 %s39, %s46
      %p304 = scmp.eq.s32.totalorder %s303, 0
      %s306 = sadd.s32 %s305, 1
      %s307 = scalar_select %p304, %s305, %s306
      %p310 = pneg %p304
      %p311 = scmp.eq.s32.totalorder %s31, 1
      %p312 = por %p310, %p311
      %p313 = scmp.ne.s32.totalorder %s305, %s308
      %p314 = scmp.eq.s32.totalorder %s31, 0
      %p315 = por %p313, %p314
      %p316 = scmp.ne.s32.totalorder %s305, %s308
      %p317 = scmp.eq.s32.totalorder %s36, 1
      %p318 = por %p316, %p317
      %p319 = scmp.ne.s32.totalorder %s308, %s309
      %p320 = scmp.eq.s32.totalorder %s36, 0
      %p321 = por %p319, %p320
      %p322 = scmp.ne.s32.totalorder %s308, %s309
      %p323 = scmp.eq.s32.totalorder %s37, 1
      %p324 = por %p322, %p323
      %p326 = scmp.ne.s32.totalorder %s309, %s325
      %p327 = scmp.eq.s32.totalorder %s37, 0
      %p328 = por %p326, %p327
      %s329 = ssub.s32 %s39, %s46
      %p330 = scmp.eq.s32.totalorder %s329, 0
      %s332 = sadd.s32 %s331, 1
      %s333 = scalar_select %p330, %s331, %s332
      %p336 = pneg %p330
      %p337 = scmp.eq.s32.totalorder %s31, 1
      %p338 = por %p336, %p337
      %p339 = scmp.ne.s32.totalorder %s331, %s334
      %p340 = scmp.eq.s32.totalorder %s31, 0
      %p341 = por %p339, %p340
      %p342 = scmp.ne.s32.totalorder %s331, %s334
      %p343 = scmp.eq.s32.totalorder %s36, 1
      %p344 = por %p342, %p343
      %p345 = scmp.ne.s32.totalorder %s334, %s335
      %p346 = scmp.eq.s32.totalorder %s36, 0
      %p347 = por %p345, %p346
      %p348 = scmp.ne.s32.totalorder %s334, %s335
      %p349 = scmp.eq.s32.totalorder %s37, 1
      %p350 = por %p348, %p349
      %p352 = scmp.ne.s32.totalorder %s335, %s351
      %p353 = scmp.eq.s32.totalorder %s37, 0
      %p354 = por %p352, %p353
      %s355 = ssub.s32 %s39, %s46
      %p356 = scmp.eq.s32.totalorder %s355, 0
      %s358 = sadd.s32 %s357, 1
      %s359 = scalar_select %p356, %s357, %s358
      %p362 = pneg %p356
      %p363 = scmp.eq.s32.totalorder %s31, 1
      %p364 = por %p362, %p363
      %p365 = scmp.ne.s32.totalorder %s357, %s360
      %p366 = scmp.eq.s32.totalorder %s31, 0
      %p367 = por %p365, %p366
      %p368 = scmp.ne.s32.totalorder %s357, %s360
      %p369 = scmp.eq.s32.totalorder %s36, 1
      %p370 = por %p368, %p369
      %p371 = scmp.ne.s32.totalorder %s360, %s361
      %p372 = scmp.eq.s32.totalorder %s36, 0
      %p373 = por %p371, %p372
      %p374 = scmp.ne.s32.totalorder %s360, %s361
      %p375 = scmp.eq.s32.totalorder %s37, 1
      %p376 = por %p374, %p375
      %p378 = scmp.ne.s32.totalorder %s361, %s377
      %p379 = scmp.eq.s32.totalorder %s37, 0
      %p380 = por %p378, %p379
      %s381 = ssub.s32 %s39, %s46
      %p382 = scmp.eq.s32.totalorder %s381, 0
      %s384 = sadd.s32 %s383, 1
      %s385 = scalar_select %p382, %s383, %s384
      %p388 = pneg %p382
      %p389 = scmp.eq.s32.totalorder %s31, 1
      %p390 = por %p388, %p389
      %p391 = scmp.ne.s32.totalorder %s383, %s386
      %p392 = scmp.eq.s32.totalorder %s31, 0
      %p393 = por %p391, %p392
      %p394 = scmp.ne.s32.totalorder %s383, %s386
      %p395 = scmp.eq.s32.totalorder %s36, 1
      %p396 = por %p394, %p395
      %p397 = scmp.ne.s32.totalorder %s386, %s387
      %p398 = scmp.eq.s32.totalorder %s36, 0
      %p399 = por %p397, %p398
      %p400 = scmp.ne.s32.totalorder %s386, %s387
      %p401 = scmp.eq.s32.totalorder %s37, 1
      %p402 = por %p400, %p401
      %p404 = scmp.ne.s32.totalorder %s387, %s403
      %p405 = scmp.eq.s32.totalorder %s37, 0
      %p406 = por %p404, %p405
      %s407 = ssub.s32 %s39, %s46
      %p408 = scmp.eq.s32.totalorder %s407, 0
      %s410 = sadd.s32 %s409, 1
      %s411 = scalar_select %p408, %s409, %s410
      %p414 = pneg %p408
      %p415 = scmp.eq.s32.totalorder %s31, 1
      %p416 = por %p414, %p415
      %p417 = scmp.ne.s32.totalorder %s409, %s412
      %p418 = scmp.eq.s32.totalorder %s31, 0
      %p419 = por %p417, %p418
      %p420 = scmp.ne.s32.totalorder %s409, %s412
      %p421 = scmp.eq.s32.totalorder %s36, 1
      %p422 = por %p420, %p421
      %p423 = scmp.ne.s32.totalorder %s412, %s413
      %p424 = scmp.eq.s32.totalorder %s36, 0
      %p425 = por %p423, %p424
      %p426 = scmp.ne.s32.totalorder %s412, %s413
      %p427 = scmp.eq.s32.totalorder %s37, 1
      %p428 = por %p426, %p427
      %p430 = scmp.ne.s32.totalorder %s413, %s429
      %p431 = scmp.eq.s32.totalorder %s37, 0
      %p432 = por %p430, %p431
      %s433 = ssub.s32 %s39, %s46
      %p434 = scmp.eq.s32.totalorder %s433, 0
      %s436 = sadd.s32 %s435, 1
      %s437 = scalar_select %p434, %s435, %s436
      %p440 = pneg %p434
      %p441 = scmp.eq.s32.totalorder %s31, 1
      %p442 = por %p440, %p441
      %p443 = scmp.ne.s32.totalorder %s435, %s438
      %p444 = scmp.eq.s32.totalorder %s31, 0
      %p445 = por %p443, %p444
      %p446 = scmp.ne.s32.totalorder %s435, %s438
      %p447 = scmp.eq.s32.totalorder %s36, 1
      %p448 = por %p446, %p447
      %p449 = scmp.ne.s32.totalorder %s438, %s439
      %p450 = scmp.eq.s32.totalorder %s36, 0
      %p451 = por %p449, %p450
      %p452 = scmp.ne.s32.totalorder %s438, %s439
      %p453 = scmp.eq.s32.totalorder %s37, 1
      %p454 = por %p452, %p453
      %p456 = scmp.ne.s32.totalorder %s439, %s455
      %p457 = scmp.eq.s32.totalorder %s37, 0
      %p458 = por %p456, %p457
      %s459 = ssub.s32 %s39, %s46
      %p460 = scmp.eq.s32.totalorder %s459, 0
      %s462 = sadd.s32 %s461, 1
      %s463 = scalar_select %p460, %s461, %s462
      %p466 = pneg %p460
      %p467 = scmp.eq.s32.totalorder %s31, 1
      %p468 = por %p466, %p467
      %p469 = scmp.ne.s32.totalorder %s461, %s464
      %p470 = scmp.eq.s32.totalorder %s31, 0
      %p471 = por %p469, %p470
      %p472 = scmp.ne.s32.totalorder %s461, %s464
      %p473 = scmp.eq.s32.totalorder %s36, 1
      %p474 = por %p472, %p473
      %p475 = scmp.ne.s32.totalorder %s464, %s465
      %p476 = scmp.eq.s32.totalorder %s36, 0
      %p477 = por %p475, %p476
      %p478 = scmp.ne.s32.totalorder %s464, %s465
      %p479 = scmp.eq.s32.totalorder %s37, 1
      %p480 = por %p478, %p479
      %p482 = scmp.ne.s32.totalorder %s465, %s481
      %p483 = scmp.eq.s32.totalorder %s37, 0
      %p484 = por %p482, %p483
      %s485 = ssub.s32 %s39, %s46
      %p486 = scmp.eq.s32.totalorder %s485, 0
      %s488 = sadd.s32 %s487, 1
      %s489 = scalar_select %p486, %s487, %s488
      %p492 = pneg %p486
      %p493 = scmp.eq.s32.totalorder %s31, 1
      %p494 = por %p492, %p493
      %p495 = scmp.ne.s32.totalorder %s487, %s490
      %p496 = scmp.eq.s32.totalorder %s31, 0
      %p497 = por %p495, %p496
      %p498 = scmp.ne.s32.totalorder %s487, %s490
      %p499 = scmp.eq.s32.totalorder %s36, 1
      %p500 = por %p498, %p499
      %p501 = scmp.ne.s32.totalorder %s490, %s491
      %p502 = scmp.eq.s32.totalorder %s36, 0
      %p503 = por %p501, %p502
      %p504 = scmp.ne.s32.totalorder %s490, %s491
      %p505 = scmp.eq.s32.totalorder %s37, 1
      %p506 = por %p504, %p505
      %p508 = scmp.ne.s32.totalorder %s491, %s507
      %p509 = scmp.eq.s32.totalorder %s37, 0
      %p510 = por %p508, %p509
      %s511 = ssub.s32 %s39, %s46
      %p512 = scmp.eq.s32.totalorder %s511, 0
      %s514 = sadd.s32 %s513, 1
      %s515 = scalar_select %p512, %s513, %s514
      %p518 = pneg %p512
      %p519 = scmp.eq.s32.totalorder %s31, 1
      %p520 = por %p518, %p519
      %p521 = scmp.ne.s32.totalorder %s513, %s516
      %p522 = scmp.eq.s32.totalorder %s31, 0
      %p523 = por %p521, %p522
      %p524 = scmp.ne.s32.totalorder %s513, %s516
      %p525 = scmp.eq.s32.totalorder %s36, 1
      %p526 = por %p524, %p525
      %p527 = scmp.ne.s32.totalorder %s516, %s517
      %p528 = scmp.eq.s32.totalorder %s36, 0
      %p529 = por %p527, %p528
      %p530 = scmp.ne.s32.totalorder %s516, %s517
      %p531 = scmp.eq.s32.totalorder %s37, 1
      %p532 = por %p530, %p531
      %p534 = scmp.ne.s32.totalorder %s517, %s533
      %p535 = scmp.eq.s32.totalorder %s37, 0
      %p536 = por %p534, %p535
      %s537 = ssub.s32 %s39, %s46
      %p538 = scmp.eq.s32.totalorder %s537, 0
      %s540 = sadd.s32 %s539, 1
      %s541 = scalar_select %p538, %s539, %s540
      %p544 = pneg %p538
      %p545 = scmp.eq.s32.totalorder %s31, 1
      %p546 = por %p544, %p545
      %p547 = scmp.ne.s32.totalorder %s539, %s542
      %p548 = scmp.eq.s32.totalorder %s31, 0
      %p549 = por %p547, %p548
      %p550 = scmp.ne.s32.totalorder %s539, %s542
      %p551 = scmp.eq.s32.totalorder %s36, 1
      %p552 = por %p550, %p551
      %p553 = scmp.ne.s32.totalorder %s542, %s543
      %p554 = scmp.eq.s32.totalorder %s36, 0
      %p555 = por %p553, %p554
      %p556 = scmp.ne.s32.totalorder %s542, %s543
      %p557 = scmp.eq.s32.totalorder %s37, 1
      %p558 = por %p556, %p557
      %p560 = scmp.ne.s32.totalorder %s543, %s559
      %p561 = scmp.eq.s32.totalorder %s37, 0
      %p562 = por %p560, %p561
      %s563 = ssub.s32 %s39, %s46
      %p564 = scmp.eq.s32.totalorder %s563, 0
      %s566 = sadd.s32 %s565, 1
      %s567 = scalar_select %p564, %s565, %s566
      %p570 = pneg %p564
      %p571 = scmp.eq.s32.totalorder %s31, 1
      %p572 = por %p570, %p571
      %p573 = scmp.ne.s32.totalorder %s565, %s568
      %p574 = scmp.eq.s32.totalorder %s31, 0
      %p575 = por %p573, %p574
      %p576 = scmp.ne.s32.totalorder %s565, %s568
      %p577 = scmp.eq.s32.totalorder %s36, 1
      %p578 = por %p576, %p577
      %p579 = scmp.ne.s32.totalorder %s568, %s569
      %p580 = scmp.eq.s32.totalorder %s36, 0
      %p581 = por %p579, %p580
      %p582 = scmp.ne.s32.totalorder %s568, %s569
      %p583 = scmp.eq.s32.totalorder %s37, 1
      %p584 = por %p582, %p583
      %p586 = scmp.ne.s32.totalorder %s569, %s585
      %p587 = scmp.eq.s32.totalorder %s37, 0
      %p588 = por %p586, %p587
      %s589 = ssub.s32 %s38, %s50
      %p590 = scmp.eq.s32.totalorder %s589, 0
      %s592 = sadd.s32 %s591, 1
      %s593 = scalar_select %p590, %s591, %s592
      %p596 = pneg %p590
      %p597 = scmp.eq.s32.totalorder %s31, 1
      %p598 = por %p596, %p597
      %p599 = scmp.ne.s32.totalorder %s591, %s594
      %p600 = scmp.eq.s32.totalorder %s31, 0
      %p601 = por %p599, %p600
      %p602 = scmp.ne.s32.totalorder %s591, %s594
      %p603 = scmp.eq.s32.totalorder %s36, 1
      %p604 = por %p602, %p603
      %p605 = scmp.ne.s32.totalorder %s594, %s595
      %p606 = scmp.eq.s32.totalorder %s36, 0
      %p607 = por %p605, %p606
      %p608 = scmp.ne.s32.totalorder %s594, %s595
      %p609 = scmp.eq.s32.totalorder %s37, 1
      %p610 = por %p608, %p609
      %p612 = scmp.ne.s32.totalorder %s595, %s611
      %p613 = scmp.eq.s32.totalorder %s37, 0
      %p614 = por %p612, %p613
      %p615 = scmp.le.s32.totalorder 1, %s31
      %p616 = scmp.lt.s32.totalorder %s31, 3
      %p617 = pnand %p615, %p616
      %p618 = pneg %p617
      // Predicated region
      $region9: #{tpu_custom_call.1} parent=5 // pred_check
        _
      $region10: #{tpu_custom_call.1} parent=5 // pred_check_branch
        %620 = sbr.rel (%p617) target = $region12
      $region11: #{tpu_custom_call.1} parent=5 // pred_region
        %s621 = ssub.s32 %s31, 1
        // Predicated region
        $region13: #{tpu_custom_call.1} parent=11 // pred_check
          %p622 = pneg %p69
        $region14: #{tpu_custom_call.1} parent=11 // pred_check_branch
          %624 = sbr.rel (%p622) target = $region16
        $region15: #{tpu_custom_call.1} parent=11 // pred_region
          %s625 = smul.u32 2, %s40
          %627 = vsyncadd [#allocation7], 0
          %s628 = smul.addr %s625, 2
          %s629 = smul.addr %s628, 4
          %s630 = scalar_lea.hbm %s0, %s629
          %s631 = sshll.u32 %s630, 4
          %s632 = int_to_ptr.hbm [resolvable:$true] %s631
          %s633 = sshll.u32 [#allocation6], 4
          %s634 = int_to_ptr.vmem [resolvable:$true] %s633
          %639 = dma.hbm_to_vmem [thread:$0]  %s632, 256, %s634, [#allocation7], 128, 128, 8
        $region16: #{tpu_custom_call.1} parent=11 // pred_fallthru
          _
        // Predicated region
        $region17: #{tpu_custom_call.1} parent=11 // pred_check
          %p640 = pneg %p95
        $region18: #{tpu_custom_call.1} parent=11 // pred_check_branch
          %642 = sbr.rel (%p640) target = $region20
        $region19: #{tpu_custom_call.1} parent=11 // pred_region
          %s643 = smul.u32 2, %s40
          %645 = vsyncadd [#allocation10], 0
          %s646 = scalar_lea.hbm %s1, %s643
          %s647 = sshll.u32 %s646, 4
          %s648 = int_to_ptr.hbm [resolvable:$true] %s647
          %s649 = sshll.u32 [#allocation9], 4
          %s650 = int_to_ptr.vmem [resolvable:$true] %s649
          %655 = dma.hbm_to_vmem [thread:$0]  %s648, 32, %s650, [#allocation10], 16, 16, 1
        $region20: #{tpu_custom_call.1} parent=11 // pred_fallthru
          _
        // Predicated region
        $region21: #{tpu_custom_call.1} parent=11 // pred_check
          %p656 = pneg %p116
        $region22: #{tpu_custom_call.1} parent=11 // pred_check_branch
          %658 = sbr.rel (%p656) target = $region24
        $region23: #{tpu_custom_call.1} parent=11 // pred_region
          %660 = vsyncadd [#allocation10], 0
          %s662 = sshll.u32 %s2, 4
          %s663 = int_to_ptr.hbm [resolvable:$true] %s662
          %s664 = sshll.u32 [#allocation11], 4
          %s665 = int_to_ptr.vmem [resolvable:$true] %s664
          %667 = dma.hbm_to_vmem [thread:$0]  %s663, 32, %s665, [#allocation10]
        $region24: #{tpu_custom_call.1} parent=11 // pred_fallthru
          _
        // Predicated region
        $region25: #{tpu_custom_call.1} parent=11 // pred_check
          %p668 = pneg %p137
        $region26: #{tpu_custom_call.1} parent=11 // pred_check_branch
          %670 = sbr.rel (%p668) target = $region28
        $region27: #{tpu_custom_call.1} parent=11 // pred_region
          %672 = vsyncadd [#allocation13], 0
          %s674 = sshll.u32 %s3, 4
          %s675 = int_to_ptr.hbm [resolvable:$true] %s674
          %s676 = sshll.u32 [#allocation12], 4
          %s677 = int_to_ptr.vmem [resolvable:$true] %s676
          %679 = dma.hbm_to_vmem [thread:$0]  %s675, 32, %s677, [#allocation13]
        $region28: #{tpu_custom_call.1} parent=11 // pred_fallthru
          _
      $region12: #{tpu_custom_call.1} parent=5 // pred_fallthru
        _
      %p680 = scmp.lt.s32.totalorder %s31, 2
      // Predicated region
      $region29: #{tpu_custom_call.1} parent=5 // pred_check
        %p681 = pneg %p680
      $region30: #{tpu_custom_call.1} parent=5 // pred_check_branch
        %683 = sbr.rel (%p681) target = $region32
      $region31: #{tpu_custom_call.1} parent=5 // pred_region
        // Predicated region
        $region33: #{tpu_custom_call.1} parent=31 // pred_check
          %p684 = pneg %p159
        $region34: #{tpu_custom_call.1} parent=31 // pred_check_branch
          %686 = sbr.rel (%p684) target = $region36
        $region35: #{tpu_custom_call.1} parent=31 // pred_region
          %s687 = sand.u32 %s31, 1
          %s688 = scalar_lea.sflag [#allocation7], %s687
          %s689 = sand.u32 %s149, 1
          %s690 = smul.addr %s689, 16
          %s691 = scalar_lea.vmem [#allocation14], %s690
          %s692 = smul.u32 2, %s38
          %694 = vsyncadd %s688, 0
          %s695 = smul.addr %s692, 2
          %s696 = smul.addr %s39, 4
          %s697 = sadd.s32 %s695, %s696
          %s698 = smul.addr %s697, 4
          %s699 = scalar_lea.hbm %s4, %s698
          %s700 = sshll.u32 %s699, 4
          %s701 = int_to_ptr.hbm [resolvable:$true] %s700
          %s702 = sshll.u32 %s691, 4
          %s703 = int_to_ptr.vmem [resolvable:$true] %s702
          %708 = dma.hbm_to_vmem [thread:$0]  %s701, 256, %s703, %s688, 128, 128, 8
        $region36: #{tpu_custom_call.1} parent=31 // pred_fallthru
          _
        // Predicated region
        $region37: #{tpu_custom_call.1} parent=31 // pred_check
          %p709 = pneg %p185
        $region38: #{tpu_custom_call.1} parent=31 // pred_check_branch
          %711 = sbr.rel (%p709) target = $region40
        $region39: #{tpu_custom_call.1} parent=31 // pred_region
          %s712 = sand.u32 %s31, 1
          %s713 = scalar_lea.sflag [#allocation7], %s712
          %s714 = sand.u32 %s175, 1
          %s715 = smul.addr %s714, 256
          %s716 = scalar_lea.vmem [#allocation15], %s715
          %718 = vsyncadd %s713, 0
          %s719 = smul.addr %s39, 64
          %s720 = smul.addr %s719, 4
          %s721 = scalar_lea.hbm %s5, %s720
          %s722 = sshll.u32 %s721, 4
          %s723 = int_to_ptr.hbm [resolvable:$true] %s722
          %s724 = sshll.u32 %s716, 4
          %s725 = int_to_ptr.vmem [resolvable:$true] %s724
          %730 = dma.hbm_to_vmem [thread:$0]  %s723, 4096, %s725, %s713, 128, 128, 8
        $region40: #{tpu_custom_call.1} parent=31 // pred_fallthru
          _
        // Predicated region
        $region41: #{tpu_custom_call.1} parent=31 // pred_check
          %p731 = pneg %p211
        $region42: #{tpu_custom_call.1} parent=31 // pred_check_branch
          %733 = sbr.rel (%p731) target = $region44
        $region43: #{tpu_custom_call.1} parent=31 // pred_region
          %p734 = scmp.lt.s32.totalorder %s39, 1
          %s735 = scalar_select %p734, %s39, 1
          %s736 = smul.addr %s735, 2
          %s737 = scalar_lea.vmem %s6, %s736
        $region44: #{tpu_custom_call.1} parent=31 // pred_fallthru
          _
        // Predicated region
        $region45: #{tpu_custom_call.1} parent=31 // pred_check
          %p738 = pneg %p237
        $region46: #{tpu_custom_call.1} parent=31 // pred_check_branch
          %740 = sbr.rel (%p738) target = $region48
        $region47: #{tpu_custom_call.1} parent=31 // pred_region
          %s741 = sand.u32 %s31, 1
          %s742 = scalar_lea.sflag [#allocation7], %s741
          %s743 = sand.u32 %s227, 1
          %s744 = smul.addr %s743, 256
          %s745 = scalar_lea.vmem [#allocation16], %s744
          %747 = vsyncadd %s742, 0
          %s748 = smul.addr %s39, 64
          %s749 = smul.addr %s748, 4
          %s750 = scalar_lea.hbm %s7, %s749
          %s751 = sshll.u32 %s750, 4
          %s752 = int_to_ptr.hbm [resolvable:$true] %s751
          %s753 = sshll.u32 %s745, 4
          %s754 = int_to_ptr.vmem [resolvable:$true] %s753
          %759 = dma.hbm_to_vmem [thread:$0]  %s752, 4096, %s754, %s742, 128, 128, 8
        $region48: #{tpu_custom_call.1} parent=31 // pred_fallthru
          _
        // Predicated region
        $region49: #{tpu_custom_call.1} parent=31 // pred_check
          %p760 = pneg %p263
        $region50: #{tpu_custom_call.1} parent=31 // pred_check_branch
          %762 = sbr.rel (%p760) target = $region52
        $region51: #{tpu_custom_call.1} parent=31 // pred_region
          %s763 = sand.u32 %s31, 1
          %s764 = scalar_lea.sflag [#allocation7], %s763
          %s765 = sand.u32 %s253, 1
          %s766 = smul.addr %s765, 2
          %s767 = scalar_lea.vmem [#allocation17], %s766
          %769 = vsyncadd %s764, 0
          %s770 = smul.addr %s39, 2
          %s771 = scalar_lea.hbm %s8, %s770
          %s773 = sshll.u32 %s771, 4
          %s774 = int_to_ptr.hbm [resolvable:$true] %s773
          %s775 = sshll.u32 %s767, 4
          %s776 = int_to_ptr.vmem [resolvable:$true] %s775
          %778 = dma.hbm_to_vmem [thread:$0]  %s774, 32, %s776, %s764
        $region52: #{tpu_custom_call.1} parent=31 // pred_fallthru
          _
        // Predicated region
        $region53: #{tpu_custom_call.1} parent=31 // pred_check
          %p779 = pneg %p289
        $region54: #{tpu_custom_call.1} parent=31 // pred_check_branch
          %781 = sbr.rel (%p779) target = $region56
        $region55: #{tpu_custom_call.1} parent=31 // pred_region
          %s782 = sand.u32 %s31, 1
          %s783 = scalar_lea.sflag [#allocation7], %s782
          %s784 = sand.u32 %s279, 1
          %s785 = smul.addr %s784, 256
          %s786 = scalar_lea.vmem [#allocation18], %s785
          %788 = vsyncadd %s783, 0
          %s789 = smul.addr %s39, 64
          %s790 = smul.addr %s789, 4
          %s791 = scalar_lea.hbm %s9, %s790
          %s792 = sshll.u32 %s791, 4
          %s793 = int_to_ptr.hbm [resolvable:$true] %s792
          %s794 = sshll.u32 %s786, 4
          %s795 = int_to_ptr.vmem [resolvable:$true] %s794
          %800 = dma.hbm_to_vmem [thread:$0]  %s793, 4096, %s795, %s783, 128, 128, 8
        $region56: #{tpu_custom_call.1} parent=31 // pred_fallthru
          _
        // Predicated region
        $region57: #{tpu_custom_call.1} parent=31 // pred_check
          %p801 = pneg %p315
        $region58: #{tpu_custom_call.1} parent=31 // pred_check_branch
          %803 = sbr.rel (%p801) target = $region60
        $region59: #{tpu_custom_call.1} parent=31 // pred_region
          %p804 = scmp.lt.s32.totalorder %s39, 1
          %s805 = scalar_select %p804, %s39, 1
          %s806 = smul.addr %s805, 2
          %s807 = scalar_lea.vmem %s10, %s806
        $region60: #{tpu_custom_call.1} parent=31 // pred_fallthru
          _
        // Predicated region
        $region61: #{tpu_custom_call.1} parent=31 // pred_check
          %p808 = pneg %p341
        $region62: #{tpu_custom_call.1} parent=31 // pred_check_branch
          %810 = sbr.rel (%p808) target = $region64
        $region63: #{tpu_custom_call.1} parent=31 // pred_region
          %s811 = sand.u32 %s31, 1
          %s812 = scalar_lea.sflag [#allocation7], %s811
          %s813 = sand.u32 %s331, 1
          %s814 = smul.addr %s813, 256
          %s815 = scalar_lea.vmem [#allocation19], %s814
          %817 = vsyncadd %s812, 0
          %s818 = smul.addr %s39, 64
          %s819 = smul.addr %s818, 4
          %s820 = scalar_lea.hbm %s11, %s819
          %s821 = sshll.u32 %s820, 4
          %s822 = int_to_ptr.hbm [resolvable:$true] %s821
          %s823 = sshll.u32 %s815, 4
          %s824 = int_to_ptr.vmem [resolvable:$true] %s823
          %829 = dma.hbm_to_vmem [thread:$0]  %s822, 4096, %s824, %s812, 128, 128, 8
        $region64: #{tpu_custom_call.1} parent=31 // pred_fallthru
          _
        // Predicated region
        $region65: #{tpu_custom_call.1} parent=31 // pred_check
          %p830 = pneg %p367
        $region66: #{tpu_custom_call.1} parent=31 // pred_check_branch
          %832 = sbr.rel (%p830) target = $region68
        $region67: #{tpu_custom_call.1} parent=31 // pred_region
          %s833 = sand.u32 %s31, 1
          %s834 = scalar_lea.sflag [#allocation7], %s833
          %s835 = sand.u32 %s357, 1
          %s836 = smul.addr %s835, 2
          %s837 = scalar_lea.vmem [#allocation20], %s836
          %839 = vsyncadd %s834, 0
          %s840 = smul.addr %s39, 2
          %s841 = scalar_lea.hbm %s12, %s840
          %s843 = sshll.u32 %s841, 4
          %s844 = int_to_ptr.hbm [resolvable:$true] %s843
          %s845 = sshll.u32 %s837, 4
          %s846 = int_to_ptr.vmem [resolvable:$true] %s845
          %848 = dma.hbm_to_vmem [thread:$0]  %s844, 32, %s846, %s834
        $region68: #{tpu_custom_call.1} parent=31 // pred_fallthru
          _
        // Predicated region
        $region69: #{tpu_custom_call.1} parent=31 // pred_check
          %p849 = pneg %p393
        $region70: #{tpu_custom_call.1} parent=31 // pred_check_branch
          %851 = sbr.rel (%p849) target = $region72
        $region71: #{tpu_custom_call.1} parent=31 // pred_region
          %p852 = scmp.lt.s32.totalorder %s39, 1
          %s853 = scalar_select %p852, %s39, 1
          %s854 = smul.addr %s853, 2
          %s855 = scalar_lea.vmem %s13, %s854
        $region72: #{tpu_custom_call.1} parent=31 // pred_fallthru
          _
        // Predicated region
        $region73: #{tpu_custom_call.1} parent=31 // pred_check
          %p856 = pneg %p419
        $region74: #{tpu_custom_call.1} parent=31 // pred_check_branch
          %858 = sbr.rel (%p856) target = $region76
        $region75: #{tpu_custom_call.1} parent=31 // pred_region
          %s859 = sand.u32 %s31, 1
          %s860 = scalar_lea.sflag [#allocation7], %s859
          %s861 = sand.u32 %s409, 1
          %s862 = smul.addr %s861, 2
          %s863 = scalar_lea.vmem [#allocation21], %s862
          %865 = vsyncadd %s860, 0
          %s866 = smul.addr %s39, 2
          %s867 = scalar_lea.hbm %s14, %s866
          %s869 = sshll.u32 %s867, 4
          %s870 = int_to_ptr.hbm [resolvable:$true] %s869
          %s871 = sshll.u32 %s863, 4
          %s872 = int_to_ptr.vmem [resolvable:$true] %s871
          %874 = dma.hbm_to_vmem [thread:$0]  %s870, 32, %s872, %s860
        $region76: #{tpu_custom_call.1} parent=31 // pred_fallthru
          _
        // Predicated region
        $region77: #{tpu_custom_call.1} parent=31 // pred_check
          %p875 = pneg %p445
        $region78: #{tpu_custom_call.1} parent=31 // pred_check_branch
          %877 = sbr.rel (%p875) target = $region80
        $region79: #{tpu_custom_call.1} parent=31 // pred_region
          %s878 = sand.u32 %s31, 1
          %s879 = scalar_lea.sflag [#allocation7], %s878
          %s880 = sand.u32 %s435, 1
          %s881 = smul.addr %s880, 1024
          %s882 = scalar_lea.vmem [#allocation22], %s881
          %884 = vsyncadd %s879, 0
          %s885 = smul.addr %s39, 256
          %s886 = smul.addr %s885, 4
          %s887 = scalar_lea.hbm %s15, %s886
          %s888 = sshll.u32 %s887, 4
          %s889 = int_to_ptr.hbm [resolvable:$true] %s888
          %s890 = sshll.u32 %s882, 4
          %s891 = int_to_ptr.vmem [resolvable:$true] %s890
          %896 = dma.hbm_to_vmem [thread:$0]  %s889, 16384, %s891, %s879, 512, 512, 32
        $region80: #{tpu_custom_call.1} parent=31 // pred_fallthru
          _
        // Predicated region
        $region81: #{tpu_custom_call.1} parent=31 // pred_check
          %p897 = pneg %p471
        $region82: #{tpu_custom_call.1} parent=31 // pred_check_branch
          %899 = sbr.rel (%p897) target = $region84
        $region83: #{tpu_custom_call.1} parent=31 // pred_region
          %s900 = sand.u32 %s31, 1
          %s901 = scalar_lea.sflag [#allocation7], %s900
          %s902 = sand.u32 %s461, 1
          %s903 = smul.addr %s902, 8
          %s904 = scalar_lea.vmem [#allocation23], %s903
          %906 = vsyncadd %s901, 0
          %s907 = smul.addr %s39, 8
          %s908 = scalar_lea.hbm %s16, %s907
          %s910 = sshll.u32 %s908, 4
          %s911 = int_to_ptr.hbm [resolvable:$true] %s910
          %s912 = sshll.u32 %s904, 4
          %s913 = int_to_ptr.vmem [resolvable:$true] %s912
          %915 = dma.hbm_to_vmem [thread:$0]  %s911, 128, %s913, %s901
        $region84: #{tpu_custom_call.1} parent=31 // pred_fallthru
          _
        // Predicated region
        $region85: #{tpu_custom_call.1} parent=31 // pred_check
          %p916 = pneg %p497
        $region86: #{tpu_custom_call.1} parent=31 // pred_check_branch
          %918 = sbr.rel (%p916) target = $region88
        $region87: #{tpu_custom_call.1} parent=31 // pred_region
          %s919 = sand.u32 %s31, 1
          %s920 = scalar_lea.sflag [#allocation7], %s919
          %s921 = sand.u32 %s487, 1
          %s922 = smul.addr %s921, 1024
          %s923 = scalar_lea.vmem [#allocation24], %s922
          %925 = vsyncadd %s920, 0
          %s926 = smul.addr %s39, 256
          %s927 = smul.addr %s926, 4
          %s928 = scalar_lea.hbm %s17, %s927
          %s929 = sshll.u32 %s928, 4
          %s930 = int_to_ptr.hbm [resolvable:$true] %s929
          %s931 = sshll.u32 %s923, 4
          %s932 = int_to_ptr.vmem [resolvable:$true] %s931
          %937 = dma.hbm_to_vmem [thread:$0]  %s930, 16384, %s932, %s920, 128, 128, 8
        $region88: #{tpu_custom_call.1} parent=31 // pred_fallthru
          _
        // Predicated region
        $region89: #{tpu_custom_call.1} parent=31 // pred_check
          %p938 = pneg %p523
        $region90: #{tpu_custom_call.1} parent=31 // pred_check_branch
          %940 = sbr.rel (%p938) target = $region92
        $region91: #{tpu_custom_call.1} parent=31 // pred_region
          %p941 = scmp.lt.s32.totalorder %s39, 1
          %s942 = scalar_select %p941, %s39, 1
          %s943 = smul.addr %s942, 2
          %s944 = scalar_lea.vmem %s18, %s943
        $region92: #{tpu_custom_call.1} parent=31 // pred_fallthru
          _
        // Predicated region
        $region93: #{tpu_custom_call.1} parent=31 // pred_check
          %p945 = pneg %p549
        $region94: #{tpu_custom_call.1} parent=31 // pred_check_branch
          %947 = sbr.rel (%p945) target = $region96
        $region95: #{tpu_custom_call.1} parent=31 // pred_region
          %s948 = sand.u32 %s31, 1
          %s949 = scalar_lea.sflag [#allocation7], %s948
          %s950 = sand.u32 %s539, 1
          %s951 = smul.addr %s950, 2
          %s952 = scalar_lea.vmem [#allocation25], %s951
          %954 = vsyncadd %s949, 0
          %s955 = smul.addr %s39, 2
          %s956 = scalar_lea.hbm %s19, %s955
          %s958 = sshll.u32 %s956, 4
          %s959 = int_to_ptr.hbm [resolvable:$true] %s958
          %s960 = sshll.u32 %s952, 4
          %s961 = int_to_ptr.vmem [resolvable:$true] %s960
          %963 = dma.hbm_to_vmem [thread:$0]  %s959, 32, %s961, %s949
        $region96: #{tpu_custom_call.1} parent=31 // pred_fallthru
          _
        // Predicated region
        $region97: #{tpu_custom_call.1} parent=31 // pred_check
          %p964 = pneg %p575
        $region98: #{tpu_custom_call.1} parent=31 // pred_check_branch
          %966 = sbr.rel (%p964) target = $region100
        $region99: #{tpu_custom_call.1} parent=31 // pred_region
          %s967 = sand.u32 %s31, 1
          %s968 = scalar_lea.sflag [#allocation7], %s967
          %s969 = sand.u32 %s565, 1
          %s970 = smul.addr %s969, 2
          %s971 = scalar_lea.vmem [#allocation26], %s970
          %973 = vsyncadd %s968, 0
          %s974 = smul.addr %s39, 2
          %s975 = scalar_lea.hbm %s20, %s974
          %s977 = sshll.u32 %s975, 4
          %s978 = int_to_ptr.hbm [resolvable:$true] %s977
          %s979 = sshll.u32 %s971, 4
          %s980 = int_to_ptr.vmem [resolvable:$true] %s979
          %982 = dma.hbm_to_vmem [thread:$0]  %s978, 32, %s980, %s968
        $region100: #{tpu_custom_call.1} parent=31 // pred_fallthru
          _
      $region32: #{tpu_custom_call.1} parent=5 // pred_fallthru
        _
      %p983 = scmp.le.s32.totalorder 1, %s31
      %p984 = scmp.lt.s32.totalorder %s31, 3
      %p985 = pnand %p983, %p984
      %p986 = pneg %p985
      // Predicated region
      $region101: #{tpu_custom_call.1} parent=5 // pred_check
        _
      $region102: #{tpu_custom_call.1} parent=5 // pred_check_branch
        %988 = sbr.rel (%p985) target = $region104
      $region103: #{tpu_custom_call.1} parent=5 // pred_region
        %s989 = ssub.s32 %s31, 1
        // Predicated region
        $region105: #{tpu_custom_call.1} parent=103 // pred_check
          %p990 = pneg %p69
        $region106: #{tpu_custom_call.1} parent=103 // pred_check_branch
          %992 = sbr.rel (%p990) target = $region108
        $region107: #{tpu_custom_call.1} parent=103 // pred_region
          %994 = dma.done [#allocation7], 256
        $region108: #{tpu_custom_call.1} parent=103 // pred_fallthru
          _
        // Predicated region
        $region109: #{tpu_custom_call.1} parent=103 // pred_check
          %p995 = pneg %p95
        $region110: #{tpu_custom_call.1} parent=103 // pred_check_branch
          %997 = sbr.rel (%p995) target = $region112
        $region111: #{tpu_custom_call.1} parent=103 // pred_region
          %999 = dma.done [#allocation10], 32
        $region112: #{tpu_custom_call.1} parent=103 // pred_fallthru
          _
        // Predicated region
        $region113: #{tpu_custom_call.1} parent=103 // pred_check
          %p1000 = pneg %p116
        $region114: #{tpu_custom_call.1} parent=103 // pred_check_branch
          %1002 = sbr.rel (%p1000) target = $region116
        $region115: #{tpu_custom_call.1} parent=103 // pred_region
          %1004 = dma.done [#allocation10], 32
        $region116: #{tpu_custom_call.1} parent=103 // pred_fallthru
          _
        // Predicated region
        $region117: #{tpu_custom_call.1} parent=103 // pred_check
          %p1005 = pneg %p137
        $region118: #{tpu_custom_call.1} parent=103 // pred_check_branch
          %1007 = sbr.rel (%p1005) target = $region120
        $region119: #{tpu_custom_call.1} parent=103 // pred_region
          %1009 = dma.done [#allocation13], 32
        $region120: #{tpu_custom_call.1} parent=103 // pred_fallthru
          _
        %s1010 = sand.u32 %s36, 1
        %s1011 = scalar_lea.sflag [#allocation7], %s1010
        %s1012 = sand.u32 %s152, 1
        %s1013 = smul.addr %s1012, 16
        %s1014 = scalar_lea.vmem [#allocation14], %s1013
        // Predicated region
        $region121: #{tpu_custom_call.1} parent=103 // pred_check
          %p1015 = pneg %p165
        $region122: #{tpu_custom_call.1} parent=103 // pred_check_branch
          %1017 = sbr.rel (%p1015) target = $region124
        $region123: #{tpu_custom_call.1} parent=103 // pred_region
          %1019 = dma.done %s1011, 256
        $region124: #{tpu_custom_call.1} parent=103 // pred_fallthru
          _
        %s1020 = sand.u32 %s36, 1
        %s1021 = scalar_lea.sflag [#allocation7], %s1020
        %s1022 = sand.u32 %s178, 1
        %s1023 = smul.addr %s1022, 256
        %s1024 = scalar_lea.vmem [#allocation15], %s1023
        // Predicated region
        $region125: #{tpu_custom_call.1} parent=103 // pred_check
          %p1025 = pneg %p191
        $region126: #{tpu_custom_call.1} parent=103 // pred_check_branch
          %1027 = sbr.rel (%p1025) target = $region128
        $region127: #{tpu_custom_call.1} parent=103 // pred_region
          %1029 = dma.done %s1021, 4096
        $region128: #{tpu_custom_call.1} parent=103 // pred_fallthru
          _
        %s1030 = sand.u32 %s36, 1
        %s1031 = scalar_lea.sflag [#allocation7], %s1030
        %s1032 = sand.u32 %s230, 1
        %s1033 = smul.addr %s1032, 256
        %s1034 = scalar_lea.vmem [#allocation16], %s1033
        // Predicated region
        $region129: #{tpu_custom_call.1} parent=103 // pred_check
          %p1035 = pneg %p243
        $region130: #{tpu_custom_call.1} parent=103 // pred_check_branch
          %1037 = sbr.rel (%p1035) target = $region132
        $region131: #{tpu_custom_call.1} parent=103 // pred_region
          %1039 = dma.done %s1031, 4096
        $region132: #{tpu_custom_call.1} parent=103 // pred_fallthru
          _
        %s1040 = sand.u32 %s36, 1
        %s1041 = scalar_lea.sflag [#allocation7], %s1040
        %s1042 = sand.u32 %s256, 1
        %s1043 = smul.addr %s1042, 2
        %s1044 = scalar_lea.vmem [#allocation17], %s1043
        // Predicated region
        $region133: #{tpu_custom_call.1} parent=103 // pred_check
          %p1045 = pneg %p269
        $region134: #{tpu_custom_call.1} parent=103 // pred_check_branch
          %1047 = sbr.rel (%p1045) target = $region136
        $region135: #{tpu_custom_call.1} parent=103 // pred_region
          %1049 = dma.done %s1041, 32
        $region136: #{tpu_custom_call.1} parent=103 // pred_fallthru
          _
        %s1050 = sand.u32 %s36, 1
        %s1051 = scalar_lea.sflag [#allocation7], %s1050
        %s1052 = sand.u32 %s282, 1
        %s1053 = smul.addr %s1052, 256
        %s1054 = scalar_lea.vmem [#allocation18], %s1053
        // Predicated region
        $region137: #{tpu_custom_call.1} parent=103 // pred_check
          %p1055 = pneg %p295
        $region138: #{tpu_custom_call.1} parent=103 // pred_check_branch
          %1057 = sbr.rel (%p1055) target = $region140
        $region139: #{tpu_custom_call.1} parent=103 // pred_region
          %1059 = dma.done %s1051, 4096
        $region140: #{tpu_custom_call.1} parent=103 // pred_fallthru
          _
        %s1060 = sand.u32 %s36, 1
        %s1061 = scalar_lea.sflag [#allocation7], %s1060
        %s1062 = sand.u32 %s334, 1
        %s1063 = smul.addr %s1062, 256
        %s1064 = scalar_lea.vmem [#allocation19], %s1063
        // Predicated region
        $region141: #{tpu_custom_call.1} parent=103 // pred_check
          %p1065 = pneg %p347
        $region142: #{tpu_custom_call.1} parent=103 // pred_check_branch
          %1067 = sbr.rel (%p1065) target = $region144
        $region143: #{tpu_custom_call.1} parent=103 // pred_region
          %1069 = dma.done %s1061, 4096
        $region144: #{tpu_custom_call.1} parent=103 // pred_fallthru
          _
        %s1070 = sand.u32 %s36, 1
        %s1071 = scalar_lea.sflag [#allocation7], %s1070
        %s1072 = sand.u32 %s360, 1
        %s1073 = smul.addr %s1072, 2
        %s1074 = scalar_lea.vmem [#allocation20], %s1073
        // Predicated region
        $region145: #{tpu_custom_call.1} parent=103 // pred_check
          %p1075 = pneg %p373
        $region146: #{tpu_custom_call.1} parent=103 // pred_check_branch
          %1077 = sbr.rel (%p1075) target = $region148
        $region147: #{tpu_custom_call.1} parent=103 // pred_region
          %1079 = dma.done %s1071, 32
        $region148: #{tpu_custom_call.1} parent=103 // pred_fallthru
          _
        %s1080 = sand.u32 %s36, 1
        %s1081 = scalar_lea.sflag [#allocation7], %s1080
        %s1082 = sand.u32 %s412, 1
        %s1083 = smul.addr %s1082, 2
        %s1084 = scalar_lea.vmem [#allocation21], %s1083
        // Predicated region
        $region149: #{tpu_custom_call.1} parent=103 // pred_check
          %p1085 = pneg %p425
        $region150: #{tpu_custom_call.1} parent=103 // pred_check_branch
          %1087 = sbr.rel (%p1085) target = $region152
        $region151: #{tpu_custom_call.1} parent=103 // pred_region
          %1089 = dma.done %s1081, 32
        $region152: #{tpu_custom_call.1} parent=103 // pred_fallthru
          _
        %s1090 = sand.u32 %s36, 1
        %s1091 = scalar_lea.sflag [#allocation7], %s1090
        %s1092 = sand.u32 %s438, 1
        %s1093 = smul.addr %s1092, 1024
        %s1094 = scalar_lea.vmem [#allocation22], %s1093
        // Predicated region
        $region153: #{tpu_custom_call.1} parent=103 // pred_check
          %p1095 = pneg %p451
        $region154: #{tpu_custom_call.1} parent=103 // pred_check_branch
          %1097 = sbr.rel (%p1095) target = $region156
        $region155: #{tpu_custom_call.1} parent=103 // pred_region
          %1099 = dma.done %s1091, 16384
        $region156: #{tpu_custom_call.1} parent=103 // pred_fallthru
          _
        %s1100 = sand.u32 %s36, 1
        %s1101 = scalar_lea.sflag [#allocation7], %s1100
        %s1102 = sand.u32 %s464, 1
        %s1103 = smul.addr %s1102, 8
        %s1104 = scalar_lea.vmem [#allocation23], %s1103
        // Predicated region
        $region157: #{tpu_custom_call.1} parent=103 // pred_check
          %p1105 = pneg %p477
        $region158: #{tpu_custom_call.1} parent=103 // pred_check_branch
          %1107 = sbr.rel (%p1105) target = $region160
        $region159: #{tpu_custom_call.1} parent=103 // pred_region
          %1109 = dma.done %s1101, 128
        $region160: #{tpu_custom_call.1} parent=103 // pred_fallthru
          _
        %s1110 = sand.u32 %s36, 1
        %s1111 = scalar_lea.sflag [#allocation7], %s1110
        %s1112 = sand.u32 %s490, 1
        %s1113 = smul.addr %s1112, 1024
        %s1114 = scalar_lea.vmem [#allocation24], %s1113
        // Predicated region
        $region161: #{tpu_custom_call.1} parent=103 // pred_check
          %p1115 = pneg %p503
        $region162: #{tpu_custom_call.1} parent=103 // pred_check_branch
          %1117 = sbr.rel (%p1115) target = $region164
        $region163: #{tpu_custom_call.1} parent=103 // pred_region
          %1119 = dma.done %s1111, 16384
        $region164: #{tpu_custom_call.1} parent=103 // pred_fallthru
          _
        %s1120 = sand.u32 %s36, 1
        %s1121 = scalar_lea.sflag [#allocation7], %s1120
        %s1122 = sand.u32 %s542, 1
        %s1123 = smul.addr %s1122, 2
        %s1124 = scalar_lea.vmem [#allocation25], %s1123
        // Predicated region
        $region165: #{tpu_custom_call.1} parent=103 // pred_check
          %p1125 = pneg %p555
        $region166: #{tpu_custom_call.1} parent=103 // pred_check_branch
          %1127 = sbr.rel (%p1125) target = $region168
        $region167: #{tpu_custom_call.1} parent=103 // pred_region
          %1129 = dma.done %s1121, 32
        $region168: #{tpu_custom_call.1} parent=103 // pred_fallthru
          _
        %s1130 = sand.u32 %s36, 1
        %s1131 = scalar_lea.sflag [#allocation7], %s1130
        %s1132 = sand.u32 %s568, 1
        %s1133 = smul.addr %s1132, 2
        %s1134 = scalar_lea.vmem [#allocation26], %s1133
        // Predicated region
        $region169: #{tpu_custom_call.1} parent=103 // pred_check
          %p1135 = pneg %p581
        $region170: #{tpu_custom_call.1} parent=103 // pred_check_branch
          %1137 = sbr.rel (%p1135) target = $region172
        $region171: #{tpu_custom_call.1} parent=103 // pred_region
          %1139 = dma.done %s1131, 32
        $region172: #{tpu_custom_call.1} parent=103 // pred_fallthru
          _
        %p1140 = pneg %p69
        %p1141 = pneg %p66
        %p1142 = pneg %p95
        %p1143 = pneg %p92
        %p1144 = pneg %p116
        %p1145 = pneg %p113
        %p1146 = pneg %p137
        %p1147 = pneg %p134
        %s1148 = sand.u32 %s36, 1
        %s1149 = scalar_lea.sflag [#allocation7], %s1148
        %s1150 = sand.u32 %s152, 1
        %s1151 = smul.addr %s1150, 16
        %s1152 = scalar_lea.vmem [#allocation14], %s1151
        %p1153 = pneg %p165
        %p1154 = pneg %p162
        %s1155 = sand.u32 %s36, 1
        %s1156 = scalar_lea.sflag [#allocation7], %s1155
        %s1157 = sand.u32 %s178, 1
        %s1158 = smul.addr %s1157, 256
        %s1159 = scalar_lea.vmem [#allocation15], %s1158
        %p1160 = pneg %p191
        %p1161 = pneg %p188
        %p1162 = scmp.lt.s32.totalorder %s41, 1
        %s1163 = scalar_select %p1162, %s41, 1
        %s1164 = smul.addr %s1163, 2
        %s1165 = scalar_lea.vmem %s6, %s1164
        %p1166 = pneg %p217
        %p1167 = pneg %p214
        %s1168 = sand.u32 %s36, 1
        %s1169 = scalar_lea.sflag [#allocation7], %s1168
        %s1170 = sand.u32 %s230, 1
        %s1171 = smul.addr %s1170, 256
        %s1172 = scalar_lea.vmem [#allocation16], %s1171
        %p1173 = pneg %p243
        %p1174 = pneg %p240
        %s1175 = sand.u32 %s36, 1
        %s1176 = scalar_lea.sflag [#allocation7], %s1175
        %s1177 = sand.u32 %s256, 1
        %s1178 = smul.addr %s1177, 2
        %s1179 = scalar_lea.vmem [#allocation17], %s1178
        %p1180 = pneg %p269
        %p1181 = pneg %p266
        %s1182 = sand.u32 %s36, 1
        %s1183 = scalar_lea.sflag [#allocation7], %s1182
        %s1184 = sand.u32 %s282, 1
        %s1185 = smul.addr %s1184, 256
        %s1186 = scalar_lea.vmem [#allocation18], %s1185
        %p1187 = pneg %p295
        %p1188 = pneg %p292
        %p1189 = scmp.lt.s32.totalorder %s41, 1
        %s1190 = scalar_select %p1189, %s41, 1
        %s1191 = smul.addr %s1190, 2
        %s1192 = scalar_lea.vmem %s10, %s1191
        %p1193 = pneg %p321
        %p1194 = pneg %p318
        %s1195 = sand.u32 %s36, 1
        %s1196 = scalar_lea.sflag [#allocation7], %s1195
        %s1197 = sand.u32 %s334, 1
        %s1198 = smul.addr %s1197, 256
        %s1199 = scalar_lea.vmem [#allocation19], %s1198
        %p1200 = pneg %p347
        %p1201 = pneg %p344
        %s1202 = sand.u32 %s36, 1
        %s1203 = scalar_lea.sflag [#allocation7], %s1202
        %s1204 = sand.u32 %s360, 1
        %s1205 = smul.addr %s1204, 2
        %s1206 = scalar_lea.vmem [#allocation20], %s1205
        %p1207 = pneg %p373
        %p1208 = pneg %p370
        %p1209 = scmp.lt.s32.totalorder %s41, 1
        %s1210 = scalar_select %p1209, %s41, 1
        %s1211 = smul.addr %s1210, 2
        %s1212 = scalar_lea.vmem %s13, %s1211
        %p1213 = pneg %p399
        %p1214 = pneg %p396
        %s1215 = sand.u32 %s36, 1
        %s1216 = scalar_lea.sflag [#allocation7], %s1215
        %s1217 = sand.u32 %s412, 1
        %s1218 = smul.addr %s1217, 2
        %s1219 = scalar_lea.vmem [#allocation21], %s1218
        %p1220 = pneg %p425
        %p1221 = pneg %p422
        %s1222 = sand.u32 %s36, 1
        %s1223 = scalar_lea.sflag [#allocation7], %s1222
        %s1224 = sand.u32 %s438, 1
        %s1225 = smul.addr %s1224, 1024
        %s1226 = scalar_lea.vmem [#allocation22], %s1225
        %p1227 = pneg %p451
        %p1228 = pneg %p448
        %s1229 = sand.u32 %s36, 1
        %s1230 = scalar_lea.sflag [#allocation7], %s1229
        %s1231 = sand.u32 %s464, 1
        %s1232 = smul.addr %s1231, 8
        %s1233 = scalar_lea.vmem [#allocation23], %s1232
        %p1234 = pneg %p477
        %p1235 = pneg %p474
        %s1236 = sand.u32 %s36, 1
        %s1237 = scalar_lea.sflag [#allocation7], %s1236
        %s1238 = sand.u32 %s490, 1
        %s1239 = smul.addr %s1238, 1024
        %s1240 = scalar_lea.vmem [#allocation24], %s1239
        %p1241 = pneg %p503
        %p1242 = pneg %p500
        %p1243 = scmp.lt.s32.totalorder %s41, 1
        %s1244 = scalar_select %p1243, %s41, 1
        %s1245 = smul.addr %s1244, 2
        %s1246 = scalar_lea.vmem %s18, %s1245
        %p1247 = pneg %p529
        %p1248 = pneg %p526
        %s1249 = sand.u32 %s36, 1
        %s1250 = scalar_lea.sflag [#allocation7], %s1249
        %s1251 = sand.u32 %s542, 1
        %s1252 = smul.addr %s1251, 2
        %s1253 = scalar_lea.vmem [#allocation25], %s1252
        %p1254 = pneg %p555
        %p1255 = pneg %p552
        %s1256 = sand.u32 %s36, 1
        %s1257 = scalar_lea.sflag [#allocation7], %s1256
        %s1258 = sand.u32 %s568, 1
        %s1259 = smul.addr %s1258, 2
        %s1260 = scalar_lea.vmem [#allocation26], %s1259
        %p1261 = pneg %p581
        %p1262 = pneg %p578
        %p1263 = pneg %p607
        %p1264 = pneg %p604
        %s1265 = smul.u32 2, %s40
        %s1266 = smul.u32 2, %s40
        %s1267 = smul.u32 2, %s40
        %p1268 = scmp.lt.s32.totalorder %s41, 1
        %s1269 = scalar_select %p1268, %s41, 1
        %s1270 = smul.addr %s1269, 2
        %s1271 = scalar_lea.vmem %s6, %s1270
        %p1272 = scmp.lt.s32.totalorder %s41, 1
        %s1273 = scalar_select %p1272, %s41, 1
        %s1274 = smul.addr %s1273, 2
        %s1275 = scalar_lea.vmem %s10, %s1274
        %p1276 = scmp.lt.s32.totalorder %s41, 1
        %s1277 = scalar_select %p1276, %s41, 1
        %s1278 = smul.addr %s1277, 2
        %s1279 = scalar_lea.vmem %s13, %s1278
        %p1280 = scmp.lt.s32.totalorder %s41, 1
        %s1281 = scalar_select %p1280, %s41, 1
        %s1282 = smul.addr %s1281, 2
        %s1283 = scalar_lea.vmem %s18, %s1282
        %s1284 = smul.u32 2, %s40
        %p1286 = scmp.eq.s32.totalorder %s41, 0
        // Predicated region
        $region173: #{tpu_custom_call.1} parent=103 // pred_check
          %p1287 = pneg %p1286
        $region174: #{tpu_custom_call.1} parent=103 // pred_check_branch
          %1289 = sbr.rel (%p1287) target = $region176
        $region175: #{tpu_custom_call.1} parent=103 // pred_region
          %v1290 = vld [vmem:[#allocation9] sm:$0x1]
          %v1291 = vld [vmem:[#allocation9 + $0x1] sm:$0x1]
          %vm1292 = vcmask 57344
          %v1293 = vsel %vm1292, %v1290, 0.0
          %1294 = vadd.xlane.f32.xlu0 %v1293
          %v1295 = vpop.xlane.xlu0 %1294
          %v1296 = vsel %vm1292, %v1291, 0.0
          %1297 = vadd.xlane.f32.xlu0 %v1296
          %v1298 = vpop.xlane.xlu0 %1297
          %v1299 = vlaneseq
          %v1300 = vshrl.u32 %v1299, 7
          %v1301 = vcvt.s32.f32 %v1300
          %v1302 = vperm.slane %v1295, 0
          %v1303 = vperm.slane %v1298, 0
          %vm1304 = vcmp.lt.f32.partialorder %v1301, %v1302
          %vm1305 = vcmp.lt.f32.partialorder %v1301, %v1303
          %v1306 = vsel %vm1304, 1, 0
          %v1307 = vsel %vm1305, 1, 0
          %v1308 = vcvt.s32.f32 %v1306
          %v1309 = vcvt.s32.f32 %v1307
          %vm1310 = vcmask 7168
          %1311 = vst.msk [vmem:[#allocation2] sm:$0xff] %vm1310, %v1308
          %1312 = vst.msk [vmem:[#allocation2 + $0x8] sm:$0xff] %vm1310, %v1309
          %vm1313 = vcmp.gt.f32.partialorder %v1290, 0.0
          %vm1314 = vcmp.gt.f32.partialorder %v1291, 0.0
          %v1315 = vsel %vm1313, 0.0, -1e+30
          %v1316 = vsel %vm1314, 0.0, -1e+30
          %1317 = vst.msk [vmem:[#allocation3] sm:$0x1] %vm1292, %v1315
          %1318 = vst.msk [vmem:[#allocation3 + $0x1] sm:$0x1] %vm1292, %v1316
          %v1319 = vrcp.pop %v1295
          %v1320 = vmul.f32 %v1295, %v1319
          %v1321 = vsub.f32 1.0, %v1320
          %v1322 = vmul.f32 %v1319, %v1321
          %v1323 = vadd.f32 %v1319, %v1322
          %vm1324 = vweird.f32 %v1295
          %vm1325 = vweird.f32 %v1319
          %vm1326 = vmor %vm1324, %vm1325
          %v1327 = vsel %vm1326, %v1319, %v1323
          %v1328 = vand.u32 2147483647, %v1295
          %vm1329 = vcmp.eq.f32.partialorder %v1328, 8.507059e+37
          %v1330 = vand.u32 %v1295, 2147483648
          %v1331 = vor.u32 1.1754944e-38, %v1330
          %v1332 = vsel %vm1329, %v1331, %v1327
          %v1333 = vmul.f32 1.0, %v1332
          %v1334 = vrcp.pop %v1298
          %v1335 = vmul.f32 %v1298, %v1334
          %v1336 = vsub.f32 1.0, %v1335
          %v1337 = vmul.f32 %v1334, %v1336
          %v1338 = vadd.f32 %v1334, %v1337
          %vm1339 = vweird.f32 %v1298
          %vm1340 = vweird.f32 %v1334
          %vm1341 = vmor %vm1339, %vm1340
          %v1342 = vsel %vm1341, %v1334, %v1338
          %v1343 = vand.u32 2147483647, %v1298
          %vm1344 = vcmp.eq.f32.partialorder %v1343, 8.507059e+37
          %v1345 = vand.u32 %v1298, 2147483648
          %v1346 = vor.u32 1.1754944e-38, %v1345
          %v1347 = vsel %vm1344, %v1346, %v1342
          %v1348 = vmul.f32 1.0, %v1347
          %vm1349 = vcmask 0
          %1350 = vst.msk [vmem:[#allocation4] sm:$0x1] %vm1349, %v1333
          %1351 = vst.msk [vmem:[#allocation4 + $0x1] sm:$0x1] %vm1349, %v1348
          %v1352 = vld [vmem:[#allocation6] sm:$0xff]
          %v1353 = vld [vmem:[#allocation6 + $0x8] sm:$0xff]
          %v1354 = vunpack.c.l.bf16 %v1352
          %v1355 = vunpack.c.h.bf16 %v1352
          %v1356 = vunpack.c.l.bf16 %v1353
          %v1357 = vunpack.c.h.bf16 %v1353
          %v1358 = vld [vmem:[#allocation11] sm:$0x3]
          %v1359 = vld [vmem:[#allocation12] sm:$0x3]
          %v1360 = vadd.f32 %v1354, %v1355
          %1361 = vadd.xlane.f32.xlu0 %v1360
          %v1362 = vpop.xlane.xlu0 %1361
          %v1363 = vadd.f32 %v1356, %v1357
          %1364 = vadd.xlane.f32.xlu0 %v1363
          %v1365 = vpop.xlane.xlu0 %1364
          %v1366 = vrcp.pop 256.0
          %v1367 = vmul.f32 256.0, %v1366
          %v1368 = vsub.f32 1.0, %v1367
          %v1369 = vmul.f32 %v1366, %v1368
          %v1370 = vadd.f32 %v1366, %v1369
          %vm1371 = vweird.f32 %v1366
          %v1372 = vsel %vm1371, %v1366, %v1370
          %v1373 = vmul.f32 %v1362, %v1372
          %v1374 = vmul.f32 %v1365, %v1372
          %v1375 = vsub.f32 %v1354, %v1373
          %v1376 = vsub.f32 %v1355, %v1373
          %v1377 = vsub.f32 %v1356, %v1374
          %v1378 = vsub.f32 %v1357, %v1374
          %v1379 = vmul.f32 %v1375, %v1375
          %v1380 = vmul.f32 %v1376, %v1376
          %v1381 = vmul.f32 %v1377, %v1377
          %v1382 = vmul.f32 %v1378, %v1378
          %v1383 = vadd.f32 %v1379, %v1380
          %1384 = vadd.xlane.f32.xlu0 %v1383
          %v1385 = vpop.xlane.xlu0 %1384
          %v1386 = vadd.f32 %v1381, %v1382
          %1387 = vadd.xlane.f32.xlu0 %v1386
          %v1388 = vpop.xlane.xlu0 %1387
          %v1389 = vmul.f32 %v1385, %v1372
          %v1390 = vmul.f32 %v1388, %v1372
          %v1391 = vadd.f32 %v1389, 1e-12
          %v1392 = vadd.f32 %v1390, 1e-12
          %v1393 = vrsqrt.pop %v1391
          %v1394 = vmul.f32 %v1393, %v1391
          %v1395 = vmul.f32 %v1394, %v1393
          %v1396 = vmul.f32 0.5, %v1395
          %v1397 = vsub.f32 1.5, %v1396
          %v1398 = vmul.f32 %v1393, %v1397
          %vm1399 = vweird.f32 %v1391
          %vm1400 = vweird.f32 %v1393
          %vm1401 = vmor %vm1399, %vm1400
          %v1402 = vsel %vm1401, %v1393, %v1398
          %v1403 = vrsqrt.pop %v1392
          %v1404 = vmul.f32 %v1403, %v1392
          %v1405 = vmul.f32 %v1404, %v1403
          %v1406 = vmul.f32 0.5, %v1405
          %v1407 = vsub.f32 1.5, %v1406
          %v1408 = vmul.f32 %v1403, %v1407
          %vm1409 = vweird.f32 %v1392
          %vm1410 = vweird.f32 %v1403
          %vm1411 = vmor %vm1409, %vm1410
          %v1412 = vsel %vm1411, %v1403, %v1408
          %v1413 = vmul.f32 %v1375, %v1402
          %v1414 = vmul.f32 %v1376, %v1402
          %v1415 = vmul.f32 %v1377, %v1412
          %v1416 = vmul.f32 %v1378, %v1412
          %v1418 = vperm.slane %v1358, 0
          %v1419 = vperm.slane %v1358, 1
          %v1422 = vmul.f32 %v1413, %v1418
          %v1423 = vmul.f32 %v1414, %v1419
          %v1424 = vmul.f32 %v1415, %v1418
          %v1425 = vmul.f32 %v1416, %v1419
          %v1427 = vperm.slane %v1359, 0
          %v1428 = vperm.slane %v1359, 1
          %v1431 = vadd.f32 %v1422, %v1427
          %v1432 = vadd.f32 %v1423, %v1428
          %v1433 = vadd.f32 %v1424, %v1427
          %v1434 = vadd.f32 %v1425, %v1428
          %v1435 = vld [vmem:[#allocation2] sm:$0xff]
          %v1436 = vld [vmem:[#allocation2 + $0x8] sm:$0xff]
          %1438 = vset.pattern.permute.xlu0 0
          %1439 = vperm.xlu0 %1438, %v1435
          %v1440 = vpop.permute.xlu0 %1439
          %1443 = vset.pattern.permute.xlu0 0
          %1444 = vperm.xlu0 %1443, %v1436
          %v1445 = vpop.permute.xlu0 %1444
          %v1447 = vmul.f32 %v1431, %v1440
          %v1448 = vmul.f32 %v1432, %v1440
          %v1449 = vmul.f32 %v1433, %v1445
          %v1450 = vmul.f32 %v1434, %v1445
          %1451 = vst [vmem:[#allocation27] sm:$0xff] %v1447
          %1452 = vst [vmem:[#allocation27 + $0x8] sm:$0xff] %v1448
          %1453 = vst [vmem:[#allocation27 + $0x10] sm:$0xff] %v1449
          %1454 = vst [vmem:[#allocation27 + $0x18] sm:$0xff] %v1450
        $region176: #{tpu_custom_call.1} parent=103 // pred_fallthru
          _
        %v1455 = vld [vmem:[#allocation2] sm:$0xff]
        %v1456 = vld [vmem:[#allocation2 + $0x8] sm:$0xff]
        %v1457 = vld [vmem:[#allocation3] sm:$0x1]
        %v1458 = vld [vmem:[#allocation3 + $0x1] sm:$0x1]
        %v1459 = vld [vmem:[#allocation27] sm:$0xff]
        %v1460 = vld [vmem:[#allocation27 + $0x8] sm:$0xff]
        %v1461 = vld [vmem:[#allocation27 + $0x10] sm:$0xff]
        %v1462 = vld [vmem:[#allocation27 + $0x18] sm:$0xff]
        %v1463 = vpack.c.bf16 %v1461, %v1459
        %v1464 = vpack.c.bf16 %v1462, %v1460
        %v1465 = vld [vmem:[%s1024] sm:$0xff]
        %v1466 = vld [vmem:[%s1024 + $0x8] sm:$0xff]
        %v1467 = vld [vmem:[%s1024 + $0x10] sm:$0xff]
        %v1468 = vld [vmem:[%s1024 + $0x18] sm:$0xff]
        %v1469 = vld [vmem:[%s1024 + $0x20] sm:$0xff]
        %v1470 = vld [vmem:[%s1024 + $0x28] sm:$0xff]
        %v1471 = vld [vmem:[%s1024 + $0x30] sm:$0xff]
        %v1472 = vld [vmem:[%s1024 + $0x38] sm:$0xff]
        %v1473 = vld [vmem:[%s1024 + $0x40] sm:$0xff]
        %v1474 = vld [vmem:[%s1024 + $0x48] sm:$0xff]
        %v1475 = vld [vmem:[%s1024 + $0x50] sm:$0xff]
        %v1476 = vld [vmem:[%s1024 + $0x58] sm:$0xff]
        %v1477 = vld [vmem:[%s1024 + $0x60] sm:$0xff]
        %v1478 = vld [vmem:[%s1024 + $0x68] sm:$0xff]
        %v1479 = vld [vmem:[%s1024 + $0x70] sm:$0xff]
        %v1480 = vld [vmem:[%s1024 + $0x78] sm:$0xff]
        %v1481 = vld [vmem:[%s1024 + $0x80] sm:$0xff]
        %v1482 = vld [vmem:[%s1024 + $0x88] sm:$0xff]
        %v1483 = vld [vmem:[%s1024 + $0x90] sm:$0xff]
        %v1484 = vld [vmem:[%s1024 + $0x98] sm:$0xff]
        %v1485 = vld [vmem:[%s1024 + $0xa0] sm:$0xff]
        %v1486 = vld [vmem:[%s1024 + $0xa8] sm:$0xff]
        %v1487 = vld [vmem:[%s1024 + $0xb0] sm:$0xff]
        %v1488 = vld [vmem:[%s1024 + $0xb8] sm:$0xff]
        %v1489 = vld [vmem:[%s1024 + $0xc0] sm:$0xff]
        %v1490 = vld [vmem:[%s1024 + $0xc8] sm:$0xff]
        %v1491 = vld [vmem:[%s1024 + $0xd0] sm:$0xff]
        %v1492 = vld [vmem:[%s1024 + $0xd8] sm:$0xff]
        %v1493 = vld [vmem:[%s1024 + $0xe0] sm:$0xff]
        %v1494 = vld [vmem:[%s1024 + $0xe8] sm:$0xff]
        %v1495 = vld [vmem:[%s1024 + $0xf0] sm:$0xff]
        %v1496 = vld [vmem:[%s1024 + $0xf8] sm:$0xff]
        %v1497 = vld [vmem:[%s1271] sm:$0x3]
        %v1499 = vperm.slane %v1497, 0
        %v1500 = vperm.slane %v1497, 1
        %v1535 = vunpack.c.l.b16 %v1465
        %v1536 = vunpack.c.h.b16 %v1465
        %v1537 = vunpack.c.l.b16 %v1466
        %v1538 = vunpack.c.h.b16 %v1466
        %v1539 = vunpack.c.l.b16 %v1467
        %v1540 = vunpack.c.h.b16 %v1467
        %v1541 = vunpack.c.l.b16 %v1468
        %v1542 = vunpack.c.h.b16 %v1468
        %v1543 = vunpack.c.l.b16 %v1469
        %v1544 = vunpack.c.h.b16 %v1469
        %v1545 = vunpack.c.l.b16 %v1470
        %v1546 = vunpack.c.h.b16 %v1470
        %v1547 = vunpack.c.l.b16 %v1471
        %v1548 = vunpack.c.h.b16 %v1471
        %v1549 = vunpack.c.l.b16 %v1472
        %v1550 = vunpack.c.h.b16 %v1472
        %v1551 = vunpack.c.l.b16 %v1473
        %v1552 = vunpack.c.h.b16 %v1473
        %v1553 = vunpack.c.l.b16 %v1474
        %v1554 = vunpack.c.h.b16 %v1474
        %v1555 = vunpack.c.l.b16 %v1475
        %v1556 = vunpack.c.h.b16 %v1475
        %v1557 = vunpack.c.l.b16 %v1476
        %v1558 = vunpack.c.h.b16 %v1476
        %v1559 = vunpack.c.l.b16 %v1477
        %v1560 = vunpack.c.h.b16 %v1477
        %v1561 = vunpack.c.l.b16 %v1478
        %v1562 = vunpack.c.h.b16 %v1478
        %v1563 = vunpack.c.l.b16 %v1479
        %v1564 = vunpack.c.h.b16 %v1479
        %v1565 = vunpack.c.l.b16 %v1480
        %v1566 = vunpack.c.h.b16 %v1480
        %v1567 = vunpack.c.l.b16 %v1481
        %v1568 = vunpack.c.h.b16 %v1481
        %v1569 = vunpack.c.l.b16 %v1482
        %v1570 = vunpack.c.h.b16 %v1482
        %v1571 = vunpack.c.l.b16 %v1483
        %v1572 = vunpack.c.h.b16 %v1483
        %v1573 = vunpack.c.l.b16 %v1484
        %v1574 = vunpack.c.h.b16 %v1484
        %v1575 = vunpack.c.l.b16 %v1485
        %v1576 = vunpack.c.h.b16 %v1485
        %v1577 = vunpack.c.l.b16 %v1486
        %v1578 = vunpack.c.h.b16 %v1486
        %v1579 = vunpack.c.l.b16 %v1487
        %v1580 = vunpack.c.h.b16 %v1487
        %v1581 = vunpack.c.l.b16 %v1488
        %v1582 = vunpack.c.h.b16 %v1488
        %v1583 = vunpack.c.l.b16 %v1489
        %v1584 = vunpack.c.h.b16 %v1489
        %v1585 = vunpack.c.l.b16 %v1490
        %v1586 = vunpack.c.h.b16 %v1490
        %v1587 = vunpack.c.l.b16 %v1491
        %v1588 = vunpack.c.h.b16 %v1491
        %v1589 = vunpack.c.l.b16 %v1492
        %v1590 = vunpack.c.h.b16 %v1492
        %v1591 = vunpack.c.l.b16 %v1493
        %v1592 = vunpack.c.h.b16 %v1493
        %v1593 = vunpack.c.l.b16 %v1494
        %v1594 = vunpack.c.h.b16 %v1494
        %v1595 = vunpack.c.l.b16 %v1495
        %v1596 = vunpack.c.h.b16 %v1495
        %v1597 = vunpack.c.l.b16 %v1496
        %v1598 = vunpack.c.h.b16 %v1496
        %v1599 = vpack.c.b16 %v1537, %v1535
        %v1600 = vpack.c.b16 %v1538, %v1536
        %v1601 = vpack.c.b16 %v1541, %v1539
        %v1602 = vpack.c.b16 %v1542, %v1540
        %v1603 = vpack.c.b16 %v1545, %v1543
        %v1604 = vpack.c.b16 %v1546, %v1544
        %v1605 = vpack.c.b16 %v1549, %v1547
        %v1606 = vpack.c.b16 %v1550, %v1548
        %v1607 = vpack.c.b16 %v1553, %v1551
        %v1608 = vpack.c.b16 %v1554, %v1552
        %v1609 = vpack.c.b16 %v1557, %v1555
        %v1610 = vpack.c.b16 %v1558, %v1556
        %v1611 = vpack.c.b16 %v1561, %v1559
        %v1612 = vpack.c.b16 %v1562, %v1560
        %v1613 = vpack.c.b16 %v1565, %v1563
        %v1614 = vpack.c.b16 %v1566, %v1564
        %v1615 = vpack.c.b16 %v1569, %v1567
        %v1616 = vpack.c.b16 %v1570, %v1568
        %v1617 = vpack.c.b16 %v1573, %v1571
        %v1618 = vpack.c.b16 %v1574, %v1572
        %v1619 = vpack.c.b16 %v1577, %v1575
        %v1620 = vpack.c.b16 %v1578, %v1576
        %v1621 = vpack.c.b16 %v1581, %v1579
        %v1622 = vpack.c.b16 %v1582, %v1580
        %v1623 = vpack.c.b16 %v1585, %v1583
        %v1624 = vpack.c.b16 %v1586, %v1584
        %v1625 = vpack.c.b16 %v1589, %v1587
        %v1626 = vpack.c.b16 %v1590, %v1588
        %v1627 = vpack.c.b16 %v1593, %v1591
        %v1628 = vpack.c.b16 %v1594, %v1592
        %v1629 = vpack.c.b16 %v1597, %v1595
        %v1630 = vpack.c.b16 %v1598, %v1596
        %1663 = vmatpush.bf16.msra.mxu0 %v1613
        %1664 = vmatpush.bf16.msra.mxu0 %v1611
        %1665 = vmatpush.bf16.msra.mxu0 %v1609
        %1666 = vmatpush.bf16.msra.mxu0 %v1607
        %1667 = vmatpush.bf16.msra.mxu0 %v1605
        %1668 = vmatpush.bf16.msra.mxu0 %v1603
        %1669 = vmatpush.bf16.msra.mxu0 %v1601
        %1670 = vmatpush.bf16.msra.mxu0 %v1599
        %1671 = vmatmul.bf16.gmra.mxu0 %v1463
        %v1672 = vpop.f32.mrf.mxu0
        %v1673 = vadd.f32 %v1499, %v1672
        %v1674 = vpop.f32.mrf.mxu0
        %v1675 = vadd.f32 %v1499, %v1674
        %1676 = vdwg.mxu0
        %1677 = vmatpush.bf16.msra.mxu0 %v1629
        %1678 = vmatpush.bf16.msra.mxu0 %v1627
        %1679 = vmatpush.bf16.msra.mxu0 %v1625
        %1680 = vmatpush.bf16.msra.mxu0 %v1623
        %1681 = vmatpush.bf16.msra.mxu0 %v1621
        %1682 = vmatpush.bf16.msra.mxu0 %v1619
        %1683 = vmatpush.bf16.msra.mxu0 %v1617
        %1684 = vmatpush.bf16.msra.mxu0 %v1615
        %1685 = vmatmul.bf16.gmra.mxu0 %v1464
        %v1686 = vpop.f32.mrf.mxu0
        %v1687 = vadd.f32 %v1673, %v1686
        %v1688 = vpop.f32.mrf.mxu0
        %v1689 = vadd.f32 %v1675, %v1688
        %1690 = vdwg.mxu0
        %1691 = vmatpush.bf16.msra.mxu0 %v1614
        %1692 = vmatpush.bf16.msra.mxu0 %v1612
        %1693 = vmatpush.bf16.msra.mxu0 %v1610
        %1694 = vmatpush.bf16.msra.mxu0 %v1608
        %1695 = vmatpush.bf16.msra.mxu0 %v1606
        %1696 = vmatpush.bf16.msra.mxu0 %v1604
        %1697 = vmatpush.bf16.msra.mxu0 %v1602
        %1698 = vmatpush.bf16.msra.mxu0 %v1600
        %1699 = vmatmul.bf16.gmra.mxu0 %v1463
        %v1700 = vpop.f32.mrf.mxu0
        %v1701 = vadd.f32 %v1500, %v1700
        %v1702 = vpop.f32.mrf.mxu0
        %v1703 = vadd.f32 %v1500, %v1702
        %1704 = vdwg.mxu0
        %1705 = vmatpush.bf16.msra.mxu0 %v1630
        %1706 = vmatpush.bf16.msra.mxu0 %v1628
        %1707 = vmatpush.bf16.msra.mxu0 %v1626
        %1708 = vmatpush.bf16.msra.mxu0 %v1624
        %1709 = vmatpush.bf16.msra.mxu0 %v1622
        %1710 = vmatpush.bf16.msra.mxu0 %v1620
        %1711 = vmatpush.bf16.msra.mxu0 %v1618
        %1712 = vmatpush.bf16.msra.mxu0 %v1616
        %1713 = vmatmul.bf16.gmra.mxu0 %v1464
        %v1714 = vpop.f32.mrf.mxu0
        %v1715 = vadd.f32 %v1701, %v1714
        %v1716 = vpop.f32.mrf.mxu0
        %v1717 = vadd.f32 %v1703, %v1716
        %1718 = vdwg.mxu0
        %v1719 = vmul.f32 %v1687, 0.088388346
        %v1720 = vmul.f32 %v1715, 0.088388346
        %v1721 = vmul.f32 %v1689, 0.088388346
        %v1722 = vmul.f32 %v1717, 0.088388346
        %v1723 = vpack.c.bf16 %v1720, %v1719
        %v1724 = vpack.c.bf16 %v1722, %v1721
        %v1725 = vld [vmem:[%s1034] sm:$0xff]
        %v1726 = vld [vmem:[%s1034 + $0x8] sm:$0xff]
        %v1727 = vld [vmem:[%s1034 + $0x10] sm:$0xff]
        %v1728 = vld [vmem:[%s1034 + $0x18] sm:$0xff]
        %v1729 = vld [vmem:[%s1034 + $0x20] sm:$0xff]
        %v1730 = vld [vmem:[%s1034 + $0x28] sm:$0xff]
        %v1731 = vld [vmem:[%s1034 + $0x30] sm:$0xff]
        %v1732 = vld [vmem:[%s1034 + $0x38] sm:$0xff]
        %v1733 = vld [vmem:[%s1034 + $0x40] sm:$0xff]
        %v1734 = vld [vmem:[%s1034 + $0x48] sm:$0xff]
        %v1735 = vld [vmem:[%s1034 + $0x50] sm:$0xff]
        %v1736 = vld [vmem:[%s1034 + $0x58] sm:$0xff]
        %v1737 = vld [vmem:[%s1034 + $0x60] sm:$0xff]
        %v1738 = vld [vmem:[%s1034 + $0x68] sm:$0xff]
        %v1739 = vld [vmem:[%s1034 + $0x70] sm:$0xff]
        %v1740 = vld [vmem:[%s1034 + $0x78] sm:$0xff]
        %v1741 = vld [vmem:[%s1034 + $0x80] sm:$0xff]
        %v1742 = vld [vmem:[%s1034 + $0x88] sm:$0xff]
        %v1743 = vld [vmem:[%s1034 + $0x90] sm:$0xff]
        %v1744 = vld [vmem:[%s1034 + $0x98] sm:$0xff]
        %v1745 = vld [vmem:[%s1034 + $0xa0] sm:$0xff]
        %v1746 = vld [vmem:[%s1034 + $0xa8] sm:$0xff]
        %v1747 = vld [vmem:[%s1034 + $0xb0] sm:$0xff]
        %v1748 = vld [vmem:[%s1034 + $0xb8] sm:$0xff]
        %v1749 = vld [vmem:[%s1034 + $0xc0] sm:$0xff]
        %v1750 = vld [vmem:[%s1034 + $0xc8] sm:$0xff]
        %v1751 = vld [vmem:[%s1034 + $0xd0] sm:$0xff]
        %v1752 = vld [vmem:[%s1034 + $0xd8] sm:$0xff]
        %v1753 = vld [vmem:[%s1034 + $0xe0] sm:$0xff]
        %v1754 = vld [vmem:[%s1034 + $0xe8] sm:$0xff]
        %v1755 = vld [vmem:[%s1034 + $0xf0] sm:$0xff]
        %v1756 = vld [vmem:[%s1034 + $0xf8] sm:$0xff]
        %v1757 = vld [vmem:[%s1044] sm:$0x3]
        %v1759 = vperm.slane %v1757, 0
        %v1760 = vperm.slane %v1757, 1
        %v1795 = vunpack.c.l.b16 %v1725
        %v1796 = vunpack.c.h.b16 %v1725
        %v1797 = vunpack.c.l.b16 %v1726
        %v1798 = vunpack.c.h.b16 %v1726
        %v1799 = vunpack.c.l.b16 %v1727
        %v1800 = vunpack.c.h.b16 %v1727
        %v1801 = vunpack.c.l.b16 %v1728
        %v1802 = vunpack.c.h.b16 %v1728
        %v1803 = vunpack.c.l.b16 %v1729
        %v1804 = vunpack.c.h.b16 %v1729
        %v1805 = vunpack.c.l.b16 %v1730
        %v1806 = vunpack.c.h.b16 %v1730
        %v1807 = vunpack.c.l.b16 %v1731
        %v1808 = vunpack.c.h.b16 %v1731
        %v1809 = vunpack.c.l.b16 %v1732
        %v1810 = vunpack.c.h.b16 %v1732
        %v1811 = vunpack.c.l.b16 %v1733
        %v1812 = vunpack.c.h.b16 %v1733
        %v1813 = vunpack.c.l.b16 %v1734
        %v1814 = vunpack.c.h.b16 %v1734
        %v1815 = vunpack.c.l.b16 %v1735
        %v1816 = vunpack.c.h.b16 %v1735
        %v1817 = vunpack.c.l.b16 %v1736
        %v1818 = vunpack.c.h.b16 %v1736
        %v1819 = vunpack.c.l.b16 %v1737
        %v1820 = vunpack.c.h.b16 %v1737
        %v1821 = vunpack.c.l.b16 %v1738
        %v1822 = vunpack.c.h.b16 %v1738
        %v1823 = vunpack.c.l.b16 %v1739
        %v1824 = vunpack.c.h.b16 %v1739
        %v1825 = vunpack.c.l.b16 %v1740
        %v1826 = vunpack.c.h.b16 %v1740
        %v1827 = vunpack.c.l.b16 %v1741
        %v1828 = vunpack.c.h.b16 %v1741
        %v1829 = vunpack.c.l.b16 %v1742
        %v1830 = vunpack.c.h.b16 %v1742
        %v1831 = vunpack.c.l.b16 %v1743
        %v1832 = vunpack.c.h.b16 %v1743
        %v1833 = vunpack.c.l.b16 %v1744
        %v1834 = vunpack.c.h.b16 %v1744
        %v1835 = vunpack.c.l.b16 %v1745
        %v1836 = vunpack.c.h.b16 %v1745
        %v1837 = vunpack.c.l.b16 %v1746
        %v1838 = vunpack.c.h.b16 %v1746
        %v1839 = vunpack.c.l.b16 %v1747
        %v1840 = vunpack.c.h.b16 %v1747
        %v1841 = vunpack.c.l.b16 %v1748
        %v1842 = vunpack.c.h.b16 %v1748
        %v1843 = vunpack.c.l.b16 %v1749
        %v1844 = vunpack.c.h.b16 %v1749
        %v1845 = vunpack.c.l.b16 %v1750
        %v1846 = vunpack.c.h.b16 %v1750
        %v1847 = vunpack.c.l.b16 %v1751
        %v1848 = vunpack.c.h.b16 %v1751
        %v1849 = vunpack.c.l.b16 %v1752
        %v1850 = vunpack.c.h.b16 %v1752
        %v1851 = vunpack.c.l.b16 %v1753
        %v1852 = vunpack.c.h.b16 %v1753
        %v1853 = vunpack.c.l.b16 %v1754
        %v1854 = vunpack.c.h.b16 %v1754
        %v1855 = vunpack.c.l.b16 %v1755
        %v1856 = vunpack.c.h.b16 %v1755
        %v1857 = vunpack.c.l.b16 %v1756
        %v1858 = vunpack.c.h.b16 %v1756
        %v1859 = vpack.c.b16 %v1797, %v1795
        %v1860 = vpack.c.b16 %v1798, %v1796
        %v1861 = vpack.c.b16 %v1801, %v1799
        %v1862 = vpack.c.b16 %v1802, %v1800
        %v1863 = vpack.c.b16 %v1805, %v1803
        %v1864 = vpack.c.b16 %v1806, %v1804
        %v1865 = vpack.c.b16 %v1809, %v1807
        %v1866 = vpack.c.b16 %v1810, %v1808
        %v1867 = vpack.c.b16 %v1813, %v1811
        %v1868 = vpack.c.b16 %v1814, %v1812
        %v1869 = vpack.c.b16 %v1817, %v1815
        %v1870 = vpack.c.b16 %v1818, %v1816
        %v1871 = vpack.c.b16 %v1821, %v1819
        %v1872 = vpack.c.b16 %v1822, %v1820
        %v1873 = vpack.c.b16 %v1825, %v1823
        %v1874 = vpack.c.b16 %v1826, %v1824
        %v1875 = vpack.c.b16 %v1829, %v1827
        %v1876 = vpack.c.b16 %v1830, %v1828
        %v1877 = vpack.c.b16 %v1833, %v1831
        %v1878 = vpack.c.b16 %v1834, %v1832
        %v1879 = vpack.c.b16 %v1837, %v1835
        %v1880 = vpack.c.b16 %v1838, %v1836
        %v1881 = vpack.c.b16 %v1841, %v1839
        %v1882 = vpack.c.b16 %v1842, %v1840
        %v1883 = vpack.c.b16 %v1845, %v1843
        %v1884 = vpack.c.b16 %v1846, %v1844
        %v1885 = vpack.c.b16 %v1849, %v1847
        %v1886 = vpack.c.b16 %v1850, %v1848
        %v1887 = vpack.c.b16 %v1853, %v1851
        %v1888 = vpack.c.b16 %v1854, %v1852
        %v1889 = vpack.c.b16 %v1857, %v1855
        %v1890 = vpack.c.b16 %v1858, %v1856
        %1923 = vmatpush.bf16.msra.mxu0 %v1873
        %1924 = vmatpush.bf16.msra.mxu0 %v1871
        %1925 = vmatpush.bf16.msra.mxu0 %v1869
        %1926 = vmatpush.bf16.msra.mxu0 %v1867
        %1927 = vmatpush.bf16.msra.mxu0 %v1865
        %1928 = vmatpush.bf16.msra.mxu0 %v1863
        %1929 = vmatpush.bf16.msra.mxu0 %v1861
        %1930 = vmatpush.bf16.msra.mxu0 %v1859
        %1931 = vmatmul.bf16.gmra.mxu0 %v1463
        %v1932 = vpop.f32.mrf.mxu0
        %v1933 = vadd.f32 %v1759, %v1932
        %v1934 = vpop.f32.mrf.mxu0
        %v1935 = vadd.f32 %v1759, %v1934
        %1936 = vdwg.mxu0
        %1937 = vmatpush.bf16.msra.mxu0 %v1889
        %1938 = vmatpush.bf16.msra.mxu0 %v1887
        %1939 = vmatpush.bf16.msra.mxu0 %v1885
        %1940 = vmatpush.bf16.msra.mxu0 %v1883
        %1941 = vmatpush.bf16.msra.mxu0 %v1881
        %1942 = vmatpush.bf16.msra.mxu0 %v1879
        %1943 = vmatpush.bf16.msra.mxu0 %v1877
        %1944 = vmatpush.bf16.msra.mxu0 %v1875
        %1945 = vmatmul.bf16.gmra.mxu0 %v1464
        %v1946 = vpop.f32.mrf.mxu0
        %v1947 = vadd.f32 %v1933, %v1946
        %v1948 = vpop.f32.mrf.mxu0
        %v1949 = vadd.f32 %v1935, %v1948
        %1950 = vdwg.mxu0
        %1951 = vmatpush.bf16.msra.mxu0 %v1874
        %1952 = vmatpush.bf16.msra.mxu0 %v1872
        %1953 = vmatpush.bf16.msra.mxu0 %v1870
        %1954 = vmatpush.bf16.msra.mxu0 %v1868
        %1955 = vmatpush.bf16.msra.mxu0 %v1866
        %1956 = vmatpush.bf16.msra.mxu0 %v1864
        %1957 = vmatpush.bf16.msra.mxu0 %v1862
        %1958 = vmatpush.bf16.msra.mxu0 %v1860
        %1959 = vmatmul.bf16.gmra.mxu0 %v1463
        %v1960 = vpop.f32.mrf.mxu0
        %v1961 = vadd.f32 %v1760, %v1960
        %v1962 = vpop.f32.mrf.mxu0
        %v1963 = vadd.f32 %v1760, %v1962
        %1964 = vdwg.mxu0
        %1965 = vmatpush.bf16.msra.mxu0 %v1890
        %1966 = vmatpush.bf16.msra.mxu0 %v1888
        %1967 = vmatpush.bf16.msra.mxu0 %v1886
        %1968 = vmatpush.bf16.msra.mxu0 %v1884
        %1969 = vmatpush.bf16.msra.mxu0 %v1882
        %1970 = vmatpush.bf16.msra.mxu0 %v1880
        %1971 = vmatpush.bf16.msra.mxu0 %v1878
        %1972 = vmatpush.bf16.msra.mxu0 %v1876
        %1973 = vmatmul.bf16.gmra.mxu0 %v1464
        %v1974 = vpop.f32.mrf.mxu0
        %v1975 = vadd.f32 %v1961, %v1974
        %v1976 = vpop.f32.mrf.mxu0
        %v1977 = vadd.f32 %v1963, %v1976
        %1978 = vdwg.mxu0
        %v1979 = vpack.c.bf16 %v1975, %v1947
        %v1980 = vpack.c.bf16 %v1977, %v1949
        %v1981 = vld [vmem:[%s1054] sm:$0xff]
        %v1982 = vld [vmem:[%s1054 + $0x8] sm:$0xff]
        %v1983 = vld [vmem:[%s1054 + $0x10] sm:$0xff]
        %v1984 = vld [vmem:[%s1054 + $0x18] sm:$0xff]
        %v1985 = vld [vmem:[%s1054 + $0x20] sm:$0xff]
        %v1986 = vld [vmem:[%s1054 + $0x28] sm:$0xff]
        %v1987 = vld [vmem:[%s1054 + $0x30] sm:$0xff]
        %v1988 = vld [vmem:[%s1054 + $0x38] sm:$0xff]
        %v1989 = vld [vmem:[%s1054 + $0x40] sm:$0xff]
        %v1990 = vld [vmem:[%s1054 + $0x48] sm:$0xff]
        %v1991 = vld [vmem:[%s1054 + $0x50] sm:$0xff]
        %v1992 = vld [vmem:[%s1054 + $0x58] sm:$0xff]
        %v1993 = vld [vmem:[%s1054 + $0x60] sm:$0xff]
        %v1994 = vld [vmem:[%s1054 + $0x68] sm:$0xff]
        %v1995 = vld [vmem:[%s1054 + $0x70] sm:$0xff]
        %v1996 = vld [vmem:[%s1054 + $0x78] sm:$0xff]
        %v1997 = vld [vmem:[%s1054 + $0x80] sm:$0xff]
        %v1998 = vld [vmem:[%s1054 + $0x88] sm:$0xff]
        %v1999 = vld [vmem:[%s1054 + $0x90] sm:$0xff]
        %v2000 = vld [vmem:[%s1054 + $0x98] sm:$0xff]
        %v2001 = vld [vmem:[%s1054 + $0xa0] sm:$0xff]
        %v2002 = vld [vmem:[%s1054 + $0xa8] sm:$0xff]
        %v2003 = vld [vmem:[%s1054 + $0xb0] sm:$0xff]
        %v2004 = vld [vmem:[%s1054 + $0xb8] sm:$0xff]
        %v2005 = vld [vmem:[%s1054 + $0xc0] sm:$0xff]
        %v2006 = vld [vmem:[%s1054 + $0xc8] sm:$0xff]
        %v2007 = vld [vmem:[%s1054 + $0xd0] sm:$0xff]
        %v2008 = vld [vmem:[%s1054 + $0xd8] sm:$0xff]
        %v2009 = vld [vmem:[%s1054 + $0xe0] sm:$0xff]
        %v2010 = vld [vmem:[%s1054 + $0xe8] sm:$0xff]
        %v2011 = vld [vmem:[%s1054 + $0xf0] sm:$0xff]
        %v2012 = vld [vmem:[%s1054 + $0xf8] sm:$0xff]
        %v2013 = vld [vmem:[%s1275] sm:$0x3]
        %v2015 = vperm.slane %v2013, 0
        %v2016 = vperm.slane %v2013, 1
        %v2051 = vunpack.c.l.b16 %v1981
        %v2052 = vunpack.c.h.b16 %v1981
        %v2053 = vunpack.c.l.b16 %v1982
        %v2054 = vunpack.c.h.b16 %v1982
        %v2055 = vunpack.c.l.b16 %v1983
        %v2056 = vunpack.c.h.b16 %v1983
        %v2057 = vunpack.c.l.b16 %v1984
        %v2058 = vunpack.c.h.b16 %v1984
        %v2059 = vunpack.c.l.b16 %v1985
        %v2060 = vunpack.c.h.b16 %v1985
        %v2061 = vunpack.c.l.b16 %v1986
        %v2062 = vunpack.c.h.b16 %v1986
        %v2063 = vunpack.c.l.b16 %v1987
        %v2064 = vunpack.c.h.b16 %v1987
        %v2065 = vunpack.c.l.b16 %v1988
        %v2066 = vunpack.c.h.b16 %v1988
        %v2067 = vunpack.c.l.b16 %v1989
        %v2068 = vunpack.c.h.b16 %v1989
        %v2069 = vunpack.c.l.b16 %v1990
        %v2070 = vunpack.c.h.b16 %v1990
        %v2071 = vunpack.c.l.b16 %v1991
        %v2072 = vunpack.c.h.b16 %v1991
        %v2073 = vunpack.c.l.b16 %v1992
        %v2074 = vunpack.c.h.b16 %v1992
        %v2075 = vunpack.c.l.b16 %v1993
        %v2076 = vunpack.c.h.b16 %v1993
        %v2077 = vunpack.c.l.b16 %v1994
        %v2078 = vunpack.c.h.b16 %v1994
        %v2079 = vunpack.c.l.b16 %v1995
        %v2080 = vunpack.c.h.b16 %v1995
        %v2081 = vunpack.c.l.b16 %v1996
        %v2082 = vunpack.c.h.b16 %v1996
        %v2083 = vunpack.c.l.b16 %v1997
        %v2084 = vunpack.c.h.b16 %v1997
        %v2085 = vunpack.c.l.b16 %v1998
        %v2086 = vunpack.c.h.b16 %v1998
        %v2087 = vunpack.c.l.b16 %v1999
        %v2088 = vunpack.c.h.b16 %v1999
        %v2089 = vunpack.c.l.b16 %v2000
        %v2090 = vunpack.c.h.b16 %v2000
        %v2091 = vunpack.c.l.b16 %v2001
        %v2092 = vunpack.c.h.b16 %v2001
        %v2093 = vunpack.c.l.b16 %v2002
        %v2094 = vunpack.c.h.b16 %v2002
        %v2095 = vunpack.c.l.b16 %v2003
        %v2096 = vunpack.c.h.b16 %v2003
        %v2097 = vunpack.c.l.b16 %v2004
        %v2098 = vunpack.c.h.b16 %v2004
        %v2099 = vunpack.c.l.b16 %v2005
        %v2100 = vunpack.c.h.b16 %v2005
        %v2101 = vunpack.c.l.b16 %v2006
        %v2102 = vunpack.c.h.b16 %v2006
        %v2103 = vunpack.c.l.b16 %v2007
        %v2104 = vunpack.c.h.b16 %v2007
        %v2105 = vunpack.c.l.b16 %v2008
        %v2106 = vunpack.c.h.b16 %v2008
        %v2107 = vunpack.c.l.b16 %v2009
        %v2108 = vunpack.c.h.b16 %v2009
        %v2109 = vunpack.c.l.b16 %v2010
        %v2110 = vunpack.c.h.b16 %v2010
        %v2111 = vunpack.c.l.b16 %v2011
        %v2112 = vunpack.c.h.b16 %v2011
        %v2113 = vunpack.c.l.b16 %v2012
        %v2114 = vunpack.c.h.b16 %v2012
        %v2115 = vpack.c.b16 %v2053, %v2051
        %v2116 = vpack.c.b16 %v2054, %v2052
        %v2117 = vpack.c.b16 %v2057, %v2055
        %v2118 = vpack.c.b16 %v2058, %v2056
        %v2119 = vpack.c.b16 %v2061, %v2059
        %v2120 = vpack.c.b16 %v2062, %v2060
        %v2121 = vpack.c.b16 %v2065, %v2063
        %v2122 = vpack.c.b16 %v2066, %v2064
        %v2123 = vpack.c.b16 %v2069, %v2067
        %v2124 = vpack.c.b16 %v2070, %v2068
        %v2125 = vpack.c.b16 %v2073, %v2071
        %v2126 = vpack.c.b16 %v2074, %v2072
        %v2127 = vpack.c.b16 %v2077, %v2075
        %v2128 = vpack.c.b16 %v2078, %v2076
        %v2129 = vpack.c.b16 %v2081, %v2079
        %v2130 = vpack.c.b16 %v2082, %v2080
        %v2131 = vpack.c.b16 %v2085, %v2083
        %v2132 = vpack.c.b16 %v2086, %v2084
        %v2133 = vpack.c.b16 %v2089, %v2087
        %v2134 = vpack.c.b16 %v2090, %v2088
        %v2135 = vpack.c.b16 %v2093, %v2091
        %v2136 = vpack.c.b16 %v2094, %v2092
        %v2137 = vpack.c.b16 %v2097, %v2095
        %v2138 = vpack.c.b16 %v2098, %v2096
        %v2139 = vpack.c.b16 %v2101, %v2099
        %v2140 = vpack.c.b16 %v2102, %v2100
        %v2141 = vpack.c.b16 %v2105, %v2103
        %v2142 = vpack.c.b16 %v2106, %v2104
        %v2143 = vpack.c.b16 %v2109, %v2107
        %v2144 = vpack.c.b16 %v2110, %v2108
        %v2145 = vpack.c.b16 %v2113, %v2111
        %v2146 = vpack.c.b16 %v2114, %v2112
        %2179 = vmatpush.bf16.msra.mxu0 %v2129
        %2180 = vmatpush.bf16.msra.mxu0 %v2127
        %2181 = vmatpush.bf16.msra.mxu0 %v2125
        %2182 = vmatpush.bf16.msra.mxu0 %v2123
        %2183 = vmatpush.bf16.msra.mxu0 %v2121
        %2184 = vmatpush.bf16.msra.mxu0 %v2119
        %2185 = vmatpush.bf16.msra.mxu0 %v2117
        %2186 = vmatpush.bf16.msra.mxu0 %v2115
        %2187 = vmatmul.bf16.gmra.mxu0 %v1463
        %v2188 = vpop.f32.mrf.mxu0
        %v2189 = vadd.f32 %v2015, %v2188
        %v2190 = vpop.f32.mrf.mxu0
        %v2191 = vadd.f32 %v2015, %v2190
        %2192 = vdwg.mxu0
        %2193 = vmatpush.bf16.msra.mxu0 %v2145
        %2194 = vmatpush.bf16.msra.mxu0 %v2143
        %2195 = vmatpush.bf16.msra.mxu0 %v2141
        %2196 = vmatpush.bf16.msra.mxu0 %v2139
        %2197 = vmatpush.bf16.msra.mxu0 %v2137
        %2198 = vmatpush.bf16.msra.mxu0 %v2135
        %2199 = vmatpush.bf16.msra.mxu0 %v2133
        %2200 = vmatpush.bf16.msra.mxu0 %v2131
        %2201 = vmatmul.bf16.gmra.mxu0 %v1464
        %v2202 = vpop.f32.mrf.mxu0
        %v2203 = vadd.f32 %v2189, %v2202
        %v2204 = vpop.f32.mrf.mxu0
        %v2205 = vadd.f32 %v2191, %v2204
        %2206 = vdwg.mxu0
        %2207 = vmatpush.bf16.msra.mxu0 %v2130
        %2208 = vmatpush.bf16.msra.mxu0 %v2128
        %2209 = vmatpush.bf16.msra.mxu0 %v2126
        %2210 = vmatpush.bf16.msra.mxu0 %v2124
        %2211 = vmatpush.bf16.msra.mxu0 %v2122
        %2212 = vmatpush.bf16.msra.mxu0 %v2120
        %2213 = vmatpush.bf16.msra.mxu0 %v2118
        %2214 = vmatpush.bf16.msra.mxu0 %v2116
        %2215 = vmatmul.bf16.gmra.mxu0 %v1463
        %v2216 = vpop.f32.mrf.mxu0
        %v2217 = vadd.f32 %v2016, %v2216
        %v2218 = vpop.f32.mrf.mxu0
        %v2219 = vadd.f32 %v2016, %v2218
        %2220 = vdwg.mxu0
        %2221 = vmatpush.bf16.msra.mxu0 %v2146
        %2222 = vmatpush.bf16.msra.mxu0 %v2144
        %2223 = vmatpush.bf16.msra.mxu0 %v2142
        %2224 = vmatpush.bf16.msra.mxu0 %v2140
        %2225 = vmatpush.bf16.msra.mxu0 %v2138
        %2226 = vmatpush.bf16.msra.mxu0 %v2136
        %2227 = vmatpush.bf16.msra.mxu0 %v2134
        %2228 = vmatpush.bf16.msra.mxu0 %v2132
        %2229 = vmatmul.bf16.gmra.mxu0 %v1464
        %v2230 = vpop.f32.mrf.mxu0
        %v2231 = vadd.f32 %v2217, %v2230
        %v2232 = vpop.f32.mrf.mxu0
        %v2233 = vadd.f32 %v2219, %v2232
        %2234 = vdwg.mxu0
        %v2235 = vpack.c.bf16 %v2231, %v2203
        %v2236 = vpack.c.bf16 %v2233, %v2205
        %v2239 = vperm.slane %v1457, 0
        %v2240 = vperm.slane %v1458, 0
        %2243 = vmatpush.bf16.xpose.msra.mxu0 0
        %2244 = vmatpush.bf16.xpose.msra.mxu0 0
        %2245 = vmatpush.bf16.xpose.msra.mxu0 0
        %2246 = vmatpush.bf16.xpose.msra.mxu0 0
        %2247 = vmatpush.bf16.xpose.msra.mxu0 0
        %2248 = vmatpush.bf16.xpose.msra.mxu0 0
        %2249 = vmatpush.bf16.xpose.msra.mxu0 0
        %2250 = vmatpush.bf16.xpose.msra.mxu0 %v1979
        %2251 = vmatmul.bf16.gmra.mxu0 %v1723
        %v2252 = vpop.f32.mrf.mxu0
        %v2253 = vadd.f32 %v2239, %v2252
        %v2254 = vpop.f32.mrf.mxu0
        %2255 = vdwg.mxu0
        %2256 = vmatpush.bf16.xpose.msra.mxu0 0
        %2257 = vmatpush.bf16.xpose.msra.mxu0 0
        %2258 = vmatpush.bf16.xpose.msra.mxu0 0
        %2259 = vmatpush.bf16.xpose.msra.mxu0 0
        %2260 = vmatpush.bf16.xpose.msra.mxu0 0
        %2261 = vmatpush.bf16.xpose.msra.mxu0 0
        %2262 = vmatpush.bf16.xpose.msra.mxu0 0
        %2263 = vmatpush.bf16.xpose.msra.mxu0 %v1980
        %2264 = vmatmul.bf16.gmra.mxu0 %v1724
        %v2265 = vpop.f32.mrf.mxu0
        %v2266 = vadd.f32 %v2240, %v2265
        %v2267 = vpop.f32.mrf.mxu0
        %2268 = vdwg.mxu0
        %vm2269 = vcmask 64512
        %v2270 = vsel %vm2269, %v2253, -inf
        %2271 = vmax.xlane.f32.xlu0 %v2270
        %v2272 = vpop.xlane.xlu0 %2271
        %v2273 = vsel %vm2269, %v2266, -inf
        %2274 = vmax.xlane.f32.xlu0 %v2273
        %v2275 = vpop.xlane.xlu0 %2274
        %v2276 = vsub.f32 %v2253, %v2272
        %v2277 = vsub.f32 %v2266, %v2275
        %v2278 = vmul.f32 %v2276, 1.442695
        %v2279 = vpow.pop %v2278
        %v2280 = vmul.f32 %v2277, 1.442695
        %v2281 = vpow.pop %v2280
        %v2282 = vsel %vm2269, %v2279, 0.0
        %2283 = vadd.xlane.f32.xlu0 %v2282
        %v2284 = vpop.xlane.xlu0 %2283
        %v2285 = vsel %vm2269, %v2281, 0.0
        %2286 = vadd.xlane.f32.xlu0 %v2285
        %v2287 = vpop.xlane.xlu0 %2286
        %v2288 = vrcp.pop %v2284
        %v2289 = vrcp.pop %v2287
        %v2290 = vmul.f32 %v2279, %v2288
        %v2291 = vmul.f32 %v2281, %v2289
        %v2292 = vpack.c.bf16 %v2290, %v2290
        %v2293 = vpack.c.bf16 %v2291, %v2291
        %v2295 = vsel %vm2269, %v2292, 0
        %vm2297 = vcmask 1043456
        %v2299 = vsel %vm2297, %v2235, 0
        %2301 = vmatpush.bf16.msra.mxu0 0
        %2302 = vmatpush.bf16.msra.mxu0 0
        %2303 = vmatpush.bf16.msra.mxu0 0
        %2304 = vmatpush.bf16.msra.mxu0 0
        %2305 = vmatpush.bf16.msra.mxu0 0
        %2306 = vmatpush.bf16.msra.mxu0 0
        %2307 = vmatpush.bf16.msra.mxu0 0
        %2308 = vmatpush.bf16.msra.mxu0 %v2299
        %2309 = vmatmul.bf16.gmra.mxu0 %v2295
        %v2310 = vpop.f32.mrf.mxu0
        %v2311 = vadd.f32 0.0, %v2310
        %v2312 = vpop.f32.mrf.mxu0
        %2313 = vdwg.mxu0
        %v2315 = vsel %vm2269, %v2293, 0
        %v2318 = vsel %vm2297, %v2236, 0
        %2320 = vmatpush.bf16.msra.mxu0 0
        %2321 = vmatpush.bf16.msra.mxu0 0
        %2322 = vmatpush.bf16.msra.mxu0 0
        %2323 = vmatpush.bf16.msra.mxu0 0
        %2324 = vmatpush.bf16.msra.mxu0 0
        %2325 = vmatpush.bf16.msra.mxu0 0
        %2326 = vmatpush.bf16.msra.mxu0 0
        %2327 = vmatpush.bf16.msra.mxu0 %v2318
        %2328 = vmatmul.bf16.gmra.mxu0 %v2315
        %v2329 = vpop.f32.mrf.mxu0
        %v2330 = vadd.f32 0.0, %v2329
        %v2331 = vpop.f32.mrf.mxu0
        %2332 = vdwg.mxu0
        %v2333 = vpack.c.bf16 %v2311, %v2311
        %v2334 = vpack.c.bf16 %v2330, %v2330
        %2335 = vst [vmem:[#allocation5] sm:$0xf] %v2333
        %2336 = vst [vmem:[#allocation5 + $0x8] sm:$0xf] %v2334
        %v2338 = vrot.slane %v1723, 4
        %v2341 = vrot.slane %v1979, 4
        %2343 = vmatpush.bf16.xpose.msra.mxu0 0
        %2344 = vmatpush.bf16.xpose.msra.mxu0 0
        %2345 = vmatpush.bf16.xpose.msra.mxu0 0
        %2346 = vmatpush.bf16.xpose.msra.mxu0 0
        %2347 = vmatpush.bf16.xpose.msra.mxu0 0
        %2348 = vmatpush.bf16.xpose.msra.mxu0 0
        %2349 = vmatpush.bf16.xpose.msra.mxu0 0
        %2350 = vmatpush.bf16.xpose.msra.mxu0 %v2341
        %2351 = vmatmul.bf16.gmra.mxu0 %v2338
        %v2352 = vpop.f32.mrf.mxu0
        %v2353 = vadd.f32 %v2239, %v2352
        %v2354 = vpop.f32.mrf.mxu0
        %2355 = vdwg.mxu0
        %v2357 = vrot.slane %v1724, 4
        %v2360 = vrot.slane %v1980, 4
        %2362 = vmatpush.bf16.xpose.msra.mxu0 0
        %2363 = vmatpush.bf16.xpose.msra.mxu0 0
        %2364 = vmatpush.bf16.xpose.msra.mxu0 0
        %2365 = vmatpush.bf16.xpose.msra.mxu0 0
        %2366 = vmatpush.bf16.xpose.msra.mxu0 0
        %2367 = vmatpush.bf16.xpose.msra.mxu0 0
        %2368 = vmatpush.bf16.xpose.msra.mxu0 0
        %2369 = vmatpush.bf16.xpose.msra.mxu0 %v2360
        %2370 = vmatmul.bf16.gmra.mxu0 %v2357
        %v2371 = vpop.f32.mrf.mxu0
        %v2372 = vadd.f32 %v2240, %v2371
        %v2373 = vpop.f32.mrf.mxu0
        %2374 = vdwg.mxu0
        %v2375 = vsel %vm2269, %v2353, -inf
        %2376 = vmax.xlane.f32.xlu0 %v2375
        %v2377 = vpop.xlane.xlu0 %2376
        %v2378 = vsel %vm2269, %v2372, -inf
        %2379 = vmax.xlane.f32.xlu0 %v2378
        %v2380 = vpop.xlane.xlu0 %2379
        %v2381 = vsub.f32 %v2353, %v2377
        %v2382 = vsub.f32 %v2372, %v2380
        %v2383 = vmul.f32 %v2381, 1.442695
        %v2384 = vpow.pop %v2383
        %v2385 = vmul.f32 %v2382, 1.442695
        %v2386 = vpow.pop %v2385
        %v2387 = vsel %vm2269, %v2384, 0.0
        %2388 = vadd.xlane.f32.xlu0 %v2387
        %v2389 = vpop.xlane.xlu0 %2388
        %v2390 = vsel %vm2269, %v2386, 0.0
        %2391 = vadd.xlane.f32.xlu0 %v2390
        %v2392 = vpop.xlane.xlu0 %2391
        %v2393 = vrcp.pop %v2389
        %v2394 = vrcp.pop %v2392
        %v2395 = vmul.f32 %v2384, %v2393
        %v2396 = vmul.f32 %v2386, %v2394
        %v2397 = vpack.c.bf16 %v2395, %v2395
        %v2398 = vpack.c.bf16 %v2396, %v2396
        %v2400 = vrot.slane %v2235, 4
        %v2402 = vsel %vm2269, %v2397, 0
        %v2405 = vsel %vm2297, %v2400, 0
        %2407 = vmatpush.bf16.msra.mxu0 0
        %2408 = vmatpush.bf16.msra.mxu0 0
        %2409 = vmatpush.bf16.msra.mxu0 0
        %2410 = vmatpush.bf16.msra.mxu0 0
        %2411 = vmatpush.bf16.msra.mxu0 0
        %2412 = vmatpush.bf16.msra.mxu0 0
        %2413 = vmatpush.bf16.msra.mxu0 0
        %2414 = vmatpush.bf16.msra.mxu0 %v2405
        %2415 = vmatmul.bf16.gmra.mxu0 %v2402
        %v2416 = vpop.f32.mrf.mxu0
        %v2417 = vadd.f32 0.0, %v2416
        %v2418 = vpop.f32.mrf.mxu0
        %2419 = vdwg.mxu0
        %v2421 = vrot.slane %v2236, 4
        %v2423 = vsel %vm2269, %v2398, 0
        %v2426 = vsel %vm2297, %v2421, 0
        %2428 = vmatpush.bf16.msra.mxu0 0
        %2429 = vmatpush.bf16.msra.mxu0 0
        %2430 = vmatpush.bf16.msra.mxu0 0
        %2431 = vmatpush.bf16.msra.mxu0 0
        %2432 = vmatpush.bf16.msra.mxu0 0
        %2433 = vmatpush.bf16.msra.mxu0 0
        %2434 = vmatpush.bf16.msra.mxu0 0
        %2435 = vmatpush.bf16.msra.mxu0 %v2426
        %2436 = vmatmul.bf16.gmra.mxu0 %v2423
        %v2437 = vpop.f32.mrf.mxu0
        %v2438 = vadd.f32 0.0, %v2437
        %v2439 = vpop.f32.mrf.mxu0
        %2440 = vdwg.mxu0
        %v2441 = vpack.c.bf16 %v2417, %v2417
        %v2442 = vpack.c.bf16 %v2438, %v2438
        %2443 = vst [vmem:[#allocation5 + $0x4] sm:$0xf] %v2441
        %2444 = vst [vmem:[#allocation5 + $0xc] sm:$0xf] %v2442
        %v2445 = vld [vmem:[#allocation5] sm:$0xff]
        %v2446 = vld [vmem:[#allocation5 + $0x8] sm:$0xff]
        %v2447 = vld [vmem:[%s1064] sm:$0xff]
        %v2448 = vld [vmem:[%s1064 + $0x8] sm:$0xff]
        %v2449 = vld [vmem:[%s1064 + $0x10] sm:$0xff]
        %v2450 = vld [vmem:[%s1064 + $0x18] sm:$0xff]
        %v2451 = vld [vmem:[%s1064 + $0x20] sm:$0xff]
        %v2452 = vld [vmem:[%s1064 + $0x28] sm:$0xff]
        %v2453 = vld [vmem:[%s1064 + $0x30] sm:$0xff]
        %v2454 = vld [vmem:[%s1064 + $0x38] sm:$0xff]
        %v2455 = vld [vmem:[%s1064 + $0x40] sm:$0xff]
        %v2456 = vld [vmem:[%s1064 + $0x48] sm:$0xff]
        %v2457 = vld [vmem:[%s1064 + $0x50] sm:$0xff]
        %v2458 = vld [vmem:[%s1064 + $0x58] sm:$0xff]
        %v2459 = vld [vmem:[%s1064 + $0x60] sm:$0xff]
        %v2460 = vld [vmem:[%s1064 + $0x68] sm:$0xff]
        %v2461 = vld [vmem:[%s1064 + $0x70] sm:$0xff]
        %v2462 = vld [vmem:[%s1064 + $0x78] sm:$0xff]
        %v2463 = vld [vmem:[%s1064 + $0x80] sm:$0xff]
        %v2464 = vld [vmem:[%s1064 + $0x88] sm:$0xff]
        %v2465 = vld [vmem:[%s1064 + $0x90] sm:$0xff]
        %v2466 = vld [vmem:[%s1064 + $0x98] sm:$0xff]
        %v2467 = vld [vmem:[%s1064 + $0xa0] sm:$0xff]
        %v2468 = vld [vmem:[%s1064 + $0xa8] sm:$0xff]
        %v2469 = vld [vmem:[%s1064 + $0xb0] sm:$0xff]
        %v2470 = vld [vmem:[%s1064 + $0xb8] sm:$0xff]
        %v2471 = vld [vmem:[%s1064 + $0xc0] sm:$0xff]
        %v2472 = vld [vmem:[%s1064 + $0xc8] sm:$0xff]
        %v2473 = vld [vmem:[%s1064 + $0xd0] sm:$0xff]
        %v2474 = vld [vmem:[%s1064 + $0xd8] sm:$0xff]
        %v2475 = vld [vmem:[%s1064 + $0xe0] sm:$0xff]
        %v2476 = vld [vmem:[%s1064 + $0xe8] sm:$0xff]
        %v2477 = vld [vmem:[%s1064 + $0xf0] sm:$0xff]
        %v2478 = vld [vmem:[%s1064 + $0xf8] sm:$0xff]
        %v2479 = vld [vmem:[%s1074] sm:$0x3]
        %v2481 = vperm.slane %v2479, 0
        %v2482 = vperm.slane %v2479, 1
        %v2487 = vunpack.c.l.b16 %v2445
        %v2488 = vunpack.c.h.b16 %v2445
        %v2489 = vunpack.c.l.b16 %v2446
        %v2490 = vunpack.c.h.b16 %v2446
        %v2491 = vpack.c.b16 %v2489, %v2487
        %v2492 = vpack.c.b16 %v2490, %v2488
        %v2527 = vunpack.c.l.b16 %v2447
        %v2528 = vunpack.c.h.b16 %v2447
        %v2529 = vunpack.c.l.b16 %v2448
        %v2530 = vunpack.c.h.b16 %v2448
        %v2531 = vunpack.c.l.b16 %v2449
        %v2532 = vunpack.c.h.b16 %v2449
        %v2533 = vunpack.c.l.b16 %v2450
        %v2534 = vunpack.c.h.b16 %v2450
        %v2535 = vunpack.c.l.b16 %v2451
        %v2536 = vunpack.c.h.b16 %v2451
        %v2537 = vunpack.c.l.b16 %v2452
        %v2538 = vunpack.c.h.b16 %v2452
        %v2539 = vunpack.c.l.b16 %v2453
        %v2540 = vunpack.c.h.b16 %v2453
        %v2541 = vunpack.c.l.b16 %v2454
        %v2542 = vunpack.c.h.b16 %v2454
        %v2543 = vunpack.c.l.b16 %v2455
        %v2544 = vunpack.c.h.b16 %v2455
        %v2545 = vunpack.c.l.b16 %v2456
        %v2546 = vunpack.c.h.b16 %v2456
        %v2547 = vunpack.c.l.b16 %v2457
        %v2548 = vunpack.c.h.b16 %v2457
        %v2549 = vunpack.c.l.b16 %v2458
        %v2550 = vunpack.c.h.b16 %v2458
        %v2551 = vunpack.c.l.b16 %v2459
        %v2552 = vunpack.c.h.b16 %v2459
        %v2553 = vunpack.c.l.b16 %v2460
        %v2554 = vunpack.c.h.b16 %v2460
        %v2555 = vunpack.c.l.b16 %v2461
        %v2556 = vunpack.c.h.b16 %v2461
        %v2557 = vunpack.c.l.b16 %v2462
        %v2558 = vunpack.c.h.b16 %v2462
        %v2559 = vunpack.c.l.b16 %v2463
        %v2560 = vunpack.c.h.b16 %v2463
        %v2561 = vunpack.c.l.b16 %v2464
        %v2562 = vunpack.c.h.b16 %v2464
        %v2563 = vunpack.c.l.b16 %v2465
        %v2564 = vunpack.c.h.b16 %v2465
        %v2565 = vunpack.c.l.b16 %v2466
        %v2566 = vunpack.c.h.b16 %v2466
        %v2567 = vunpack.c.l.b16 %v2467
        %v2568 = vunpack.c.h.b16 %v2467
        %v2569 = vunpack.c.l.b16 %v2468
        %v2570 = vunpack.c.h.b16 %v2468
        %v2571 = vunpack.c.l.b16 %v2469
        %v2572 = vunpack.c.h.b16 %v2469
        %v2573 = vunpack.c.l.b16 %v2470
        %v2574 = vunpack.c.h.b16 %v2470
        %v2575 = vunpack.c.l.b16 %v2471
        %v2576 = vunpack.c.h.b16 %v2471
        %v2577 = vunpack.c.l.b16 %v2472
        %v2578 = vunpack.c.h.b16 %v2472
        %v2579 = vunpack.c.l.b16 %v2473
        %v2580 = vunpack.c.h.b16 %v2473
        %v2581 = vunpack.c.l.b16 %v2474
        %v2582 = vunpack.c.h.b16 %v2474
        %v2583 = vunpack.c.l.b16 %v2475
        %v2584 = vunpack.c.h.b16 %v2475
        %v2585 = vunpack.c.l.b16 %v2476
        %v2586 = vunpack.c.h.b16 %v2476
        %v2587 = vunpack.c.l.b16 %v2477
        %v2588 = vunpack.c.h.b16 %v2477
        %v2589 = vunpack.c.l.b16 %v2478
        %v2590 = vunpack.c.h.b16 %v2478
        %v2591 = vpack.c.b16 %v2529, %v2527
        %v2592 = vpack.c.b16 %v2530, %v2528
        %v2593 = vpack.c.b16 %v2533, %v2531
        %v2594 = vpack.c.b16 %v2534, %v2532
        %v2595 = vpack.c.b16 %v2537, %v2535
        %v2596 = vpack.c.b16 %v2538, %v2536
        %v2597 = vpack.c.b16 %v2541, %v2539
        %v2598 = vpack.c.b16 %v2542, %v2540
        %v2599 = vpack.c.b16 %v2545, %v2543
        %v2600 = vpack.c.b16 %v2546, %v2544
        %v2601 = vpack.c.b16 %v2549, %v2547
        %v2602 = vpack.c.b16 %v2550, %v2548
        %v2603 = vpack.c.b16 %v2553, %v2551
        %v2604 = vpack.c.b16 %v2554, %v2552
        %v2605 = vpack.c.b16 %v2557, %v2555
        %v2606 = vpack.c.b16 %v2558, %v2556
        %v2607 = vpack.c.b16 %v2561, %v2559
        %v2608 = vpack.c.b16 %v2562, %v2560
        %v2609 = vpack.c.b16 %v2565, %v2563
        %v2610 = vpack.c.b16 %v2566, %v2564
        %v2611 = vpack.c.b16 %v2569, %v2567
        %v2612 = vpack.c.b16 %v2570, %v2568
        %v2613 = vpack.c.b16 %v2573, %v2571
        %v2614 = vpack.c.b16 %v2574, %v2572
        %v2615 = vpack.c.b16 %v2577, %v2575
        %v2616 = vpack.c.b16 %v2578, %v2576
        %v2617 = vpack.c.b16 %v2581, %v2579
        %v2618 = vpack.c.b16 %v2582, %v2580
        %v2619 = vpack.c.b16 %v2585, %v2583
        %v2620 = vpack.c.b16 %v2586, %v2584
        %v2621 = vpack.c.b16 %v2589, %v2587
        %v2622 = vpack.c.b16 %v2590, %v2588
        %2655 = vmatpush.bf16.msra.mxu0 %v2605
        %2656 = vmatpush.bf16.msra.mxu0 %v2603
        %2657 = vmatpush.bf16.msra.mxu0 %v2601
        %2658 = vmatpush.bf16.msra.mxu0 %v2599
        %2659 = vmatpush.bf16.msra.mxu0 %v2597
        %2660 = vmatpush.bf16.msra.mxu0 %v2595
        %2661 = vmatpush.bf16.msra.mxu0 %v2593
        %2662 = vmatpush.bf16.msra.mxu0 %v2591
        %2663 = vmatmul.bf16.gmra.mxu0 %v2491
        %v2664 = vpop.f32.mrf.mxu0
        %v2665 = vadd.f32 %v2481, %v2664
        %v2666 = vpop.f32.mrf.mxu0
        %v2667 = vadd.f32 %v2481, %v2666
        %2668 = vdwg.mxu0
        %2669 = vmatpush.bf16.msra.mxu0 %v2621
        %2670 = vmatpush.bf16.msra.mxu0 %v2619
        %2671 = vmatpush.bf16.msra.mxu0 %v2617
        %2672 = vmatpush.bf16.msra.mxu0 %v2615
        %2673 = vmatpush.bf16.msra.mxu0 %v2613
        %2674 = vmatpush.bf16.msra.mxu0 %v2611
        %2675 = vmatpush.bf16.msra.mxu0 %v2609
        %2676 = vmatpush.bf16.msra.mxu0 %v2607
        %2677 = vmatmul.bf16.gmra.mxu0 %v2492
        %v2678 = vpop.f32.mrf.mxu0
        %v2679 = vadd.f32 %v2665, %v2678
        %v2680 = vpop.f32.mrf.mxu0
        %v2681 = vadd.f32 %v2667, %v2680
        %2682 = vdwg.mxu0
        %2683 = vmatpush.bf16.msra.mxu0 %v2606
        %2684 = vmatpush.bf16.msra.mxu0 %v2604
        %2685 = vmatpush.bf16.msra.mxu0 %v2602
        %2686 = vmatpush.bf16.msra.mxu0 %v2600
        %2687 = vmatpush.bf16.msra.mxu0 %v2598
        %2688 = vmatpush.bf16.msra.mxu0 %v2596
        %2689 = vmatpush.bf16.msra.mxu0 %v2594
        %2690 = vmatpush.bf16.msra.mxu0 %v2592
        %2691 = vmatmul.bf16.gmra.mxu0 %v2491
        %v2692 = vpop.f32.mrf.mxu0
        %v2693 = vadd.f32 %v2482, %v2692
        %v2694 = vpop.f32.mrf.mxu0
        %v2695 = vadd.f32 %v2482, %v2694
        %2696 = vdwg.mxu0
        %2697 = vmatpush.bf16.msra.mxu0 %v2622
        %2698 = vmatpush.bf16.msra.mxu0 %v2620
        %2699 = vmatpush.bf16.msra.mxu0 %v2618
        %2700 = vmatpush.bf16.msra.mxu0 %v2616
        %2701 = vmatpush.bf16.msra.mxu0 %v2614
        %2702 = vmatpush.bf16.msra.mxu0 %v2612
        %2703 = vmatpush.bf16.msra.mxu0 %v2610
        %2704 = vmatpush.bf16.msra.mxu0 %v2608
        %2705 = vmatmul.bf16.gmra.mxu0 %v2492
        %v2706 = vpop.f32.mrf.mxu0
        %v2707 = vadd.f32 %v2693, %v2706
        %v2708 = vpop.f32.mrf.mxu0
        %v2709 = vadd.f32 %v2695, %v2708
        %2710 = vdwg.mxu0
        %v2711 = vadd.f32 %v1459, %v2679
        %v2712 = vadd.f32 %v1460, %v2707
        %v2713 = vadd.f32 %v1461, %v2681
        %v2714 = vadd.f32 %v1462, %v2709
        %v2715 = vld [vmem:[%s1279] sm:$0x3]
        %v2716 = vld [vmem:[%s1084] sm:$0x3]
        %v2717 = vadd.f32 %v2711, %v2712
        %2718 = vadd.xlane.f32.xlu0 %v2717
        %v2719 = vpop.xlane.xlu0 %2718
        %v2720 = vadd.f32 %v2713, %v2714
        %2721 = vadd.xlane.f32.xlu0 %v2720
        %v2722 = vpop.xlane.xlu0 %2721
        %v2723 = vrcp.pop 256.0
        %v2724 = vmul.f32 256.0, %v2723
        %v2725 = vsub.f32 1.0, %v2724
        %v2726 = vmul.f32 %v2723, %v2725
        %v2727 = vadd.f32 %v2723, %v2726
        %vm2728 = vweird.f32 %v2723
        %v2729 = vsel %vm2728, %v2723, %v2727
        %v2730 = vmul.f32 %v2719, %v2729
        %v2731 = vmul.f32 %v2722, %v2729
        %v2732 = vsub.f32 %v2711, %v2730
        %v2733 = vsub.f32 %v2712, %v2730
        %v2734 = vsub.f32 %v2713, %v2731
        %v2735 = vsub.f32 %v2714, %v2731
        %v2736 = vmul.f32 %v2732, %v2732
        %v2737 = vmul.f32 %v2733, %v2733
        %v2738 = vmul.f32 %v2734, %v2734
        %v2739 = vmul.f32 %v2735, %v2735
        %v2740 = vadd.f32 %v2736, %v2737
        %2741 = vadd.xlane.f32.xlu0 %v2740
        %v2742 = vpop.xlane.xlu0 %2741
        %v2743 = vadd.f32 %v2738, %v2739
        %2744 = vadd.xlane.f32.xlu0 %v2743
        %v2745 = vpop.xlane.xlu0 %2744
        %v2746 = vmul.f32 %v2742, %v2729
        %v2747 = vmul.f32 %v2745, %v2729
        %v2748 = vadd.f32 %v2746, 1e-12
        %v2749 = vadd.f32 %v2747, 1e-12
        %v2750 = vrsqrt.pop %v2748
        %v2751 = vmul.f32 %v2750, %v2748
        %v2752 = vmul.f32 %v2751, %v2750
        %v2753 = vmul.f32 0.5, %v2752
        %v2754 = vsub.f32 1.5, %v2753
        %v2755 = vmul.f32 %v2750, %v2754
        %vm2756 = vweird.f32 %v2748
        %vm2757 = vweird.f32 %v2750
        %vm2758 = vmor %vm2756, %vm2757
        %v2759 = vsel %vm2758, %v2750, %v2755
        %v2760 = vrsqrt.pop %v2749
        %v2761 = vmul.f32 %v2760, %v2749
        %v2762 = vmul.f32 %v2761, %v2760
        %v2763 = vmul.f32 0.5, %v2762
        %v2764 = vsub.f32 1.5, %v2763
        %v2765 = vmul.f32 %v2760, %v2764
        %vm2766 = vweird.f32 %v2749
        %vm2767 = vweird.f32 %v2760
        %vm2768 = vmor %vm2766, %vm2767
        %v2769 = vsel %vm2768, %v2760, %v2765
        %v2770 = vmul.f32 %v2732, %v2759
        %v2771 = vmul.f32 %v2733, %v2759
        %v2772 = vmul.f32 %v2734, %v2769
        %v2773 = vmul.f32 %v2735, %v2769
        %v2775 = vperm.slane %v2715, 0
        %v2776 = vperm.slane %v2715, 1
        %v2779 = vmul.f32 %v2770, %v2775
        %v2780 = vmul.f32 %v2771, %v2776
        %v2781 = vmul.f32 %v2772, %v2775
        %v2782 = vmul.f32 %v2773, %v2776
        %v2784 = vperm.slane %v2716, 0
        %v2785 = vperm.slane %v2716, 1
        %v2788 = vadd.f32 %v2779, %v2784
        %v2789 = vadd.f32 %v2780, %v2785
        %v2790 = vadd.f32 %v2781, %v2784
        %v2791 = vadd.f32 %v2782, %v2785
        %v2792 = vpack.c.bf16 %v2790, %v2788
        %v2793 = vpack.c.bf16 %v2791, %v2789
        %v2794 = vld [vmem:[%s1094] sm:$0xff]
        %v2795 = vld [vmem:[%s1094 + $0x8] sm:$0xff]
        %v2796 = vld [vmem:[%s1094 + $0x10] sm:$0xff]
        %v2797 = vld [vmem:[%s1094 + $0x18] sm:$0xff]
        %v2798 = vld [vmem:[%s1094 + $0x20] sm:$0xff]
        %v2799 = vld [vmem:[%s1094 + $0x28] sm:$0xff]
        %v2800 = vld [vmem:[%s1094 + $0x30] sm:$0xff]
        %v2801 = vld [vmem:[%s1094 + $0x38] sm:$0xff]
        %v2802 = vld [vmem:[%s1094 + $0x40] sm:$0xff]
        %v2803 = vld [vmem:[%s1094 + $0x48] sm:$0xff]
        %v2804 = vld [vmem:[%s1094 + $0x50] sm:$0xff]
        %v2805 = vld [vmem:[%s1094 + $0x58] sm:$0xff]
        %v2806 = vld [vmem:[%s1094 + $0x60] sm:$0xff]
        %v2807 = vld [vmem:[%s1094 + $0x68] sm:$0xff]
        %v2808 = vld [vmem:[%s1094 + $0x70] sm:$0xff]
        %v2809 = vld [vmem:[%s1094 + $0x78] sm:$0xff]
        %v2810 = vld [vmem:[%s1094 + $0x80] sm:$0xff]
        %v2811 = vld [vmem:[%s1094 + $0x88] sm:$0xff]
        %v2812 = vld [vmem:[%s1094 + $0x90] sm:$0xff]
        %v2813 = vld [vmem:[%s1094 + $0x98] sm:$0xff]
        %v2814 = vld [vmem:[%s1094 + $0xa0] sm:$0xff]
        %v2815 = vld [vmem:[%s1094 + $0xa8] sm:$0xff]
        %v2816 = vld [vmem:[%s1094 + $0xb0] sm:$0xff]
        %v2817 = vld [vmem:[%s1094 + $0xb8] sm:$0xff]
        %v2818 = vld [vmem:[%s1094 + $0xc0] sm:$0xff]
        %v2819 = vld [vmem:[%s1094 + $0xc8] sm:$0xff]
        %v2820 = vld [vmem:[%s1094 + $0xd0] sm:$0xff]
        %v2821 = vld [vmem:[%s1094 + $0xd8] sm:$0xff]
        %v2822 = vld [vmem:[%s1094 + $0xe0] sm:$0xff]
        %v2823 = vld [vmem:[%s1094 + $0xe8] sm:$0xff]
        %v2824 = vld [vmem:[%s1094 + $0xf0] sm:$0xff]
        %v2825 = vld [vmem:[%s1094 + $0xf8] sm:$0xff]
        %v2826 = vld [vmem:[%s1094 + $0x100] sm:$0xff]
        %v2827 = vld [vmem:[%s1094 + $0x108] sm:$0xff]
        %v2828 = vld [vmem:[%s1094 + $0x110] sm:$0xff]
        %v2829 = vld [vmem:[%s1094 + $0x118] sm:$0xff]
        %v2830 = vld [vmem:[%s1094 + $0x120] sm:$0xff]
        %v2831 = vld [vmem:[%s1094 + $0x128] sm:$0xff]
        %v2832 = vld [vmem:[%s1094 + $0x130] sm:$0xff]
        %v2833 = vld [vmem:[%s1094 + $0x138] sm:$0xff]
        %v2834 = vld [vmem:[%s1094 + $0x140] sm:$0xff]
        %v2835 = vld [vmem:[%s1094 + $0x148] sm:$0xff]
        %v2836 = vld [vmem:[%s1094 + $0x150] sm:$0xff]
        %v2837 = vld [vmem:[%s1094 + $0x158] sm:$0xff]
        %v2838 = vld [vmem:[%s1094 + $0x160] sm:$0xff]
        %v2839 = vld [vmem:[%s1094 + $0x168] sm:$0xff]
        %v2840 = vld [vmem:[%s1094 + $0x170] sm:$0xff]
        %v2841 = vld [vmem:[%s1094 + $0x178] sm:$0xff]
        %v2842 = vld [vmem:[%s1094 + $0x180] sm:$0xff]
        %v2843 = vld [vmem:[%s1094 + $0x188] sm:$0xff]
        %v2844 = vld [vmem:[%s1094 + $0x190] sm:$0xff]
        %v2845 = vld [vmem:[%s1094 + $0x198] sm:$0xff]
        %v2846 = vld [vmem:[%s1094 + $0x1a0] sm:$0xff]
        %v2847 = vld [vmem:[%s1094 + $0x1a8] sm:$0xff]
        %v2848 = vld [vmem:[%s1094 + $0x1b0] sm:$0xff]
        %v2849 = vld [vmem:[%s1094 + $0x1b8] sm:$0xff]
        %v2850 = vld [vmem:[%s1094 + $0x1c0] sm:$0xff]
        %v2851 = vld [vmem:[%s1094 + $0x1c8] sm:$0xff]
        %v2852 = vld [vmem:[%s1094 + $0x1d0] sm:$0xff]
        %v2853 = vld [vmem:[%s1094 + $0x1d8] sm:$0xff]
        %v2854 = vld [vmem:[%s1094 + $0x1e0] sm:$0xff]
        %v2855 = vld [vmem:[%s1094 + $0x1e8] sm:$0xff]
        %v2856 = vld [vmem:[%s1094 + $0x1f0] sm:$0xff]
        %v2857 = vld [vmem:[%s1094 + $0x1f8] sm:$0xff]
        %v2858 = vld [vmem:[%s1094 + $0x200] sm:$0xff]
        %v2859 = vld [vmem:[%s1094 + $0x208] sm:$0xff]
        %v2860 = vld [vmem:[%s1094 + $0x210] sm:$0xff]
        %v2861 = vld [vmem:[%s1094 + $0x218] sm:$0xff]
        %v2862 = vld [vmem:[%s1094 + $0x220] sm:$0xff]
        %v2863 = vld [vmem:[%s1094 + $0x228] sm:$0xff]
        %v2864 = vld [vmem:[%s1094 + $0x230] sm:$0xff]
        %v2865 = vld [vmem:[%s1094 + $0x238] sm:$0xff]
        %v2866 = vld [vmem:[%s1094 + $0x240] sm:$0xff]
        %v2867 = vld [vmem:[%s1094 + $0x248] sm:$0xff]
        %v2868 = vld [vmem:[%s1094 + $0x250] sm:$0xff]
        %v2869 = vld [vmem:[%s1094 + $0x258] sm:$0xff]
        %v2870 = vld [vmem:[%s1094 + $0x260] sm:$0xff]
        %v2871 = vld [vmem:[%s1094 + $0x268] sm:$0xff]
        %v2872 = vld [vmem:[%s1094 + $0x270] sm:$0xff]
        %v2873 = vld [vmem:[%s1094 + $0x278] sm:$0xff]
        %v2874 = vld [vmem:[%s1094 + $0x280] sm:$0xff]
        %v2875 = vld [vmem:[%s1094 + $0x288] sm:$0xff]
        %v2876 = vld [vmem:[%s1094 + $0x290] sm:$0xff]
        %v2877 = vld [vmem:[%s1094 + $0x298] sm:$0xff]
        %v2878 = vld [vmem:[%s1094 + $0x2a0] sm:$0xff]
        %v2879 = vld [vmem:[%s1094 + $0x2a8] sm:$0xff]
        %v2880 = vld [vmem:[%s1094 + $0x2b0] sm:$0xff]
        %v2881 = vld [vmem:[%s1094 + $0x2b8] sm:$0xff]
        %v2882 = vld [vmem:[%s1094 + $0x2c0] sm:$0xff]
        %v2883 = vld [vmem:[%s1094 + $0x2c8] sm:$0xff]
        %v2884 = vld [vmem:[%s1094 + $0x2d0] sm:$0xff]
        %v2885 = vld [vmem:[%s1094 + $0x2d8] sm:$0xff]
        %v2886 = vld [vmem:[%s1094 + $0x2e0] sm:$0xff]
        %v2887 = vld [vmem:[%s1094 + $0x2e8] sm:$0xff]
        %v2888 = vld [vmem:[%s1094 + $0x2f0] sm:$0xff]
        %v2889 = vld [vmem:[%s1094 + $0x2f8] sm:$0xff]
        %v2890 = vld [vmem:[%s1094 + $0x300] sm:$0xff]
        %v2891 = vld [vmem:[%s1094 + $0x308] sm:$0xff]
        %v2892 = vld [vmem:[%s1094 + $0x310] sm:$0xff]
        %v2893 = vld [vmem:[%s1094 + $0x318] sm:$0xff]
        %v2894 = vld [vmem:[%s1094 + $0x320] sm:$0xff]
        %v2895 = vld [vmem:[%s1094 + $0x328] sm:$0xff]
        %v2896 = vld [vmem:[%s1094 + $0x330] sm:$0xff]
        %v2897 = vld [vmem:[%s1094 + $0x338] sm:$0xff]
        %v2898 = vld [vmem:[%s1094 + $0x340] sm:$0xff]
        %v2899 = vld [vmem:[%s1094 + $0x348] sm:$0xff]
        %v2900 = vld [vmem:[%s1094 + $0x350] sm:$0xff]
        %v2901 = vld [vmem:[%s1094 + $0x358] sm:$0xff]
        %v2902 = vld [vmem:[%s1094 + $0x360] sm:$0xff]
        %v2903 = vld [vmem:[%s1094 + $0x368] sm:$0xff]
        %v2904 = vld [vmem:[%s1094 + $0x370] sm:$0xff]
        %v2905 = vld [vmem:[%s1094 + $0x378] sm:$0xff]
        %v2906 = vld [vmem:[%s1094 + $0x380] sm:$0xff]
        %v2907 = vld [vmem:[%s1094 + $0x388] sm:$0xff]
        %v2908 = vld [vmem:[%s1094 + $0x390] sm:$0xff]
        %v2909 = vld [vmem:[%s1094 + $0x398] sm:$0xff]
        %v2910 = vld [vmem:[%s1094 + $0x3a0] sm:$0xff]
        %v2911 = vld [vmem:[%s1094 + $0x3a8] sm:$0xff]
        %v2912 = vld [vmem:[%s1094 + $0x3b0] sm:$0xff]
        %v2913 = vld [vmem:[%s1094 + $0x3b8] sm:$0xff]
        %v2914 = vld [vmem:[%s1094 + $0x3c0] sm:$0xff]
        %v2915 = vld [vmem:[%s1094 + $0x3c8] sm:$0xff]
        %v2916 = vld [vmem:[%s1094 + $0x3d0] sm:$0xff]
        %v2917 = vld [vmem:[%s1094 + $0x3d8] sm:$0xff]
        %v2918 = vld [vmem:[%s1094 + $0x3e0] sm:$0xff]
        %v2919 = vld [vmem:[%s1094 + $0x3e8] sm:$0xff]
        %v2920 = vld [vmem:[%s1094 + $0x3f0] sm:$0xff]
        %v2921 = vld [vmem:[%s1094 + $0x3f8] sm:$0xff]
        %v2922 = vld [vmem:[%s1104] sm:$0xff]
        %v2924 = vperm.slane %v2922, 0
        %v2925 = vperm.slane %v2922, 1
        %v2926 = vperm.slane %v2922, 2
        %v2927 = vperm.slane %v2922, 3
        %v2928 = vperm.slane %v2922, 4
        %v2929 = vperm.slane %v2922, 5
        %v2930 = vperm.slane %v2922, 6
        %v2931 = vperm.slane %v2922, 7
        %v3068 = vunpack.c.l.b16 %v2794
        %v3069 = vunpack.c.h.b16 %v2794
        %v3070 = vunpack.c.l.b16 %v2795
        %v3071 = vunpack.c.h.b16 %v2795
        %v3072 = vunpack.c.l.b16 %v2796
        %v3073 = vunpack.c.h.b16 %v2796
        %v3074 = vunpack.c.l.b16 %v2797
        %v3075 = vunpack.c.h.b16 %v2797
        %v3076 = vunpack.c.l.b16 %v2798
        %v3077 = vunpack.c.h.b16 %v2798
        %v3078 = vunpack.c.l.b16 %v2799
        %v3079 = vunpack.c.h.b16 %v2799
        %v3080 = vunpack.c.l.b16 %v2800
        %v3081 = vunpack.c.h.b16 %v2800
        %v3082 = vunpack.c.l.b16 %v2801
        %v3083 = vunpack.c.h.b16 %v2801
        %v3084 = vunpack.c.l.b16 %v2802
        %v3085 = vunpack.c.h.b16 %v2802
        %v3086 = vunpack.c.l.b16 %v2803
        %v3087 = vunpack.c.h.b16 %v2803
        %v3088 = vunpack.c.l.b16 %v2804
        %v3089 = vunpack.c.h.b16 %v2804
        %v3090 = vunpack.c.l.b16 %v2805
        %v3091 = vunpack.c.h.b16 %v2805
        %v3092 = vunpack.c.l.b16 %v2806
        %v3093 = vunpack.c.h.b16 %v2806
        %v3094 = vunpack.c.l.b16 %v2807
        %v3095 = vunpack.c.h.b16 %v2807
        %v3096 = vunpack.c.l.b16 %v2808
        %v3097 = vunpack.c.h.b16 %v2808
        %v3098 = vunpack.c.l.b16 %v2809
        %v3099 = vunpack.c.h.b16 %v2809
        %v3100 = vunpack.c.l.b16 %v2810
        %v3101 = vunpack.c.h.b16 %v2810
        %v3102 = vunpack.c.l.b16 %v2811
        %v3103 = vunpack.c.h.b16 %v2811
        %v3104 = vunpack.c.l.b16 %v2812
        %v3105 = vunpack.c.h.b16 %v2812
        %v3106 = vunpack.c.l.b16 %v2813
        %v3107 = vunpack.c.h.b16 %v2813
        %v3108 = vunpack.c.l.b16 %v2814
        %v3109 = vunpack.c.h.b16 %v2814
        %v3110 = vunpack.c.l.b16 %v2815
        %v3111 = vunpack.c.h.b16 %v2815
        %v3112 = vunpack.c.l.b16 %v2816
        %v3113 = vunpack.c.h.b16 %v2816
        %v3114 = vunpack.c.l.b16 %v2817
        %v3115 = vunpack.c.h.b16 %v2817
        %v3116 = vunpack.c.l.b16 %v2818
        %v3117 = vunpack.c.h.b16 %v2818
        %v3118 = vunpack.c.l.b16 %v2819
        %v3119 = vunpack.c.h.b16 %v2819
        %v3120 = vunpack.c.l.b16 %v2820
        %v3121 = vunpack.c.h.b16 %v2820
        %v3122 = vunpack.c.l.b16 %v2821
        %v3123 = vunpack.c.h.b16 %v2821
        %v3124 = vunpack.c.l.b16 %v2822
        %v3125 = vunpack.c.h.b16 %v2822
        %v3126 = vunpack.c.l.b16 %v2823
        %v3127 = vunpack.c.h.b16 %v2823
        %v3128 = vunpack.c.l.b16 %v2824
        %v3129 = vunpack.c.h.b16 %v2824
        %v3130 = vunpack.c.l.b16 %v2825
        %v3131 = vunpack.c.h.b16 %v2825
        %v3132 = vunpack.c.l.b16 %v2826
        %v3133 = vunpack.c.h.b16 %v2826
        %v3134 = vunpack.c.l.b16 %v2827
        %v3135 = vunpack.c.h.b16 %v2827
        %v3136 = vunpack.c.l.b16 %v2828
        %v3137 = vunpack.c.h.b16 %v2828
        %v3138 = vunpack.c.l.b16 %v2829
        %v3139 = vunpack.c.h.b16 %v2829
        %v3140 = vunpack.c.l.b16 %v2830
        %v3141 = vunpack.c.h.b16 %v2830
        %v3142 = vunpack.c.l.b16 %v2831
        %v3143 = vunpack.c.h.b16 %v2831
        %v3144 = vunpack.c.l.b16 %v2832
        %v3145 = vunpack.c.h.b16 %v2832
        %v3146 = vunpack.c.l.b16 %v2833
        %v3147 = vunpack.c.h.b16 %v2833
        %v3148 = vunpack.c.l.b16 %v2834
        %v3149 = vunpack.c.h.b16 %v2834
        %v3150 = vunpack.c.l.b16 %v2835
        %v3151 = vunpack.c.h.b16 %v2835
        %v3152 = vunpack.c.l.b16 %v2836
        %v3153 = vunpack.c.h.b16 %v2836
        %v3154 = vunpack.c.l.b16 %v2837
        %v3155 = vunpack.c.h.b16 %v2837
        %v3156 = vunpack.c.l.b16 %v2838
        %v3157 = vunpack.c.h.b16 %v2838
        %v3158 = vunpack.c.l.b16 %v2839
        %v3159 = vunpack.c.h.b16 %v2839
        %v3160 = vunpack.c.l.b16 %v2840
        %v3161 = vunpack.c.h.b16 %v2840
        %v3162 = vunpack.c.l.b16 %v2841
        %v3163 = vunpack.c.h.b16 %v2841
        %v3164 = vunpack.c.l.b16 %v2842
        %v3165 = vunpack.c.h.b16 %v2842
        %v3166 = vunpack.c.l.b16 %v2843
        %v3167 = vunpack.c.h.b16 %v2843
        %v3168 = vunpack.c.l.b16 %v2844
        %v3169 = vunpack.c.h.b16 %v2844
        %v3170 = vunpack.c.l.b16 %v2845
        %v3171 = vunpack.c.h.b16 %v2845
        %v3172 = vunpack.c.l.b16 %v2846
        %v3173 = vunpack.c.h.b16 %v2846
        %v3174 = vunpack.c.l.b16 %v2847
        %v3175 = vunpack.c.h.b16 %v2847
        %v3176 = vunpack.c.l.b16 %v2848
        %v3177 = vunpack.c.h.b16 %v2848
        %v3178 = vunpack.c.l.b16 %v2849
        %v3179 = vunpack.c.h.b16 %v2849
        %v3180 = vunpack.c.l.b16 %v2850
        %v3181 = vunpack.c.h.b16 %v2850
        %v3182 = vunpack.c.l.b16 %v2851
        %v3183 = vunpack.c.h.b16 %v2851
        %v3184 = vunpack.c.l.b16 %v2852
        %v3185 = vunpack.c.h.b16 %v2852
        %v3186 = vunpack.c.l.b16 %v2853
        %v3187 = vunpack.c.h.b16 %v2853
        %v3188 = vunpack.c.l.b16 %v2854
        %v3189 = vunpack.c.h.b16 %v2854
        %v3190 = vunpack.c.l.b16 %v2855
        %v3191 = vunpack.c.h.b16 %v2855
        %v3192 = vunpack.c.l.b16 %v2856
        %v3193 = vunpack.c.h.b16 %v2856
        %v3194 = vunpack.c.l.b16 %v2857
        %v3195 = vunpack.c.h.b16 %v2857
        %v3196 = vunpack.c.l.b16 %v2858
        %v3197 = vunpack.c.h.b16 %v2858
        %v3198 = vunpack.c.l.b16 %v2859
        %v3199 = vunpack.c.h.b16 %v2859
        %v3200 = vunpack.c.l.b16 %v2860
        %v3201 = vunpack.c.h.b16 %v2860
        %v3202 = vunpack.c.l.b16 %v2861
        %v3203 = vunpack.c.h.b16 %v2861
        %v3204 = vunpack.c.l.b16 %v2862
        %v3205 = vunpack.c.h.b16 %v2862
        %v3206 = vunpack.c.l.b16 %v2863
        %v3207 = vunpack.c.h.b16 %v2863
        %v3208 = vunpack.c.l.b16 %v2864
        %v3209 = vunpack.c.h.b16 %v2864
        %v3210 = vunpack.c.l.b16 %v2865
        %v3211 = vunpack.c.h.b16 %v2865
        %v3212 = vunpack.c.l.b16 %v2866
        %v3213 = vunpack.c.h.b16 %v2866
        %v3214 = vunpack.c.l.b16 %v2867
        %v3215 = vunpack.c.h.b16 %v2867
        %v3216 = vunpack.c.l.b16 %v2868
        %v3217 = vunpack.c.h.b16 %v2868
        %v3218 = vunpack.c.l.b16 %v2869
        %v3219 = vunpack.c.h.b16 %v2869
        %v3220 = vunpack.c.l.b16 %v2870
        %v3221 = vunpack.c.h.b16 %v2870
        %v3222 = vunpack.c.l.b16 %v2871
        %v3223 = vunpack.c.h.b16 %v2871
        %v3224 = vunpack.c.l.b16 %v2872
        %v3225 = vunpack.c.h.b16 %v2872
        %v3226 = vunpack.c.l.b16 %v2873
        %v3227 = vunpack.c.h.b16 %v2873
        %v3228 = vunpack.c.l.b16 %v2874
        %v3229 = vunpack.c.h.b16 %v2874
        %v3230 = vunpack.c.l.b16 %v2875
        %v3231 = vunpack.c.h.b16 %v2875
        %v3232 = vunpack.c.l.b16 %v2876
        %v3233 = vunpack.c.h.b16 %v2876
        %v3234 = vunpack.c.l.b16 %v2877
        %v3235 = vunpack.c.h.b16 %v2877
        %v3236 = vunpack.c.l.b16 %v2878
        %v3237 = vunpack.c.h.b16 %v2878
        %v3238 = vunpack.c.l.b16 %v2879
        %v3239 = vunpack.c.h.b16 %v2879
        %v3240 = vunpack.c.l.b16 %v2880
        %v3241 = vunpack.c.h.b16 %v2880
        %v3242 = vunpack.c.l.b16 %v2881
        %v3243 = vunpack.c.h.b16 %v2881
        %v3244 = vunpack.c.l.b16 %v2882
        %v3245 = vunpack.c.h.b16 %v2882
        %v3246 = vunpack.c.l.b16 %v2883
        %v3247 = vunpack.c.h.b16 %v2883
        %v3248 = vunpack.c.l.b16 %v2884
        %v3249 = vunpack.c.h.b16 %v2884
        %v3250 = vunpack.c.l.b16 %v2885
        %v3251 = vunpack.c.h.b16 %v2885
        %v3252 = vunpack.c.l.b16 %v2886
        %v3253 = vunpack.c.h.b16 %v2886
        %v3254 = vunpack.c.l.b16 %v2887
        %v3255 = vunpack.c.h.b16 %v2887
        %v3256 = vunpack.c.l.b16 %v2888
        %v3257 = vunpack.c.h.b16 %v2888
        %v3258 = vunpack.c.l.b16 %v2889
        %v3259 = vunpack.c.h.b16 %v2889
        %v3260 = vunpack.c.l.b16 %v2890
        %v3261 = vunpack.c.h.b16 %v2890
        %v3262 = vunpack.c.l.b16 %v2891
        %v3263 = vunpack.c.h.b16 %v2891
        %v3264 = vunpack.c.l.b16 %v2892
        %v3265 = vunpack.c.h.b16 %v2892
        %v3266 = vunpack.c.l.b16 %v2893
        %v3267 = vunpack.c.h.b16 %v2893
        %v3268 = vunpack.c.l.b16 %v2894
        %v3269 = vunpack.c.h.b16 %v2894
        %v3270 = vunpack.c.l.b16 %v2895
        %v3271 = vunpack.c.h.b16 %v2895
        %v3272 = vunpack.c.l.b16 %v2896
        %v3273 = vunpack.c.h.b16 %v2896
        %v3274 = vunpack.c.l.b16 %v2897
        %v3275 = vunpack.c.h.b16 %v2897
        %v3276 = vunpack.c.l.b16 %v2898
        %v3277 = vunpack.c.h.b16 %v2898
        %v3278 = vunpack.c.l.b16 %v2899
        %v3279 = vunpack.c.h.b16 %v2899
        %v3280 = vunpack.c.l.b16 %v2900
        %v3281 = vunpack.c.h.b16 %v2900
        %v3282 = vunpack.c.l.b16 %v2901
        %v3283 = vunpack.c.h.b16 %v2901
        %v3284 = vunpack.c.l.b16 %v2902
        %v3285 = vunpack.c.h.b16 %v2902
        %v3286 = vunpack.c.l.b16 %v2903
        %v3287 = vunpack.c.h.b16 %v2903
        %v3288 = vunpack.c.l.b16 %v2904
        %v3289 = vunpack.c.h.b16 %v2904
        %v3290 = vunpack.c.l.b16 %v2905
        %v3291 = vunpack.c.h.b16 %v2905
        %v3292 = vunpack.c.l.b16 %v2906
        %v3293 = vunpack.c.h.b16 %v2906
        %v3294 = vunpack.c.l.b16 %v2907
        %v3295 = vunpack.c.h.b16 %v2907
        %v3296 = vunpack.c.l.b16 %v2908
        %v3297 = vunpack.c.h.b16 %v2908
        %v3298 = vunpack.c.l.b16 %v2909
        %v3299 = vunpack.c.h.b16 %v2909
        %v3300 = vunpack.c.l.b16 %v2910
        %v3301 = vunpack.c.h.b16 %v2910
        %v3302 = vunpack.c.l.b16 %v2911
        %v3303 = vunpack.c.h.b16 %v2911
        %v3304 = vunpack.c.l.b16 %v2912
        %v3305 = vunpack.c.h.b16 %v2912
        %v3306 = vunpack.c.l.b16 %v2913
        %v3307 = vunpack.c.h.b16 %v2913
        %v3308 = vunpack.c.l.b16 %v2914
        %v3309 = vunpack.c.h.b16 %v2914
        %v3310 = vunpack.c.l.b16 %v2915
        %v3311 = vunpack.c.h.b16 %v2915
        %v3312 = vunpack.c.l.b16 %v2916
        %v3313 = vunpack.c.h.b16 %v2916
        %v3314 = vunpack.c.l.b16 %v2917
        %v3315 = vunpack.c.h.b16 %v2917
        %v3316 = vunpack.c.l.b16 %v2918
        %v3317 = vunpack.c.h.b16 %v2918
        %v3318 = vunpack.c.l.b16 %v2919
        %v3319 = vunpack.c.h.b16 %v2919
        %v3320 = vunpack.c.l.b16 %v2920
        %v3321 = vunpack.c.h.b16 %v2920
        %v3322 = vunpack.c.l.b16 %v2921
        %v3323 = vunpack.c.h.b16 %v2921
        %v3324 = vpack.c.b16 %v3076, %v3068
        %v3325 = vpack.c.b16 %v3077, %v3069
        %v3326 = vpack.c.b16 %v3078, %v3070
        %v3327 = vpack.c.b16 %v3079, %v3071
        %v3328 = vpack.c.b16 %v3080, %v3072
        %v3329 = vpack.c.b16 %v3081, %v3073
        %v3330 = vpack.c.b16 %v3082, %v3074
        %v3331 = vpack.c.b16 %v3083, %v3075
        %v3332 = vpack.c.b16 %v3092, %v3084
        %v3333 = vpack.c.b16 %v3093, %v3085
        %v3334 = vpack.c.b16 %v3094, %v3086
        %v3335 = vpack.c.b16 %v3095, %v3087
        %v3336 = vpack.c.b16 %v3096, %v3088
        %v3337 = vpack.c.b16 %v3097, %v3089
        %v3338 = vpack.c.b16 %v3098, %v3090
        %v3339 = vpack.c.b16 %v3099, %v3091
        %v3340 = vpack.c.b16 %v3108, %v3100
        %v3341 = vpack.c.b16 %v3109, %v3101
        %v3342 = vpack.c.b16 %v3110, %v3102
        %v3343 = vpack.c.b16 %v3111, %v3103
        %v3344 = vpack.c.b16 %v3112, %v3104
        %v3345 = vpack.c.b16 %v3113, %v3105
        %v3346 = vpack.c.b16 %v3114, %v3106
        %v3347 = vpack.c.b16 %v3115, %v3107
        %v3348 = vpack.c.b16 %v3124, %v3116
        %v3349 = vpack.c.b16 %v3125, %v3117
        %v3350 = vpack.c.b16 %v3126, %v3118
        %v3351 = vpack.c.b16 %v3127, %v3119
        %v3352 = vpack.c.b16 %v3128, %v3120
        %v3353 = vpack.c.b16 %v3129, %v3121
        %v3354 = vpack.c.b16 %v3130, %v3122
        %v3355 = vpack.c.b16 %v3131, %v3123
        %v3356 = vpack.c.b16 %v3140, %v3132
        %v3357 = vpack.c.b16 %v3141, %v3133
        %v3358 = vpack.c.b16 %v3142, %v3134
        %v3359 = vpack.c.b16 %v3143, %v3135
        %v3360 = vpack.c.b16 %v3144, %v3136
        %v3361 = vpack.c.b16 %v3145, %v3137
        %v3362 = vpack.c.b16 %v3146, %v3138
        %v3363 = vpack.c.b16 %v3147, %v3139
        %v3364 = vpack.c.b16 %v3156, %v3148
        %v3365 = vpack.c.b16 %v3157, %v3149
        %v3366 = vpack.c.b16 %v3158, %v3150
        %v3367 = vpack.c.b16 %v3159, %v3151
        %v3368 = vpack.c.b16 %v3160, %v3152
        %v3369 = vpack.c.b16 %v3161, %v3153
        %v3370 = vpack.c.b16 %v3162, %v3154
        %v3371 = vpack.c.b16 %v3163, %v3155
        %v3372 = vpack.c.b16 %v3172, %v3164
        %v3373 = vpack.c.b16 %v3173, %v3165
        %v3374 = vpack.c.b16 %v3174, %v3166
        %v3375 = vpack.c.b16 %v3175, %v3167
        %v3376 = vpack.c.b16 %v3176, %v3168
        %v3377 = vpack.c.b16 %v3177, %v3169
        %v3378 = vpack.c.b16 %v3178, %v3170
        %v3379 = vpack.c.b16 %v3179, %v3171
        %v3380 = vpack.c.b16 %v3188, %v3180
        %v3381 = vpack.c.b16 %v3189, %v3181
        %v3382 = vpack.c.b16 %v3190, %v3182
        %v3383 = vpack.c.b16 %v3191, %v3183
        %v3384 = vpack.c.b16 %v3192, %v3184
        %v3385 = vpack.c.b16 %v3193, %v3185
        %v3386 = vpack.c.b16 %v3194, %v3186
        %v3387 = vpack.c.b16 %v3195, %v3187
        %v3388 = vpack.c.b16 %v3204, %v3196
        %v3389 = vpack.c.b16 %v3205, %v3197
        %v3390 = vpack.c.b16 %v3206, %v3198
        %v3391 = vpack.c.b16 %v3207, %v3199
        %v3392 = vpack.c.b16 %v3208, %v3200
        %v3393 = vpack.c.b16 %v3209, %v3201
        %v3394 = vpack.c.b16 %v3210, %v3202
        %v3395 = vpack.c.b16 %v3211, %v3203
        %v3396 = vpack.c.b16 %v3220, %v3212
        %v3397 = vpack.c.b16 %v3221, %v3213
        %v3398 = vpack.c.b16 %v3222, %v3214
        %v3399 = vpack.c.b16 %v3223, %v3215
        %v3400 = vpack.c.b16 %v3224, %v3216
        %v3401 = vpack.c.b16 %v3225, %v3217
        %v3402 = vpack.c.b16 %v3226, %v3218
        %v3403 = vpack.c.b16 %v3227, %v3219
        %v3404 = vpack.c.b16 %v3236, %v3228
        %v3405 = vpack.c.b16 %v3237, %v3229
        %v3406 = vpack.c.b16 %v3238, %v3230
        %v3407 = vpack.c.b16 %v3239, %v3231
        %v3408 = vpack.c.b16 %v3240, %v3232
        %v3409 = vpack.c.b16 %v3241, %v3233
        %v3410 = vpack.c.b16 %v3242, %v3234
        %v3411 = vpack.c.b16 %v3243, %v3235
        %v3412 = vpack.c.b16 %v3252, %v3244
        %v3413 = vpack.c.b16 %v3253, %v3245
        %v3414 = vpack.c.b16 %v3254, %v3246
        %v3415 = vpack.c.b16 %v3255, %v3247
        %v3416 = vpack.c.b16 %v3256, %v3248
        %v3417 = vpack.c.b16 %v3257, %v3249
        %v3418 = vpack.c.b16 %v3258, %v3250
        %v3419 = vpack.c.b16 %v3259, %v3251
        %v3420 = vpack.c.b16 %v3268, %v3260
        %v3421 = vpack.c.b16 %v3269, %v3261
        %v3422 = vpack.c.b16 %v3270, %v3262
        %v3423 = vpack.c.b16 %v3271, %v3263
        %v3424 = vpack.c.b16 %v3272, %v3264
        %v3425 = vpack.c.b16 %v3273, %v3265
        %v3426 = vpack.c.b16 %v3274, %v3266
        %v3427 = vpack.c.b16 %v3275, %v3267
        %v3428 = vpack.c.b16 %v3284, %v3276
        %v3429 = vpack.c.b16 %v3285, %v3277
        %v3430 = vpack.c.b16 %v3286, %v3278
        %v3431 = vpack.c.b16 %v3287, %v3279
        %v3432 = vpack.c.b16 %v3288, %v3280
        %v3433 = vpack.c.b16 %v3289, %v3281
        %v3434 = vpack.c.b16 %v3290, %v3282
        %v3435 = vpack.c.b16 %v3291, %v3283
        %v3436 = vpack.c.b16 %v3300, %v3292
        %v3437 = vpack.c.b16 %v3301, %v3293
        %v3438 = vpack.c.b16 %v3302, %v3294
        %v3439 = vpack.c.b16 %v3303, %v3295
        %v3440 = vpack.c.b16 %v3304, %v3296
        %v3441 = vpack.c.b16 %v3305, %v3297
        %v3442 = vpack.c.b16 %v3306, %v3298
        %v3443 = vpack.c.b16 %v3307, %v3299
        %v3444 = vpack.c.b16 %v3316, %v3308
        %v3445 = vpack.c.b16 %v3317, %v3309
        %v3446 = vpack.c.b16 %v3318, %v3310
        %v3447 = vpack.c.b16 %v3319, %v3311
        %v3448 = vpack.c.b16 %v3320, %v3312
        %v3449 = vpack.c.b16 %v3321, %v3313
        %v3450 = vpack.c.b16 %v3322, %v3314
        %v3451 = vpack.c.b16 %v3323, %v3315
        %3580 = vmatpush.bf16.msra.mxu0 %v3380
        %3581 = vmatpush.bf16.msra.mxu0 %v3372
        %3582 = vmatpush.bf16.msra.mxu0 %v3364
        %3583 = vmatpush.bf16.msra.mxu0 %v3356
        %3584 = vmatpush.bf16.msra.mxu0 %v3348
        %3585 = vmatpush.bf16.msra.mxu0 %v3340
        %3586 = vmatpush.bf16.msra.mxu0 %v3332
        %3587 = vmatpush.bf16.msra.mxu0 %v3324
        %3588 = vmatmul.bf16.gmra.mxu0 %v2792
        %v3589 = vpop.f32.mrf.mxu0
        %v3590 = vadd.f32 %v2924, %v3589
        %v3591 = vpop.f32.mrf.mxu0
        %v3592 = vadd.f32 %v2924, %v3591
        %3593 = vdwg.mxu0
        %3594 = vmatpush.bf16.msra.mxu0 %v3444
        %3595 = vmatpush.bf16.msra.mxu0 %v3436
        %3596 = vmatpush.bf16.msra.mxu0 %v3428
        %3597 = vmatpush.bf16.msra.mxu0 %v3420
        %3598 = vmatpush.bf16.msra.mxu0 %v3412
        %3599 = vmatpush.bf16.msra.mxu0 %v3404
        %3600 = vmatpush.bf16.msra.mxu0 %v3396
        %3601 = vmatpush.bf16.msra.mxu0 %v3388
        %3602 = vmatmul.bf16.gmra.mxu0 %v2793
        %v3603 = vpop.f32.mrf.mxu0
        %v3604 = vadd.f32 %v3590, %v3603
        %v3605 = vpop.f32.mrf.mxu0
        %v3606 = vadd.f32 %v3592, %v3605
        %3607 = vdwg.mxu0
        %3608 = vmatpush.bf16.msra.mxu0 %v3381
        %3609 = vmatpush.bf16.msra.mxu0 %v3373
        %3610 = vmatpush.bf16.msra.mxu0 %v3365
        %3611 = vmatpush.bf16.msra.mxu0 %v3357
        %3612 = vmatpush.bf16.msra.mxu0 %v3349
        %3613 = vmatpush.bf16.msra.mxu0 %v3341
        %3614 = vmatpush.bf16.msra.mxu0 %v3333
        %3615 = vmatpush.bf16.msra.mxu0 %v3325
        %3616 = vmatmul.bf16.gmra.mxu0 %v2792
        %v3617 = vpop.f32.mrf.mxu0
        %v3618 = vadd.f32 %v2925, %v3617
        %v3619 = vpop.f32.mrf.mxu0
        %v3620 = vadd.f32 %v2925, %v3619
        %3621 = vdwg.mxu0
        %3622 = vmatpush.bf16.msra.mxu0 %v3445
        %3623 = vmatpush.bf16.msra.mxu0 %v3437
        %3624 = vmatpush.bf16.msra.mxu0 %v3429
        %3625 = vmatpush.bf16.msra.mxu0 %v3421
        %3626 = vmatpush.bf16.msra.mxu0 %v3413
        %3627 = vmatpush.bf16.msra.mxu0 %v3405
        %3628 = vmatpush.bf16.msra.mxu0 %v3397
        %3629 = vmatpush.bf16.msra.mxu0 %v3389
        %3630 = vmatmul.bf16.gmra.mxu0 %v2793
        %v3631 = vpop.f32.mrf.mxu0
        %v3632 = vadd.f32 %v3618, %v3631
        %v3633 = vpop.f32.mrf.mxu0
        %v3634 = vadd.f32 %v3620, %v3633
        %3635 = vdwg.mxu0
        %3636 = vmatpush.bf16.msra.mxu0 %v3382
        %3637 = vmatpush.bf16.msra.mxu0 %v3374
        %3638 = vmatpush.bf16.msra.mxu0 %v3366
        %3639 = vmatpush.bf16.msra.mxu0 %v3358
        %3640 = vmatpush.bf16.msra.mxu0 %v3350
        %3641 = vmatpush.bf16.msra.mxu0 %v3342
        %3642 = vmatpush.bf16.msra.mxu0 %v3334
        %3643 = vmatpush.bf16.msra.mxu0 %v3326
        %3644 = vmatmul.bf16.gmra.mxu0 %v2792
        %v3645 = vpop.f32.mrf.mxu0
        %v3646 = vadd.f32 %v2926, %v3645
        %v3647 = vpop.f32.mrf.mxu0
        %v3648 = vadd.f32 %v2926, %v3647
        %3649 = vdwg.mxu0
        %3650 = vmatpush.bf16.msra.mxu0 %v3446
        %3651 = vmatpush.bf16.msra.mxu0 %v3438
        %3652 = vmatpush.bf16.msra.mxu0 %v3430
        %3653 = vmatpush.bf16.msra.mxu0 %v3422
        %3654 = vmatpush.bf16.msra.mxu0 %v3414
        %3655 = vmatpush.bf16.msra.mxu0 %v3406
        %3656 = vmatpush.bf16.msra.mxu0 %v3398
        %3657 = vmatpush.bf16.msra.mxu0 %v3390
        %3658 = vmatmul.bf16.gmra.mxu0 %v2793
        %v3659 = vpop.f32.mrf.mxu0
        %v3660 = vadd.f32 %v3646, %v3659
        %v3661 = vpop.f32.mrf.mxu0
        %v3662 = vadd.f32 %v3648, %v3661
        %3663 = vdwg.mxu0
        %3664 = vmatpush.bf16.msra.mxu0 %v3383
        %3665 = vmatpush.bf16.msra.mxu0 %v3375
        %3666 = vmatpush.bf16.msra.mxu0 %v3367
        %3667 = vmatpush.bf16.msra.mxu0 %v3359
        %3668 = vmatpush.bf16.msra.mxu0 %v3351
        %3669 = vmatpush.bf16.msra.mxu0 %v3343
        %3670 = vmatpush.bf16.msra.mxu0 %v3335
        %3671 = vmatpush.bf16.msra.mxu0 %v3327
        %3672 = vmatmul.bf16.gmra.mxu0 %v2792
        %v3673 = vpop.f32.mrf.mxu0
        %v3674 = vadd.f32 %v2927, %v3673
        %v3675 = vpop.f32.mrf.mxu0
        %v3676 = vadd.f32 %v2927, %v3675
        %3677 = vdwg.mxu0
        %3678 = vmatpush.bf16.msra.mxu0 %v3447
        %3679 = vmatpush.bf16.msra.mxu0 %v3439
        %3680 = vmatpush.bf16.msra.mxu0 %v3431
        %3681 = vmatpush.bf16.msra.mxu0 %v3423
        %3682 = vmatpush.bf16.msra.mxu0 %v3415
        %3683 = vmatpush.bf16.msra.mxu0 %v3407
        %3684 = vmatpush.bf16.msra.mxu0 %v3399
        %3685 = vmatpush.bf16.msra.mxu0 %v3391
        %3686 = vmatmul.bf16.gmra.mxu0 %v2793
        %v3687 = vpop.f32.mrf.mxu0
        %v3688 = vadd.f32 %v3674, %v3687
        %v3689 = vpop.f32.mrf.mxu0
        %v3690 = vadd.f32 %v3676, %v3689
        %3691 = vdwg.mxu0
        %3692 = vmatpush.bf16.msra.mxu0 %v3384
        %3693 = vmatpush.bf16.msra.mxu0 %v3376
        %3694 = vmatpush.bf16.msra.mxu0 %v3368
        %3695 = vmatpush.bf16.msra.mxu0 %v3360
        %3696 = vmatpush.bf16.msra.mxu0 %v3352
        %3697 = vmatpush.bf16.msra.mxu0 %v3344
        %3698 = vmatpush.bf16.msra.mxu0 %v3336
        %3699 = vmatpush.bf16.msra.mxu0 %v3328
        %3700 = vmatmul.bf16.gmra.mxu0 %v2792
        %v3701 = vpop.f32.mrf.mxu0
        %v3702 = vadd.f32 %v2928, %v3701
        %v3703 = vpop.f32.mrf.mxu0
        %v3704 = vadd.f32 %v2928, %v3703
        %3705 = vdwg.mxu0
        %3706 = vmatpush.bf16.msra.mxu0 %v3448
        %3707 = vmatpush.bf16.msra.mxu0 %v3440
        %3708 = vmatpush.bf16.msra.mxu0 %v3432
        %3709 = vmatpush.bf16.msra.mxu0 %v3424
        %3710 = vmatpush.bf16.msra.mxu0 %v3416
        %3711 = vmatpush.bf16.msra.mxu0 %v3408
        %3712 = vmatpush.bf16.msra.mxu0 %v3400
        %3713 = vmatpush.bf16.msra.mxu0 %v3392
        %3714 = vmatmul.bf16.gmra.mxu0 %v2793
        %v3715 = vpop.f32.mrf.mxu0
        %v3716 = vadd.f32 %v3702, %v3715
        %v3717 = vpop.f32.mrf.mxu0
        %v3718 = vadd.f32 %v3704, %v3717
        %3719 = vdwg.mxu0
        %3720 = vmatpush.bf16.msra.mxu0 %v3385
        %3721 = vmatpush.bf16.msra.mxu0 %v3377
        %3722 = vmatpush.bf16.msra.mxu0 %v3369
        %3723 = vmatpush.bf16.msra.mxu0 %v3361
        %3724 = vmatpush.bf16.msra.mxu0 %v3353
        %3725 = vmatpush.bf16.msra.mxu0 %v3345
        %3726 = vmatpush.bf16.msra.mxu0 %v3337
        %3727 = vmatpush.bf16.msra.mxu0 %v3329
        %3728 = vmatmul.bf16.gmra.mxu0 %v2792
        %v3729 = vpop.f32.mrf.mxu0
        %v3730 = vadd.f32 %v2929, %v3729
        %v3731 = vpop.f32.mrf.mxu0
        %v3732 = vadd.f32 %v2929, %v3731
        %3733 = vdwg.mxu0
        %3734 = vmatpush.bf16.msra.mxu0 %v3449
        %3735 = vmatpush.bf16.msra.mxu0 %v3441
        %3736 = vmatpush.bf16.msra.mxu0 %v3433
        %3737 = vmatpush.bf16.msra.mxu0 %v3425
        %3738 = vmatpush.bf16.msra.mxu0 %v3417
        %3739 = vmatpush.bf16.msra.mxu0 %v3409
        %3740 = vmatpush.bf16.msra.mxu0 %v3401
        %3741 = vmatpush.bf16.msra.mxu0 %v3393
        %3742 = vmatmul.bf16.gmra.mxu0 %v2793
        %v3743 = vpop.f32.mrf.mxu0
        %v3744 = vadd.f32 %v3730, %v3743
        %v3745 = vpop.f32.mrf.mxu0
        %v3746 = vadd.f32 %v3732, %v3745
        %3747 = vdwg.mxu0
        %3748 = vmatpush.bf16.msra.mxu0 %v3386
        %3749 = vmatpush.bf16.msra.mxu0 %v3378
        %3750 = vmatpush.bf16.msra.mxu0 %v3370
        %3751 = vmatpush.bf16.msra.mxu0 %v3362
        %3752 = vmatpush.bf16.msra.mxu0 %v3354
        %3753 = vmatpush.bf16.msra.mxu0 %v3346
        %3754 = vmatpush.bf16.msra.mxu0 %v3338
        %3755 = vmatpush.bf16.msra.mxu0 %v3330
        %3756 = vmatmul.bf16.gmra.mxu0 %v2792
        %v3757 = vpop.f32.mrf.mxu0
        %v3758 = vadd.f32 %v2930, %v3757
        %v3759 = vpop.f32.mrf.mxu0
        %v3760 = vadd.f32 %v2930, %v3759
        %3761 = vdwg.mxu0
        %3762 = vmatpush.bf16.msra.mxu0 %v3450
        %3763 = vmatpush.bf16.msra.mxu0 %v3442
        %3764 = vmatpush.bf16.msra.mxu0 %v3434
        %3765 = vmatpush.bf16.msra.mxu0 %v3426
        %3766 = vmatpush.bf16.msra.mxu0 %v3418
        %3767 = vmatpush.bf16.msra.mxu0 %v3410
        %3768 = vmatpush.bf16.msra.mxu0 %v3402
        %3769 = vmatpush.bf16.msra.mxu0 %v3394
        %3770 = vmatmul.bf16.gmra.mxu0 %v2793
        %v3771 = vpop.f32.mrf.mxu0
        %v3772 = vadd.f32 %v3758, %v3771
        %v3773 = vpop.f32.mrf.mxu0
        %v3774 = vadd.f32 %v3760, %v3773
        %3775 = vdwg.mxu0
        %3776 = vmatpush.bf16.msra.mxu0 %v3387
        %3777 = vmatpush.bf16.msra.mxu0 %v3379
        %3778 = vmatpush.bf16.msra.mxu0 %v3371
        %3779 = vmatpush.bf16.msra.mxu0 %v3363
        %3780 = vmatpush.bf16.msra.mxu0 %v3355
        %3781 = vmatpush.bf16.msra.mxu0 %v3347
        %3782 = vmatpush.bf16.msra.mxu0 %v3339
        %3783 = vmatpush.bf16.msra.mxu0 %v3331
        %3784 = vmatmul.bf16.gmra.mxu0 %v2792
        %v3785 = vpop.f32.mrf.mxu0
        %v3786 = vadd.f32 %v2931, %v3785
        %v3787 = vpop.f32.mrf.mxu0
        %v3788 = vadd.f32 %v2931, %v3787
        %3789 = vdwg.mxu0
        %3790 = vmatpush.bf16.msra.mxu0 %v3451
        %3791 = vmatpush.bf16.msra.mxu0 %v3443
        %3792 = vmatpush.bf16.msra.mxu0 %v3435
        %3793 = vmatpush.bf16.msra.mxu0 %v3427
        %3794 = vmatpush.bf16.msra.mxu0 %v3419
        %3795 = vmatpush.bf16.msra.mxu0 %v3411
        %3796 = vmatpush.bf16.msra.mxu0 %v3403
        %3797 = vmatpush.bf16.msra.mxu0 %v3395
        %3798 = vmatmul.bf16.gmra.mxu0 %v2793
        %v3799 = vpop.f32.mrf.mxu0
        %v3800 = vadd.f32 %v3786, %v3799
        %v3801 = vpop.f32.mrf.mxu0
        %v3802 = vadd.f32 %v3788, %v3801
        %3803 = vdwg.mxu0
        %v3804 = vmax.f32 %v3604, 0.0
        %v3805 = vmax.f32 %v3632, 0.0
        %v3806 = vmax.f32 %v3660, 0.0
        %v3807 = vmax.f32 %v3688, 0.0
        %v3808 = vmax.f32 %v3716, 0.0
        %v3809 = vmax.f32 %v3744, 0.0
        %v3810 = vmax.f32 %v3772, 0.0
        %v3811 = vmax.f32 %v3800, 0.0
        %v3812 = vmax.f32 %v3606, 0.0
        %v3813 = vmax.f32 %v3634, 0.0
        %v3814 = vmax.f32 %v3662, 0.0
        %v3815 = vmax.f32 %v3690, 0.0
        %v3816 = vmax.f32 %v3718, 0.0
        %v3817 = vmax.f32 %v3746, 0.0
        %v3818 = vmax.f32 %v3774, 0.0
        %v3819 = vmax.f32 %v3802, 0.0
        %v3820 = vpack.c.bf16 %v3812, %v3804
        %v3821 = vpack.c.bf16 %v3813, %v3805
        %v3822 = vpack.c.bf16 %v3814, %v3806
        %v3823 = vpack.c.bf16 %v3815, %v3807
        %v3824 = vpack.c.bf16 %v3816, %v3808
        %v3825 = vpack.c.bf16 %v3817, %v3809
        %v3826 = vpack.c.bf16 %v3818, %v3810
        %v3827 = vpack.c.bf16 %v3819, %v3811
        %v3828 = vld [vmem:[%s1114] sm:$0xff]
        %v3829 = vld [vmem:[%s1114 + $0x8] sm:$0xff]
        %v3830 = vld [vmem:[%s1114 + $0x10] sm:$0xff]
        %v3831 = vld [vmem:[%s1114 + $0x18] sm:$0xff]
        %v3832 = vld [vmem:[%s1114 + $0x20] sm:$0xff]
        %v3833 = vld [vmem:[%s1114 + $0x28] sm:$0xff]
        %v3834 = vld [vmem:[%s1114 + $0x30] sm:$0xff]
        %v3835 = vld [vmem:[%s1114 + $0x38] sm:$0xff]
        %v3836 = vld [vmem:[%s1114 + $0x40] sm:$0xff]
        %v3837 = vld [vmem:[%s1114 + $0x48] sm:$0xff]
        %v3838 = vld [vmem:[%s1114 + $0x50] sm:$0xff]
        %v3839 = vld [vmem:[%s1114 + $0x58] sm:$0xff]
        %v3840 = vld [vmem:[%s1114 + $0x60] sm:$0xff]
        %v3841 = vld [vmem:[%s1114 + $0x68] sm:$0xff]
        %v3842 = vld [vmem:[%s1114 + $0x70] sm:$0xff]
        %v3843 = vld [vmem:[%s1114 + $0x78] sm:$0xff]
        %v3844 = vld [vmem:[%s1114 + $0x80] sm:$0xff]
        %v3845 = vld [vmem:[%s1114 + $0x88] sm:$0xff]
        %v3846 = vld [vmem:[%s1114 + $0x90] sm:$0xff]
        %v3847 = vld [vmem:[%s1114 + $0x98] sm:$0xff]
        %v3848 = vld [vmem:[%s1114 + $0xa0] sm:$0xff]
        %v3849 = vld [vmem:[%s1114 + $0xa8] sm:$0xff]
        %v3850 = vld [vmem:[%s1114 + $0xb0] sm:$0xff]
        %v3851 = vld [vmem:[%s1114 + $0xb8] sm:$0xff]
        %v3852 = vld [vmem:[%s1114 + $0xc0] sm:$0xff]
        %v3853 = vld [vmem:[%s1114 + $0xc8] sm:$0xff]
        %v3854 = vld [vmem:[%s1114 + $0xd0] sm:$0xff]
        %v3855 = vld [vmem:[%s1114 + $0xd8] sm:$0xff]
        %v3856 = vld [vmem:[%s1114 + $0xe0] sm:$0xff]
        %v3857 = vld [vmem:[%s1114 + $0xe8] sm:$0xff]
        %v3858 = vld [vmem:[%s1114 + $0xf0] sm:$0xff]
        %v3859 = vld [vmem:[%s1114 + $0xf8] sm:$0xff]
        %v3860 = vld [vmem:[%s1114 + $0x100] sm:$0xff]
        %v3861 = vld [vmem:[%s1114 + $0x108] sm:$0xff]
        %v3862 = vld [vmem:[%s1114 + $0x110] sm:$0xff]
        %v3863 = vld [vmem:[%s1114 + $0x118] sm:$0xff]
        %v3864 = vld [vmem:[%s1114 + $0x120] sm:$0xff]
        %v3865 = vld [vmem:[%s1114 + $0x128] sm:$0xff]
        %v3866 = vld [vmem:[%s1114 + $0x130] sm:$0xff]
        %v3867 = vld [vmem:[%s1114 + $0x138] sm:$0xff]
        %v3868 = vld [vmem:[%s1114 + $0x140] sm:$0xff]
        %v3869 = vld [vmem:[%s1114 + $0x148] sm:$0xff]
        %v3870 = vld [vmem:[%s1114 + $0x150] sm:$0xff]
        %v3871 = vld [vmem:[%s1114 + $0x158] sm:$0xff]
        %v3872 = vld [vmem:[%s1114 + $0x160] sm:$0xff]
        %v3873 = vld [vmem:[%s1114 + $0x168] sm:$0xff]
        %v3874 = vld [vmem:[%s1114 + $0x170] sm:$0xff]
        %v3875 = vld [vmem:[%s1114 + $0x178] sm:$0xff]
        %v3876 = vld [vmem:[%s1114 + $0x180] sm:$0xff]
        %v3877 = vld [vmem:[%s1114 + $0x188] sm:$0xff]
        %v3878 = vld [vmem:[%s1114 + $0x190] sm:$0xff]
        %v3879 = vld [vmem:[%s1114 + $0x198] sm:$0xff]
        %v3880 = vld [vmem:[%s1114 + $0x1a0] sm:$0xff]
        %v3881 = vld [vmem:[%s1114 + $0x1a8] sm:$0xff]
        %v3882 = vld [vmem:[%s1114 + $0x1b0] sm:$0xff]
        %v3883 = vld [vmem:[%s1114 + $0x1b8] sm:$0xff]
        %v3884 = vld [vmem:[%s1114 + $0x1c0] sm:$0xff]
        %v3885 = vld [vmem:[%s1114 + $0x1c8] sm:$0xff]
        %v3886 = vld [vmem:[%s1114 + $0x1d0] sm:$0xff]
        %v3887 = vld [vmem:[%s1114 + $0x1d8] sm:$0xff]
        %v3888 = vld [vmem:[%s1114 + $0x1e0] sm:$0xff]
        %v3889 = vld [vmem:[%s1114 + $0x1e8] sm:$0xff]
        %v3890 = vld [vmem:[%s1114 + $0x1f0] sm:$0xff]
        %v3891 = vld [vmem:[%s1114 + $0x1f8] sm:$0xff]
        %v3892 = vld [vmem:[%s1114 + $0x200] sm:$0xff]
        %v3893 = vld [vmem:[%s1114 + $0x208] sm:$0xff]
        %v3894 = vld [vmem:[%s1114 + $0x210] sm:$0xff]
        %v3895 = vld [vmem:[%s1114 + $0x218] sm:$0xff]
        %v3896 = vld [vmem:[%s1114 + $0x220] sm:$0xff]
        %v3897 = vld [vmem:[%s1114 + $0x228] sm:$0xff]
        %v3898 = vld [vmem:[%s1114 + $0x230] sm:$0xff]
        %v3899 = vld [vmem:[%s1114 + $0x238] sm:$0xff]
        %v3900 = vld [vmem:[%s1114 + $0x240] sm:$0xff]
        %v3901 = vld [vmem:[%s1114 + $0x248] sm:$0xff]
        %v3902 = vld [vmem:[%s1114 + $0x250] sm:$0xff]
        %v3903 = vld [vmem:[%s1114 + $0x258] sm:$0xff]
        %v3904 = vld [vmem:[%s1114 + $0x260] sm:$0xff]
        %v3905 = vld [vmem:[%s1114 + $0x268] sm:$0xff]
        %v3906 = vld [vmem:[%s1114 + $0x270] sm:$0xff]
        %v3907 = vld [vmem:[%s1114 + $0x278] sm:$0xff]
        %v3908 = vld [vmem:[%s1114 + $0x280] sm:$0xff]
        %v3909 = vld [vmem:[%s1114 + $0x288] sm:$0xff]
        %v3910 = vld [vmem:[%s1114 + $0x290] sm:$0xff]
        %v3911 = vld [vmem:[%s1114 + $0x298] sm:$0xff]
        %v3912 = vld [vmem:[%s1114 + $0x2a0] sm:$0xff]
        %v3913 = vld [vmem:[%s1114 + $0x2a8] sm:$0xff]
        %v3914 = vld [vmem:[%s1114 + $0x2b0] sm:$0xff]
        %v3915 = vld [vmem:[%s1114 + $0x2b8] sm:$0xff]
        %v3916 = vld [vmem:[%s1114 + $0x2c0] sm:$0xff]
        %v3917 = vld [vmem:[%s1114 + $0x2c8] sm:$0xff]
        %v3918 = vld [vmem:[%s1114 + $0x2d0] sm:$0xff]
        %v3919 = vld [vmem:[%s1114 + $0x2d8] sm:$0xff]
        %v3920 = vld [vmem:[%s1114 + $0x2e0] sm:$0xff]
        %v3921 = vld [vmem:[%s1114 + $0x2e8] sm:$0xff]
        %v3922 = vld [vmem:[%s1114 + $0x2f0] sm:$0xff]
        %v3923 = vld [vmem:[%s1114 + $0x2f8] sm:$0xff]
        %v3924 = vld [vmem:[%s1114 + $0x300] sm:$0xff]
        %v3925 = vld [vmem:[%s1114 + $0x308] sm:$0xff]
        %v3926 = vld [vmem:[%s1114 + $0x310] sm:$0xff]
        %v3927 = vld [vmem:[%s1114 + $0x318] sm:$0xff]
        %v3928 = vld [vmem:[%s1114 + $0x320] sm:$0xff]
        %v3929 = vld [vmem:[%s1114 + $0x328] sm:$0xff]
        %v3930 = vld [vmem:[%s1114 + $0x330] sm:$0xff]
        %v3931 = vld [vmem:[%s1114 + $0x338] sm:$0xff]
        %v3932 = vld [vmem:[%s1114 + $0x340] sm:$0xff]
        %v3933 = vld [vmem:[%s1114 + $0x348] sm:$0xff]
        %v3934 = vld [vmem:[%s1114 + $0x350] sm:$0xff]
        %v3935 = vld [vmem:[%s1114 + $0x358] sm:$0xff]
        %v3936 = vld [vmem:[%s1114 + $0x360] sm:$0xff]
        %v3937 = vld [vmem:[%s1114 + $0x368] sm:$0xff]
        %v3938 = vld [vmem:[%s1114 + $0x370] sm:$0xff]
        %v3939 = vld [vmem:[%s1114 + $0x378] sm:$0xff]
        %v3940 = vld [vmem:[%s1114 + $0x380] sm:$0xff]
        %v3941 = vld [vmem:[%s1114 + $0x388] sm:$0xff]
        %v3942 = vld [vmem:[%s1114 + $0x390] sm:$0xff]
        %v3943 = vld [vmem:[%s1114 + $0x398] sm:$0xff]
        %v3944 = vld [vmem:[%s1114 + $0x3a0] sm:$0xff]
        %v3945 = vld [vmem:[%s1114 + $0x3a8] sm:$0xff]
        %v3946 = vld [vmem:[%s1114 + $0x3b0] sm:$0xff]
        %v3947 = vld [vmem:[%s1114 + $0x3b8] sm:$0xff]
        %v3948 = vld [vmem:[%s1114 + $0x3c0] sm:$0xff]
        %v3949 = vld [vmem:[%s1114 + $0x3c8] sm:$0xff]
        %v3950 = vld [vmem:[%s1114 + $0x3d0] sm:$0xff]
        %v3951 = vld [vmem:[%s1114 + $0x3d8] sm:$0xff]
        %v3952 = vld [vmem:[%s1114 + $0x3e0] sm:$0xff]
        %v3953 = vld [vmem:[%s1114 + $0x3e8] sm:$0xff]
        %v3954 = vld [vmem:[%s1114 + $0x3f0] sm:$0xff]
        %v3955 = vld [vmem:[%s1114 + $0x3f8] sm:$0xff]
        %v3956 = vld [vmem:[%s1283] sm:$0x3]
        %v3958 = vperm.slane %v3956, 0
        %v3959 = vperm.slane %v3956, 1
        %v4090 = vunpack.c.l.b16 %v3828
        %v4091 = vunpack.c.h.b16 %v3828
        %v4092 = vunpack.c.l.b16 %v3829
        %v4093 = vunpack.c.h.b16 %v3829
        %v4094 = vunpack.c.l.b16 %v3830
        %v4095 = vunpack.c.h.b16 %v3830
        %v4096 = vunpack.c.l.b16 %v3831
        %v4097 = vunpack.c.h.b16 %v3831
        %v4098 = vunpack.c.l.b16 %v3832
        %v4099 = vunpack.c.h.b16 %v3832
        %v4100 = vunpack.c.l.b16 %v3833
        %v4101 = vunpack.c.h.b16 %v3833
        %v4102 = vunpack.c.l.b16 %v3834
        %v4103 = vunpack.c.h.b16 %v3834
        %v4104 = vunpack.c.l.b16 %v3835
        %v4105 = vunpack.c.h.b16 %v3835
        %v4106 = vunpack.c.l.b16 %v3836
        %v4107 = vunpack.c.h.b16 %v3836
        %v4108 = vunpack.c.l.b16 %v3837
        %v4109 = vunpack.c.h.b16 %v3837
        %v4110 = vunpack.c.l.b16 %v3838
        %v4111 = vunpack.c.h.b16 %v3838
        %v4112 = vunpack.c.l.b16 %v3839
        %v4113 = vunpack.c.h.b16 %v3839
        %v4114 = vunpack.c.l.b16 %v3840
        %v4115 = vunpack.c.h.b16 %v3840
        %v4116 = vunpack.c.l.b16 %v3841
        %v4117 = vunpack.c.h.b16 %v3841
        %v4118 = vunpack.c.l.b16 %v3842
        %v4119 = vunpack.c.h.b16 %v3842
        %v4120 = vunpack.c.l.b16 %v3843
        %v4121 = vunpack.c.h.b16 %v3843
        %v4122 = vunpack.c.l.b16 %v3844
        %v4123 = vunpack.c.h.b16 %v3844
        %v4124 = vunpack.c.l.b16 %v3845
        %v4125 = vunpack.c.h.b16 %v3845
        %v4126 = vunpack.c.l.b16 %v3846
        %v4127 = vunpack.c.h.b16 %v3846
        %v4128 = vunpack.c.l.b16 %v3847
        %v4129 = vunpack.c.h.b16 %v3847
        %v4130 = vunpack.c.l.b16 %v3848
        %v4131 = vunpack.c.h.b16 %v3848
        %v4132 = vunpack.c.l.b16 %v3849
        %v4133 = vunpack.c.h.b16 %v3849
        %v4134 = vunpack.c.l.b16 %v3850
        %v4135 = vunpack.c.h.b16 %v3850
        %v4136 = vunpack.c.l.b16 %v3851
        %v4137 = vunpack.c.h.b16 %v3851
        %v4138 = vunpack.c.l.b16 %v3852
        %v4139 = vunpack.c.h.b16 %v3852
        %v4140 = vunpack.c.l.b16 %v3853
        %v4141 = vunpack.c.h.b16 %v3853
        %v4142 = vunpack.c.l.b16 %v3854
        %v4143 = vunpack.c.h.b16 %v3854
        %v4144 = vunpack.c.l.b16 %v3855
        %v4145 = vunpack.c.h.b16 %v3855
        %v4146 = vunpack.c.l.b16 %v3856
        %v4147 = vunpack.c.h.b16 %v3856
        %v4148 = vunpack.c.l.b16 %v3857
        %v4149 = vunpack.c.h.b16 %v3857
        %v4150 = vunpack.c.l.b16 %v3858
        %v4151 = vunpack.c.h.b16 %v3858
        %v4152 = vunpack.c.l.b16 %v3859
        %v4153 = vunpack.c.h.b16 %v3859
        %v4154 = vunpack.c.l.b16 %v3860
        %v4155 = vunpack.c.h.b16 %v3860
        %v4156 = vunpack.c.l.b16 %v3861
        %v4157 = vunpack.c.h.b16 %v3861
        %v4158 = vunpack.c.l.b16 %v3862
        %v4159 = vunpack.c.h.b16 %v3862
        %v4160 = vunpack.c.l.b16 %v3863
        %v4161 = vunpack.c.h.b16 %v3863
        %v4162 = vunpack.c.l.b16 %v3864
        %v4163 = vunpack.c.h.b16 %v3864
        %v4164 = vunpack.c.l.b16 %v3865
        %v4165 = vunpack.c.h.b16 %v3865
        %v4166 = vunpack.c.l.b16 %v3866
        %v4167 = vunpack.c.h.b16 %v3866
        %v4168 = vunpack.c.l.b16 %v3867
        %v4169 = vunpack.c.h.b16 %v3867
        %v4170 = vunpack.c.l.b16 %v3868
        %v4171 = vunpack.c.h.b16 %v3868
        %v4172 = vunpack.c.l.b16 %v3869
        %v4173 = vunpack.c.h.b16 %v3869
        %v4174 = vunpack.c.l.b16 %v3870
        %v4175 = vunpack.c.h.b16 %v3870
        %v4176 = vunpack.c.l.b16 %v3871
        %v4177 = vunpack.c.h.b16 %v3871
        %v4178 = vunpack.c.l.b16 %v3872
        %v4179 = vunpack.c.h.b16 %v3872
        %v4180 = vunpack.c.l.b16 %v3873
        %v4181 = vunpack.c.h.b16 %v3873
        %v4182 = vunpack.c.l.b16 %v3874
        %v4183 = vunpack.c.h.b16 %v3874
        %v4184 = vunpack.c.l.b16 %v3875
        %v4185 = vunpack.c.h.b16 %v3875
        %v4186 = vunpack.c.l.b16 %v3876
        %v4187 = vunpack.c.h.b16 %v3876
        %v4188 = vunpack.c.l.b16 %v3877
        %v4189 = vunpack.c.h.b16 %v3877
        %v4190 = vunpack.c.l.b16 %v3878
        %v4191 = vunpack.c.h.b16 %v3878
        %v4192 = vunpack.c.l.b16 %v3879
        %v4193 = vunpack.c.h.b16 %v3879
        %v4194 = vunpack.c.l.b16 %v3880
        %v4195 = vunpack.c.h.b16 %v3880
        %v4196 = vunpack.c.l.b16 %v3881
        %v4197 = vunpack.c.h.b16 %v3881
        %v4198 = vunpack.c.l.b16 %v3882
        %v4199 = vunpack.c.h.b16 %v3882
        %v4200 = vunpack.c.l.b16 %v3883
        %v4201 = vunpack.c.h.b16 %v3883
        %v4202 = vunpack.c.l.b16 %v3884
        %v4203 = vunpack.c.h.b16 %v3884
        %v4204 = vunpack.c.l.b16 %v3885
        %v4205 = vunpack.c.h.b16 %v3885
        %v4206 = vunpack.c.l.b16 %v3886
        %v4207 = vunpack.c.h.b16 %v3886
        %v4208 = vunpack.c.l.b16 %v3887
        %v4209 = vunpack.c.h.b16 %v3887
        %v4210 = vunpack.c.l.b16 %v3888
        %v4211 = vunpack.c.h.b16 %v3888
        %v4212 = vunpack.c.l.b16 %v3889
        %v4213 = vunpack.c.h.b16 %v3889
        %v4214 = vunpack.c.l.b16 %v3890
        %v4215 = vunpack.c.h.b16 %v3890
        %v4216 = vunpack.c.l.b16 %v3891
        %v4217 = vunpack.c.h.b16 %v3891
        %v4218 = vunpack.c.l.b16 %v3892
        %v4219 = vunpack.c.h.b16 %v3892
        %v4220 = vunpack.c.l.b16 %v3893
        %v4221 = vunpack.c.h.b16 %v3893
        %v4222 = vunpack.c.l.b16 %v3894
        %v4223 = vunpack.c.h.b16 %v3894
        %v4224 = vunpack.c.l.b16 %v3895
        %v4225 = vunpack.c.h.b16 %v3895
        %v4226 = vunpack.c.l.b16 %v3896
        %v4227 = vunpack.c.h.b16 %v3896
        %v4228 = vunpack.c.l.b16 %v3897
        %v4229 = vunpack.c.h.b16 %v3897
        %v4230 = vunpack.c.l.b16 %v3898
        %v4231 = vunpack.c.h.b16 %v3898
        %v4232 = vunpack.c.l.b16 %v3899
        %v4233 = vunpack.c.h.b16 %v3899
        %v4234 = vunpack.c.l.b16 %v3900
        %v4235 = vunpack.c.h.b16 %v3900
        %v4236 = vunpack.c.l.b16 %v3901
        %v4237 = vunpack.c.h.b16 %v3901
        %v4238 = vunpack.c.l.b16 %v3902
        %v4239 = vunpack.c.h.b16 %v3902
        %v4240 = vunpack.c.l.b16 %v3903
        %v4241 = vunpack.c.h.b16 %v3903
        %v4242 = vunpack.c.l.b16 %v3904
        %v4243 = vunpack.c.h.b16 %v3904
        %v4244 = vunpack.c.l.b16 %v3905
        %v4245 = vunpack.c.h.b16 %v3905
        %v4246 = vunpack.c.l.b16 %v3906
        %v4247 = vunpack.c.h.b16 %v3906
        %v4248 = vunpack.c.l.b16 %v3907
        %v4249 = vunpack.c.h.b16 %v3907
        %v4250 = vunpack.c.l.b16 %v3908
        %v4251 = vunpack.c.h.b16 %v3908
        %v4252 = vunpack.c.l.b16 %v3909
        %v4253 = vunpack.c.h.b16 %v3909
        %v4254 = vunpack.c.l.b16 %v3910
        %v4255 = vunpack.c.h.b16 %v3910
        %v4256 = vunpack.c.l.b16 %v3911
        %v4257 = vunpack.c.h.b16 %v3911
        %v4258 = vunpack.c.l.b16 %v3912
        %v4259 = vunpack.c.h.b16 %v3912
        %v4260 = vunpack.c.l.b16 %v3913
        %v4261 = vunpack.c.h.b16 %v3913
        %v4262 = vunpack.c.l.b16 %v3914
        %v4263 = vunpack.c.h.b16 %v3914
        %v4264 = vunpack.c.l.b16 %v3915
        %v4265 = vunpack.c.h.b16 %v3915
        %v4266 = vunpack.c.l.b16 %v3916
        %v4267 = vunpack.c.h.b16 %v3916
        %v4268 = vunpack.c.l.b16 %v3917
        %v4269 = vunpack.c.h.b16 %v3917
        %v4270 = vunpack.c.l.b16 %v3918
        %v4271 = vunpack.c.h.b16 %v3918
        %v4272 = vunpack.c.l.b16 %v3919
        %v4273 = vunpack.c.h.b16 %v3919
        %v4274 = vunpack.c.l.b16 %v3920
        %v4275 = vunpack.c.h.b16 %v3920
        %v4276 = vunpack.c.l.b16 %v3921
        %v4277 = vunpack.c.h.b16 %v3921
        %v4278 = vunpack.c.l.b16 %v3922
        %v4279 = vunpack.c.h.b16 %v3922
        %v4280 = vunpack.c.l.b16 %v3923
        %v4281 = vunpack.c.h.b16 %v3923
        %v4282 = vunpack.c.l.b16 %v3924
        %v4283 = vunpack.c.h.b16 %v3924
        %v4284 = vunpack.c.l.b16 %v3925
        %v4285 = vunpack.c.h.b16 %v3925
        %v4286 = vunpack.c.l.b16 %v3926
        %v4287 = vunpack.c.h.b16 %v3926
        %v4288 = vunpack.c.l.b16 %v3927
        %v4289 = vunpack.c.h.b16 %v3927
        %v4290 = vunpack.c.l.b16 %v3928
        %v4291 = vunpack.c.h.b16 %v3928
        %v4292 = vunpack.c.l.b16 %v3929
        %v4293 = vunpack.c.h.b16 %v3929
        %v4294 = vunpack.c.l.b16 %v3930
        %v4295 = vunpack.c.h.b16 %v3930
        %v4296 = vunpack.c.l.b16 %v3931
        %v4297 = vunpack.c.h.b16 %v3931
        %v4298 = vunpack.c.l.b16 %v3932
        %v4299 = vunpack.c.h.b16 %v3932
        %v4300 = vunpack.c.l.b16 %v3933
        %v4301 = vunpack.c.h.b16 %v3933
        %v4302 = vunpack.c.l.b16 %v3934
        %v4303 = vunpack.c.h.b16 %v3934
        %v4304 = vunpack.c.l.b16 %v3935
        %v4305 = vunpack.c.h.b16 %v3935
        %v4306 = vunpack.c.l.b16 %v3936
        %v4307 = vunpack.c.h.b16 %v3936
        %v4308 = vunpack.c.l.b16 %v3937
        %v4309 = vunpack.c.h.b16 %v3937
        %v4310 = vunpack.c.l.b16 %v3938
        %v4311 = vunpack.c.h.b16 %v3938
        %v4312 = vunpack.c.l.b16 %v3939
        %v4313 = vunpack.c.h.b16 %v3939
        %v4314 = vunpack.c.l.b16 %v3940
        %v4315 = vunpack.c.h.b16 %v3940
        %v4316 = vunpack.c.l.b16 %v3941
        %v4317 = vunpack.c.h.b16 %v3941
        %v4318 = vunpack.c.l.b16 %v3942
        %v4319 = vunpack.c.h.b16 %v3942
        %v4320 = vunpack.c.l.b16 %v3943
        %v4321 = vunpack.c.h.b16 %v3943
        %v4322 = vunpack.c.l.b16 %v3944
        %v4323 = vunpack.c.h.b16 %v3944
        %v4324 = vunpack.c.l.b16 %v3945
        %v4325 = vunpack.c.h.b16 %v3945
        %v4326 = vunpack.c.l.b16 %v3946
        %v4327 = vunpack.c.h.b16 %v3946
        %v4328 = vunpack.c.l.b16 %v3947
        %v4329 = vunpack.c.h.b16 %v3947
        %v4330 = vunpack.c.l.b16 %v3948
        %v4331 = vunpack.c.h.b16 %v3948
        %v4332 = vunpack.c.l.b16 %v3949
        %v4333 = vunpack.c.h.b16 %v3949
        %v4334 = vunpack.c.l.b16 %v3950
        %v4335 = vunpack.c.h.b16 %v3950
        %v4336 = vunpack.c.l.b16 %v3951
        %v4337 = vunpack.c.h.b16 %v3951
        %v4338 = vunpack.c.l.b16 %v3952
        %v4339 = vunpack.c.h.b16 %v3952
        %v4340 = vunpack.c.l.b16 %v3953
        %v4341 = vunpack.c.h.b16 %v3953
        %v4342 = vunpack.c.l.b16 %v3954
        %v4343 = vunpack.c.h.b16 %v3954
        %v4344 = vunpack.c.l.b16 %v3955
        %v4345 = vunpack.c.h.b16 %v3955
        %v4346 = vpack.c.b16 %v4092, %v4090
        %v4347 = vpack.c.b16 %v4093, %v4091
        %v4348 = vpack.c.b16 %v4096, %v4094
        %v4349 = vpack.c.b16 %v4097, %v4095
        %v4350 = vpack.c.b16 %v4100, %v4098
        %v4351 = vpack.c.b16 %v4101, %v4099
        %v4352 = vpack.c.b16 %v4104, %v4102
        %v4353 = vpack.c.b16 %v4105, %v4103
        %v4354 = vpack.c.b16 %v4108, %v4106
        %v4355 = vpack.c.b16 %v4109, %v4107
        %v4356 = vpack.c.b16 %v4112, %v4110
        %v4357 = vpack.c.b16 %v4113, %v4111
        %v4358 = vpack.c.b16 %v4116, %v4114
        %v4359 = vpack.c.b16 %v4117, %v4115
        %v4360 = vpack.c.b16 %v4120, %v4118
        %v4361 = vpack.c.b16 %v4121, %v4119
        %v4362 = vpack.c.b16 %v4124, %v4122
        %v4363 = vpack.c.b16 %v4125, %v4123
        %v4364 = vpack.c.b16 %v4128, %v4126
        %v4365 = vpack.c.b16 %v4129, %v4127
        %v4366 = vpack.c.b16 %v4132, %v4130
        %v4367 = vpack.c.b16 %v4133, %v4131
        %v4368 = vpack.c.b16 %v4136, %v4134
        %v4369 = vpack.c.b16 %v4137, %v4135
        %v4370 = vpack.c.b16 %v4140, %v4138
        %v4371 = vpack.c.b16 %v4141, %v4139
        %v4372 = vpack.c.b16 %v4144, %v4142
        %v4373 = vpack.c.b16 %v4145, %v4143
        %v4374 = vpack.c.b16 %v4148, %v4146
        %v4375 = vpack.c.b16 %v4149, %v4147
        %v4376 = vpack.c.b16 %v4152, %v4150
        %v4377 = vpack.c.b16 %v4153, %v4151
        %v4378 = vpack.c.b16 %v4156, %v4154
        %v4379 = vpack.c.b16 %v4157, %v4155
        %v4380 = vpack.c.b16 %v4160, %v4158
        %v4381 = vpack.c.b16 %v4161, %v4159
        %v4382 = vpack.c.b16 %v4164, %v4162
        %v4383 = vpack.c.b16 %v4165, %v4163
        %v4384 = vpack.c.b16 %v4168, %v4166
        %v4385 = vpack.c.b16 %v4169, %v4167
        %v4386 = vpack.c.b16 %v4172, %v4170
        %v4387 = vpack.c.b16 %v4173, %v4171
        %v4388 = vpack.c.b16 %v4176, %v4174
        %v4389 = vpack.c.b16 %v4177, %v4175
        %v4390 = vpack.c.b16 %v4180, %v4178
        %v4391 = vpack.c.b16 %v4181, %v4179
        %v4392 = vpack.c.b16 %v4184, %v4182
        %v4393 = vpack.c.b16 %v4185, %v4183
        %v4394 = vpack.c.b16 %v4188, %v4186
        %v4395 = vpack.c.b16 %v4189, %v4187
        %v4396 = vpack.c.b16 %v4192, %v4190
        %v4397 = vpack.c.b16 %v4193, %v4191
        %v4398 = vpack.c.b16 %v4196, %v4194
        %v4399 = vpack.c.b16 %v4197, %v4195
        %v4400 = vpack.c.b16 %v4200, %v4198
        %v4401 = vpack.c.b16 %v4201, %v4199
        %v4402 = vpack.c.b16 %v4204, %v4202
        %v4403 = vpack.c.b16 %v4205, %v4203
        %v4404 = vpack.c.b16 %v4208, %v4206
        %v4405 = vpack.c.b16 %v4209, %v4207
        %v4406 = vpack.c.b16 %v4212, %v4210
        %v4407 = vpack.c.b16 %v4213, %v4211
        %v4408 = vpack.c.b16 %v4216, %v4214
        %v4409 = vpack.c.b16 %v4217, %v4215
        %v4410 = vpack.c.b16 %v4220, %v4218
        %v4411 = vpack.c.b16 %v4221, %v4219
        %v4412 = vpack.c.b16 %v4224, %v4222
        %v4413 = vpack.c.b16 %v4225, %v4223
        %v4414 = vpack.c.b16 %v4228, %v4226
        %v4415 = vpack.c.b16 %v4229, %v4227
        %v4416 = vpack.c.b16 %v4232, %v4230
        %v4417 = vpack.c.b16 %v4233, %v4231
        %v4418 = vpack.c.b16 %v4236, %v4234
        %v4419 = vpack.c.b16 %v4237, %v4235
        %v4420 = vpack.c.b16 %v4240, %v4238
        %v4421 = vpack.c.b16 %v4241, %v4239
        %v4422 = vpack.c.b16 %v4244, %v4242
        %v4423 = vpack.c.b16 %v4245, %v4243
        %v4424 = vpack.c.b16 %v4248, %v4246
        %v4425 = vpack.c.b16 %v4249, %v4247
        %v4426 = vpack.c.b16 %v4252, %v4250
        %v4427 = vpack.c.b16 %v4253, %v4251
        %v4428 = vpack.c.b16 %v4256, %v4254
        %v4429 = vpack.c.b16 %v4257, %v4255
        %v4430 = vpack.c.b16 %v4260, %v4258
        %v4431 = vpack.c.b16 %v4261, %v4259
        %v4432 = vpack.c.b16 %v4264, %v4262
        %v4433 = vpack.c.b16 %v4265, %v4263
        %v4434 = vpack.c.b16 %v4268, %v4266
        %v4435 = vpack.c.b16 %v4269, %v4267
        %v4436 = vpack.c.b16 %v4272, %v4270
        %v4437 = vpack.c.b16 %v4273, %v4271
        %v4438 = vpack.c.b16 %v4276, %v4274
        %v4439 = vpack.c.b16 %v4277, %v4275
        %v4440 = vpack.c.b16 %v4280, %v4278
        %v4441 = vpack.c.b16 %v4281, %v4279
        %v4442 = vpack.c.b16 %v4284, %v4282
        %v4443 = vpack.c.b16 %v4285, %v4283
        %v4444 = vpack.c.b16 %v4288, %v4286
        %v4445 = vpack.c.b16 %v4289, %v4287
        %v4446 = vpack.c.b16 %v4292, %v4290
        %v4447 = vpack.c.b16 %v4293, %v4291
        %v4448 = vpack.c.b16 %v4296, %v4294
        %v4449 = vpack.c.b16 %v4297, %v4295
        %v4450 = vpack.c.b16 %v4300, %v4298
        %v4451 = vpack.c.b16 %v4301, %v4299
        %v4452 = vpack.c.b16 %v4304, %v4302
        %v4453 = vpack.c.b16 %v4305, %v4303
        %v4454 = vpack.c.b16 %v4308, %v4306
        %v4455 = vpack.c.b16 %v4309, %v4307
        %v4456 = vpack.c.b16 %v4312, %v4310
        %v4457 = vpack.c.b16 %v4313, %v4311
        %v4458 = vpack.c.b16 %v4316, %v4314
        %v4459 = vpack.c.b16 %v4317, %v4315
        %v4460 = vpack.c.b16 %v4320, %v4318
        %v4461 = vpack.c.b16 %v4321, %v4319
        %v4462 = vpack.c.b16 %v4324, %v4322
        %v4463 = vpack.c.b16 %v4325, %v4323
        %v4464 = vpack.c.b16 %v4328, %v4326
        %v4465 = vpack.c.b16 %v4329, %v4327
        %v4466 = vpack.c.b16 %v4332, %v4330
        %v4467 = vpack.c.b16 %v4333, %v4331
        %v4468 = vpack.c.b16 %v4336, %v4334
        %v4469 = vpack.c.b16 %v4337, %v4335
        %v4470 = vpack.c.b16 %v4340, %v4338
        %v4471 = vpack.c.b16 %v4341, %v4339
        %v4472 = vpack.c.b16 %v4344, %v4342
        %v4473 = vpack.c.b16 %v4345, %v4343
        %4602 = vmatpush.bf16.msra.mxu0 %v4360
        %4603 = vmatpush.bf16.msra.mxu0 %v4358
        %4604 = vmatpush.bf16.msra.mxu0 %v4356
        %4605 = vmatpush.bf16.msra.mxu0 %v4354
        %4606 = vmatpush.bf16.msra.mxu0 %v4352
        %4607 = vmatpush.bf16.msra.mxu0 %v4350
        %4608 = vmatpush.bf16.msra.mxu0 %v4348
        %4609 = vmatpush.bf16.msra.mxu0 %v4346
        %4610 = vmatmul.bf16.gmra.mxu0 %v3820
        %v4611 = vpop.f32.mrf.mxu0
        %v4612 = vadd.f32 %v3958, %v4611
        %v4613 = vpop.f32.mrf.mxu0
        %v4614 = vadd.f32 %v3958, %v4613
        %4615 = vdwg.mxu0
        %4616 = vmatpush.bf16.msra.mxu0 %v4376
        %4617 = vmatpush.bf16.msra.mxu0 %v4374
        %4618 = vmatpush.bf16.msra.mxu0 %v4372
        %4619 = vmatpush.bf16.msra.mxu0 %v4370
        %4620 = vmatpush.bf16.msra.mxu0 %v4368
        %4621 = vmatpush.bf16.msra.mxu0 %v4366
        %4622 = vmatpush.bf16.msra.mxu0 %v4364
        %4623 = vmatpush.bf16.msra.mxu0 %v4362
        %4624 = vmatmul.bf16.gmra.mxu0 %v3821
        %v4625 = vpop.f32.mrf.mxu0
        %v4626 = vadd.f32 %v4612, %v4625
        %v4627 = vpop.f32.mrf.mxu0
        %v4628 = vadd.f32 %v4614, %v4627
        %4629 = vdwg.mxu0
        %4630 = vmatpush.bf16.msra.mxu0 %v4392
        %4631 = vmatpush.bf16.msra.mxu0 %v4390
        %4632 = vmatpush.bf16.msra.mxu0 %v4388
        %4633 = vmatpush.bf16.msra.mxu0 %v4386
        %4634 = vmatpush.bf16.msra.mxu0 %v4384
        %4635 = vmatpush.bf16.msra.mxu0 %v4382
        %4636 = vmatpush.bf16.msra.mxu0 %v4380
        %4637 = vmatpush.bf16.msra.mxu0 %v4378
        %4638 = vmatmul.bf16.gmra.mxu0 %v3822
        %v4639 = vpop.f32.mrf.mxu0
        %v4640 = vadd.f32 %v4626, %v4639
        %v4641 = vpop.f32.mrf.mxu0
        %v4642 = vadd.f32 %v4628, %v4641
        %4643 = vdwg.mxu0
        %4644 = vmatpush.bf16.msra.mxu0 %v4408
        %4645 = vmatpush.bf16.msra.mxu0 %v4406
        %4646 = vmatpush.bf16.msra.mxu0 %v4404
        %4647 = vmatpush.bf16.msra.mxu0 %v4402
        %4648 = vmatpush.bf16.msra.mxu0 %v4400
        %4649 = vmatpush.bf16.msra.mxu0 %v4398
        %4650 = vmatpush.bf16.msra.mxu0 %v4396
        %4651 = vmatpush.bf16.msra.mxu0 %v4394
        %4652 = vmatmul.bf16.gmra.mxu0 %v3823
        %v4653 = vpop.f32.mrf.mxu0
        %v4654 = vadd.f32 %v4640, %v4653
        %v4655 = vpop.f32.mrf.mxu0
        %v4656 = vadd.f32 %v4642, %v4655
        %4657 = vdwg.mxu0
        %4658 = vmatpush.bf16.msra.mxu0 %v4424
        %4659 = vmatpush.bf16.msra.mxu0 %v4422
        %4660 = vmatpush.bf16.msra.mxu0 %v4420
        %4661 = vmatpush.bf16.msra.mxu0 %v4418
        %4662 = vmatpush.bf16.msra.mxu0 %v4416
        %4663 = vmatpush.bf16.msra.mxu0 %v4414
        %4664 = vmatpush.bf16.msra.mxu0 %v4412
        %4665 = vmatpush.bf16.msra.mxu0 %v4410
        %4666 = vmatmul.bf16.gmra.mxu0 %v3824
        %v4667 = vpop.f32.mrf.mxu0
        %v4668 = vadd.f32 %v4654, %v4667
        %v4669 = vpop.f32.mrf.mxu0
        %v4670 = vadd.f32 %v4656, %v4669
        %4671 = vdwg.mxu0
        %4672 = vmatpush.bf16.msra.mxu0 %v4440
        %4673 = vmatpush.bf16.msra.mxu0 %v4438
        %4674 = vmatpush.bf16.msra.mxu0 %v4436
        %4675 = vmatpush.bf16.msra.mxu0 %v4434
        %4676 = vmatpush.bf16.msra.mxu0 %v4432
        %4677 = vmatpush.bf16.msra.mxu0 %v4430
        %4678 = vmatpush.bf16.msra.mxu0 %v4428
        %4679 = vmatpush.bf16.msra.mxu0 %v4426
        %4680 = vmatmul.bf16.gmra.mxu0 %v3825
        %v4681 = vpop.f32.mrf.mxu0
        %v4682 = vadd.f32 %v4668, %v4681
        %v4683 = vpop.f32.mrf.mxu0
        %v4684 = vadd.f32 %v4670, %v4683
        %4685 = vdwg.mxu0
        %4686 = vmatpush.bf16.msra.mxu0 %v4456
        %4687 = vmatpush.bf16.msra.mxu0 %v4454
        %4688 = vmatpush.bf16.msra.mxu0 %v4452
        %4689 = vmatpush.bf16.msra.mxu0 %v4450
        %4690 = vmatpush.bf16.msra.mxu0 %v4448
        %4691 = vmatpush.bf16.msra.mxu0 %v4446
        %4692 = vmatpush.bf16.msra.mxu0 %v4444
        %4693 = vmatpush.bf16.msra.mxu0 %v4442
        %4694 = vmatmul.bf16.gmra.mxu0 %v3826
        %v4695 = vpop.f32.mrf.mxu0
        %v4696 = vadd.f32 %v4682, %v4695
        %v4697 = vpop.f32.mrf.mxu0
        %v4698 = vadd.f32 %v4684, %v4697
        %4699 = vdwg.mxu0
        %4700 = vmatpush.bf16.msra.mxu0 %v4472
        %4701 = vmatpush.bf16.msra.mxu0 %v4470
        %4702 = vmatpush.bf16.msra.mxu0 %v4468
        %4703 = vmatpush.bf16.msra.mxu0 %v4466
        %4704 = vmatpush.bf16.msra.mxu0 %v4464
        %4705 = vmatpush.bf16.msra.mxu0 %v4462
        %4706 = vmatpush.bf16.msra.mxu0 %v4460
        %4707 = vmatpush.bf16.msra.mxu0 %v4458
        %4708 = vmatmul.bf16.gmra.mxu0 %v3827
        %v4709 = vpop.f32.mrf.mxu0
        %v4710 = vadd.f32 %v4696, %v4709
        %v4711 = vpop.f32.mrf.mxu0
        %v4712 = vadd.f32 %v4698, %v4711
        %4713 = vdwg.mxu0
        %4714 = vmatpush.bf16.msra.mxu0 %v4361
        %4715 = vmatpush.bf16.msra.mxu0 %v4359
        %4716 = vmatpush.bf16.msra.mxu0 %v4357
        %4717 = vmatpush.bf16.msra.mxu0 %v4355
        %4718 = vmatpush.bf16.msra.mxu0 %v4353
        %4719 = vmatpush.bf16.msra.mxu0 %v4351
        %4720 = vmatpush.bf16.msra.mxu0 %v4349
        %4721 = vmatpush.bf16.msra.mxu0 %v4347
        %4722 = vmatmul.bf16.gmra.mxu0 %v3820
        %v4723 = vpop.f32.mrf.mxu0
        %v4724 = vadd.f32 %v3959, %v4723
        %v4725 = vpop.f32.mrf.mxu0
        %v4726 = vadd.f32 %v3959, %v4725
        %4727 = vdwg.mxu0
        %4728 = vmatpush.bf16.msra.mxu0 %v4377
        %4729 = vmatpush.bf16.msra.mxu0 %v4375
        %4730 = vmatpush.bf16.msra.mxu0 %v4373
        %4731 = vmatpush.bf16.msra.mxu0 %v4371
        %4732 = vmatpush.bf16.msra.mxu0 %v4369
        %4733 = vmatpush.bf16.msra.mxu0 %v4367
        %4734 = vmatpush.bf16.msra.mxu0 %v4365
        %4735 = vmatpush.bf16.msra.mxu0 %v4363
        %4736 = vmatmul.bf16.gmra.mxu0 %v3821
        %v4737 = vpop.f32.mrf.mxu0
        %v4738 = vadd.f32 %v4724, %v4737
        %v4739 = vpop.f32.mrf.mxu0
        %v4740 = vadd.f32 %v4726, %v4739
        %4741 = vdwg.mxu0
        %4742 = vmatpush.bf16.msra.mxu0 %v4393
        %4743 = vmatpush.bf16.msra.mxu0 %v4391
        %4744 = vmatpush.bf16.msra.mxu0 %v4389
        %4745 = vmatpush.bf16.msra.mxu0 %v4387
        %4746 = vmatpush.bf16.msra.mxu0 %v4385
        %4747 = vmatpush.bf16.msra.mxu0 %v4383
        %4748 = vmatpush.bf16.msra.mxu0 %v4381
        %4749 = vmatpush.bf16.msra.mxu0 %v4379
        %4750 = vmatmul.bf16.gmra.mxu0 %v3822
        %v4751 = vpop.f32.mrf.mxu0
        %v4752 = vadd.f32 %v4738, %v4751
        %v4753 = vpop.f32.mrf.mxu0
        %v4754 = vadd.f32 %v4740, %v4753
        %4755 = vdwg.mxu0
        %4756 = vmatpush.bf16.msra.mxu0 %v4409
        %4757 = vmatpush.bf16.msra.mxu0 %v4407
        %4758 = vmatpush.bf16.msra.mxu0 %v4405
        %4759 = vmatpush.bf16.msra.mxu0 %v4403
        %4760 = vmatpush.bf16.msra.mxu0 %v4401
        %4761 = vmatpush.bf16.msra.mxu0 %v4399
        %4762 = vmatpush.bf16.msra.mxu0 %v4397
        %4763 = vmatpush.bf16.msra.mxu0 %v4395
        %4764 = vmatmul.bf16.gmra.mxu0 %v3823
        %v4765 = vpop.f32.mrf.mxu0
        %v4766 = vadd.f32 %v4752, %v4765
        %v4767 = vpop.f32.mrf.mxu0
        %v4768 = vadd.f32 %v4754, %v4767
        %4769 = vdwg.mxu0
        %4770 = vmatpush.bf16.msra.mxu0 %v4425
        %4771 = vmatpush.bf16.msra.mxu0 %v4423
        %4772 = vmatpush.bf16.msra.mxu0 %v4421
        %4773 = vmatpush.bf16.msra.mxu0 %v4419
        %4774 = vmatpush.bf16.msra.mxu0 %v4417
        %4775 = vmatpush.bf16.msra.mxu0 %v4415
        %4776 = vmatpush.bf16.msra.mxu0 %v4413
        %4777 = vmatpush.bf16.msra.mxu0 %v4411
        %4778 = vmatmul.bf16.gmra.mxu0 %v3824
        %v4779 = vpop.f32.mrf.mxu0
        %v4780 = vadd.f32 %v4766, %v4779
        %v4781 = vpop.f32.mrf.mxu0
        %v4782 = vadd.f32 %v4768, %v4781
        %4783 = vdwg.mxu0
        %4784 = vmatpush.bf16.msra.mxu0 %v4441
        %4785 = vmatpush.bf16.msra.mxu0 %v4439
        %4786 = vmatpush.bf16.msra.mxu0 %v4437
        %4787 = vmatpush.bf16.msra.mxu0 %v4435
        %4788 = vmatpush.bf16.msra.mxu0 %v4433
        %4789 = vmatpush.bf16.msra.mxu0 %v4431
        %4790 = vmatpush.bf16.msra.mxu0 %v4429
        %4791 = vmatpush.bf16.msra.mxu0 %v4427
        %4792 = vmatmul.bf16.gmra.mxu0 %v3825
        %v4793 = vpop.f32.mrf.mxu0
        %v4794 = vadd.f32 %v4780, %v4793
        %v4795 = vpop.f32.mrf.mxu0
        %v4796 = vadd.f32 %v4782, %v4795
        %4797 = vdwg.mxu0
        %4798 = vmatpush.bf16.msra.mxu0 %v4457
        %4799 = vmatpush.bf16.msra.mxu0 %v4455
        %4800 = vmatpush.bf16.msra.mxu0 %v4453
        %4801 = vmatpush.bf16.msra.mxu0 %v4451
        %4802 = vmatpush.bf16.msra.mxu0 %v4449
        %4803 = vmatpush.bf16.msra.mxu0 %v4447
        %4804 = vmatpush.bf16.msra.mxu0 %v4445
        %4805 = vmatpush.bf16.msra.mxu0 %v4443
        %4806 = vmatmul.bf16.gmra.mxu0 %v3826
        %v4807 = vpop.f32.mrf.mxu0
        %v4808 = vadd.f32 %v4794, %v4807
        %v4809 = vpop.f32.mrf.mxu0
        %v4810 = vadd.f32 %v4796, %v4809
        %4811 = vdwg.mxu0
        %4812 = vmatpush.bf16.msra.mxu0 %v4473
        %4813 = vmatpush.bf16.msra.mxu0 %v4471
        %4814 = vmatpush.bf16.msra.mxu0 %v4469
        %4815 = vmatpush.bf16.msra.mxu0 %v4467
        %4816 = vmatpush.bf16.msra.mxu0 %v4465
        %4817 = vmatpush.bf16.msra.mxu0 %v4463
        %4818 = vmatpush.bf16.msra.mxu0 %v4461
        %4819 = vmatpush.bf16.msra.mxu0 %v4459
        %4820 = vmatmul.bf16.gmra.mxu0 %v3827
        %v4821 = vpop.f32.mrf.mxu0
        %v4822 = vadd.f32 %v4808, %v4821
        %v4823 = vpop.f32.mrf.mxu0
        %v4824 = vadd.f32 %v4810, %v4823
        %4825 = vdwg.mxu0
        %v4826 = vadd.f32 %v2788, %v4710
        %v4827 = vadd.f32 %v2789, %v4822
        %v4828 = vadd.f32 %v2790, %v4712
        %v4829 = vadd.f32 %v2791, %v4824
        %v4830 = vld [vmem:[%s1124] sm:$0x3]
        %v4831 = vld [vmem:[%s1134] sm:$0x3]
        %v4832 = vadd.f32 %v4826, %v4827
        %4833 = vadd.xlane.f32.xlu0 %v4832
        %v4834 = vpop.xlane.xlu0 %4833
        %v4835 = vadd.f32 %v4828, %v4829
        %4836 = vadd.xlane.f32.xlu0 %v4835
        %v4837 = vpop.xlane.xlu0 %4836
        %v4838 = vmul.f32 %v4834, %v2729
        %v4839 = vmul.f32 %v4837, %v2729
        %v4840 = vsub.f32 %v4826, %v4838
        %v4841 = vsub.f32 %v4827, %v4838
        %v4842 = vsub.f32 %v4828, %v4839
        %v4843 = vsub.f32 %v4829, %v4839
        %v4844 = vmul.f32 %v4840, %v4840
        %v4845 = vmul.f32 %v4841, %v4841
        %v4846 = vmul.f32 %v4842, %v4842
        %v4847 = vmul.f32 %v4843, %v4843
        %v4848 = vadd.f32 %v4844, %v4845
        %4849 = vadd.xlane.f32.xlu0 %v4848
        %v4850 = vpop.xlane.xlu0 %4849
        %v4851 = vadd.f32 %v4846, %v4847
        %4852 = vadd.xlane.f32.xlu0 %v4851
        %v4853 = vpop.xlane.xlu0 %4852
        %v4854 = vmul.f32 %v4850, %v2729
        %v4855 = vmul.f32 %v4853, %v2729
        %v4856 = vadd.f32 %v4854, 1e-12
        %v4857 = vadd.f32 %v4855, 1e-12
        %v4858 = vrsqrt.pop %v4856
        %v4859 = vmul.f32 %v4858, %v4856
        %v4860 = vmul.f32 %v4859, %v4858
        %v4861 = vmul.f32 0.5, %v4860
        %v4862 = vsub.f32 1.5, %v4861
        %v4863 = vmul.f32 %v4858, %v4862
        %vm4864 = vweird.f32 %v4856
        %vm4865 = vweird.f32 %v4858
        %vm4866 = vmor %vm4864, %vm4865
        %v4867 = vsel %vm4866, %v4858, %v4863
        %v4868 = vrsqrt.pop %v4857
        %v4869 = vmul.f32 %v4868, %v4857
        %v4870 = vmul.f32 %v4869, %v4868
        %v4871 = vmul.f32 0.5, %v4870
        %v4872 = vsub.f32 1.5, %v4871
        %v4873 = vmul.f32 %v4868, %v4872
        %vm4874 = vweird.f32 %v4857
        %vm4875 = vweird.f32 %v4868
        %vm4876 = vmor %vm4874, %vm4875
        %v4877 = vsel %vm4876, %v4868, %v4873
        %v4878 = vmul.f32 %v4840, %v4867
        %v4879 = vmul.f32 %v4841, %v4867
        %v4880 = vmul.f32 %v4842, %v4877
        %v4881 = vmul.f32 %v4843, %v4877
        %v4883 = vperm.slane %v4830, 0
        %v4884 = vperm.slane %v4830, 1
        %v4887 = vmul.f32 %v4878, %v4883
        %v4888 = vmul.f32 %v4879, %v4884
        %v4889 = vmul.f32 %v4880, %v4883
        %v4890 = vmul.f32 %v4881, %v4884
        %v4892 = vperm.slane %v4831, 0
        %v4893 = vperm.slane %v4831, 1
        %v4896 = vadd.f32 %v4887, %v4892
        %v4897 = vadd.f32 %v4888, %v4893
        %v4898 = vadd.f32 %v4889, %v4892
        %v4899 = vadd.f32 %v4890, %v4893
        %4901 = vset.pattern.permute.xlu0 0
        %4902 = vperm.xlu0 %4901, %v1455
        %v4903 = vpop.permute.xlu0 %4902
        %4906 = vset.pattern.permute.xlu0 0
        %4907 = vperm.xlu0 %4906, %v1456
        %v4908 = vpop.permute.xlu0 %4907
        %v4910 = vmul.f32 %v4896, %v4903
        %v4911 = vmul.f32 %v4897, %v4903
        %v4912 = vmul.f32 %v4898, %v4908
        %v4913 = vmul.f32 %v4899, %v4908
        %v4914 = vrot.slane %v4910, 4
        %v4915 = vadd.f32 %v4910, %v4914
        %v4916 = vrot.slane %v4915, 2
        %v4917 = vadd.f32 %v4915, %v4916
        %v4918 = vrot.slane %v4917, 1
        %v4919 = vadd.f32 %v4917, %v4918
        %v4920 = vrot.slane %v4911, 4
        %v4921 = vadd.f32 %v4911, %v4920
        %v4922 = vrot.slane %v4921, 2
        %v4923 = vadd.f32 %v4921, %v4922
        %v4924 = vrot.slane %v4923, 1
        %v4925 = vadd.f32 %v4923, %v4924
        %v4926 = vrot.slane %v4912, 4
        %v4927 = vadd.f32 %v4912, %v4926
        %v4928 = vrot.slane %v4927, 2
        %v4929 = vadd.f32 %v4927, %v4928
        %v4930 = vrot.slane %v4929, 1
        %v4931 = vadd.f32 %v4929, %v4930
        %v4932 = vrot.slane %v4913, 4
        %v4933 = vadd.f32 %v4913, %v4932
        %v4934 = vrot.slane %v4933, 2
        %v4935 = vadd.f32 %v4933, %v4934
        %v4936 = vrot.slane %v4935, 1
        %v4937 = vadd.f32 %v4935, %v4936
        %v4938 = vld [vmem:[#allocation4] sm:$0x1]
        %v4939 = vld [vmem:[#allocation4 + $0x1] sm:$0x1]
        %4941 = vset.pattern.permute.xlu0 0
        %4942 = vperm.xlu0 %4941, %v4938
        %v4943 = vpop.permute.xlu0 %4942
        %v4945 = vperm.slane %v4943, 0
        %4947 = vset.pattern.permute.xlu0 0
        %4948 = vperm.xlu0 %4947, %v4939
        %v4949 = vpop.permute.xlu0 %4948
        %v4951 = vperm.slane %v4949, 0
        %v4952 = vmul.f32 %v4919, %v4945
        %v4953 = vmul.f32 %v4925, %v4945
        %v4954 = vmul.f32 %v4931, %v4951
        %v4955 = vmul.f32 %v4937, %v4951
        %v4956 = vxor.u32 %v4952, 2147483648
        %v4957 = vxor.u32 %v4953, 2147483648
        %v4958 = vxor.u32 %v4954, 2147483648
        %v4959 = vxor.u32 %v4955, 2147483648
        %v4960 = vmul.f32 %v4956, 1.442695
        %v4961 = vpow.pop %v4960
        %v4962 = vmul.f32 %v4957, 1.442695
        %v4963 = vpow.pop %v4962
        %v4964 = vmul.f32 %v4958, 1.442695
        %v4965 = vpow.pop %v4964
        %v4966 = vmul.f32 %v4959, 1.442695
        %v4967 = vpow.pop %v4966
        %v4968 = vadd.f32 %v4961, 1.0
        %v4969 = vadd.f32 %v4963, 1.0
        %v4970 = vadd.f32 %v4965, 1.0
        %v4971 = vadd.f32 %v4967, 1.0
        %v4972 = vrcp.pop %v4968
        %v4973 = vmul.f32 %v4968, %v4972
        %v4974 = vsub.f32 1.0, %v4973
        %v4975 = vmul.f32 %v4972, %v4974
        %v4976 = vadd.f32 %v4972, %v4975
        %vm4977 = vweird.f32 %v4968
        %vm4978 = vweird.f32 %v4972
        %vm4979 = vmor %vm4977, %vm4978
        %v4980 = vsel %vm4979, %v4972, %v4976
        %v4981 = vand.u32 2147483647, %v4968
        %vm4982 = vcmp.eq.f32.partialorder %v4981, 8.507059e+37
        %v4983 = vand.u32 %v4968, 2147483648
        %v4984 = vor.u32 1.1754944e-38, %v4983
        %v4985 = vsel %vm4982, %v4984, %v4980
        %v4986 = vmul.f32 1.0, %v4985
        %v4987 = vrcp.pop %v4969
        %v4988 = vmul.f32 %v4969, %v4987
        %v4989 = vsub.f32 1.0, %v4988
        %v4990 = vmul.f32 %v4987, %v4989
        %v4991 = vadd.f32 %v4987, %v4990
        %vm4992 = vweird.f32 %v4969
        %vm4993 = vweird.f32 %v4987
        %vm4994 = vmor %vm4992, %vm4993
        %v4995 = vsel %vm4994, %v4987, %v4991
        %v4996 = vand.u32 2147483647, %v4969
        %vm4997 = vcmp.eq.f32.partialorder %v4996, 8.507059e+37
        %v4998 = vand.u32 %v4969, 2147483648
        %v4999 = vor.u32 1.1754944e-38, %v4998
        %v5000 = vsel %vm4997, %v4999, %v4995
        %v5001 = vmul.f32 1.0, %v5000
        %v5002 = vrcp.pop %v4970
        %v5003 = vmul.f32 %v4970, %v5002
        %v5004 = vsub.f32 1.0, %v5003
        %v5005 = vmul.f32 %v5002, %v5004
        %v5006 = vadd.f32 %v5002, %v5005
        %vm5007 = vweird.f32 %v4970
        %vm5008 = vweird.f32 %v5002
        %vm5009 = vmor %vm5007, %vm5008
        %v5010 = vsel %vm5009, %v5002, %v5006
        %v5011 = vand.u32 2147483647, %v4970
        %vm5012 = vcmp.eq.f32.partialorder %v5011, 8.507059e+37
        %v5013 = vand.u32 %v4970, 2147483648
        %v5014 = vor.u32 1.1754944e-38, %v5013
        %v5015 = vsel %vm5012, %v5014, %v5010
        %v5016 = vmul.f32 1.0, %v5015
        %v5017 = vrcp.pop %v4971
        %v5018 = vmul.f32 %v4971, %v5017
        %v5019 = vsub.f32 1.0, %v5018
        %v5020 = vmul.f32 %v5017, %v5019
        %v5021 = vadd.f32 %v5017, %v5020
        %vm5022 = vweird.f32 %v4971
        %vm5023 = vweird.f32 %v5017
        %vm5024 = vmor %vm5022, %vm5023
        %v5025 = vsel %vm5024, %v5017, %v5021
        %v5026 = vand.u32 2147483647, %v4971
        %vm5027 = vcmp.eq.f32.partialorder %v5026, 8.507059e+37
        %v5028 = vand.u32 %v4971, 2147483648
        %v5029 = vor.u32 1.1754944e-38, %v5028
        %v5030 = vsel %vm5027, %v5029, %v5025
        %v5031 = vmul.f32 1.0, %v5030
        %v5032 = vld [vmem:[%s1014] sm:$0xff]
        %v5033 = vld [vmem:[%s1014 + $0x8] sm:$0xff]
        %v5034 = vunpack.c.l.bf16 %v5032
        %v5035 = vunpack.c.h.bf16 %v5032
        %v5036 = vunpack.c.l.bf16 %v5033
        %v5037 = vunpack.c.h.bf16 %v5033
        %v5038 = vmul.f32 %v4986, %v5034
        %v5039 = vmul.f32 %v5001, %v5035
        %v5040 = vmul.f32 %v5016, %v5036
        %v5041 = vmul.f32 %v5031, %v5037
        %v5042 = vadd.f32 %v4910, %v5038
        %v5043 = vadd.f32 %v4911, %v5039
        %v5044 = vadd.f32 %v4912, %v5040
        %v5045 = vadd.f32 %v4913, %v5041
        %5046 = vst [vmem:[#allocation27] sm:$0xff] %v5042
        %5047 = vst [vmem:[#allocation27 + $0x8] sm:$0xff] %v5043
        %5048 = vst [vmem:[#allocation27 + $0x10] sm:$0xff] %v5044
        %5049 = vst [vmem:[#allocation27 + $0x18] sm:$0xff] %v5045
        // Predicated region
        $region177: #{tpu_custom_call.1} parent=103 // pred_check
          %p5050 = pneg %p604
        $region178: #{tpu_custom_call.1} parent=103 // pred_check_branch
          %5052 = sbr.rel (%p5050) target = $region180
        $region179: #{tpu_custom_call.1} parent=103 // pred_region
          %s5053 = smul.u32 2, %s40
          %5055 = vsyncadd [#allocation8], 0
          %s5056 = smul.addr %s5053, 2
          %s5057 = smul.addr %s5056, 8
          %s5058 = scalar_lea.hbm %s21, %s5057
          %s5059 = sshll.u32 [#allocation27], 4
          %s5060 = int_to_ptr.vmem [resolvable:$true] %s5059
          %s5061 = sshll.u32 %s5058, 4
          %s5062 = int_to_ptr.hbm [resolvable:$true] %s5061
          %5067 = dma.vmem_to_hbm [thread:$0]  %s5060, 512, %s5062, [#allocation8], 256, 256, 16
        $region180: #{tpu_custom_call.1} parent=103 // pred_fallthru
          _
        // Predicated region
        $region181: #{tpu_custom_call.1} parent=103 // pred_check
          %p5068 = pneg %p604
        $region182: #{tpu_custom_call.1} parent=103 // pred_check_branch
          %5070 = sbr.rel (%p5068) target = $region184
        $region183: #{tpu_custom_call.1} parent=103 // pred_region
          %5072 = dma.done [#allocation8], 512
        $region184: #{tpu_custom_call.1} parent=103 // pred_fallthru
          _
      $region104: #{tpu_custom_call.1} parent=5 // pred_fallthru
        _
      %p5073 = scmp.le.s32.totalorder 2, %s31
      // Predicated region
      $region185: #{tpu_custom_call.1} parent=5 // pred_check
        %p5074 = pneg %p5073
      $region186: #{tpu_custom_call.1} parent=5 // pred_check_branch
        %5076 = sbr.rel (%p5074) target = $region188
      $region187: #{tpu_custom_call.1} parent=5 // pred_region
        %s5077 = ssub.s32 %s31, 2
      $region188: #{tpu_custom_call.1} parent=5 // pred_fallthru
        _
    $region6: #{tpu_custom_call.1} parent=1 // loop_footer
      %s35 = sadd.s32 1, %s31
    $region7: #{tpu_custom_call.1} parent=1 // loop_footer_branch
      %30 = sbr.rel target = $region3
    $region8: #{tpu_custom_call.1} parent=1 // loop_exit
      _
    %5078 = vsyncpa [#allocation7], 1
    %s5079 = scalar_lea.sflag [#allocation7], 1
    %5080 = vsyncpa %s5079, 1
    %5081 = vsyncpa [#allocation10], 1
    %5082 = vsyncpa [#allocation13], 1
    %5083 = vsyncpa [#allocation8], 1
    %s5084 = scalar_lea.sflag [#allocation8], 1
    %5085 = vsyncpa %s5084, 1

</llo_original>
